<compile_context>
chip_gen: v5e
topology: v5e:2x2
jax: 0.10.0
libtpu: 0.0.40
codegen_flags: <defaults>
</compile_context>

<pallas_src>
import functools

import jax
import jax.numpy as jnp
import numpy as np
from jax import lax
from jax.experimental import pallas as pl
from jax.experimental.pallas import tpu as pltpu


# ----------------------------------------------------------------------------
# Pallas kernel: full unrolled LISTA forward for Nb images per grid step.
# ----------------------------------------------------------------------------
def lista_kernel(xcol_ref, wB_ref, wS_ref, wC_ref, thr_ref, mask_ref,
                 out_ref, g_ref, *, ksize, unfoldings, H, W, Nb, F):
    """One grid step processes Nb images packed into the lane dimension.

    With CF = Nb*F, Ho = H-k+1, Wo = W-k+1, Wp = Wo+2(k-1),
         base = (k-1)*Wp + (k-1), R = (Ho-1)*Wp + Wo, OUT_R = H*Wp:
      xcol_ref : (1, R, k*k*Nb)     lane-dense im2col of the images; rows are
                                    padded-flat code rows [base, base+R)
      wB_ref   : (k*k*Nb, CF)       block-diag-over-images Conv2d(1->F) weight
      wS_ref   : ((2k-1)^2*CF, CF)  block-diag conv_B o conv_T_A operator
      wC_ref   : (k*k*CF, Nb)       block-diag ConvT(C) weight, F -> 1
      thr_ref  : (1, CF)            per-(image, filter) soft threshold
      mask_ref : (R, CF)            1.0 on valid code rows, 0.0 on padding
      out_ref  : (1, Nb, OUT_R)     output on the stride-Wp image grid
      g_ref    : (base+OUT_R, CF)   VMEM scratch, padded-flat code buffer
    """
    k = ksize
    Ho, Wo = H - k + 1, W - k + 1
    Wp = Wo + 2 * (k - 1)
    CF = Nb * F
    base = (k - 1) * Wp + (k - 1)       # padded-flat row of code pixel (0, 0)
    R = (Ho - 1) * Wp + Wo              # rows spanning all valid code pixels
    OUT_R = H * Wp                      # output rows: image pixel (p,q) -> p*Wp+q
    f32 = jnp.float32

    wB = wB_ref[...]                    # (k*k*Nb, CF)
    wS = wS_ref[...]                    # ((2k-1)^2*CF, CF)
    wC = wC_ref[...]                    # (k*k*CF, Nb)
    mask = mask_ref[...]                # (R, CF)
    # Hoisted threshold broadcast (used by every soft-threshold call below).
    thr = jnp.broadcast_to(thr_ref[...], (R, CF))

    def soft_thr(z):
        # max(z-t,0) - max(-z-t,0) == (z>t)*(z-t) + (z<-t)*(z+t) for t >= 0.
        return jnp.maximum(z - thr, 0.0) - jnp.maximum(-z - thr, 0.0)

    # --- b0 = conv_B(x): one lane-dense MXU matmul, f32 accumulation. ------
    b0 = jnp.dot(xcol_ref[0], wB, preferred_element_type=f32)        # (R, CF)

    # --- gamma_0 = soft_thr(b0) on the zero-bordered padded-flat grid. -----
    g_ref[...] = jnp.zeros(g_ref.shape, f32)
    g_ref[base:base + R, :] = soft_thr(b0) * mask

    # --- unfolding loop, entirely in code space (S = conv_B o conv_T_A). ---
    n_taps = 2 * k - 1
    center = (k - 1) * n_taps + (k - 1)
    for _ in range(unfoldings - 1):
        cols = []
        for u in range(-(k - 1), k):
            for v in range(-(k - 1), k):
                off = base + u * Wp + v
                cols.append(g_ref[off:off + R, :])                   # (R, CF)
        s_val = jnp.dot(jnp.concatenate(cols, axis=1), wS,
                        preferred_element_type=f32)                  # (R, CF)
        gamma = cols[center]                                         # (R, CF)
        g_ref[base:base + R, :] = soft_thr(gamma - s_val + b0) * mask

    # --- output = conv_T_C(gamma) on the stride-Wp image grid. -------------
    cols = []
    for ei in range(k):
        for ej in range(k):
            off = (k - 1 - ei) * Wp + (k - 1 - ej)
            cols.append(g_ref[off:off + OUT_R, :])                   # (OUT_R, CF)
    y = jnp.dot(jnp.concatenate(cols, axis=1), wC,
                preferred_element_type=f32)                          # (OUT_R, Nb)
    # Lane-dense store: (Nb, OUT_R) with OUT_R = H*Wp lanes.
    out_ref[0] = jnp.transpose(y, (1, 0))


# ----------------------------------------------------------------------------
# Wrapper: layout plumbing (im2col, block-diag / composed weights) + call.
# ----------------------------------------------------------------------------
def conv_lista_forward(I_nchw, A, Bw, Cw, threshold, unfoldings):
    """ConvLista_T.forward for stride == 1.
    I_nchw: (N,1,H,W) f32. A/Bw/Cw: (F,1,k,k). threshold: (F,). -> (N,1,H,W)."""
    N, C, H, W = I_nchw.shape
    assert C == 1, "single input channel, as in the PyTorch module"
    F, _, k, _ = A.shape
    Ho, Wo = H - k + 1, W - k + 1
    Hp, Wp = Ho + 2 * (k - 1), Wo + 2 * (k - 1)
    T = k * k
    TT = (2 * k - 1) ** 2

    # Images per grid step: fill the MXU result width (CF = Nb*F, up to 256
    # lanes) while keeping >= 2 grid steps when possible (v7x dual TensorCore
    # + software-pipeline overlap).
    lane_cap = max(1, 256 // F)
    nb_cap = min(lane_cap, max(1, N // 2)) if N >= 2 else 1
    Nb = 1
    for cand in range(min(nb_cap, N), 0, -1):
        if N % cand == 0:
            Nb = cand
            break
    G = N // Nb
    CF = Nb * F

    base = (k - 1) * Wp + (k - 1)
    R = (Ho - 1) * Wp + Wo
    OUT_R = H * Wp
    GROWS = base + OUT_R                # >= Hp*Wp, covers every tap slice

    x = I_nchw.astype(jnp.float32).reshape(G, Nb, H, W)

    # ---- lane-dense im2col of the input on padded-flat code rows ----------
    pats = []
    for di in range(k):
        for dj in range(k):
            pats.append(x[:, :, di:di + Ho, dj:dj + Wo])             # (G,Nb,Ho,Wo)
    P = jnp.stack(pats, axis=-1)                                      # (G,Nb,Ho,Wo,T)
    P = jnp.transpose(P, (0, 2, 3, 4, 1)).reshape(G, Ho, Wo, T * Nb)
    Pfull = jnp.zeros((G, Hp, Wp, T * Nb), jnp.float32)
    Pfull = Pfull.at[:, k - 1:k - 1 + Ho, k - 1:k - 1 + Wo, :].set(P)
    X_col = Pfull.reshape(G, Hp * Wp, T * Nb)[:, base:base + R, :]    # (G,R,T*Nb)

    # ---- block-diagonal-over-images weights --------------------------------
    A2 = A[:, 0].astype(jnp.float32)    # (F, k, k)
    B2 = Bw[:, 0].astype(jnp.float32)
    C2 = Cw[:, 0].astype(jnp.float32)
    eye = jnp.eye(Nb, dtype=jnp.float32)

    # conv_B: wB_big[tap*Nb + m, n*F + f] = delta_{mn} * B[f, di, dj]
    wBf = jnp.transpose(B2.reshape(F, T), (1, 0))                     # (T, F)
    wB_big = jnp.einsum('tf,mn->tmnf', wBf, eye).reshape(T * Nb, CF)

    # S = conv_B o conv_T_A as a (2k-1)x(2k-1), F->F code-space kernel:
    #   Sker[f_out, f_in, u, v] = sum_{di,dj} B[f_out,di,dj] * A[f_in,di-u,dj-v]
    blocks = []
    for u in range(-(k - 1), k):
        for v in range(-(k - 1), k):
            di0, di1 = max(0, u), min(k, k + u)
            dj0, dj1 = max(0, v), min(k, k + v)
            Bsl = B2[:, di0:di1, dj0:dj1]
            Asl = A2[:, di0 - u:di1 - u, dj0 - v:dj1 - v]
            M = jnp.einsum('fij,gij->gf', Bsl, Asl,
                           precision=jax.lax.Precision.HIGHEST)       # (F_in, F_out)
            blocks.append(jnp.einsum('gf,mn->mgnf', M, eye).reshape(CF, CF))
    wS_big = jnp.concatenate(blocks, axis=0)                          # (TT*CF, CF)

    # conv_T_C: wC_big[(ei*k+ej)*CF + n*F + f, m] = delta_{nm} * C[f, ei, ej]
    wCf = jnp.transpose(C2.reshape(F, T), (1, 0))                     # (T, F)
    wC_big = jnp.einsum('tf,nm->tnfm', wCf, eye).reshape(T * CF, Nb)

    thr_row = jnp.tile(threshold.astype(jnp.float32).reshape(1, F), (1, Nb))

    # valid-code-row mask for padded-flat rows [base, base+R)
    mrow = jnp.zeros((Hp, Wp), jnp.float32)
    mrow = mrow.at[k - 1:k - 1 + Ho, k - 1:k - 1 + Wo].set(1.0)
    mrow = mrow.reshape(Hp * Wp)[base:base + R]
    mask = jnp.broadcast_to(mrow[:, None], (R, CF))

    kern = functools.partial(lista_kernel, ksize=k, unfoldings=unfoldings,
                             H=H, W=W, Nb=Nb, F=F)

    out = pl.pallas_call(
        kern,
        out_shape=jax.ShapeDtypeStruct((G, Nb, OUT_R), jnp.float32),
        grid=(G,),
        in_specs=[
            pl.BlockSpec((1, R, T * Nb), lambda b: (b, 0, 0)),
            pl.BlockSpec((T * Nb, CF), lambda b: (0, 0)),
            pl.BlockSpec((TT * CF, CF), lambda b: (0, 0)),
            pl.BlockSpec((T * CF, Nb), lambda b: (0, 0)),
            pl.BlockSpec((1, CF), lambda b: (0, 0)),
            pl.BlockSpec((R, CF), lambda b: (0, 0)),
        ],
        out_specs=pl.BlockSpec((1, Nb, OUT_R), lambda b: (b, 0, 0)),
        scratch_shapes=[pltpu.VMEM((GROWS, CF), jnp.float32)],
        compiler_params=pltpu.CompilerParams(
            dimension_semantics=("parallel",),
            vmem_limit_bytes=32 * 1024 * 1024),
    )(X_col, wB_big, wS_big, wC_big, thr_row, mask)

    # Drop the stride-Wp padding columns; back to (N, 1, H, W).
    out = out.reshape(N, H, Wp)[:, :, :W]
    return out.reshape(N, 1, H, W)


# ----------------------------------------------------------------------------
# Init-time glue: conv_power_method (spectral-norm normalization) in plain JAX.
# ----------------------------------------------------------------------------
def conv_power_method_jax(D, image_size, num_iters=30, stride=1):
    F, _, k, _ = D.shape
    nh = (image_size[0] - k) // stride + 1
    nw = (image_size[1] - k) // stride + 1
    x = jax.random.normal(jax.random.PRNGKey(1), (1, F, nh, nw), jnp.float32)
    dn = ('NCHW', 'OIHW', 'NCHW')
    D_t = jnp.transpose(D, (1, 0, 2, 3))[:, :, ::-1, ::-1]   # flipped, (1,F,k,k)
    for _ in range(num_iters):
        x = x / jnp.linalg.norm(x.reshape(-1))
        y = lax.conv_general_dilated(x, D_t, (1, 1), [(k - 1, k - 1), (k - 1, k - 1)],
                                     dimension_numbers=dn, precision='highest')
        x = lax.conv_general_dilated(y, D, (1, 1), 'VALID',
                                     dimension_numbers=dn, precision='highest')
    return jnp.linalg.norm(x.reshape(-1))


# ----------------------------------------------------------------------------
# Pure-JAX reference (independent of the kernel) for a correctness check.
# ----------------------------------------------------------------------------
def reference_forward(I, A, Bw, Cw, thr, unfoldings):
    dn = ('NCHW', 'OIHW', 'NCHW')
    k = A.shape[-1]

    def conv_B(x):
        return lax.conv_general_dilated(x, Bw, (1, 1), 'VALID',
                                        dimension_numbers=dn, precision='highest')

    def conv_T(g, Wt):
        Kf = jnp.transpose(Wt, (1, 0, 2, 3))[:, :, ::-1, ::-1]
        return lax.conv_general_dilated(g, Kf, (1, 1), [(k - 1, k - 1), (k - 1, k - 1)],
                                        dimension_numbers=dn, precision='highest')

    def st(x):
        t = thr.reshape(1, -1, 1, 1)
        m1 = (x > t).astype(x.dtype)
        m2 = (x < -t).astype(x.dtype)
        return m1 * (x - t) + m2 * (x + t)

    gamma = st(conv_B(I))
    for _ in range(unfoldings - 1):
        x_k = conv_T(gamma, A)
        r_k = conv_B(x_k - I)
        gamma = st(gamma - r_k)
    return conv_T(gamma, Cw)


# ----------------------------------------------------------------------------
if __name__ == "__main__":
    key = jax.random.PRNGKey(0)
    k_a, k_x = jax.random.split(key)

    # ListaParams(kernel_size=3, num_filters=32, stride=1, unfoldings=3)
    N, H, W = 8, 16, 16          # N=8 -> Nb=4 images/step (CF=128), 2 parallel steps
    ksize, F, unfoldings = 3, 32, 3

    A = jax.random.normal(k_a, (F, 1, ksize, ksize), jnp.float32)
    l = conv_power_method_jax(A, (64, 64), num_iters=30, stride=1)
    A = A / jnp.sqrt(l)
    Bw = A
    Cw = A
    thr = 0.01 * jnp.ones((F,), jnp.float32)

    x = jax.random.normal(k_x, (N, 1, H, W), jnp.float32)

    out = conv_lista_forward(x, A, Bw, Cw, thr, unfoldings)
    out = jax.block_until_ready(out)
    assert out.shape == (N, 1, H, W)

    ref = reference_forward(x, A, Bw, Cw, thr, unfoldings)
    # Kernel matmuls run at default (single-pass bf16) MXU precision per the
    # perf guidance; the reference is f32/HIGHEST, so allow a modest tolerance.
    np.testing.assert_allclose(np.asarray(out), np.asarray(ref),
                               atol=2e-2, rtol=2e-2)

    print("KERNEL_OK")
</pallas_src>

<mosaic_0001>
module attributes {stable_mosaic.version = 11 : i64} {
  func.func @lista_kernel(%arg0: i32, %arg1: memref<1x248x36xf32, #tpu.memory_space<vmem>>, %arg2: memref<36x128xf32, #tpu.memory_space<vmem>>, %arg3: memref<3200x128xf32, #tpu.memory_space<vmem>>, %arg4: memref<1152x4xf32, #tpu.memory_space<vmem>>, %arg5: memref<1x128xf32, #tpu.memory_space<vmem>>, %arg6: memref<248x128xf32, #tpu.memory_space<vmem>>, %arg7: memref<1x4x288xf32, #tpu.memory_space<vmem>>, %arg8: memref<326x128xf32, #tpu.memory_space<vmem>>) attributes {dimension_semantics = [#tpu.dimension_semantics<parallel>], iteration_bounds = array<i64: 2>, scalar_prefetch = 0 : i64, scratch_operands = 1 : i64, tpu.core_type = #tpu.core_type<tc>, window_params = [{transform_indices = @transform_0, window_bounds = array<i64: 1, 248, 36>}, {pipeline_mode = #tpu.pipeline_mode<synchronous>, transform_indices = @transform_1, window_bounds = array<i64: 36, 128>}, {pipeline_mode = #tpu.pipeline_mode<synchronous>, transform_indices = @transform_2, window_bounds = array<i64: 3200, 128>}, {pipeline_mode = #tpu.pipeline_mode<synchronous>, transform_indices = @transform_3, window_bounds = array<i64: 1152, 4>}, {pipeline_mode = #tpu.pipeline_mode<synchronous>, transform_indices = @transform_4, window_bounds = array<i64: 1, 128>}, {pipeline_mode = #tpu.pipeline_mode<synchronous>, transform_indices = @transform_5, window_bounds = array<i64: 248, 128>}, {transform_indices = @transform_6, window_bounds = array<i64: 1, 4, 288>}]} {
    %c0 = arith.constant 0 : index
    %c0_0 = arith.constant 0 : index
    %0 = vector.load %arg2[%c0, %c0_0] : memref<36x128xf32, #tpu.memory_space<vmem>>, vector<36x128xf32>
    %c0_1 = arith.constant 0 : index
    %c0_2 = arith.constant 0 : index
    %1 = vector.load %arg3[%c0_1, %c0_2] : memref<3200x128xf32, #tpu.memory_space<vmem>>, vector<3200x128xf32>
    %c0_3 = arith.constant 0 : index
    %c0_4 = arith.constant 0 : index
    %2 = vector.load %arg4[%c0_3, %c0_4] : memref<1152x4xf32, #tpu.memory_space<vmem>>, vector<1152x4xf32>
    %c0_5 = arith.constant 0 : index
    %c0_6 = arith.constant 0 : index
    %3 = vector.load %arg6[%c0_5, %c0_6] : memref<248x128xf32, #tpu.memory_space<vmem>>, vector<248x128xf32>
    %c0_7 = arith.constant 0 : index
    %c0_8 = arith.constant 0 : index
    %4 = vector.load %arg5[%c0_7, %c0_8] : memref<1x128xf32, #tpu.memory_space<vmem>>, vector<1x128xf32>
    %5 = vector.shape_cast %4 : vector<1x128xf32> to vector<1x128xf32>
    %6 = vector.broadcast %5 : vector<1x128xf32> to vector<248x128xf32>
    %c0_9 = arith.constant 0 : index
    %c0_10 = arith.constant 0 : index
    %c0_11 = arith.constant 0 : index
    %7 = vector.load %arg1[%c0_9, %c0_10, %c0_11] : memref<1x248x36xf32, #tpu.memory_space<vmem>>, vector<1x248x36xf32>
    %8 = vector.shape_cast %7 : vector<1x248x36xf32> to vector<248x36xf32>
    %cst = arith.constant dense<0.000000e+00> : vector<248x128xf32>
    %9 = tpu.matmul %8, %0, %cst {dimension_numbers = #tpu.dot_dimension_numbers<[1], [0], [0], [1], [0, 0, 1, 1], [], []>} : vector<248x36xf32>, vector<36x128xf32>, vector<248x128xf32> -> vector<248x128xf32>
    %cst_12 = arith.constant 0.000000e+00 : f32
    %10 = vector.broadcast %cst_12 : f32 to vector<326x128xf32>
    %c0_13 = arith.constant 0 : index
    %c0_14 = arith.constant 0 : index
    %11 = vector.load %arg8[%c0_13, %c0_14] : memref<326x128xf32, #tpu.memory_space<vmem>>, vector<326x128xf32>
    tpu.vector_store %arg8[%c0_13, %c0_14], %10 {strides = array<i32>} : memref<326x128xf32, #tpu.memory_space<vmem>>, vector<326x128xf32>,
    %12 = arith.subf %9, %6 : vector<248x128xf32>
    %cst_15 = arith.constant 0.000000e+00 : f32
    %13 = vector.broadcast %cst_15 : f32 to vector<248x128xf32>
    %14 = arith.maximumf %12, %13 : vector<248x128xf32>
    %cst_16 = arith.constant 0.000000e+00 : f32
    %15 = vector.broadcast %cst_16 : f32 to vector<248x128xf32>
    %16 = arith.subf %15, %9 : vector<248x128xf32>
    %17 = arith.subf %16, %6 : vector<248x128xf32>
    %cst_17 = arith.constant 0.000000e+00 : f32
    %18 = vector.broadcast %cst_17 : f32 to vector<248x128xf32>
    %19 = arith.maximumf %17, %18 : vector<248x128xf32>
    %20 = arith.subf %14, %19 : vector<248x128xf32>
    %21 = arith.mulf %20, %3 : vector<248x128xf32>
    %c38 = arith.constant 38 : index
    %c0_18 = arith.constant 0 : index
    %22 = vector.load %arg8[%c38, %c0_18] : memref<326x128xf32, #tpu.memory_space<vmem>>, vector<248x128xf32>
    tpu.vector_store %arg8[%c38, %c0_18], %21 {strides = array<i32>} : memref<326x128xf32, #tpu.memory_space<vmem>>, vector<248x128xf32>,
    %c0_19 = arith.constant 0 : index
    %c0_20 = arith.constant 0 : index
    %23 = vector.load %arg8[%c0_19, %c0_20] : memref<326x128xf32, #tpu.memory_space<vmem>>, vector<248x128xf32>
    %c1 = arith.constant 1 : index
    %c0_21 = arith.constant 0 : index
    %24 = vector.load %arg8[%c1, %c0_21] : memref<326x128xf32, #tpu.memory_space<vmem>>, vector<248x128xf32>
    %c2 = arith.constant 2 : index
    %c0_22 = arith.constant 0 : index
    %25 = vector.load %arg8[%c2, %c0_22] : memref<326x128xf32, #tpu.memory_space<vmem>>, vector<248x128xf32>
    %c3 = arith.constant 3 : index
    %c0_23 = arith.constant 0 : index
    %26 = vector.load %arg8[%c3, %c0_23] : memref<326x128xf32, #tpu.memory_space<vmem>>, vector<248x128xf32>
    %c4 = arith.constant 4 : index
    %c0_24 = arith.constant 0 : index
    %27 = vector.load %arg8[%c4, %c0_24] : memref<326x128xf32, #tpu.memory_space<vmem>>, vector<248x128xf32>
    %c18 = arith.constant 18 : index
    %c0_25 = arith.constant 0 : index
    %28 = vector.load %arg8[%c18, %c0_25] : memref<326x128xf32, #tpu.memory_space<vmem>>, vector<248x128xf32>
    %c19 = arith.constant 19 : index
    %c0_26 = arith.constant 0 : index
    %29 = vector.load %arg8[%c19, %c0_26] : memref<326x128xf32, #tpu.memory_space<vmem>>, vector<248x128xf32>
    %c20 = arith.constant 20 : index
    %c0_27 = arith.constant 0 : index
    %30 = vector.load %arg8[%c20, %c0_27] : memref<326x128xf32, #tpu.memory_space<vmem>>, vector<248x128xf32>
    %c21 = arith.constant 21 : index
    %c0_28 = arith.constant 0 : index
    %31 = vector.load %arg8[%c21, %c0_28] : memref<326x128xf32, #tpu.memory_space<vmem>>, vector<248x128xf32>
    %c22 = arith.constant 22 : index
    %c0_29 = arith.constant 0 : index
    %32 = vector.load %arg8[%c22, %c0_29] : memref<326x128xf32, #tpu.memory_space<vmem>>, vector<248x128xf32>
    %c36 = arith.constant 36 : index
    %c0_30 = arith.constant 0 : index
    %33 = vector.load %arg8[%c36, %c0_30] : memref<326x128xf32, #tpu.memory_space<vmem>>, vector<248x128xf32>
    %c37 = arith.constant 37 : index
    %c0_31 = arith.constant 0 : index
    %34 = vector.load %arg8[%c37, %c0_31] : memref<326x128xf32, #tpu.memory_space<vmem>>, vector<248x128xf32>
    %c38_32 = arith.constant 38 : index
    %c0_33 = arith.constant 0 : index
    %35 = vector.load %arg8[%c38_32, %c0_33] : memref<326x128xf32, #tpu.memory_space<vmem>>, vector<248x128xf32>
    %c39 = arith.constant 39 : index
    %c0_34 = arith.constant 0 : index
    %36 = vector.load %arg8[%c39, %c0_34] : memref<326x128xf32, #tpu.memory_space<vmem>>, vector<248x128xf32>
    %c40 = arith.constant 40 : index
    %c0_35 = arith.constant 0 : index
    %37 = vector.load %arg8[%c40, %c0_35] : memref<326x128xf32, #tpu.memory_space<vmem>>, vector<248x128xf32>
    %c54 = arith.constant 54 : index
    %c0_36 = arith.constant 0 : index
    %38 = vector.load %arg8[%c54, %c0_36] : memref<326x128xf32, #tpu.memory_space<vmem>>, vector<248x128xf32>
    %c55 = arith.constant 55 : index
    %c0_37 = arith.constant 0 : index
    %39 = vector.load %arg8[%c55, %c0_37] : memref<326x128xf32, #tpu.memory_space<vmem>>, vector<248x128xf32>
    %c56 = arith.constant 56 : index
    %c0_38 = arith.constant 0 : index
    %40 = vector.load %arg8[%c56, %c0_38] : memref<326x128xf32, #tpu.memory_space<vmem>>, vector<248x128xf32>
    %c57 = arith.constant 57 : index
    %c0_39 = arith.constant 0 : index
    %41 = vector.load %arg8[%c57, %c0_39] : memref<326x128xf32, #tpu.memory_space<vmem>>, vector<248x128xf32>
    %c58 = arith.constant 58 : index
    %c0_40 = arith.constant 0 : index
    %42 = vector.load %arg8[%c58, %c0_40] : memref<326x128xf32, #tpu.memory_space<vmem>>, vector<248x128xf32>
    %c72 = arith.constant 72 : index
    %c0_41 = arith.constant 0 : index
    %43 = vector.load %arg8[%c72, %c0_41] : memref<326x128xf32, #tpu.memory_space<vmem>>, vector<248x128xf32>
    %c73 = arith.constant 73 : index
    %c0_42 = arith.constant 0 : index
    %44 = vector.load %arg8[%c73, %c0_42] : memref<326x128xf32, #tpu.memory_space<vmem>>, vector<248x128xf32>
    %c74 = arith.constant 74 : index
    %c0_43 = arith.constant 0 : index
    %45 = vector.load %arg8[%c74, %c0_43] : memref<326x128xf32, #tpu.memory_space<vmem>>, vector<248x128xf32>
    %c75 = arith.constant 75 : index
    %c0_44 = arith.constant 0 : index
    %46 = vector.load %arg8[%c75, %c0_44] : memref<326x128xf32, #tpu.memory_space<vmem>>, vector<248x128xf32>
    %c76 = arith.constant 76 : index
    %c0_45 = arith.constant 0 : index
    %47 = vector.load %arg8[%c76, %c0_45] : memref<326x128xf32, #tpu.memory_space<vmem>>, vector<248x128xf32>
    %48 = tpu.concatenate %23, %24, %25, %26, %27, %28, %29, %30, %31, %32, %33, %34, %35, %36, %37, %38 in 1 : vector<248x128xf32>, vector<248x128xf32>, vector<248x128xf32>, vector<248x128xf32>, vector<248x128xf32>, vector<248x128xf32>, vector<248x128xf32>, vector<248x128xf32>, vector<248x128xf32>, vector<248x128xf32>, vector<248x128xf32>, vector<248x128xf32>, vector<248x128xf32>, vector<248x128xf32>, vector<248x128xf32>, vector<248x128xf32> -> vector<248x2048xf32>
    %49 = tpu.concatenate %39, %40, %41, %42, %43, %44, %45, %46, %47 in 1 : vector<248x128xf32>, vector<248x128xf32>, vector<248x128xf32>, vector<248x128xf32>, vector<248x128xf32>, vector<248x128xf32>, vector<248x128xf32>, vector<248x128xf32>, vector<248x128xf32> -> vector<248x1152xf32>
    %50 = tpu.concatenate %48, %49 in 1 : vector<248x2048xf32>, vector<248x1152xf32> -> vector<248x3200xf32>
    %cst_46 = arith.constant dense<0.000000e+00> : vector<248x128xf32>
    %51 = tpu.matmul %50, %1, %cst_46 {dimension_numbers = #tpu.dot_dimension_numbers<[1], [0], [0], [1], [0, 0, 1, 1], [], []>} : vector<248x3200xf32>, vector<3200x128xf32>, vector<248x128xf32> -> vector<248x128xf32>
    %52 = arith.subf %35, %51 : vector<248x128xf32>
    %53 = arith.addf %52, %9 : vector<248x128xf32>
    %54 = arith.subf %53, %6 : vector<248x128xf32>
    %cst_47 = arith.constant 0.000000e+00 : f32
    %55 = vector.broadcast %cst_47 : f32 to vector<248x128xf32>
    %56 = arith.maximumf %54, %55 : vector<248x128xf32>
    %cst_48 = arith.constant 0.000000e+00 : f32
    %57 = vector.broadcast %cst_48 : f32 to vector<248x128xf32>
    %58 = arith.subf %57, %53 : vector<248x128xf32>
    %59 = arith.subf %58, %6 : vector<248x128xf32>
    %cst_49 = arith.constant 0.000000e+00 : f32
    %60 = vector.broadcast %cst_49 : f32 to vector<248x128xf32>
    %61 = arith.maximumf %59, %60 : vector<248x128xf32>
    %62 = arith.subf %56, %61 : vector<248x128xf32>
    %63 = arith.mulf %62, %3 : vector<248x128xf32>
    %c38_50 = arith.constant 38 : index
    %c0_51 = arith.constant 0 : index
    %64 = vector.load %arg8[%c38_50, %c0_51] : memref<326x128xf32, #tpu.memory_space<vmem>>, vector<248x128xf32>
    tpu.vector_store %arg8[%c38_50, %c0_51], %63 {strides = array<i32>} : memref<326x128xf32, #tpu.memory_space<vmem>>, vector<248x128xf32>,
    %c0_52 = arith.constant 0 : index
    %c0_53 = arith.constant 0 : index
    %65 = vector.load %arg8[%c0_52, %c0_53] : memref<326x128xf32, #tpu.memory_space<vmem>>, vector<248x128xf32>
    %c1_54 = arith.constant 1 : index
    %c0_55 = arith.constant 0 : index
    %66 = vector.load %arg8[%c1_54, %c0_55] : memref<326x128xf32, #tpu.memory_space<vmem>>, vector<248x128xf32>
    %c2_56 = arith.constant 2 : index
    %c0_57 = arith.constant 0 : index
    %67 = vector.load %arg8[%c2_56, %c0_57] : memref<326x128xf32, #tpu.memory_space<vmem>>, vector<248x128xf32>
    %c3_58 = arith.constant 3 : index
    %c0_59 = arith.constant 0 : index
    %68 = vector.load %arg8[%c3_58, %c0_59] : memref<326x128xf32, #tpu.memory_space<vmem>>, vector<248x128xf32>
    %c4_60 = arith.constant 4 : index
    %c0_61 = arith.constant 0 : index
    %69 = vector.load %arg8[%c4_60, %c0_61] : memref<326x128xf32, #tpu.memory_space<vmem>>, vector<248x128xf32>
    %c18_62 = arith.constant 18 : index
    %c0_63 = arith.constant 0 : index
    %70 = vector.load %arg8[%c18_62, %c0_63] : memref<326x128xf32, #tpu.memory_space<vmem>>, vector<248x128xf32>
    %c19_64 = arith.constant 19 : index
    %c0_65 = arith.constant 0 : index
    %71 = vector.load %arg8[%c19_64, %c0_65] : memref<326x128xf32, #tpu.memory_space<vmem>>, vector<248x128xf32>
    %c20_66 = arith.constant 20 : index
    %c0_67 = arith.constant 0 : index
    %72 = vector.load %arg8[%c20_66, %c0_67] : memref<326x128xf32, #tpu.memory_space<vmem>>, vector<248x128xf32>
    %c21_68 = arith.constant 21 : index
    %c0_69 = arith.constant 0 : index
    %73 = vector.load %arg8[%c21_68, %c0_69] : memref<326x128xf32, #tpu.memory_space<vmem>>, vector<248x128xf32>
    %c22_70 = arith.constant 22 : index
    %c0_71 = arith.constant 0 : index
    %74 = vector.load %arg8[%c22_70, %c0_71] : memref<326x128xf32, #tpu.memory_space<vmem>>, vector<248x128xf32>
    %c36_72 = arith.constant 36 : index
    %c0_73 = arith.constant 0 : index
    %75 = vector.load %arg8[%c36_72, %c0_73] : memref<326x128xf32, #tpu.memory_space<vmem>>, vector<248x128xf32>
    %c37_74 = arith.constant 37 : index
    %c0_75 = arith.constant 0 : index
    %76 = vector.load %arg8[%c37_74, %c0_75] : memref<326x128xf32, #tpu.memory_space<vmem>>, vector<248x128xf32>
    %c38_76 = arith.constant 38 : index
    %c0_77 = arith.constant 0 : index
    %77 = vector.load %arg8[%c38_76, %c0_77] : memref<326x128xf32, #tpu.memory_space<vmem>>, vector<248x128xf32>
    %c39_78 = arith.constant 39 : index
    %c0_79 = arith.constant 0 : index
    %78 = vector.load %arg8[%c39_78, %c0_79] : memref<326x128xf32, #tpu.memory_space<vmem>>, vector<248x128xf32>
    %c40_80 = arith.constant 40 : index
    %c0_81 = arith.constant 0 : index
    %79 = vector.load %arg8[%c40_80, %c0_81] : memref<326x128xf32, #tpu.memory_space<vmem>>, vector<248x128xf32>
    %c54_82 = arith.constant 54 : index
    %c0_83 = arith.constant 0 : index
    %80 = vector.load %arg8[%c54_82, %c0_83] : memref<326x128xf32, #tpu.memory_space<vmem>>, vector<248x128xf32>
    %c55_84 = arith.constant 55 : index
    %c0_85 = arith.constant 0 : index
    %81 = vector.load %arg8[%c55_84, %c0_85] : memref<326x128xf32, #tpu.memory_space<vmem>>, vector<248x128xf32>
    %c56_86 = arith.constant 56 : index
    %c0_87 = arith.constant 0 : index
    %82 = vector.load %arg8[%c56_86, %c0_87] : memref<326x128xf32, #tpu.memory_space<vmem>>, vector<248x128xf32>
    %c57_88 = arith.constant 57 : index
    %c0_89 = arith.constant 0 : index
    %83 = vector.load %arg8[%c57_88, %c0_89] : memref<326x128xf32, #tpu.memory_space<vmem>>, vector<248x128xf32>
    %c58_90 = arith.constant 58 : index
    %c0_91 = arith.constant 0 : index
    %84 = vector.load %arg8[%c58_90, %c0_91] : memref<326x128xf32, #tpu.memory_space<vmem>>, vector<248x128xf32>
    %c72_92 = arith.constant 72 : index
    %c0_93 = arith.constant 0 : index
    %85 = vector.load %arg8[%c72_92, %c0_93] : memref<326x128xf32, #tpu.memory_space<vmem>>, vector<248x128xf32>
    %c73_94 = arith.constant 73 : index
    %c0_95 = arith.constant 0 : index
    %86 = vector.load %arg8[%c73_94, %c0_95] : memref<326x128xf32, #tpu.memory_space<vmem>>, vector<248x128xf32>
    %c74_96 = arith.constant 74 : index
    %c0_97 = arith.constant 0 : index
    %87 = vector.load %arg8[%c74_96, %c0_97] : memref<326x128xf32, #tpu.memory_space<vmem>>, vector<248x128xf32>
    %c75_98 = arith.constant 75 : index
    %c0_99 = arith.constant 0 : index
    %88 = vector.load %arg8[%c75_98, %c0_99] : memref<326x128xf32, #tpu.memory_space<vmem>>, vector<248x128xf32>
    %c76_100 = arith.constant 76 : index
    %c0_101 = arith.constant 0 : index
    %89 = vector.load %arg8[%c76_100, %c0_101] : memref<326x128xf32, #tpu.memory_space<vmem>>, vector<248x128xf32>
    %90 = tpu.concatenate %65, %66, %67, %68, %69, %70, %71, %72, %73, %74, %75, %76, %77, %78, %79, %80 in 1 : vector<248x128xf32>, vector<248x128xf32>, vector<248x128xf32>, vector<248x128xf32>, vector<248x128xf32>, vector<248x128xf32>, vector<248x128xf32>, vector<248x128xf32>, vector<248x128xf32>, vector<248x128xf32>, vector<248x128xf32>, vector<248x128xf32>, vector<248x128xf32>, vector<248x128xf32>, vector<248x128xf32>, vector<248x128xf32> -> vector<248x2048xf32>
    %91 = tpu.concatenate %81, %82, %83, %84, %85, %86, %87, %88, %89 in 1 : vector<248x128xf32>, vector<248x128xf32>, vector<248x128xf32>, vector<248x128xf32>, vector<248x128xf32>, vector<248x128xf32>, vector<248x128xf32>, vector<248x128xf32>, vector<248x128xf32> -> vector<248x1152xf32>
    %92 = tpu.concatenate %90, %91 in 1 : vector<248x2048xf32>, vector<248x1152xf32> -> vector<248x3200xf32>
    %cst_102 = arith.constant dense<0.000000e+00> : vector<248x128xf32>
    %93 = tpu.matmul %92, %1, %cst_102 {dimension_numbers = #tpu.dot_dimension_numbers<[1], [0], [0], [1], [0, 0, 1, 1], [], []>} : vector<248x3200xf32>, vector<3200x128xf32>, vector<248x128xf32> -> vector<248x128xf32>
    %94 = arith.subf %77, %93 : vector<248x128xf32>
    %95 = arith.addf %94, %9 : vector<248x128xf32>
    %96 = arith.subf %95, %6 : vector<248x128xf32>
    %cst_103 = arith.constant 0.000000e+00 : f32
    %97 = vector.broadcast %cst_103 : f32 to vector<248x128xf32>
    %98 = arith.maximumf %96, %97 : vector<248x128xf32>
    %cst_104 = arith.constant 0.000000e+00 : f32
    %99 = vector.broadcast %cst_104 : f32 to vector<248x128xf32>
    %100 = arith.subf %99, %95 : vector<248x128xf32>
    %101 = arith.subf %100, %6 : vector<248x128xf32>
    %cst_105 = arith.constant 0.000000e+00 : f32
    %102 = vector.broadcast %cst_105 : f32 to vector<248x128xf32>
    %103 = arith.maximumf %101, %102 : vector<248x128xf32>
    %104 = arith.subf %98, %103 : vector<248x128xf32>
    %105 = arith.mulf %104, %3 : vector<248x128xf32>
    %c38_106 = arith.constant 38 : index
    %c0_107 = arith.constant 0 : index
    %106 = vector.load %arg8[%c38_106, %c0_107] : memref<326x128xf32, #tpu.memory_space<vmem>>, vector<248x128xf32>
    tpu.vector_store %arg8[%c38_106, %c0_107], %105 {strides = array<i32>} : memref<326x128xf32, #tpu.memory_space<vmem>>, vector<248x128xf32>,
    %c38_108 = arith.constant 38 : index
    %c0_109 = arith.constant 0 : index
    %107 = vector.load %arg8[%c38_108, %c0_109] : memref<326x128xf32, #tpu.memory_space<vmem>>, vector<288x128xf32>
    %c37_110 = arith.constant 37 : index
    %c0_111 = arith.constant 0 : index
    %108 = vector.load %arg8[%c37_110, %c0_111] : memref<326x128xf32, #tpu.memory_space<vmem>>, vector<288x128xf32>
    %c36_112 = arith.constant 36 : index
    %c0_113 = arith.constant 0 : index
    %109 = vector.load %arg8[%c36_112, %c0_113] : memref<326x128xf32, #tpu.memory_space<vmem>>, vector<288x128xf32>
    %c20_114 = arith.constant 20 : index
    %c0_115 = arith.constant 0 : index
    %110 = vector.load %arg8[%c20_114, %c0_115] : memref<326x128xf32, #tpu.memory_space<vmem>>, vector<288x128xf32>
    %c19_116 = arith.constant 19 : index
    %c0_117 = arith.constant 0 : index
    %111 = vector.load %arg8[%c19_116, %c0_117] : memref<326x128xf32, #tpu.memory_space<vmem>>, vector<288x128xf32>
    %c18_118 = arith.constant 18 : index
    %c0_119 = arith.constant 0 : index
    %112 = vector.load %arg8[%c18_118, %c0_119] : memref<326x128xf32, #tpu.memory_space<vmem>>, vector<288x128xf32>
    %c2_120 = arith.constant 2 : index
    %c0_121 = arith.constant 0 : index
    %113 = vector.load %arg8[%c2_120, %c0_121] : memref<326x128xf32, #tpu.memory_space<vmem>>, vector<288x128xf32>
    %c1_122 = arith.constant 1 : index
    %c0_123 = arith.constant 0 : index
    %114 = vector.load %arg8[%c1_122, %c0_123] : memref<326x128xf32, #tpu.memory_space<vmem>>, vector<288x128xf32>
    %c0_124 = arith.constant 0 : index
    %c0_125 = arith.constant 0 : index
    %115 = vector.load %arg8[%c0_124, %c0_125] : memref<326x128xf32, #tpu.memory_space<vmem>>, vector<288x128xf32>
    %116 = tpu.concatenate %107, %108, %109, %110, %111, %112, %113, %114, %115 in 1 : vector<288x128xf32>, vector<288x128xf32>, vector<288x128xf32>, vector<288x128xf32>, vector<288x128xf32>, vector<288x128xf32>, vector<288x128xf32>, vector<288x128xf32>, vector<288x128xf32> -> vector<288x1152xf32>
    %cst_126 = arith.constant dense<0.000000e+00> : vector<288x4xf32>
    %117 = tpu.matmul %116, %2, %cst_126 {dimension_numbers = #tpu.dot_dimension_numbers<[1], [0], [0], [1], [0, 0, 1, 1], [], []>} : vector<288x1152xf32>, vector<1152x4xf32>, vector<288x4xf32> -> vector<288x4xf32>
    %118 = tpu.transpose %117, [1, 0] : vector<288x4xf32> -> vector<4x288xf32>
    %c0_127 = arith.constant 0 : index
    %c0_128 = arith.constant 0 : index
    %c0_129 = arith.constant 0 : index
    %119 = vector.load %arg7[%c0_127, %c0_128, %c0_129] : memref<1x4x288xf32, #tpu.memory_space<vmem>>, vector<1x4x288xf32>
    %120 = vector.shape_cast %119 : vector<1x4x288xf32> to vector<4x288xf32>
    %121 = vector.shape_cast %118 : vector<4x288xf32> to vector<1x4x288xf32>
    tpu.vector_store %arg7[%c0_127, %c0_128, %c0_129], %121 {strides = array<i32>} : memref<1x4x288xf32, #tpu.memory_space<vmem>>, vector<1x4x288xf32>,
    return
  }
  func.func @transform_0(%arg0: i32) -> (i32, i32, i32) {
    %c0_i32 = arith.constant 0 : i32
    %c0_i32_0 = arith.constant 0 : i32
    %c0_i32_1 = arith.constant 0 : i32
    return %arg0, %c0_i32, %c0_i32_0 : i32, i32, i32
  }
  func.func @transform_1(%arg0: i32) -> (i32, i32) {
    %c0_i32 = arith.constant 0 : i32
    %c0_i32_0 = arith.constant 0 : i32
    %c0_i32_1 = arith.constant 0 : i32
    return %c0_i32, %c0_i32_0 : i32, i32
  }
  func.func @transform_2(%arg0: i32) -> (i32, i32) {
    %c0_i32 = arith.constant 0 : i32
    %c0_i32_0 = arith.constant 0 : i32
    %c0_i32_1 = arith.constant 0 : i32
    return %c0_i32, %c0_i32_0 : i32, i32
  }
  func.func @transform_3(%arg0: i32) -> (i32, i32) {
    %c0_i32 = arith.constant 0 : i32
    %c0_i32_0 = arith.constant 0 : i32
    %c0_i32_1 = arith.constant 0 : i32
    return %c0_i32, %c0_i32_0 : i32, i32
  }
  func.func @transform_4(%arg0: i32) -> (i32, i32) {
    %c0_i32 = arith.constant 0 : i32
    %c0_i32_0 = arith.constant 0 : i32
    %c0_i32_1 = arith.constant 0 : i32
    return %c0_i32, %c0_i32_0 : i32, i32
  }
  func.func @transform_5(%arg0: i32) -> (i32, i32) {
    %c0_i32 = arith.constant 0 : i32
    %c0_i32_0 = arith.constant 0 : i32
    %c0_i32_1 = arith.constant 0 : i32
    return %c0_i32, %c0_i32_0 : i32, i32
  }
  func.func @transform_6(%arg0: i32) -> (i32, i32, i32) {
    %c0_i32 = arith.constant 0 : i32
    %c0_i32_0 = arith.constant 0 : i32
    %c0_i32_1 = arith.constant 0 : i32
    return %arg0, %c0_i32, %c0_i32_0 : i32, i32, i32
  }
}

</mosaic_0001>

<llo_original>
// kernel: tpu_custom_call.1
$region0: #{tpu_custom_call.1}
  #allocation0 [shape = 'u32[]', space=smem, size = 0x4, offset = 0x4, fixed_abs, tag = 'smem constant byte address 0x4 - core index']
  #allocation1 [shape = 'u32[72,128]{1,0:T(1,128)}', space=vmem, size = 0x9000, scoped, tag = 'internal scratch']
  #allocation2 [shape = 'f32[326,128]{1,0:T(8,128)}', space=vmem, size = 0x29000, scoped, tag = 'scratch operand']
  %s0 = inlined_call_operand.vmem [shape: f32[2,248,36], index: 0, kind: input, shape index: {}]
  %s1 = inlined_call_operand.hbm [shape: f32[36,128], index: 1, kind: input, shape index: {}]
  %s2 = inlined_call_operand.hbm [shape: f32[3200,128], index: 2, kind: input, shape index: {}]
  %s3 = inlined_call_operand.vmem [shape: f32[1152,4], index: 3, kind: input, shape index: {}]
  %s4 = inlined_call_operand.hbm [shape: f32[1,128], index: 4, kind: input, shape index: {}]
  %s5 = inlined_call_operand.hbm [shape: f32[248,128], index: 5, kind: input, shape index: {}]
  %s6 = inlined_call_operand.hbm [shape: f32[2,4,288], index: 6, kind: output, shape index: {}]
  %s7 = sld [smem:[#allocation0]]
  $region73: #{tpu_custom_call.1} parent=0
    _
  %s9 = ssub.s32 1, %s7
  %s10 = scalar_select 0, %s9, %s7
  $region1: #{tpu_custom_call.1} parent=0
    #allocation3 [shape = 'u8[20480]{0}', space=vmem, size = 0x5000, scoped, tag = 'input window, operand 1, single buffered']
    #allocation4 [shape = 's32[2]{0}', space=sflag, size = 0x8, scoped, tag = 'scoped memory for tpu_custom_call.1']
    #allocation5 [shape = 's32[2]{0}', space=sflag, size = 0x8, scoped, tag = 'scoped memory for tpu_custom_call.1']
    #allocation6 [shape = 'u8[1638400]{0}', space=vmem, size = 0x190000, scoped, tag = 'input window, operand 2, single buffered']
    #allocation7 [shape = 's32[1]{0}', space=sflag, size = 0x4, scoped, tag = 'scoped memory for tpu_custom_call.1']
    #allocation8 [shape = 'u8[512]{0}', space=vmem, size = 0x400, scoped, tag = 'input window, operand 4, single buffered']
    #allocation9 [shape = 'u8[126976]{0}', space=vmem, size = 0x1f000, scoped, tag = 'input window, operand 5, single buffered']
    #allocation10 [shape = 's32[1]{0}', space=sflag, size = 0x4, scoped, tag = 'scoped memory for tpu_custom_call.1']
    #allocation11 [shape = 'u8[12288]{0}', space=vmem, size = 0x3000, scoped, tag = 'output window, operand 0']
    %11 = vsyncpa [#allocation4], 0
    %12 = vsyncpa [#allocation7], 0
    %13 = vsyncpa [#allocation10], 0
    %14 = vsyncpa [#allocation5], 0
    %s15 = scalar_lea.sflag [#allocation5], 1
    %16 = vsyncpa %s15, 0
    loop: start=0, step=1, limit=4
    $region2: #{tpu_custom_call.1} parent=1 // loop_pre_header
      _
    $region3: #{tpu_custom_call.1} parent=1 // loop_header
      %s18 = sphi 0, %s22
      %p19 = scmp.ge.s32.totalorder %s18, 4
      %s28 = sphi 0, %s30
      %s31 = sphi 0, %s28
      %s32 = sphi 0, %s31
      %s48 = sphi 0, %s32
      %s52 = sphi 0, %s52
      %s54 = sphi 0, %s52
      %s55 = sphi 0, %s54
      %s69 = sphi 0, %s55
      %s73 = sphi 0, %s73
      %s75 = sphi 0, %s73
      %s76 = sphi 0, %s75
      %s90 = sphi 0, %s76
      %s94 = sphi 0, %s94
      %s96 = sphi 0, %s94
      %s97 = sphi 0, %s96
      %s111 = sphi 0, %s97
      %s115 = sphi 0, %s115
      %s117 = sphi 0, %s115
      %s118 = sphi 0, %s117
      %s132 = sphi 0, %s118
      %s136 = sphi 0, %s136
      %s138 = sphi 0, %s136
      %s139 = sphi 0, %s138
      %s153 = sphi 0, %s139
      %s159 = sphi 0, %s161
      %s162 = sphi 0, %s159
      %s163 = sphi 0, %s162
      %s179 = sphi 0, %s163
    $region4: #{tpu_custom_call.1} parent=1 // loop_header_branch
      %21 = sbr.rel (%p19) target = $region8
    $region5: #{tpu_custom_call.1} parent=1 // loop_body
      %s23 = ssub.s32 %s18, 1
      %s24 = ssub.s32 %s18, 2
      %s25 = sadd.s32 %s18, 1
      %s26 = ssub.s32 %s18, %s25
      %p27 = scmp.eq.s32.totalorder %s26, 0
      %s29 = sadd.s32 %s28, 1
      %s30 = scalar_select %p27, %s28, %s29
      %p33 = pneg %p27
      %p34 = scmp.eq.s32.totalorder %s18, 1
      %p35 = por %p33, %p34
      %p36 = scmp.ne.s32.totalorder %s28, %s31
      %p37 = scmp.eq.s32.totalorder %s18, 0
      %p38 = por %p36, %p37
      %p39 = scmp.ne.s32.totalorder %s28, %s31
      %p40 = scmp.eq.s32.totalorder %s23, 1
      %p41 = por %p39, %p40
      %p42 = scmp.ne.s32.totalorder %s31, %s32
      %p43 = scmp.eq.s32.totalorder %s23, 0
      %p44 = por %p42, %p43
      %p45 = scmp.ne.s32.totalorder %s31, %s32
      %p46 = scmp.eq.s32.totalorder %s24, 1
      %p47 = por %p45, %p46
      %p49 = scmp.ne.s32.totalorder %s32, %s48
      %p50 = scmp.eq.s32.totalorder %s24, 0
      %p51 = por %p49, %p50
      %s53 = sadd.s32 %s52, 1
      %p56 = scmp.eq.s32.totalorder %s18, 1
      %p57 = scmp.ne.s32.totalorder %s52, %s54
      %p58 = scmp.eq.s32.totalorder %s18, 0
      %p59 = por %p57, %p58
      %p60 = scmp.ne.s32.totalorder %s52, %s54
      %p61 = scmp.eq.s32.totalorder %s23, 1
      %p62 = por %p60, %p61
      %p63 = scmp.ne.s32.totalorder %s54, %s55
      %p64 = scmp.eq.s32.totalorder %s23, 0
      %p65 = por %p63, %p64
      %p66 = scmp.ne.s32.totalorder %s54, %s55
      %p67 = scmp.eq.s32.totalorder %s24, 1
      %p68 = por %p66, %p67
      %p70 = scmp.ne.s32.totalorder %s55, %s69
      %p71 = scmp.eq.s32.totalorder %s24, 0
      %p72 = por %p70, %p71
      %s74 = sadd.s32 %s73, 1
      %p77 = scmp.eq.s32.totalorder %s18, 1
      %p78 = scmp.ne.s32.totalorder %s73, %s75
      %p79 = scmp.eq.s32.totalorder %s18, 0
      %p80 = por %p78, %p79
      %p81 = scmp.ne.s32.totalorder %s73, %s75
      %p82 = scmp.eq.s32.totalorder %s23, 1
      %p83 = por %p81, %p82
      %p84 = scmp.ne.s32.totalorder %s75, %s76
      %p85 = scmp.eq.s32.totalorder %s23, 0
      %p86 = por %p84, %p85
      %p87 = scmp.ne.s32.totalorder %s75, %s76
      %p88 = scmp.eq.s32.totalorder %s24, 1
      %p89 = por %p87, %p88
      %p91 = scmp.ne.s32.totalorder %s76, %s90
      %p92 = scmp.eq.s32.totalorder %s24, 0
      %p93 = por %p91, %p92
      %s95 = sadd.s32 %s94, 1
      %p98 = scmp.eq.s32.totalorder %s18, 1
      %p99 = scmp.ne.s32.totalorder %s94, %s96
      %p100 = scmp.eq.s32.totalorder %s18, 0
      %p101 = por %p99, %p100
      %p102 = scmp.ne.s32.totalorder %s94, %s96
      %p103 = scmp.eq.s32.totalorder %s23, 1
      %p104 = por %p102, %p103
      %p105 = scmp.ne.s32.totalorder %s96, %s97
      %p106 = scmp.eq.s32.totalorder %s23, 0
      %p107 = por %p105, %p106
      %p108 = scmp.ne.s32.totalorder %s96, %s97
      %p109 = scmp.eq.s32.totalorder %s24, 1
      %p110 = por %p108, %p109
      %p112 = scmp.ne.s32.totalorder %s97, %s111
      %p113 = scmp.eq.s32.totalorder %s24, 0
      %p114 = por %p112, %p113
      %s116 = sadd.s32 %s115, 1
      %p119 = scmp.eq.s32.totalorder %s18, 1
      %p120 = scmp.ne.s32.totalorder %s115, %s117
      %p121 = scmp.eq.s32.totalorder %s18, 0
      %p122 = por %p120, %p121
      %p123 = scmp.ne.s32.totalorder %s115, %s117
      %p124 = scmp.eq.s32.totalorder %s23, 1
      %p125 = por %p123, %p124
      %p126 = scmp.ne.s32.totalorder %s117, %s118
      %p127 = scmp.eq.s32.totalorder %s23, 0
      %p128 = por %p126, %p127
      %p129 = scmp.ne.s32.totalorder %s117, %s118
      %p130 = scmp.eq.s32.totalorder %s24, 1
      %p131 = por %p129, %p130
      %p133 = scmp.ne.s32.totalorder %s118, %s132
      %p134 = scmp.eq.s32.totalorder %s24, 0
      %p135 = por %p133, %p134
      %s137 = sadd.s32 %s136, 1
      %p140 = scmp.eq.s32.totalorder %s18, 1
      %p141 = scmp.ne.s32.totalorder %s136, %s138
      %p142 = scmp.eq.s32.totalorder %s18, 0
      %p143 = por %p141, %p142
      %p144 = scmp.ne.s32.totalorder %s136, %s138
      %p145 = scmp.eq.s32.totalorder %s23, 1
      %p146 = por %p144, %p145
      %p147 = scmp.ne.s32.totalorder %s138, %s139
      %p148 = scmp.eq.s32.totalorder %s23, 0
      %p149 = por %p147, %p148
      %p150 = scmp.ne.s32.totalorder %s138, %s139
      %p151 = scmp.eq.s32.totalorder %s24, 1
      %p152 = por %p150, %p151
      %p154 = scmp.ne.s32.totalorder %s139, %s153
      %p155 = scmp.eq.s32.totalorder %s24, 0
      %p156 = por %p154, %p155
      %s157 = ssub.s32 %s18, %s25
      %p158 = scmp.eq.s32.totalorder %s157, 0
      %s160 = sadd.s32 %s159, 1
      %s161 = scalar_select %p158, %s159, %s160
      %p164 = pneg %p158
      %p165 = scmp.eq.s32.totalorder %s18, 1
      %p166 = por %p164, %p165
      %p167 = scmp.ne.s32.totalorder %s159, %s162
      %p168 = scmp.eq.s32.totalorder %s18, 0
      %p169 = por %p167, %p168
      %p170 = scmp.ne.s32.totalorder %s159, %s162
      %p171 = scmp.eq.s32.totalorder %s23, 1
      %p172 = por %p170, %p171
      %p173 = scmp.ne.s32.totalorder %s162, %s163
      %p174 = scmp.eq.s32.totalorder %s23, 0
      %p175 = por %p173, %p174
      %p176 = scmp.ne.s32.totalorder %s162, %s163
      %p177 = scmp.eq.s32.totalorder %s24, 1
      %p178 = por %p176, %p177
      %p180 = scmp.ne.s32.totalorder %s163, %s179
      %p181 = scmp.eq.s32.totalorder %s24, 0
      %p182 = por %p180, %p181
      %p183 = scmp.le.s32.totalorder 1, %s18
      %p184 = scmp.lt.s32.totalorder %s18, 3
      %p185 = pnand %p183, %p184
      %p186 = pneg %p185
      // Predicated region
      $region9: #{tpu_custom_call.1} parent=5 // pred_check
        _
      $region10: #{tpu_custom_call.1} parent=5 // pred_check_branch
        %188 = sbr.rel (%p185) target = $region12
      $region11: #{tpu_custom_call.1} parent=5 // pred_region
        %s189 = ssub.s32 %s18, 1
        // Predicated region
        $region13: #{tpu_custom_call.1} parent=11 // pred_check
          %p190 = pneg %p65
        $region14: #{tpu_custom_call.1} parent=11 // pred_check_branch
          %192 = sbr.rel (%p190) target = $region16
        $region15: #{tpu_custom_call.1} parent=11 // pred_region
          %194 = vsyncadd [#allocation4], 0
          %s195 = sshll.u32 %s1, 4
          %s196 = int_to_ptr.hbm [resolvable:$true] %s195
          %s197 = sshll.u32 [#allocation3], 4
          %s198 = int_to_ptr.vmem [resolvable:$true] %s197
          %203 = dma.hbm_to_vmem [thread:$0]  %s196, 640, %s198, [#allocation4], 128, 128, 8
        $region16: #{tpu_custom_call.1} parent=11 // pred_fallthru
          _
        // Predicated region
        $region17: #{tpu_custom_call.1} parent=11 // pred_check
          %p204 = pneg %p86
        $region18: #{tpu_custom_call.1} parent=11 // pred_check_branch
          %206 = sbr.rel (%p204) target = $region20
        $region19: #{tpu_custom_call.1} parent=11 // pred_region
          %208 = vsyncadd [#allocation7], 0
          %s209 = sshll.u32 %s2, 4
          %s210 = int_to_ptr.hbm [resolvable:$true] %s209
          %s211 = sshll.u32 [#allocation6], 4
          %s212 = int_to_ptr.vmem [resolvable:$true] %s211
          %217 = dma.hbm_to_vmem [thread:$0]  %s210, 51200, %s212, [#allocation7], 128, 128, 8
        $region20: #{tpu_custom_call.1} parent=11 // pred_fallthru
          _
        // Predicated region
        $region21: #{tpu_custom_call.1} parent=11 // pred_check
          %p218 = pneg %p107
        $region22: #{tpu_custom_call.1} parent=11 // pred_check_branch
          %220 = sbr.rel (%p218) target = $region24
        $region23: #{tpu_custom_call.1} parent=11 // pred_region
          _
        $region24: #{tpu_custom_call.1} parent=11 // pred_fallthru
          _
        // Predicated region
        $region25: #{tpu_custom_call.1} parent=11 // pred_check
          %p221 = pneg %p128
        $region26: #{tpu_custom_call.1} parent=11 // pred_check_branch
          %223 = sbr.rel (%p221) target = $region28
        $region27: #{tpu_custom_call.1} parent=11 // pred_region
          %225 = vsyncadd [#allocation7], 0
          %s227 = sshll.u32 %s4, 4
          %s228 = int_to_ptr.hbm [resolvable:$true] %s227
          %s229 = sshll.u32 [#allocation8], 4
          %s230 = int_to_ptr.vmem [resolvable:$true] %s229
          %232 = dma.hbm_to_vmem [thread:$0]  %s228, 16, %s230, [#allocation7]
        $region28: #{tpu_custom_call.1} parent=11 // pred_fallthru
          _
        // Predicated region
        $region29: #{tpu_custom_call.1} parent=11 // pred_check
          %p233 = pneg %p149
        $region30: #{tpu_custom_call.1} parent=11 // pred_check_branch
          %235 = sbr.rel (%p233) target = $region32
        $region31: #{tpu_custom_call.1} parent=11 // pred_region
          %237 = vsyncadd [#allocation10], 0
          %s238 = sshll.u32 %s5, 4
          %s239 = int_to_ptr.hbm [resolvable:$true] %s238
          %s240 = sshll.u32 [#allocation9], 4
          %s241 = int_to_ptr.vmem [resolvable:$true] %s240
          %246 = dma.hbm_to_vmem [thread:$0]  %s239, 3968, %s241, [#allocation10], 128, 128, 8
        $region32: #{tpu_custom_call.1} parent=11 // pred_fallthru
          _
      $region12: #{tpu_custom_call.1} parent=5 // pred_fallthru
        _
      %p247 = scmp.lt.s32.totalorder %s18, 2
      // Predicated region
      $region33: #{tpu_custom_call.1} parent=5 // pred_check
        %p248 = pneg %p247
      $region34: #{tpu_custom_call.1} parent=5 // pred_check_branch
        %250 = sbr.rel (%p248) target = $region36
      $region35: #{tpu_custom_call.1} parent=5 // pred_region
        // Predicated region
        $region37: #{tpu_custom_call.1} parent=35 // pred_check
          %p251 = pneg %p38
        $region38: #{tpu_custom_call.1} parent=35 // pred_check_branch
          %253 = sbr.rel (%p251) target = $region40
        $region39: #{tpu_custom_call.1} parent=35 // pred_region
          %p254 = scmp.lt.s32.totalorder %s18, 1
          %s255 = scalar_select %p254, %s18, 1
          %s256 = smul.addr %s255, 31
          %s257 = smul.addr %s256, 8
          %s258 = scalar_lea.vmem %s0, %s257
        $region40: #{tpu_custom_call.1} parent=35 // pred_fallthru
          _
      $region36: #{tpu_custom_call.1} parent=5 // pred_fallthru
        _
      %p259 = scmp.le.s32.totalorder 1, %s18
      %p260 = scmp.lt.s32.totalorder %s18, 3
      %p261 = pnand %p259, %p260
      %p262 = pneg %p261
      // Predicated region
      $region41: #{tpu_custom_call.1} parent=5 // pred_check
        _
      $region42: #{tpu_custom_call.1} parent=5 // pred_check_branch
        %264 = sbr.rel (%p261) target = $region44
      $region43: #{tpu_custom_call.1} parent=5 // pred_region
        %s265 = ssub.s32 %s18, 1
        // Predicated region
        $region45: #{tpu_custom_call.1} parent=43 // pred_check
          %p266 = pneg %p65
        $region46: #{tpu_custom_call.1} parent=43 // pred_check_branch
          %268 = sbr.rel (%p266) target = $region48
        $region47: #{tpu_custom_call.1} parent=43 // pred_region
          %270 = dma.done [#allocation4], 640
        $region48: #{tpu_custom_call.1} parent=43 // pred_fallthru
          _
        // Predicated region
        $region49: #{tpu_custom_call.1} parent=43 // pred_check
          %p271 = pneg %p86
        $region50: #{tpu_custom_call.1} parent=43 // pred_check_branch
          %273 = sbr.rel (%p271) target = $region52
        $region51: #{tpu_custom_call.1} parent=43 // pred_region
          %275 = dma.done [#allocation7], 51200
        $region52: #{tpu_custom_call.1} parent=43 // pred_fallthru
          _
        // Predicated region
        $region53: #{tpu_custom_call.1} parent=43 // pred_check
          %p276 = pneg %p128
        $region54: #{tpu_custom_call.1} parent=43 // pred_check_branch
          %278 = sbr.rel (%p276) target = $region56
        $region55: #{tpu_custom_call.1} parent=43 // pred_region
          %280 = dma.done [#allocation7], 16
        $region56: #{tpu_custom_call.1} parent=43 // pred_fallthru
          _
        // Predicated region
        $region57: #{tpu_custom_call.1} parent=43 // pred_check
          %p281 = pneg %p149
        $region58: #{tpu_custom_call.1} parent=43 // pred_check_branch
          %283 = sbr.rel (%p281) target = $region60
        $region59: #{tpu_custom_call.1} parent=43 // pred_region
          %285 = dma.done [#allocation10], 3968
        $region60: #{tpu_custom_call.1} parent=43 // pred_fallthru
          _
        %p286 = scmp.lt.s32.totalorder %s23, 1
        %s287 = scalar_select %p286, %s23, 1
        %s288 = smul.addr %s287, 31
        %s289 = smul.addr %s288, 8
        %s290 = scalar_lea.vmem %s0, %s289
        %p291 = pneg %p44
        %p292 = pneg %p41
        %p293 = pneg %p65
        %p294 = pneg %p62
        %p295 = pneg %p86
        %p296 = pneg %p83
        %p297 = pneg %p107
        %p298 = pneg %p104
        %p299 = pneg %p128
        %p300 = pneg %p125
        %p301 = pneg %p149
        %p302 = pneg %p146
        %p303 = pneg %p175
        %p304 = pneg %p172
        %s305 = sand.u32 %s162, 1
        %s306 = scalar_lea.sflag [#allocation5], %s305
        %s307 = sand.u32 %s162, 1
        %s308 = smul.addr %s307, 12
        %s309 = scalar_lea.vmem [#allocation11], %s308
        %p310 = scmp.lt.s32.totalorder %s23, 1
        %s311 = scalar_select %p310, %s23, 1
        %s312 = smul.addr %s311, 31
        %s313 = smul.addr %s312, 8
        %s314 = scalar_lea.vmem %s0, %s313
        %v315 = vld [vmem:[#allocation3] sm:$0xff]
        %v316 = vld [vmem:[#allocation3 + $0x8] sm:$0xff]
        %v317 = vld [vmem:[#allocation3 + $0x10] sm:$0xff]
        %v318 = vld [vmem:[#allocation3 + $0x18] sm:$0xff]
        %v319 = vld [vmem:[#allocation3 + $0x20] sm:$0xf]
        %v320 = vld [vmem:[#allocation6] sm:$0xff]
        %v321 = vld [vmem:[#allocation6 + $0x8] sm:$0xff]
        %v322 = vld [vmem:[#allocation6 + $0x10] sm:$0xff]
        %v323 = vld [vmem:[#allocation6 + $0x18] sm:$0xff]
        %v324 = vld [vmem:[#allocation6 + $0x20] sm:$0xff]
        %v325 = vld [vmem:[#allocation6 + $0x28] sm:$0xff]
        %v326 = vld [vmem:[#allocation6 + $0x30] sm:$0xff]
        %v327 = vld [vmem:[#allocation6 + $0x38] sm:$0xff]
        %v328 = vld [vmem:[#allocation6 + $0x40] sm:$0xff]
        %v329 = vld [vmem:[#allocation6 + $0x48] sm:$0xff]
        %v330 = vld [vmem:[#allocation6 + $0x50] sm:$0xff]
        %v331 = vld [vmem:[#allocation6 + $0x58] sm:$0xff]
        %v332 = vld [vmem:[#allocation6 + $0x60] sm:$0xff]
        %v333 = vld [vmem:[#allocation6 + $0x68] sm:$0xff]
        %v334 = vld [vmem:[#allocation6 + $0x70] sm:$0xff]
        %v335 = vld [vmem:[#allocation6 + $0x78] sm:$0xff]
        %v336 = vld [vmem:[#allocation6 + $0x80] sm:$0xff]
        %v337 = vld [vmem:[#allocation6 + $0x88] sm:$0xff]
        %v338 = vld [vmem:[#allocation6 + $0x90] sm:$0xff]
        %v339 = vld [vmem:[#allocation6 + $0x98] sm:$0xff]
        %v340 = vld [vmem:[#allocation6 + $0xa0] sm:$0xff]
        %v341 = vld [vmem:[#allocation6 + $0xa8] sm:$0xff]
        %v342 = vld [vmem:[#allocation6 + $0xb0] sm:$0xff]
        %v343 = vld [vmem:[#allocation6 + $0xb8] sm:$0xff]
        %v344 = vld [vmem:[#allocation6 + $0xc0] sm:$0xff]
        %v345 = vld [vmem:[#allocation6 + $0xc8] sm:$0xff]
        %v346 = vld [vmem:[#allocation6 + $0xd0] sm:$0xff]
        %v347 = vld [vmem:[#allocation6 + $0xd8] sm:$0xff]
        %v348 = vld [vmem:[#allocation6 + $0xe0] sm:$0xff]
        %v349 = vld [vmem:[#allocation6 + $0xe8] sm:$0xff]
        %v350 = vld [vmem:[#allocation6 + $0xf0] sm:$0xff]
        %v351 = vld [vmem:[#allocation6 + $0xf8] sm:$0xff]
        %v352 = vld [vmem:[#allocation6 + $0x100] sm:$0xff]
        %v353 = vld [vmem:[#allocation6 + $0x108] sm:$0xff]
        %v354 = vld [vmem:[#allocation6 + $0x110] sm:$0xff]
        %v355 = vld [vmem:[#allocation6 + $0x118] sm:$0xff]
        %v356 = vld [vmem:[#allocation6 + $0x120] sm:$0xff]
        %v357 = vld [vmem:[#allocation6 + $0x128] sm:$0xff]
        %v358 = vld [vmem:[#allocation6 + $0x130] sm:$0xff]
        %v359 = vld [vmem:[#allocation6 + $0x138] sm:$0xff]
        %v360 = vld [vmem:[#allocation6 + $0x140] sm:$0xff]
        %v361 = vld [vmem:[#allocation6 + $0x148] sm:$0xff]
        %v362 = vld [vmem:[#allocation6 + $0x150] sm:$0xff]
        %v363 = vld [vmem:[#allocation6 + $0x158] sm:$0xff]
        %v364 = vld [vmem:[#allocation6 + $0x160] sm:$0xff]
        %v365 = vld [vmem:[#allocation6 + $0x168] sm:$0xff]
        %v366 = vld [vmem:[#allocation6 + $0x170] sm:$0xff]
        %v367 = vld [vmem:[#allocation6 + $0x178] sm:$0xff]
        %v368 = vld [vmem:[#allocation6 + $0x180] sm:$0xff]
        %v369 = vld [vmem:[#allocation6 + $0x188] sm:$0xff]
        %v370 = vld [vmem:[#allocation6 + $0x190] sm:$0xff]
        %v371 = vld [vmem:[#allocation6 + $0x198] sm:$0xff]
        %v372 = vld [vmem:[#allocation6 + $0x1a0] sm:$0xff]
        %v373 = vld [vmem:[#allocation6 + $0x1a8] sm:$0xff]
        %v374 = vld [vmem:[#allocation6 + $0x1b0] sm:$0xff]
        %v375 = vld [vmem:[#allocation6 + $0x1b8] sm:$0xff]
        %v376 = vld [vmem:[#allocation6 + $0x1c0] sm:$0xff]
        %v377 = vld [vmem:[#allocation6 + $0x1c8] sm:$0xff]
        %v378 = vld [vmem:[#allocation6 + $0x1d0] sm:$0xff]
        %v379 = vld [vmem:[#allocation6 + $0x1d8] sm:$0xff]
        %v380 = vld [vmem:[#allocation6 + $0x1e0] sm:$0xff]
        %v381 = vld [vmem:[#allocation6 + $0x1e8] sm:$0xff]
        %v382 = vld [vmem:[#allocation6 + $0x1f0] sm:$0xff]
        %v383 = vld [vmem:[#allocation6 + $0x1f8] sm:$0xff]
        %v384 = vld [vmem:[#allocation6 + $0x200] sm:$0xff]
        %v385 = vld [vmem:[#allocation6 + $0x208] sm:$0xff]
        %v386 = vld [vmem:[#allocation6 + $0x210] sm:$0xff]
        %v387 = vld [vmem:[#allocation6 + $0x218] sm:$0xff]
        %v388 = vld [vmem:[#allocation6 + $0x220] sm:$0xff]
        %v389 = vld [vmem:[#allocation6 + $0x228] sm:$0xff]
        %v390 = vld [vmem:[#allocation6 + $0x230] sm:$0xff]
        %v391 = vld [vmem:[#allocation6 + $0x238] sm:$0xff]
        %v392 = vld [vmem:[#allocation6 + $0x240] sm:$0xff]
        %v393 = vld [vmem:[#allocation6 + $0x248] sm:$0xff]
        %v394 = vld [vmem:[#allocation6 + $0x250] sm:$0xff]
        %v395 = vld [vmem:[#allocation6 + $0x258] sm:$0xff]
        %v396 = vld [vmem:[#allocation6 + $0x260] sm:$0xff]
        %v397 = vld [vmem:[#allocation6 + $0x268] sm:$0xff]
        %v398 = vld [vmem:[#allocation6 + $0x270] sm:$0xff]
        %v399 = vld [vmem:[#allocation6 + $0x278] sm:$0xff]
        %v400 = vld [vmem:[#allocation6 + $0x280] sm:$0xff]
        %v401 = vld [vmem:[#allocation6 + $0x288] sm:$0xff]
        %v402 = vld [vmem:[#allocation6 + $0x290] sm:$0xff]
        %v403 = vld [vmem:[#allocation6 + $0x298] sm:$0xff]
        %v404 = vld [vmem:[#allocation6 + $0x2a0] sm:$0xff]
        %v405 = vld [vmem:[#allocation6 + $0x2a8] sm:$0xff]
        %v406 = vld [vmem:[#allocation6 + $0x2b0] sm:$0xff]
        %v407 = vld [vmem:[#allocation6 + $0x2b8] sm:$0xff]
        %v408 = vld [vmem:[#allocation6 + $0x2c0] sm:$0xff]
        %v409 = vld [vmem:[#allocation6 + $0x2c8] sm:$0xff]
        %v410 = vld [vmem:[#allocation6 + $0x2d0] sm:$0xff]
        %v411 = vld [vmem:[#allocation6 + $0x2d8] sm:$0xff]
        %v412 = vld [vmem:[#allocation6 + $0x2e0] sm:$0xff]
        %v413 = vld [vmem:[#allocation6 + $0x2e8] sm:$0xff]
        %v414 = vld [vmem:[#allocation6 + $0x2f0] sm:$0xff]
        %v415 = vld [vmem:[#allocation6 + $0x2f8] sm:$0xff]
        %v416 = vld [vmem:[#allocation6 + $0x300] sm:$0xff]
        %v417 = vld [vmem:[#allocation6 + $0x308] sm:$0xff]
        %v418 = vld [vmem:[#allocation6 + $0x310] sm:$0xff]
        %v419 = vld [vmem:[#allocation6 + $0x318] sm:$0xff]
        %v420 = vld [vmem:[#allocation6 + $0x320] sm:$0xff]
        %v421 = vld [vmem:[#allocation6 + $0x328] sm:$0xff]
        %v422 = vld [vmem:[#allocation6 + $0x330] sm:$0xff]
        %v423 = vld [vmem:[#allocation6 + $0x338] sm:$0xff]
        %v424 = vld [vmem:[#allocation6 + $0x340] sm:$0xff]
        %v425 = vld [vmem:[#allocation6 + $0x348] sm:$0xff]
        %v426 = vld [vmem:[#allocation6 + $0x350] sm:$0xff]
        %v427 = vld [vmem:[#allocation6 + $0x358] sm:$0xff]
        %v428 = vld [vmem:[#allocation6 + $0x360] sm:$0xff]
        %v429 = vld [vmem:[#allocation6 + $0x368] sm:$0xff]
        %v430 = vld [vmem:[#allocation6 + $0x370] sm:$0xff]
        %v431 = vld [vmem:[#allocation6 + $0x378] sm:$0xff]
        %v432 = vld [vmem:[#allocation6 + $0x380] sm:$0xff]
        %v433 = vld [vmem:[#allocation6 + $0x388] sm:$0xff]
        %v434 = vld [vmem:[#allocation6 + $0x390] sm:$0xff]
        %v435 = vld [vmem:[#allocation6 + $0x398] sm:$0xff]
        %v436 = vld [vmem:[#allocation6 + $0x3a0] sm:$0xff]
        %v437 = vld [vmem:[#allocation6 + $0x3a8] sm:$0xff]
        %v438 = vld [vmem:[#allocation6 + $0x3b0] sm:$0xff]
        %v439 = vld [vmem:[#allocation6 + $0x3b8] sm:$0xff]
        %v440 = vld [vmem:[#allocation6 + $0x3c0] sm:$0xff]
        %v441 = vld [vmem:[#allocation6 + $0x3c8] sm:$0xff]
        %v442 = vld [vmem:[#allocation6 + $0x3d0] sm:$0xff]
        %v443 = vld [vmem:[#allocation6 + $0x3d8] sm:$0xff]
        %v444 = vld [vmem:[#allocation6 + $0x3e0] sm:$0xff]
        %v445 = vld [vmem:[#allocation6 + $0x3e8] sm:$0xff]
        %v446 = vld [vmem:[#allocation6 + $0x3f0] sm:$0xff]
        %v447 = vld [vmem:[#allocation6 + $0x3f8] sm:$0xff]
        %v448 = vld [vmem:[#allocation6 + $0x400] sm:$0xff]
        %v449 = vld [vmem:[#allocation6 + $0x408] sm:$0xff]
        %v450 = vld [vmem:[#allocation6 + $0x410] sm:$0xff]
        %v451 = vld [vmem:[#allocation6 + $0x418] sm:$0xff]
        %v452 = vld [vmem:[#allocation6 + $0x420] sm:$0xff]
        %v453 = vld [vmem:[#allocation6 + $0x428] sm:$0xff]
        %v454 = vld [vmem:[#allocation6 + $0x430] sm:$0xff]
        %v455 = vld [vmem:[#allocation6 + $0x438] sm:$0xff]
        %v456 = vld [vmem:[#allocation6 + $0x440] sm:$0xff]
        %v457 = vld [vmem:[#allocation6 + $0x448] sm:$0xff]
        %v458 = vld [vmem:[#allocation6 + $0x450] sm:$0xff]
        %v459 = vld [vmem:[#allocation6 + $0x458] sm:$0xff]
        %v460 = vld [vmem:[#allocation6 + $0x460] sm:$0xff]
        %v461 = vld [vmem:[#allocation6 + $0x468] sm:$0xff]
        %v462 = vld [vmem:[#allocation6 + $0x470] sm:$0xff]
        %v463 = vld [vmem:[#allocation6 + $0x478] sm:$0xff]
        %v464 = vld [vmem:[#allocation6 + $0x480] sm:$0xff]
        %v465 = vld [vmem:[#allocation6 + $0x488] sm:$0xff]
        %v466 = vld [vmem:[#allocation6 + $0x490] sm:$0xff]
        %v467 = vld [vmem:[#allocation6 + $0x498] sm:$0xff]
        %v468 = vld [vmem:[#allocation6 + $0x4a0] sm:$0xff]
        %v469 = vld [vmem:[#allocation6 + $0x4a8] sm:$0xff]
        %v470 = vld [vmem:[#allocation6 + $0x4b0] sm:$0xff]
        %v471 = vld [vmem:[#allocation6 + $0x4b8] sm:$0xff]
        %v472 = vld [vmem:[#allocation6 + $0x4c0] sm:$0xff]
        %v473 = vld [vmem:[#allocation6 + $0x4c8] sm:$0xff]
        %v474 = vld [vmem:[#allocation6 + $0x4d0] sm:$0xff]
        %v475 = vld [vmem:[#allocation6 + $0x4d8] sm:$0xff]
        %v476 = vld [vmem:[#allocation6 + $0x4e0] sm:$0xff]
        %v477 = vld [vmem:[#allocation6 + $0x4e8] sm:$0xff]
        %v478 = vld [vmem:[#allocation6 + $0x4f0] sm:$0xff]
        %v479 = vld [vmem:[#allocation6 + $0x4f8] sm:$0xff]
        %v480 = vld [vmem:[#allocation6 + $0x500] sm:$0xff]
        %v481 = vld [vmem:[#allocation6 + $0x508] sm:$0xff]
        %v482 = vld [vmem:[#allocation6 + $0x510] sm:$0xff]
        %v483 = vld [vmem:[#allocation6 + $0x518] sm:$0xff]
        %v484 = vld [vmem:[#allocation6 + $0x520] sm:$0xff]
        %v485 = vld [vmem:[#allocation6 + $0x528] sm:$0xff]
        %v486 = vld [vmem:[#allocation6 + $0x530] sm:$0xff]
        %v487 = vld [vmem:[#allocation6 + $0x538] sm:$0xff]
        %v488 = vld [vmem:[#allocation6 + $0x540] sm:$0xff]
        %v489 = vld [vmem:[#allocation6 + $0x548] sm:$0xff]
        %v490 = vld [vmem:[#allocation6 + $0x550] sm:$0xff]
        %v491 = vld [vmem:[#allocation6 + $0x558] sm:$0xff]
        %v492 = vld [vmem:[#allocation6 + $0x560] sm:$0xff]
        %v493 = vld [vmem:[#allocation6 + $0x568] sm:$0xff]
        %v494 = vld [vmem:[#allocation6 + $0x570] sm:$0xff]
        %v495 = vld [vmem:[#allocation6 + $0x578] sm:$0xff]
        %v496 = vld [vmem:[#allocation6 + $0x580] sm:$0xff]
        %v497 = vld [vmem:[#allocation6 + $0x588] sm:$0xff]
        %v498 = vld [vmem:[#allocation6 + $0x590] sm:$0xff]
        %v499 = vld [vmem:[#allocation6 + $0x598] sm:$0xff]
        %v500 = vld [vmem:[#allocation6 + $0x5a0] sm:$0xff]
        %v501 = vld [vmem:[#allocation6 + $0x5a8] sm:$0xff]
        %v502 = vld [vmem:[#allocation6 + $0x5b0] sm:$0xff]
        %v503 = vld [vmem:[#allocation6 + $0x5b8] sm:$0xff]
        %v504 = vld [vmem:[#allocation6 + $0x5c0] sm:$0xff]
        %v505 = vld [vmem:[#allocation6 + $0x5c8] sm:$0xff]
        %v506 = vld [vmem:[#allocation6 + $0x5d0] sm:$0xff]
        %v507 = vld [vmem:[#allocation6 + $0x5d8] sm:$0xff]
        %v508 = vld [vmem:[#allocation6 + $0x5e0] sm:$0xff]
        %v509 = vld [vmem:[#allocation6 + $0x5e8] sm:$0xff]
        %v510 = vld [vmem:[#allocation6 + $0x5f0] sm:$0xff]
        %v511 = vld [vmem:[#allocation6 + $0x5f8] sm:$0xff]
        %v512 = vld [vmem:[#allocation6 + $0x600] sm:$0xff]
        %v513 = vld [vmem:[#allocation6 + $0x608] sm:$0xff]
        %v514 = vld [vmem:[#allocation6 + $0x610] sm:$0xff]
        %v515 = vld [vmem:[#allocation6 + $0x618] sm:$0xff]
        %v516 = vld [vmem:[#allocation6 + $0x620] sm:$0xff]
        %v517 = vld [vmem:[#allocation6 + $0x628] sm:$0xff]
        %v518 = vld [vmem:[#allocation6 + $0x630] sm:$0xff]
        %v519 = vld [vmem:[#allocation6 + $0x638] sm:$0xff]
        %v520 = vld [vmem:[#allocation6 + $0x640] sm:$0xff]
        %v521 = vld [vmem:[#allocation6 + $0x648] sm:$0xff]
        %v522 = vld [vmem:[#allocation6 + $0x650] sm:$0xff]
        %v523 = vld [vmem:[#allocation6 + $0x658] sm:$0xff]
        %v524 = vld [vmem:[#allocation6 + $0x660] sm:$0xff]
        %v525 = vld [vmem:[#allocation6 + $0x668] sm:$0xff]
        %v526 = vld [vmem:[#allocation6 + $0x670] sm:$0xff]
        %v527 = vld [vmem:[#allocation6 + $0x678] sm:$0xff]
        %v528 = vld [vmem:[#allocation6 + $0x680] sm:$0xff]
        %v529 = vld [vmem:[#allocation6 + $0x688] sm:$0xff]
        %v530 = vld [vmem:[#allocation6 + $0x690] sm:$0xff]
        %v531 = vld [vmem:[#allocation6 + $0x698] sm:$0xff]
        %v532 = vld [vmem:[#allocation6 + $0x6a0] sm:$0xff]
        %v533 = vld [vmem:[#allocation6 + $0x6a8] sm:$0xff]
        %v534 = vld [vmem:[#allocation6 + $0x6b0] sm:$0xff]
        %v535 = vld [vmem:[#allocation6 + $0x6b8] sm:$0xff]
        %v536 = vld [vmem:[#allocation6 + $0x6c0] sm:$0xff]
        %v537 = vld [vmem:[#allocation6 + $0x6c8] sm:$0xff]
        %v538 = vld [vmem:[#allocation6 + $0x6d0] sm:$0xff]
        %v539 = vld [vmem:[#allocation6 + $0x6d8] sm:$0xff]
        %v540 = vld [vmem:[#allocation6 + $0x6e0] sm:$0xff]
        %v541 = vld [vmem:[#allocation6 + $0x6e8] sm:$0xff]
        %v542 = vld [vmem:[#allocation6 + $0x6f0] sm:$0xff]
        %v543 = vld [vmem:[#allocation6 + $0x6f8] sm:$0xff]
        %v544 = vld [vmem:[#allocation6 + $0x700] sm:$0xff]
        %v545 = vld [vmem:[#allocation6 + $0x708] sm:$0xff]
        %v546 = vld [vmem:[#allocation6 + $0x710] sm:$0xff]
        %v547 = vld [vmem:[#allocation6 + $0x718] sm:$0xff]
        %v548 = vld [vmem:[#allocation6 + $0x720] sm:$0xff]
        %v549 = vld [vmem:[#allocation6 + $0x728] sm:$0xff]
        %v550 = vld [vmem:[#allocation6 + $0x730] sm:$0xff]
        %v551 = vld [vmem:[#allocation6 + $0x738] sm:$0xff]
        %v552 = vld [vmem:[#allocation6 + $0x740] sm:$0xff]
        %v553 = vld [vmem:[#allocation6 + $0x748] sm:$0xff]
        %v554 = vld [vmem:[#allocation6 + $0x750] sm:$0xff]
        %v555 = vld [vmem:[#allocation6 + $0x758] sm:$0xff]
        %v556 = vld [vmem:[#allocation6 + $0x760] sm:$0xff]
        %v557 = vld [vmem:[#allocation6 + $0x768] sm:$0xff]
        %v558 = vld [vmem:[#allocation6 + $0x770] sm:$0xff]
        %v559 = vld [vmem:[#allocation6 + $0x778] sm:$0xff]
        %v560 = vld [vmem:[#allocation6 + $0x780] sm:$0xff]
        %v561 = vld [vmem:[#allocation6 + $0x788] sm:$0xff]
        %v562 = vld [vmem:[#allocation6 + $0x790] sm:$0xff]
        %v563 = vld [vmem:[#allocation6 + $0x798] sm:$0xff]
        %v564 = vld [vmem:[#allocation6 + $0x7a0] sm:$0xff]
        %v565 = vld [vmem:[#allocation6 + $0x7a8] sm:$0xff]
        %v566 = vld [vmem:[#allocation6 + $0x7b0] sm:$0xff]
        %v567 = vld [vmem:[#allocation6 + $0x7b8] sm:$0xff]
        %v568 = vld [vmem:[#allocation6 + $0x7c0] sm:$0xff]
        %v569 = vld [vmem:[#allocation6 + $0x7c8] sm:$0xff]
        %v570 = vld [vmem:[#allocation6 + $0x7d0] sm:$0xff]
        %v571 = vld [vmem:[#allocation6 + $0x7d8] sm:$0xff]
        %v572 = vld [vmem:[#allocation6 + $0x7e0] sm:$0xff]
        %v573 = vld [vmem:[#allocation6 + $0x7e8] sm:$0xff]
        %v574 = vld [vmem:[#allocation6 + $0x7f0] sm:$0xff]
        %v575 = vld [vmem:[#allocation6 + $0x7f8] sm:$0xff]
        %v576 = vld [vmem:[#allocation6 + $0x800] sm:$0xff]
        %v577 = vld [vmem:[#allocation6 + $0x808] sm:$0xff]
        %v578 = vld [vmem:[#allocation6 + $0x810] sm:$0xff]
        %v579 = vld [vmem:[#allocation6 + $0x818] sm:$0xff]
        %v580 = vld [vmem:[#allocation6 + $0x820] sm:$0xff]
        %v581 = vld [vmem:[#allocation6 + $0x828] sm:$0xff]
        %v582 = vld [vmem:[#allocation6 + $0x830] sm:$0xff]
        %v583 = vld [vmem:[#allocation6 + $0x838] sm:$0xff]
        %v584 = vld [vmem:[#allocation6 + $0x840] sm:$0xff]
        %v585 = vld [vmem:[#allocation6 + $0x848] sm:$0xff]
        %v586 = vld [vmem:[#allocation6 + $0x850] sm:$0xff]
        %v587 = vld [vmem:[#allocation6 + $0x858] sm:$0xff]
        %v588 = vld [vmem:[#allocation6 + $0x860] sm:$0xff]
        %v589 = vld [vmem:[#allocation6 + $0x868] sm:$0xff]
        %v590 = vld [vmem:[#allocation6 + $0x870] sm:$0xff]
        %v591 = vld [vmem:[#allocation6 + $0x878] sm:$0xff]
        %v592 = vld [vmem:[#allocation6 + $0x880] sm:$0xff]
        %v593 = vld [vmem:[#allocation6 + $0x888] sm:$0xff]
        %v594 = vld [vmem:[#allocation6 + $0x890] sm:$0xff]
        %v595 = vld [vmem:[#allocation6 + $0x898] sm:$0xff]
        %v596 = vld [vmem:[#allocation6 + $0x8a0] sm:$0xff]
        %v597 = vld [vmem:[#allocation6 + $0x8a8] sm:$0xff]
        %v598 = vld [vmem:[#allocation6 + $0x8b0] sm:$0xff]
        %v599 = vld [vmem:[#allocation6 + $0x8b8] sm:$0xff]
        %v600 = vld [vmem:[#allocation6 + $0x8c0] sm:$0xff]
        %v601 = vld [vmem:[#allocation6 + $0x8c8] sm:$0xff]
        %v602 = vld [vmem:[#allocation6 + $0x8d0] sm:$0xff]
        %v603 = vld [vmem:[#allocation6 + $0x8d8] sm:$0xff]
        %v604 = vld [vmem:[#allocation6 + $0x8e0] sm:$0xff]
        %v605 = vld [vmem:[#allocation6 + $0x8e8] sm:$0xff]
        %v606 = vld [vmem:[#allocation6 + $0x8f0] sm:$0xff]
        %v607 = vld [vmem:[#allocation6 + $0x8f8] sm:$0xff]
        %v608 = vld [vmem:[#allocation6 + $0x900] sm:$0xff]
        %v609 = vld [vmem:[#allocation6 + $0x908] sm:$0xff]
        %v610 = vld [vmem:[#allocation6 + $0x910] sm:$0xff]
        %v611 = vld [vmem:[#allocation6 + $0x918] sm:$0xff]
        %v612 = vld [vmem:[#allocation6 + $0x920] sm:$0xff]
        %v613 = vld [vmem:[#allocation6 + $0x928] sm:$0xff]
        %v614 = vld [vmem:[#allocation6 + $0x930] sm:$0xff]
        %v615 = vld [vmem:[#allocation6 + $0x938] sm:$0xff]
        %v616 = vld [vmem:[#allocation6 + $0x940] sm:$0xff]
        %v617 = vld [vmem:[#allocation6 + $0x948] sm:$0xff]
        %v618 = vld [vmem:[#allocation6 + $0x950] sm:$0xff]
        %v619 = vld [vmem:[#allocation6 + $0x958] sm:$0xff]
        %v620 = vld [vmem:[#allocation6 + $0x960] sm:$0xff]
        %v621 = vld [vmem:[#allocation6 + $0x968] sm:$0xff]
        %v622 = vld [vmem:[#allocation6 + $0x970] sm:$0xff]
        %v623 = vld [vmem:[#allocation6 + $0x978] sm:$0xff]
        %v624 = vld [vmem:[#allocation6 + $0x980] sm:$0xff]
        %v625 = vld [vmem:[#allocation6 + $0x988] sm:$0xff]
        %v626 = vld [vmem:[#allocation6 + $0x990] sm:$0xff]
        %v627 = vld [vmem:[#allocation6 + $0x998] sm:$0xff]
        %v628 = vld [vmem:[#allocation6 + $0x9a0] sm:$0xff]
        %v629 = vld [vmem:[#allocation6 + $0x9a8] sm:$0xff]
        %v630 = vld [vmem:[#allocation6 + $0x9b0] sm:$0xff]
        %v631 = vld [vmem:[#allocation6 + $0x9b8] sm:$0xff]
        %v632 = vld [vmem:[#allocation6 + $0x9c0] sm:$0xff]
        %v633 = vld [vmem:[#allocation6 + $0x9c8] sm:$0xff]
        %v634 = vld [vmem:[#allocation6 + $0x9d0] sm:$0xff]
        %v635 = vld [vmem:[#allocation6 + $0x9d8] sm:$0xff]
        %v636 = vld [vmem:[#allocation6 + $0x9e0] sm:$0xff]
        %v637 = vld [vmem:[#allocation6 + $0x9e8] sm:$0xff]
        %v638 = vld [vmem:[#allocation6 + $0x9f0] sm:$0xff]
        %v639 = vld [vmem:[#allocation6 + $0x9f8] sm:$0xff]
        %v640 = vld [vmem:[#allocation6 + $0xa00] sm:$0xff]
        %v641 = vld [vmem:[#allocation6 + $0xa08] sm:$0xff]
        %v642 = vld [vmem:[#allocation6 + $0xa10] sm:$0xff]
        %v643 = vld [vmem:[#allocation6 + $0xa18] sm:$0xff]
        %v644 = vld [vmem:[#allocation6 + $0xa20] sm:$0xff]
        %v645 = vld [vmem:[#allocation6 + $0xa28] sm:$0xff]
        %v646 = vld [vmem:[#allocation6 + $0xa30] sm:$0xff]
        %v647 = vld [vmem:[#allocation6 + $0xa38] sm:$0xff]
        %v648 = vld [vmem:[#allocation6 + $0xa40] sm:$0xff]
        %v649 = vld [vmem:[#allocation6 + $0xa48] sm:$0xff]
        %v650 = vld [vmem:[#allocation6 + $0xa50] sm:$0xff]
        %v651 = vld [vmem:[#allocation6 + $0xa58] sm:$0xff]
        %v652 = vld [vmem:[#allocation6 + $0xa60] sm:$0xff]
        %v653 = vld [vmem:[#allocation6 + $0xa68] sm:$0xff]
        %v654 = vld [vmem:[#allocation6 + $0xa70] sm:$0xff]
        %v655 = vld [vmem:[#allocation6 + $0xa78] sm:$0xff]
        %v656 = vld [vmem:[#allocation6 + $0xa80] sm:$0xff]
        %v657 = vld [vmem:[#allocation6 + $0xa88] sm:$0xff]
        %v658 = vld [vmem:[#allocation6 + $0xa90] sm:$0xff]
        %v659 = vld [vmem:[#allocation6 + $0xa98] sm:$0xff]
        %v660 = vld [vmem:[#allocation6 + $0xaa0] sm:$0xff]
        %v661 = vld [vmem:[#allocation6 + $0xaa8] sm:$0xff]
        %v662 = vld [vmem:[#allocation6 + $0xab0] sm:$0xff]
        %v663 = vld [vmem:[#allocation6 + $0xab8] sm:$0xff]
        %v664 = vld [vmem:[#allocation6 + $0xac0] sm:$0xff]
        %v665 = vld [vmem:[#allocation6 + $0xac8] sm:$0xff]
        %v666 = vld [vmem:[#allocation6 + $0xad0] sm:$0xff]
        %v667 = vld [vmem:[#allocation6 + $0xad8] sm:$0xff]
        %v668 = vld [vmem:[#allocation6 + $0xae0] sm:$0xff]
        %v669 = vld [vmem:[#allocation6 + $0xae8] sm:$0xff]
        %v670 = vld [vmem:[#allocation6 + $0xaf0] sm:$0xff]
        %v671 = vld [vmem:[#allocation6 + $0xaf8] sm:$0xff]
        %v672 = vld [vmem:[#allocation6 + $0xb00] sm:$0xff]
        %v673 = vld [vmem:[#allocation6 + $0xb08] sm:$0xff]
        %v674 = vld [vmem:[#allocation6 + $0xb10] sm:$0xff]
        %v675 = vld [vmem:[#allocation6 + $0xb18] sm:$0xff]
        %v676 = vld [vmem:[#allocation6 + $0xb20] sm:$0xff]
        %v677 = vld [vmem:[#allocation6 + $0xb28] sm:$0xff]
        %v678 = vld [vmem:[#allocation6 + $0xb30] sm:$0xff]
        %v679 = vld [vmem:[#allocation6 + $0xb38] sm:$0xff]
        %v680 = vld [vmem:[#allocation6 + $0xb40] sm:$0xff]
        %v681 = vld [vmem:[#allocation6 + $0xb48] sm:$0xff]
        %v682 = vld [vmem:[#allocation6 + $0xb50] sm:$0xff]
        %v683 = vld [vmem:[#allocation6 + $0xb58] sm:$0xff]
        %v684 = vld [vmem:[#allocation6 + $0xb60] sm:$0xff]
        %v685 = vld [vmem:[#allocation6 + $0xb68] sm:$0xff]
        %v686 = vld [vmem:[#allocation6 + $0xb70] sm:$0xff]
        %v687 = vld [vmem:[#allocation6 + $0xb78] sm:$0xff]
        %v688 = vld [vmem:[#allocation6 + $0xb80] sm:$0xff]
        %v689 = vld [vmem:[#allocation6 + $0xb88] sm:$0xff]
        %v690 = vld [vmem:[#allocation6 + $0xb90] sm:$0xff]
        %v691 = vld [vmem:[#allocation6 + $0xb98] sm:$0xff]
        %v692 = vld [vmem:[#allocation6 + $0xba0] sm:$0xff]
        %v693 = vld [vmem:[#allocation6 + $0xba8] sm:$0xff]
        %v694 = vld [vmem:[#allocation6 + $0xbb0] sm:$0xff]
        %v695 = vld [vmem:[#allocation6 + $0xbb8] sm:$0xff]
        %v696 = vld [vmem:[#allocation6 + $0xbc0] sm:$0xff]
        %v697 = vld [vmem:[#allocation6 + $0xbc8] sm:$0xff]
        %v698 = vld [vmem:[#allocation6 + $0xbd0] sm:$0xff]
        %v699 = vld [vmem:[#allocation6 + $0xbd8] sm:$0xff]
        %v700 = vld [vmem:[#allocation6 + $0xbe0] sm:$0xff]
        %v701 = vld [vmem:[#allocation6 + $0xbe8] sm:$0xff]
        %v702 = vld [vmem:[#allocation6 + $0xbf0] sm:$0xff]
        %v703 = vld [vmem:[#allocation6 + $0xbf8] sm:$0xff]
        %v704 = vld [vmem:[#allocation6 + $0xc00] sm:$0xff]
        %v705 = vld [vmem:[#allocation6 + $0xc08] sm:$0xff]
        %v706 = vld [vmem:[#allocation6 + $0xc10] sm:$0xff]
        %v707 = vld [vmem:[#allocation6 + $0xc18] sm:$0xff]
        %v708 = vld [vmem:[#allocation6 + $0xc20] sm:$0xff]
        %v709 = vld [vmem:[#allocation6 + $0xc28] sm:$0xff]
        %v710 = vld [vmem:[#allocation6 + $0xc30] sm:$0xff]
        %v711 = vld [vmem:[#allocation6 + $0xc38] sm:$0xff]
        %v712 = vld [vmem:[#allocation6 + $0xc40] sm:$0xff]
        %v713 = vld [vmem:[#allocation6 + $0xc48] sm:$0xff]
        %v714 = vld [vmem:[#allocation6 + $0xc50] sm:$0xff]
        %v715 = vld [vmem:[#allocation6 + $0xc58] sm:$0xff]
        %v716 = vld [vmem:[#allocation6 + $0xc60] sm:$0xff]
        %v717 = vld [vmem:[#allocation6 + $0xc68] sm:$0xff]
        %v718 = vld [vmem:[#allocation6 + $0xc70] sm:$0xff]
        %v719 = vld [vmem:[#allocation6 + $0xc78] sm:$0xff]
        %v720 = vld [vmem:[%s3] sm:$0xff]
        %v721 = vld [vmem:[%s3 + $0x8] sm:$0xff]
        %v722 = vld [vmem:[%s3 + $0x10] sm:$0xff]
        %v723 = vld [vmem:[%s3 + $0x18] sm:$0xff]
        %v724 = vld [vmem:[%s3 + $0x20] sm:$0xff]
        %v725 = vld [vmem:[%s3 + $0x28] sm:$0xff]
        %v726 = vld [vmem:[%s3 + $0x30] sm:$0xff]
        %v727 = vld [vmem:[%s3 + $0x38] sm:$0xff]
        %v728 = vld [vmem:[%s3 + $0x40] sm:$0xff]
        %v729 = vld [vmem:[%s3 + $0x48] sm:$0xff]
        %v730 = vld [vmem:[%s3 + $0x50] sm:$0xff]
        %v731 = vld [vmem:[%s3 + $0x58] sm:$0xff]
        %v732 = vld [vmem:[%s3 + $0x60] sm:$0xff]
        %v733 = vld [vmem:[%s3 + $0x68] sm:$0xff]
        %v734 = vld [vmem:[%s3 + $0x70] sm:$0xff]
        %v735 = vld [vmem:[%s3 + $0x78] sm:$0xff]
        %v736 = vld [vmem:[%s3 + $0x80] sm:$0xff]
        %v737 = vld [vmem:[%s3 + $0x88] sm:$0xff]
        %v738 = vld [vmem:[%s3 + $0x90] sm:$0xff]
        %v739 = vld [vmem:[%s3 + $0x98] sm:$0xff]
        %v740 = vld [vmem:[%s3 + $0xa0] sm:$0xff]
        %v741 = vld [vmem:[%s3 + $0xa8] sm:$0xff]
        %v742 = vld [vmem:[%s3 + $0xb0] sm:$0xff]
        %v743 = vld [vmem:[%s3 + $0xb8] sm:$0xff]
        %v744 = vld [vmem:[%s3 + $0xc0] sm:$0xff]
        %v745 = vld [vmem:[%s3 + $0xc8] sm:$0xff]
        %v746 = vld [vmem:[%s3 + $0xd0] sm:$0xff]
        %v747 = vld [vmem:[%s3 + $0xd8] sm:$0xff]
        %v748 = vld [vmem:[%s3 + $0xe0] sm:$0xff]
        %v749 = vld [vmem:[%s3 + $0xe8] sm:$0xff]
        %v750 = vld [vmem:[%s3 + $0xf0] sm:$0xff]
        %v751 = vld [vmem:[%s3 + $0xf8] sm:$0xff]
        %v752 = vld [vmem:[%s3 + $0x100] sm:$0xff]
        %v753 = vld [vmem:[%s3 + $0x108] sm:$0xff]
        %v754 = vld [vmem:[%s3 + $0x110] sm:$0xff]
        %v755 = vld [vmem:[%s3 + $0x118] sm:$0xff]
        %v756 = vld [vmem:[%s3 + $0x120] sm:$0xff]
        %v757 = vld [vmem:[%s3 + $0x128] sm:$0xff]
        %v758 = vld [vmem:[%s3 + $0x130] sm:$0xff]
        %v759 = vld [vmem:[%s3 + $0x138] sm:$0xff]
        %v760 = vld [vmem:[%s3 + $0x140] sm:$0xff]
        %v761 = vld [vmem:[%s3 + $0x148] sm:$0xff]
        %v762 = vld [vmem:[%s3 + $0x150] sm:$0xff]
        %v763 = vld [vmem:[%s3 + $0x158] sm:$0xff]
        %v764 = vld [vmem:[%s3 + $0x160] sm:$0xff]
        %v765 = vld [vmem:[%s3 + $0x168] sm:$0xff]
        %v766 = vld [vmem:[%s3 + $0x170] sm:$0xff]
        %v767 = vld [vmem:[%s3 + $0x178] sm:$0xff]
        %v768 = vld [vmem:[%s3 + $0x180] sm:$0xff]
        %v769 = vld [vmem:[%s3 + $0x188] sm:$0xff]
        %v770 = vld [vmem:[%s3 + $0x190] sm:$0xff]
        %v771 = vld [vmem:[%s3 + $0x198] sm:$0xff]
        %v772 = vld [vmem:[%s3 + $0x1a0] sm:$0xff]
        %v773 = vld [vmem:[%s3 + $0x1a8] sm:$0xff]
        %v774 = vld [vmem:[%s3 + $0x1b0] sm:$0xff]
        %v775 = vld [vmem:[%s3 + $0x1b8] sm:$0xff]
        %v776 = vld [vmem:[%s3 + $0x1c0] sm:$0xff]
        %v777 = vld [vmem:[%s3 + $0x1c8] sm:$0xff]
        %v778 = vld [vmem:[%s3 + $0x1d0] sm:$0xff]
        %v779 = vld [vmem:[%s3 + $0x1d8] sm:$0xff]
        %v780 = vld [vmem:[%s3 + $0x1e0] sm:$0xff]
        %v781 = vld [vmem:[%s3 + $0x1e8] sm:$0xff]
        %v782 = vld [vmem:[%s3 + $0x1f0] sm:$0xff]
        %v783 = vld [vmem:[%s3 + $0x1f8] sm:$0xff]
        %v784 = vld [vmem:[%s3 + $0x200] sm:$0xff]
        %v785 = vld [vmem:[%s3 + $0x208] sm:$0xff]
        %v786 = vld [vmem:[%s3 + $0x210] sm:$0xff]
        %v787 = vld [vmem:[%s3 + $0x218] sm:$0xff]
        %v788 = vld [vmem:[%s3 + $0x220] sm:$0xff]
        %v789 = vld [vmem:[%s3 + $0x228] sm:$0xff]
        %v790 = vld [vmem:[%s3 + $0x230] sm:$0xff]
        %v791 = vld [vmem:[%s3 + $0x238] sm:$0xff]
        %v792 = vld [vmem:[%s3 + $0x240] sm:$0xff]
        %v793 = vld [vmem:[%s3 + $0x248] sm:$0xff]
        %v794 = vld [vmem:[%s3 + $0x250] sm:$0xff]
        %v795 = vld [vmem:[%s3 + $0x258] sm:$0xff]
        %v796 = vld [vmem:[%s3 + $0x260] sm:$0xff]
        %v797 = vld [vmem:[%s3 + $0x268] sm:$0xff]
        %v798 = vld [vmem:[%s3 + $0x270] sm:$0xff]
        %v799 = vld [vmem:[%s3 + $0x278] sm:$0xff]
        %v800 = vld [vmem:[%s3 + $0x280] sm:$0xff]
        %v801 = vld [vmem:[%s3 + $0x288] sm:$0xff]
        %v802 = vld [vmem:[%s3 + $0x290] sm:$0xff]
        %v803 = vld [vmem:[%s3 + $0x298] sm:$0xff]
        %v804 = vld [vmem:[%s3 + $0x2a0] sm:$0xff]
        %v805 = vld [vmem:[%s3 + $0x2a8] sm:$0xff]
        %v806 = vld [vmem:[%s3 + $0x2b0] sm:$0xff]
        %v807 = vld [vmem:[%s3 + $0x2b8] sm:$0xff]
        %v808 = vld [vmem:[%s3 + $0x2c0] sm:$0xff]
        %v809 = vld [vmem:[%s3 + $0x2c8] sm:$0xff]
        %v810 = vld [vmem:[%s3 + $0x2d0] sm:$0xff]
        %v811 = vld [vmem:[%s3 + $0x2d8] sm:$0xff]
        %v812 = vld [vmem:[%s3 + $0x2e0] sm:$0xff]
        %v813 = vld [vmem:[%s3 + $0x2e8] sm:$0xff]
        %v814 = vld [vmem:[%s3 + $0x2f0] sm:$0xff]
        %v815 = vld [vmem:[%s3 + $0x2f8] sm:$0xff]
        %v816 = vld [vmem:[%s3 + $0x300] sm:$0xff]
        %v817 = vld [vmem:[%s3 + $0x308] sm:$0xff]
        %v818 = vld [vmem:[%s3 + $0x310] sm:$0xff]
        %v819 = vld [vmem:[%s3 + $0x318] sm:$0xff]
        %v820 = vld [vmem:[%s3 + $0x320] sm:$0xff]
        %v821 = vld [vmem:[%s3 + $0x328] sm:$0xff]
        %v822 = vld [vmem:[%s3 + $0x330] sm:$0xff]
        %v823 = vld [vmem:[%s3 + $0x338] sm:$0xff]
        %v824 = vld [vmem:[%s3 + $0x340] sm:$0xff]
        %v825 = vld [vmem:[%s3 + $0x348] sm:$0xff]
        %v826 = vld [vmem:[%s3 + $0x350] sm:$0xff]
        %v827 = vld [vmem:[%s3 + $0x358] sm:$0xff]
        %v828 = vld [vmem:[%s3 + $0x360] sm:$0xff]
        %v829 = vld [vmem:[%s3 + $0x368] sm:$0xff]
        %v830 = vld [vmem:[%s3 + $0x370] sm:$0xff]
        %v831 = vld [vmem:[%s3 + $0x378] sm:$0xff]
        %v832 = vld [vmem:[%s3 + $0x380] sm:$0xff]
        %v833 = vld [vmem:[%s3 + $0x388] sm:$0xff]
        %v834 = vld [vmem:[%s3 + $0x390] sm:$0xff]
        %v835 = vld [vmem:[%s3 + $0x398] sm:$0xff]
        %v836 = vld [vmem:[%s3 + $0x3a0] sm:$0xff]
        %v837 = vld [vmem:[%s3 + $0x3a8] sm:$0xff]
        %v838 = vld [vmem:[%s3 + $0x3b0] sm:$0xff]
        %v839 = vld [vmem:[%s3 + $0x3b8] sm:$0xff]
        %v840 = vld [vmem:[%s3 + $0x3c0] sm:$0xff]
        %v841 = vld [vmem:[%s3 + $0x3c8] sm:$0xff]
        %v842 = vld [vmem:[%s3 + $0x3d0] sm:$0xff]
        %v843 = vld [vmem:[%s3 + $0x3d8] sm:$0xff]
        %v844 = vld [vmem:[%s3 + $0x3e0] sm:$0xff]
        %v845 = vld [vmem:[%s3 + $0x3e8] sm:$0xff]
        %v846 = vld [vmem:[%s3 + $0x3f0] sm:$0xff]
        %v847 = vld [vmem:[%s3 + $0x3f8] sm:$0xff]
        %v848 = vld [vmem:[%s3 + $0x400] sm:$0xff]
        %v849 = vld [vmem:[%s3 + $0x408] sm:$0xff]
        %v850 = vld [vmem:[%s3 + $0x410] sm:$0xff]
        %v851 = vld [vmem:[%s3 + $0x418] sm:$0xff]
        %v852 = vld [vmem:[%s3 + $0x420] sm:$0xff]
        %v853 = vld [vmem:[%s3 + $0x428] sm:$0xff]
        %v854 = vld [vmem:[%s3 + $0x430] sm:$0xff]
        %v855 = vld [vmem:[%s3 + $0x438] sm:$0xff]
        %v856 = vld [vmem:[%s3 + $0x440] sm:$0xff]
        %v857 = vld [vmem:[%s3 + $0x448] sm:$0xff]
        %v858 = vld [vmem:[%s3 + $0x450] sm:$0xff]
        %v859 = vld [vmem:[%s3 + $0x458] sm:$0xff]
        %v860 = vld [vmem:[%s3 + $0x460] sm:$0xff]
        %v861 = vld [vmem:[%s3 + $0x468] sm:$0xff]
        %v862 = vld [vmem:[%s3 + $0x470] sm:$0xff]
        %v863 = vld [vmem:[%s3 + $0x478] sm:$0xff]
        %v864 = vld [vmem:[#allocation9] sm:$0xff]
        %v865 = vld [vmem:[#allocation9 + $0x8] sm:$0xff]
        %v866 = vld [vmem:[#allocation9 + $0x10] sm:$0xff]
        %v867 = vld [vmem:[#allocation9 + $0x18] sm:$0xff]
        %v868 = vld [vmem:[#allocation9 + $0x20] sm:$0xff]
        %v869 = vld [vmem:[#allocation9 + $0x28] sm:$0xff]
        %v870 = vld [vmem:[#allocation9 + $0x30] sm:$0xff]
        %v871 = vld [vmem:[#allocation9 + $0x38] sm:$0xff]
        %v872 = vld [vmem:[#allocation9 + $0x40] sm:$0xff]
        %v873 = vld [vmem:[#allocation9 + $0x48] sm:$0xff]
        %v874 = vld [vmem:[#allocation9 + $0x50] sm:$0xff]
        %v875 = vld [vmem:[#allocation9 + $0x58] sm:$0xff]
        %v876 = vld [vmem:[#allocation9 + $0x60] sm:$0xff]
        %v877 = vld [vmem:[#allocation9 + $0x68] sm:$0xff]
        %v878 = vld [vmem:[#allocation9 + $0x70] sm:$0xff]
        %v879 = vld [vmem:[#allocation9 + $0x78] sm:$0xff]
        %v880 = vld [vmem:[#allocation9 + $0x80] sm:$0xff]
        %v881 = vld [vmem:[#allocation9 + $0x88] sm:$0xff]
        %v882 = vld [vmem:[#allocation9 + $0x90] sm:$0xff]
        %v883 = vld [vmem:[#allocation9 + $0x98] sm:$0xff]
        %v884 = vld [vmem:[#allocation9 + $0xa0] sm:$0xff]
        %v885 = vld [vmem:[#allocation9 + $0xa8] sm:$0xff]
        %v886 = vld [vmem:[#allocation9 + $0xb0] sm:$0xff]
        %v887 = vld [vmem:[#allocation9 + $0xb8] sm:$0xff]
        %v888 = vld [vmem:[#allocation9 + $0xc0] sm:$0xff]
        %v889 = vld [vmem:[#allocation9 + $0xc8] sm:$0xff]
        %v890 = vld [vmem:[#allocation9 + $0xd0] sm:$0xff]
        %v891 = vld [vmem:[#allocation9 + $0xd8] sm:$0xff]
        %v892 = vld [vmem:[#allocation9 + $0xe0] sm:$0xff]
        %v893 = vld [vmem:[#allocation9 + $0xe8] sm:$0xff]
        %v894 = vld [vmem:[#allocation9 + $0xf0] sm:$0xff]
        %v895 = vld [vmem:[#allocation8] sm:$0x1]
        %v897 = vperm.slane %v895, 0
        %v899 = vld [vmem:[%s314] sm:$0xff]
        %v900 = vld [vmem:[%s314 + $0x8] sm:$0xff]
        %v901 = vld [vmem:[%s314 + $0x10] sm:$0xff]
        %v902 = vld [vmem:[%s314 + $0x18] sm:$0xff]
        %v903 = vld [vmem:[%s314 + $0x20] sm:$0xff]
        %v904 = vld [vmem:[%s314 + $0x28] sm:$0xff]
        %v905 = vld [vmem:[%s314 + $0x30] sm:$0xff]
        %v906 = vld [vmem:[%s314 + $0x38] sm:$0xff]
        %v907 = vld [vmem:[%s314 + $0x40] sm:$0xff]
        %v908 = vld [vmem:[%s314 + $0x48] sm:$0xff]
        %v909 = vld [vmem:[%s314 + $0x50] sm:$0xff]
        %v910 = vld [vmem:[%s314 + $0x58] sm:$0xff]
        %v911 = vld [vmem:[%s314 + $0x60] sm:$0xff]
        %v912 = vld [vmem:[%s314 + $0x68] sm:$0xff]
        %v913 = vld [vmem:[%s314 + $0x70] sm:$0xff]
        %v914 = vld [vmem:[%s314 + $0x78] sm:$0xff]
        %v915 = vld [vmem:[%s314 + $0x80] sm:$0xff]
        %v916 = vld [vmem:[%s314 + $0x88] sm:$0xff]
        %v917 = vld [vmem:[%s314 + $0x90] sm:$0xff]
        %v918 = vld [vmem:[%s314 + $0x98] sm:$0xff]
        %v919 = vld [vmem:[%s314 + $0xa0] sm:$0xff]
        %v920 = vld [vmem:[%s314 + $0xa8] sm:$0xff]
        %v921 = vld [vmem:[%s314 + $0xb0] sm:$0xff]
        %v922 = vld [vmem:[%s314 + $0xb8] sm:$0xff]
        %v923 = vld [vmem:[%s314 + $0xc0] sm:$0xff]
        %v924 = vld [vmem:[%s314 + $0xc8] sm:$0xff]
        %v925 = vld [vmem:[%s314 + $0xd0] sm:$0xff]
        %v926 = vld [vmem:[%s314 + $0xd8] sm:$0xff]
        %v927 = vld [vmem:[%s314 + $0xe0] sm:$0xff]
        %v928 = vld [vmem:[%s314 + $0xe8] sm:$0xff]
        %v929 = vld [vmem:[%s314 + $0xf0] sm:$0xff]
        %vm930 = vcmask 293888
        %v932 = vsel %vm930, %v899, 0
        %v935 = vsel %vm930, %v900, 0
        %v938 = vsel %vm930, %v901, 0
        %v941 = vsel %vm930, %v902, 0
        %v944 = vsel %vm930, %v903, 0
        %v947 = vsel %vm930, %v904, 0
        %v950 = vsel %vm930, %v905, 0
        %v953 = vsel %vm930, %v906, 0
        %v956 = vsel %vm930, %v907, 0
        %v959 = vsel %vm930, %v908, 0
        %v962 = vsel %vm930, %v909, 0
        %v965 = vsel %vm930, %v910, 0
        %v968 = vsel %vm930, %v911, 0
        %v971 = vsel %vm930, %v912, 0
        %v974 = vsel %vm930, %v913, 0
        %v977 = vsel %vm930, %v914, 0
        %v980 = vsel %vm930, %v915, 0
        %v983 = vsel %vm930, %v916, 0
        %v986 = vsel %vm930, %v917, 0
        %v989 = vsel %vm930, %v918, 0
        %v992 = vsel %vm930, %v919, 0
        %v995 = vsel %vm930, %v920, 0
        %v998 = vsel %vm930, %v921, 0
        %v1001 = vsel %vm930, %v922, 0
        %v1004 = vsel %vm930, %v923, 0
        %v1007 = vsel %vm930, %v924, 0
        %v1010 = vsel %vm930, %v925, 0
        %v1013 = vsel %vm930, %v926, 0
        %v1016 = vsel %vm930, %v927, 0
        %v1019 = vsel %vm930, %v928, 0
        %v1022 = vsel %vm930, %v929, 0
        %vm1024 = vcmask 1043456
        %v1026 = vsel %vm1024, %v319, 0
        %1028 = vmatpush.msra.mxu0 0.0
        %1029 = vmatpush.msra.mxu0 0.0
        %1030 = vmatpush.msra.mxu0 0.0
        %1031 = vmatpush.msra.mxu0 0.0
        %1032 = vmatpush.msra.mxu0 0.0
        %1033 = vmatpush.msra.mxu0 0.0
        %1034 = vmatpush.msra.mxu0 0.0
        %1035 = vmatpush.msra.mxu0 0.0
        %1036 = vmatpush.msra.mxu0 0.0
        %1037 = vmatpush.msra.mxu0 0.0
        %1038 = vmatpush.msra.mxu0 0.0
        %1039 = vmatpush.msra.mxu0 %v1026
        %1040 = vmatpush.msra.mxu0 %v318
        %1041 = vmatpush.msra.mxu0 %v317
        %1042 = vmatpush.msra.mxu0 %v316
        %1043 = vmatpush.msra.mxu0 %v315
        %1044 = vmatmul.f32.gmra.mxu0 %v932
        %v1045 = vpop.f32.mrf.mxu0
        %v1046 = vadd.f32 0.0, %v1045
        %1047 = vmatmul.f32.gmra.mxu0 %v935
        %v1048 = vpop.f32.mrf.mxu0
        %v1049 = vadd.f32 0.0, %v1048
        %1050 = vmatmul.f32.gmra.mxu0 %v938
        %v1051 = vpop.f32.mrf.mxu0
        %v1052 = vadd.f32 0.0, %v1051
        %1053 = vmatmul.f32.gmra.mxu0 %v941
        %v1054 = vpop.f32.mrf.mxu0
        %v1055 = vadd.f32 0.0, %v1054
        %1056 = vmatmul.f32.gmra.mxu0 %v944
        %v1057 = vpop.f32.mrf.mxu0
        %v1058 = vadd.f32 0.0, %v1057
        %1059 = vmatmul.f32.gmra.mxu0 %v947
        %v1060 = vpop.f32.mrf.mxu0
        %v1061 = vadd.f32 0.0, %v1060
        %1062 = vmatmul.f32.gmra.mxu0 %v950
        %v1063 = vpop.f32.mrf.mxu0
        %v1064 = vadd.f32 0.0, %v1063
        %1065 = vmatmul.f32.gmra.mxu0 %v953
        %v1066 = vpop.f32.mrf.mxu0
        %v1067 = vadd.f32 0.0, %v1066
        %1068 = vmatmul.f32.gmra.mxu0 %v956
        %v1069 = vpop.f32.mrf.mxu0
        %v1070 = vadd.f32 0.0, %v1069
        %1071 = vmatmul.f32.gmra.mxu0 %v959
        %v1072 = vpop.f32.mrf.mxu0
        %v1073 = vadd.f32 0.0, %v1072
        %1074 = vmatmul.f32.gmra.mxu0 %v962
        %v1075 = vpop.f32.mrf.mxu0
        %v1076 = vadd.f32 0.0, %v1075
        %1077 = vmatmul.f32.gmra.mxu0 %v965
        %v1078 = vpop.f32.mrf.mxu0
        %v1079 = vadd.f32 0.0, %v1078
        %1080 = vmatmul.f32.gmra.mxu0 %v968
        %v1081 = vpop.f32.mrf.mxu0
        %v1082 = vadd.f32 0.0, %v1081
        %1083 = vmatmul.f32.gmra.mxu0 %v971
        %v1084 = vpop.f32.mrf.mxu0
        %v1085 = vadd.f32 0.0, %v1084
        %1086 = vmatmul.f32.gmra.mxu0 %v974
        %v1087 = vpop.f32.mrf.mxu0
        %v1088 = vadd.f32 0.0, %v1087
        %1089 = vmatmul.f32.gmra.mxu0 %v977
        %v1090 = vpop.f32.mrf.mxu0
        %v1091 = vadd.f32 0.0, %v1090
        %1092 = vmatmul.f32.gmra.mxu0 %v980
        %v1093 = vpop.f32.mrf.mxu0
        %v1094 = vadd.f32 0.0, %v1093
        %1095 = vmatmul.f32.gmra.mxu0 %v983
        %v1096 = vpop.f32.mrf.mxu0
        %v1097 = vadd.f32 0.0, %v1096
        %1098 = vmatmul.f32.gmra.mxu0 %v986
        %v1099 = vpop.f32.mrf.mxu0
        %v1100 = vadd.f32 0.0, %v1099
        %1101 = vmatmul.f32.gmra.mxu0 %v989
        %v1102 = vpop.f32.mrf.mxu0
        %v1103 = vadd.f32 0.0, %v1102
        %1104 = vmatmul.f32.gmra.mxu0 %v992
        %v1105 = vpop.f32.mrf.mxu0
        %v1106 = vadd.f32 0.0, %v1105
        %1107 = vmatmul.f32.gmra.mxu0 %v995
        %v1108 = vpop.f32.mrf.mxu0
        %v1109 = vadd.f32 0.0, %v1108
        %1110 = vmatmul.f32.gmra.mxu0 %v998
        %v1111 = vpop.f32.mrf.mxu0
        %v1112 = vadd.f32 0.0, %v1111
        %1113 = vmatmul.f32.gmra.mxu0 %v1001
        %v1114 = vpop.f32.mrf.mxu0
        %v1115 = vadd.f32 0.0, %v1114
        %1116 = vmatmul.f32.gmra.mxu0 %v1004
        %v1117 = vpop.f32.mrf.mxu0
        %v1118 = vadd.f32 0.0, %v1117
        %1119 = vmatmul.f32.gmra.mxu0 %v1007
        %v1120 = vpop.f32.mrf.mxu0
        %v1121 = vadd.f32 0.0, %v1120
        %1122 = vmatmul.f32.gmra.mxu0 %v1010
        %v1123 = vpop.f32.mrf.mxu0
        %v1124 = vadd.f32 0.0, %v1123
        %1125 = vmatmul.f32.gmra.mxu0 %v1013
        %v1126 = vpop.f32.mrf.mxu0
        %v1127 = vadd.f32 0.0, %v1126
        %1128 = vmatmul.f32.gmra.mxu0 %v1016
        %v1129 = vpop.f32.mrf.mxu0
        %v1130 = vadd.f32 0.0, %v1129
        %1131 = vmatmul.f32.gmra.mxu0 %v1019
        %v1132 = vpop.f32.mrf.mxu0
        %v1133 = vadd.f32 0.0, %v1132
        %1134 = vmatmul.f32.gmra.mxu0 %v1022
        %v1135 = vpop.f32.mrf.mxu0
        %v1136 = vadd.f32 0.0, %v1135
        %1137 = vdwg.mxu0
        %1138 = vst [vmem:[#allocation2] sm:$0xff] 0.0
        %1139 = vst [vmem:[#allocation2 + $0x8] sm:$0xff] 0.0
        %1140 = vst [vmem:[#allocation2 + $0x10] sm:$0xff] 0.0
        %1141 = vst [vmem:[#allocation2 + $0x18] sm:$0xff] 0.0
        %1142 = vst [vmem:[#allocation2 + $0x20] sm:$0xff] 0.0
        %1143 = vst [vmem:[#allocation2 + $0x28] sm:$0xff] 0.0
        %1144 = vst [vmem:[#allocation2 + $0x30] sm:$0xff] 0.0
        %1145 = vst [vmem:[#allocation2 + $0x38] sm:$0xff] 0.0
        %1146 = vst [vmem:[#allocation2 + $0x40] sm:$0xff] 0.0
        %1147 = vst [vmem:[#allocation2 + $0x48] sm:$0xff] 0.0
        %1148 = vst [vmem:[#allocation2 + $0x50] sm:$0xff] 0.0
        %1149 = vst [vmem:[#allocation2 + $0x58] sm:$0xff] 0.0
        %1150 = vst [vmem:[#allocation2 + $0x60] sm:$0xff] 0.0
        %1151 = vst [vmem:[#allocation2 + $0x68] sm:$0xff] 0.0
        %1152 = vst [vmem:[#allocation2 + $0x70] sm:$0xff] 0.0
        %1153 = vst [vmem:[#allocation2 + $0x78] sm:$0xff] 0.0
        %1154 = vst [vmem:[#allocation2 + $0x80] sm:$0xff] 0.0
        %1155 = vst [vmem:[#allocation2 + $0x88] sm:$0xff] 0.0
        %1156 = vst [vmem:[#allocation2 + $0x90] sm:$0xff] 0.0
        %1157 = vst [vmem:[#allocation2 + $0x98] sm:$0xff] 0.0
        %1158 = vst [vmem:[#allocation2 + $0xa0] sm:$0xff] 0.0
        %1159 = vst [vmem:[#allocation2 + $0xa8] sm:$0xff] 0.0
        %1160 = vst [vmem:[#allocation2 + $0xb0] sm:$0xff] 0.0
        %1161 = vst [vmem:[#allocation2 + $0xb8] sm:$0xff] 0.0
        %1162 = vst [vmem:[#allocation2 + $0xc0] sm:$0xff] 0.0
        %1163 = vst [vmem:[#allocation2 + $0xc8] sm:$0xff] 0.0
        %1164 = vst [vmem:[#allocation2 + $0xd0] sm:$0xff] 0.0
        %1165 = vst [vmem:[#allocation2 + $0xd8] sm:$0xff] 0.0
        %1166 = vst [vmem:[#allocation2 + $0xe0] sm:$0xff] 0.0
        %1167 = vst [vmem:[#allocation2 + $0xe8] sm:$0xff] 0.0
        %1168 = vst [vmem:[#allocation2 + $0xf0] sm:$0xff] 0.0
        %1169 = vst [vmem:[#allocation2 + $0xf8] sm:$0xff] 0.0
        %1170 = vst [vmem:[#allocation2 + $0x100] sm:$0xff] 0.0
        %1171 = vst [vmem:[#allocation2 + $0x108] sm:$0xff] 0.0
        %1172 = vst [vmem:[#allocation2 + $0x110] sm:$0xff] 0.0
        %1173 = vst [vmem:[#allocation2 + $0x118] sm:$0xff] 0.0
        %1174 = vst [vmem:[#allocation2 + $0x120] sm:$0xff] 0.0
        %1175 = vst [vmem:[#allocation2 + $0x128] sm:$0xff] 0.0
        %1176 = vst [vmem:[#allocation2 + $0x130] sm:$0xff] 0.0
        %1177 = vst [vmem:[#allocation2 + $0x138] sm:$0xff] 0.0
        %1178 = vst [vmem:[#allocation2 + $0x140] sm:$0x3f] 0.0
        %v1179 = vsub.f32 %v1046, %v897
        %v1180 = vsub.f32 %v1049, %v897
        %v1181 = vsub.f32 %v1052, %v897
        %v1182 = vsub.f32 %v1055, %v897
        %v1183 = vsub.f32 %v1058, %v897
        %v1184 = vsub.f32 %v1061, %v897
        %v1185 = vsub.f32 %v1064, %v897
        %v1186 = vsub.f32 %v1067, %v897
        %v1187 = vsub.f32 %v1070, %v897
        %v1188 = vsub.f32 %v1073, %v897
        %v1189 = vsub.f32 %v1076, %v897
        %v1190 = vsub.f32 %v1079, %v897
        %v1191 = vsub.f32 %v1082, %v897
        %v1192 = vsub.f32 %v1085, %v897
        %v1193 = vsub.f32 %v1088, %v897
        %v1194 = vsub.f32 %v1091, %v897
        %v1195 = vsub.f32 %v1094, %v897
        %v1196 = vsub.f32 %v1097, %v897
        %v1197 = vsub.f32 %v1100, %v897
        %v1198 = vsub.f32 %v1103, %v897
        %v1199 = vsub.f32 %v1106, %v897
        %v1200 = vsub.f32 %v1109, %v897
        %v1201 = vsub.f32 %v1112, %v897
        %v1202 = vsub.f32 %v1115, %v897
        %v1203 = vsub.f32 %v1118, %v897
        %v1204 = vsub.f32 %v1121, %v897
        %v1205 = vsub.f32 %v1124, %v897
        %v1206 = vsub.f32 %v1127, %v897
        %v1207 = vsub.f32 %v1130, %v897
        %v1208 = vsub.f32 %v1133, %v897
        %v1209 = vsub.f32 %v1136, %v897
        %v1210 = vmax.f32 %v1179, 0.0
        %v1211 = vmax.f32 %v1180, 0.0
        %v1212 = vmax.f32 %v1181, 0.0
        %v1213 = vmax.f32 %v1182, 0.0
        %v1214 = vmax.f32 %v1183, 0.0
        %v1215 = vmax.f32 %v1184, 0.0
        %v1216 = vmax.f32 %v1185, 0.0
        %v1217 = vmax.f32 %v1186, 0.0
        %v1218 = vmax.f32 %v1187, 0.0
        %v1219 = vmax.f32 %v1188, 0.0
        %v1220 = vmax.f32 %v1189, 0.0
        %v1221 = vmax.f32 %v1190, 0.0
        %v1222 = vmax.f32 %v1191, 0.0
        %v1223 = vmax.f32 %v1192, 0.0
        %v1224 = vmax.f32 %v1193, 0.0
        %v1225 = vmax.f32 %v1194, 0.0
        %v1226 = vmax.f32 %v1195, 0.0
        %v1227 = vmax.f32 %v1196, 0.0
        %v1228 = vmax.f32 %v1197, 0.0
        %v1229 = vmax.f32 %v1198, 0.0
        %v1230 = vmax.f32 %v1199, 0.0
        %v1231 = vmax.f32 %v1200, 0.0
        %v1232 = vmax.f32 %v1201, 0.0
        %v1233 = vmax.f32 %v1202, 0.0
        %v1234 = vmax.f32 %v1203, 0.0
        %v1235 = vmax.f32 %v1204, 0.0
        %v1236 = vmax.f32 %v1205, 0.0
        %v1237 = vmax.f32 %v1206, 0.0
        %v1238 = vmax.f32 %v1207, 0.0
        %v1239 = vmax.f32 %v1208, 0.0
        %v1240 = vmax.f32 %v1209, 0.0
        %v1241 = vsub.f32 0.0, %v1046
        %v1242 = vsub.f32 0.0, %v1049
        %v1243 = vsub.f32 0.0, %v1052
        %v1244 = vsub.f32 0.0, %v1055
        %v1245 = vsub.f32 0.0, %v1058
        %v1246 = vsub.f32 0.0, %v1061
        %v1247 = vsub.f32 0.0, %v1064
        %v1248 = vsub.f32 0.0, %v1067
        %v1249 = vsub.f32 0.0, %v1070
        %v1250 = vsub.f32 0.0, %v1073
        %v1251 = vsub.f32 0.0, %v1076
        %v1252 = vsub.f32 0.0, %v1079
        %v1253 = vsub.f32 0.0, %v1082
        %v1254 = vsub.f32 0.0, %v1085
        %v1255 = vsub.f32 0.0, %v1088
        %v1256 = vsub.f32 0.0, %v1091
        %v1257 = vsub.f32 0.0, %v1094
        %v1258 = vsub.f32 0.0, %v1097
        %v1259 = vsub.f32 0.0, %v1100
        %v1260 = vsub.f32 0.0, %v1103
        %v1261 = vsub.f32 0.0, %v1106
        %v1262 = vsub.f32 0.0, %v1109
        %v1263 = vsub.f32 0.0, %v1112
        %v1264 = vsub.f32 0.0, %v1115
        %v1265 = vsub.f32 0.0, %v1118
        %v1266 = vsub.f32 0.0, %v1121
        %v1267 = vsub.f32 0.0, %v1124
        %v1268 = vsub.f32 0.0, %v1127
        %v1269 = vsub.f32 0.0, %v1130
        %v1270 = vsub.f32 0.0, %v1133
        %v1271 = vsub.f32 0.0, %v1136
        %v1272 = vsub.f32 %v1241, %v897
        %v1273 = vsub.f32 %v1242, %v897
        %v1274 = vsub.f32 %v1243, %v897
        %v1275 = vsub.f32 %v1244, %v897
        %v1276 = vsub.f32 %v1245, %v897
        %v1277 = vsub.f32 %v1246, %v897
        %v1278 = vsub.f32 %v1247, %v897
        %v1279 = vsub.f32 %v1248, %v897
        %v1280 = vsub.f32 %v1249, %v897
        %v1281 = vsub.f32 %v1250, %v897
        %v1282 = vsub.f32 %v1251, %v897
        %v1283 = vsub.f32 %v1252, %v897
        %v1284 = vsub.f32 %v1253, %v897
        %v1285 = vsub.f32 %v1254, %v897
        %v1286 = vsub.f32 %v1255, %v897
        %v1287 = vsub.f32 %v1256, %v897
        %v1288 = vsub.f32 %v1257, %v897
        %v1289 = vsub.f32 %v1258, %v897
        %v1290 = vsub.f32 %v1259, %v897
        %v1291 = vsub.f32 %v1260, %v897
        %v1292 = vsub.f32 %v1261, %v897
        %v1293 = vsub.f32 %v1262, %v897
        %v1294 = vsub.f32 %v1263, %v897
        %v1295 = vsub.f32 %v1264, %v897
        %v1296 = vsub.f32 %v1265, %v897
        %v1297 = vsub.f32 %v1266, %v897
        %v1298 = vsub.f32 %v1267, %v897
        %v1299 = vsub.f32 %v1268, %v897
        %v1300 = vsub.f32 %v1269, %v897
        %v1301 = vsub.f32 %v1270, %v897
        %v1302 = vsub.f32 %v1271, %v897
        %v1303 = vmax.f32 %v1272, 0.0
        %v1304 = vmax.f32 %v1273, 0.0
        %v1305 = vmax.f32 %v1274, 0.0
        %v1306 = vmax.f32 %v1275, 0.0
        %v1307 = vmax.f32 %v1276, 0.0
        %v1308 = vmax.f32 %v1277, 0.0
        %v1309 = vmax.f32 %v1278, 0.0
        %v1310 = vmax.f32 %v1279, 0.0
        %v1311 = vmax.f32 %v1280, 0.0
        %v1312 = vmax.f32 %v1281, 0.0
        %v1313 = vmax.f32 %v1282, 0.0
        %v1314 = vmax.f32 %v1283, 0.0
        %v1315 = vmax.f32 %v1284, 0.0
        %v1316 = vmax.f32 %v1285, 0.0
        %v1317 = vmax.f32 %v1286, 0.0
        %v1318 = vmax.f32 %v1287, 0.0
        %v1319 = vmax.f32 %v1288, 0.0
        %v1320 = vmax.f32 %v1289, 0.0
        %v1321 = vmax.f32 %v1290, 0.0
        %v1322 = vmax.f32 %v1291, 0.0
        %v1323 = vmax.f32 %v1292, 0.0
        %v1324 = vmax.f32 %v1293, 0.0
        %v1325 = vmax.f32 %v1294, 0.0
        %v1326 = vmax.f32 %v1295, 0.0
        %v1327 = vmax.f32 %v1296, 0.0
        %v1328 = vmax.f32 %v1297, 0.0
        %v1329 = vmax.f32 %v1298, 0.0
        %v1330 = vmax.f32 %v1299, 0.0
        %v1331 = vmax.f32 %v1300, 0.0
        %v1332 = vmax.f32 %v1301, 0.0
        %v1333 = vmax.f32 %v1302, 0.0
        %v1334 = vsub.f32 %v1210, %v1303
        %v1335 = vsub.f32 %v1211, %v1304
        %v1336 = vsub.f32 %v1212, %v1305
        %v1337 = vsub.f32 %v1213, %v1306
        %v1338 = vsub.f32 %v1214, %v1307
        %v1339 = vsub.f32 %v1215, %v1308
        %v1340 = vsub.f32 %v1216, %v1309
        %v1341 = vsub.f32 %v1217, %v1310
        %v1342 = vsub.f32 %v1218, %v1311
        %v1343 = vsub.f32 %v1219, %v1312
        %v1344 = vsub.f32 %v1220, %v1313
        %v1345 = vsub.f32 %v1221, %v1314
        %v1346 = vsub.f32 %v1222, %v1315
        %v1347 = vsub.f32 %v1223, %v1316
        %v1348 = vsub.f32 %v1224, %v1317
        %v1349 = vsub.f32 %v1225, %v1318
        %v1350 = vsub.f32 %v1226, %v1319
        %v1351 = vsub.f32 %v1227, %v1320
        %v1352 = vsub.f32 %v1228, %v1321
        %v1353 = vsub.f32 %v1229, %v1322
        %v1354 = vsub.f32 %v1230, %v1323
        %v1355 = vsub.f32 %v1231, %v1324
        %v1356 = vsub.f32 %v1232, %v1325
        %v1357 = vsub.f32 %v1233, %v1326
        %v1358 = vsub.f32 %v1234, %v1327
        %v1359 = vsub.f32 %v1235, %v1328
        %v1360 = vsub.f32 %v1236, %v1329
        %v1361 = vsub.f32 %v1237, %v1330
        %v1362 = vsub.f32 %v1238, %v1331
        %v1363 = vsub.f32 %v1239, %v1332
        %v1364 = vsub.f32 %v1240, %v1333
        %v1365 = vmul.f32 %v1334, %v864
        %v1366 = vmul.f32 %v1335, %v865
        %v1367 = vmul.f32 %v1336, %v866
        %v1368 = vmul.f32 %v1337, %v867
        %v1369 = vmul.f32 %v1338, %v868
        %v1370 = vmul.f32 %v1339, %v869
        %v1371 = vmul.f32 %v1340, %v870
        %v1372 = vmul.f32 %v1341, %v871
        %v1373 = vmul.f32 %v1342, %v872
        %v1374 = vmul.f32 %v1343, %v873
        %v1375 = vmul.f32 %v1344, %v874
        %v1376 = vmul.f32 %v1345, %v875
        %v1377 = vmul.f32 %v1346, %v876
        %v1378 = vmul.f32 %v1347, %v877
        %v1379 = vmul.f32 %v1348, %v878
        %v1380 = vmul.f32 %v1349, %v879
        %v1381 = vmul.f32 %v1350, %v880
        %v1382 = vmul.f32 %v1351, %v881
        %v1383 = vmul.f32 %v1352, %v882
        %v1384 = vmul.f32 %v1353, %v883
        %v1385 = vmul.f32 %v1354, %v884
        %v1386 = vmul.f32 %v1355, %v885
        %v1387 = vmul.f32 %v1356, %v886
        %v1388 = vmul.f32 %v1357, %v887
        %v1389 = vmul.f32 %v1358, %v888
        %v1390 = vmul.f32 %v1359, %v889
        %v1391 = vmul.f32 %v1360, %v890
        %v1392 = vmul.f32 %v1361, %v891
        %v1393 = vmul.f32 %v1362, %v892
        %v1394 = vmul.f32 %v1363, %v893
        %v1395 = vmul.f32 %v1364, %v894
        %1396 = vst [vmem:[#allocation2 + $0x26] sm:$0xff] %v1365
        %1397 = vst [vmem:[#allocation2 + $0x2e] sm:$0xff] %v1366
        %1398 = vst [vmem:[#allocation2 + $0x36] sm:$0xff] %v1367
        %1399 = vst [vmem:[#allocation2 + $0x3e] sm:$0xff] %v1368
        %1400 = vst [vmem:[#allocation2 + $0x46] sm:$0xff] %v1369
        %1401 = vst [vmem:[#allocation2 + $0x4e] sm:$0xff] %v1370
        %1402 = vst [vmem:[#allocation2 + $0x56] sm:$0xff] %v1371
        %1403 = vst [vmem:[#allocation2 + $0x5e] sm:$0xff] %v1372
        %1404 = vst [vmem:[#allocation2 + $0x66] sm:$0xff] %v1373
        %1405 = vst [vmem:[#allocation2 + $0x6e] sm:$0xff] %v1374
        %1406 = vst [vmem:[#allocation2 + $0x76] sm:$0xff] %v1375
        %1407 = vst [vmem:[#allocation2 + $0x7e] sm:$0xff] %v1376
        %1408 = vst [vmem:[#allocation2 + $0x86] sm:$0xff] %v1377
        %1409 = vst [vmem:[#allocation2 + $0x8e] sm:$0xff] %v1378
        %1410 = vst [vmem:[#allocation2 + $0x96] sm:$0xff] %v1379
        %1411 = vst [vmem:[#allocation2 + $0x9e] sm:$0xff] %v1380
        %1412 = vst [vmem:[#allocation2 + $0xa6] sm:$0xff] %v1381
        %1413 = vst [vmem:[#allocation2 + $0xae] sm:$0xff] %v1382
        %1414 = vst [vmem:[#allocation2 + $0xb6] sm:$0xff] %v1383
        %1415 = vst [vmem:[#allocation2 + $0xbe] sm:$0xff] %v1384
        %1416 = vst [vmem:[#allocation2 + $0xc6] sm:$0xff] %v1385
        %1417 = vst [vmem:[#allocation2 + $0xce] sm:$0xff] %v1386
        %1418 = vst [vmem:[#allocation2 + $0xd6] sm:$0xff] %v1387
        %1419 = vst [vmem:[#allocation2 + $0xde] sm:$0xff] %v1388
        %1420 = vst [vmem:[#allocation2 + $0xe6] sm:$0xff] %v1389
        %1421 = vst [vmem:[#allocation2 + $0xee] sm:$0xff] %v1390
        %1422 = vst [vmem:[#allocation2 + $0xf6] sm:$0xff] %v1391
        %1423 = vst [vmem:[#allocation2 + $0xfe] sm:$0xff] %v1392
        %1424 = vst [vmem:[#allocation2 + $0x106] sm:$0xff] %v1393
        %1425 = vst [vmem:[#allocation2 + $0x10e] sm:$0xff] %v1394
        %1426 = vst [vmem:[#allocation2 + $0x116] sm:$0xff] %v1395
        %v1427 = vld [vmem:[#allocation2] sm:$0xff]
        %v1428 = vld [vmem:[#allocation2 + $0x8] sm:$0xff]
        %v1429 = vld [vmem:[#allocation2 + $0x10] sm:$0xff]
        %v1430 = vld [vmem:[#allocation2 + $0x18] sm:$0xff]
        %v1431 = vld [vmem:[#allocation2 + $0x20] sm:$0xff]
        %v1432 = vld [vmem:[#allocation2 + $0x28] sm:$0xff]
        %v1433 = vld [vmem:[#allocation2 + $0x30] sm:$0xff]
        %v1434 = vld [vmem:[#allocation2 + $0x38] sm:$0xff]
        %v1435 = vld [vmem:[#allocation2 + $0x40] sm:$0xff]
        %v1436 = vld [vmem:[#allocation2 + $0x48] sm:$0xff]
        %v1437 = vld [vmem:[#allocation2 + $0x50] sm:$0xff]
        %v1438 = vld [vmem:[#allocation2 + $0x58] sm:$0xff]
        %v1439 = vld [vmem:[#allocation2 + $0x60] sm:$0xff]
        %v1440 = vld [vmem:[#allocation2 + $0x68] sm:$0xff]
        %v1441 = vld [vmem:[#allocation2 + $0x70] sm:$0xff]
        %v1442 = vld [vmem:[#allocation2 + $0x78] sm:$0xff]
        %v1443 = vld [vmem:[#allocation2 + $0x80] sm:$0xff]
        %v1444 = vld [vmem:[#allocation2 + $0x88] sm:$0xff]
        %v1445 = vld [vmem:[#allocation2 + $0x90] sm:$0xff]
        %v1446 = vld [vmem:[#allocation2 + $0x98] sm:$0xff]
        %v1447 = vld [vmem:[#allocation2 + $0xa0] sm:$0xff]
        %v1448 = vld [vmem:[#allocation2 + $0xa8] sm:$0xff]
        %v1449 = vld [vmem:[#allocation2 + $0xb0] sm:$0xff]
        %v1450 = vld [vmem:[#allocation2 + $0xb8] sm:$0xff]
        %v1451 = vld [vmem:[#allocation2 + $0xc0] sm:$0xff]
        %v1452 = vld [vmem:[#allocation2 + $0xc8] sm:$0xff]
        %v1453 = vld [vmem:[#allocation2 + $0xd0] sm:$0xff]
        %v1454 = vld [vmem:[#allocation2 + $0xd8] sm:$0xff]
        %v1455 = vld [vmem:[#allocation2 + $0xe0] sm:$0xff]
        %v1456 = vld [vmem:[#allocation2 + $0xe8] sm:$0xff]
        %v1457 = vld [vmem:[#allocation2 + $0xf0] sm:$0xff]
        %v1458 = vld [vmem:[#allocation2 + $0x1] sm:$0xff]
        %v1459 = vld [vmem:[#allocation2 + $0x9] sm:$0xff]
        %v1460 = vld [vmem:[#allocation2 + $0x11] sm:$0xff]
        %v1461 = vld [vmem:[#allocation2 + $0x19] sm:$0xff]
        %v1462 = vld [vmem:[#allocation2 + $0x21] sm:$0xff]
        %v1463 = vld [vmem:[#allocation2 + $0x29] sm:$0xff]
        %v1464 = vld [vmem:[#allocation2 + $0x31] sm:$0xff]
        %v1465 = vld [vmem:[#allocation2 + $0x39] sm:$0xff]
        %v1466 = vld [vmem:[#allocation2 + $0x41] sm:$0xff]
        %v1467 = vld [vmem:[#allocation2 + $0x49] sm:$0xff]
        %v1468 = vld [vmem:[#allocation2 + $0x51] sm:$0xff]
        %v1469 = vld [vmem:[#allocation2 + $0x59] sm:$0xff]
        %v1470 = vld [vmem:[#allocation2 + $0x61] sm:$0xff]
        %v1471 = vld [vmem:[#allocation2 + $0x69] sm:$0xff]
        %v1472 = vld [vmem:[#allocation2 + $0x71] sm:$0xff]
        %v1473 = vld [vmem:[#allocation2 + $0x79] sm:$0xff]
        %v1474 = vld [vmem:[#allocation2 + $0x81] sm:$0xff]
        %v1475 = vld [vmem:[#allocation2 + $0x89] sm:$0xff]
        %v1476 = vld [vmem:[#allocation2 + $0x91] sm:$0xff]
        %v1477 = vld [vmem:[#allocation2 + $0x99] sm:$0xff]
        %v1478 = vld [vmem:[#allocation2 + $0xa1] sm:$0xff]
        %v1479 = vld [vmem:[#allocation2 + $0xa9] sm:$0xff]
        %v1480 = vld [vmem:[#allocation2 + $0xb1] sm:$0xff]
        %v1481 = vld [vmem:[#allocation2 + $0xb9] sm:$0xff]
        %v1482 = vld [vmem:[#allocation2 + $0xc1] sm:$0xff]
        %v1483 = vld [vmem:[#allocation2 + $0xc9] sm:$0xff]
        %v1484 = vld [vmem:[#allocation2 + $0xd1] sm:$0xff]
        %v1485 = vld [vmem:[#allocation2 + $0xd9] sm:$0xff]
        %v1486 = vld [vmem:[#allocation2 + $0xe1] sm:$0xff]
        %v1487 = vld [vmem:[#allocation2 + $0xe9] sm:$0xff]
        %v1488 = vld [vmem:[#allocation2 + $0xf1] sm:$0xff]
        %v1489 = vld [vmem:[#allocation2 + $0x2] sm:$0xff]
        %v1490 = vld [vmem:[#allocation2 + $0xa] sm:$0xff]
        %v1491 = vld [vmem:[#allocation2 + $0x12] sm:$0xff]
        %v1492 = vld [vmem:[#allocation2 + $0x1a] sm:$0xff]
        %v1493 = vld [vmem:[#allocation2 + $0x22] sm:$0xff]
        %v1494 = vld [vmem:[#allocation2 + $0x2a] sm:$0xff]
        %v1495 = vld [vmem:[#allocation2 + $0x32] sm:$0xff]
        %v1496 = vld [vmem:[#allocation2 + $0x3a] sm:$0xff]
        %v1497 = vld [vmem:[#allocation2 + $0x42] sm:$0xff]
        %v1498 = vld [vmem:[#allocation2 + $0x4a] sm:$0xff]
        %v1499 = vld [vmem:[#allocation2 + $0x52] sm:$0xff]
        %v1500 = vld [vmem:[#allocation2 + $0x5a] sm:$0xff]
        %v1501 = vld [vmem:[#allocation2 + $0x62] sm:$0xff]
        %v1502 = vld [vmem:[#allocation2 + $0x6a] sm:$0xff]
        %v1503 = vld [vmem:[#allocation2 + $0x72] sm:$0xff]
        %v1504 = vld [vmem:[#allocation2 + $0x7a] sm:$0xff]
        %v1505 = vld [vmem:[#allocation2 + $0x82] sm:$0xff]
        %v1506 = vld [vmem:[#allocation2 + $0x8a] sm:$0xff]
        %v1507 = vld [vmem:[#allocation2 + $0x92] sm:$0xff]
        %v1508 = vld [vmem:[#allocation2 + $0x9a] sm:$0xff]
        %v1509 = vld [vmem:[#allocation2 + $0xa2] sm:$0xff]
        %v1510 = vld [vmem:[#allocation2 + $0xaa] sm:$0xff]
        %v1511 = vld [vmem:[#allocation2 + $0xb2] sm:$0xff]
        %v1512 = vld [vmem:[#allocation2 + $0xba] sm:$0xff]
        %v1513 = vld [vmem:[#allocation2 + $0xc2] sm:$0xff]
        %v1514 = vld [vmem:[#allocation2 + $0xca] sm:$0xff]
        %v1515 = vld [vmem:[#allocation2 + $0xd2] sm:$0xff]
        %v1516 = vld [vmem:[#allocation2 + $0xda] sm:$0xff]
        %v1517 = vld [vmem:[#allocation2 + $0xe2] sm:$0xff]
        %v1518 = vld [vmem:[#allocation2 + $0xea] sm:$0xff]
        %v1519 = vld [vmem:[#allocation2 + $0xf2] sm:$0xff]
        %v1520 = vld [vmem:[#allocation2 + $0x3] sm:$0xff]
        %v1521 = vld [vmem:[#allocation2 + $0xb] sm:$0xff]
        %v1522 = vld [vmem:[#allocation2 + $0x13] sm:$0xff]
        %v1523 = vld [vmem:[#allocation2 + $0x1b] sm:$0xff]
        %v1524 = vld [vmem:[#allocation2 + $0x23] sm:$0xff]
        %v1525 = vld [vmem:[#allocation2 + $0x2b] sm:$0xff]
        %v1526 = vld [vmem:[#allocation2 + $0x33] sm:$0xff]
        %v1527 = vld [vmem:[#allocation2 + $0x3b] sm:$0xff]
        %v1528 = vld [vmem:[#allocation2 + $0x43] sm:$0xff]
        %v1529 = vld [vmem:[#allocation2 + $0x4b] sm:$0xff]
        %v1530 = vld [vmem:[#allocation2 + $0x53] sm:$0xff]
        %v1531 = vld [vmem:[#allocation2 + $0x5b] sm:$0xff]
        %v1532 = vld [vmem:[#allocation2 + $0x63] sm:$0xff]
        %v1533 = vld [vmem:[#allocation2 + $0x6b] sm:$0xff]
        %v1534 = vld [vmem:[#allocation2 + $0x73] sm:$0xff]
        %v1535 = vld [vmem:[#allocation2 + $0x7b] sm:$0xff]
        %v1536 = vld [vmem:[#allocation2 + $0x83] sm:$0xff]
        %v1537 = vld [vmem:[#allocation2 + $0x8b] sm:$0xff]
        %v1538 = vld [vmem:[#allocation2 + $0x93] sm:$0xff]
        %v1539 = vld [vmem:[#allocation2 + $0x9b] sm:$0xff]
        %v1540 = vld [vmem:[#allocation2 + $0xa3] sm:$0xff]
        %v1541 = vld [vmem:[#allocation2 + $0xab] sm:$0xff]
        %v1542 = vld [vmem:[#allocation2 + $0xb3] sm:$0xff]
        %v1543 = vld [vmem:[#allocation2 + $0xbb] sm:$0xff]
        %v1544 = vld [vmem:[#allocation2 + $0xc3] sm:$0xff]
        %v1545 = vld [vmem:[#allocation2 + $0xcb] sm:$0xff]
        %v1546 = vld [vmem:[#allocation2 + $0xd3] sm:$0xff]
        %v1547 = vld [vmem:[#allocation2 + $0xdb] sm:$0xff]
        %v1548 = vld [vmem:[#allocation2 + $0xe3] sm:$0xff]
        %v1549 = vld [vmem:[#allocation2 + $0xeb] sm:$0xff]
        %v1550 = vld [vmem:[#allocation2 + $0xf3] sm:$0xff]
        %v1551 = vld [vmem:[#allocation2 + $0x4] sm:$0xff]
        %v1552 = vld [vmem:[#allocation2 + $0xc] sm:$0xff]
        %v1553 = vld [vmem:[#allocation2 + $0x14] sm:$0xff]
        %v1554 = vld [vmem:[#allocation2 + $0x1c] sm:$0xff]
        %v1555 = vld [vmem:[#allocation2 + $0x24] sm:$0xff]
        %v1556 = vld [vmem:[#allocation2 + $0x2c] sm:$0xff]
        %v1557 = vld [vmem:[#allocation2 + $0x34] sm:$0xff]
        %v1558 = vld [vmem:[#allocation2 + $0x3c] sm:$0xff]
        %v1559 = vld [vmem:[#allocation2 + $0x44] sm:$0xff]
        %v1560 = vld [vmem:[#allocation2 + $0x4c] sm:$0xff]
        %v1561 = vld [vmem:[#allocation2 + $0x54] sm:$0xff]
        %v1562 = vld [vmem:[#allocation2 + $0x5c] sm:$0xff]
        %v1563 = vld [vmem:[#allocation2 + $0x64] sm:$0xff]
        %v1564 = vld [vmem:[#allocation2 + $0x6c] sm:$0xff]
        %v1565 = vld [vmem:[#allocation2 + $0x74] sm:$0xff]
        %v1566 = vld [vmem:[#allocation2 + $0x7c] sm:$0xff]
        %v1567 = vld [vmem:[#allocation2 + $0x84] sm:$0xff]
        %v1568 = vld [vmem:[#allocation2 + $0x8c] sm:$0xff]
        %v1569 = vld [vmem:[#allocation2 + $0x94] sm:$0xff]
        %v1570 = vld [vmem:[#allocation2 + $0x9c] sm:$0xff]
        %v1571 = vld [vmem:[#allocation2 + $0xa4] sm:$0xff]
        %v1572 = vld [vmem:[#allocation2 + $0xac] sm:$0xff]
        %v1573 = vld [vmem:[#allocation2 + $0xb4] sm:$0xff]
        %v1574 = vld [vmem:[#allocation2 + $0xbc] sm:$0xff]
        %v1575 = vld [vmem:[#allocation2 + $0xc4] sm:$0xff]
        %v1576 = vld [vmem:[#allocation2 + $0xcc] sm:$0xff]
        %v1577 = vld [vmem:[#allocation2 + $0xd4] sm:$0xff]
        %v1578 = vld [vmem:[#allocation2 + $0xdc] sm:$0xff]
        %v1579 = vld [vmem:[#allocation2 + $0xe4] sm:$0xff]
        %v1580 = vld [vmem:[#allocation2 + $0xec] sm:$0xff]
        %v1581 = vld [vmem:[#allocation2 + $0xf4] sm:$0xff]
        %v1582 = vld [vmem:[#allocation2 + $0xfa] sm:$0xff]
        %v1583 = vld [vmem:[#allocation2 + $0x102] sm:$0xff]
        %v1584 = vld [vmem:[#allocation2 + $0xfb] sm:$0xff]
        %v1585 = vld [vmem:[#allocation2 + $0x103] sm:$0xff]
        %v1586 = vld [vmem:[#allocation2 + $0xfc] sm:$0xff]
        %v1587 = vld [vmem:[#allocation2 + $0x104] sm:$0xff]
        %v1588 = vld [vmem:[#allocation2 + $0x15] sm:$0xff]
        %v1589 = vld [vmem:[#allocation2 + $0x1d] sm:$0xff]
        %v1590 = vld [vmem:[#allocation2 + $0x25] sm:$0xff]
        %v1591 = vld [vmem:[#allocation2 + $0x2d] sm:$0xff]
        %v1592 = vld [vmem:[#allocation2 + $0x35] sm:$0xff]
        %v1593 = vld [vmem:[#allocation2 + $0x3d] sm:$0xff]
        %v1594 = vld [vmem:[#allocation2 + $0x45] sm:$0xff]
        %v1595 = vld [vmem:[#allocation2 + $0x4d] sm:$0xff]
        %v1596 = vld [vmem:[#allocation2 + $0x55] sm:$0xff]
        %v1597 = vld [vmem:[#allocation2 + $0x5d] sm:$0xff]
        %v1598 = vld [vmem:[#allocation2 + $0x65] sm:$0xff]
        %v1599 = vld [vmem:[#allocation2 + $0x6d] sm:$0xff]
        %v1600 = vld [vmem:[#allocation2 + $0x75] sm:$0xff]
        %v1601 = vld [vmem:[#allocation2 + $0x7d] sm:$0xff]
        %v1602 = vld [vmem:[#allocation2 + $0x85] sm:$0xff]
        %v1603 = vld [vmem:[#allocation2 + $0x8d] sm:$0xff]
        %v1604 = vld [vmem:[#allocation2 + $0x95] sm:$0xff]
        %v1605 = vld [vmem:[#allocation2 + $0x9d] sm:$0xff]
        %v1606 = vld [vmem:[#allocation2 + $0xa5] sm:$0xff]
        %v1607 = vld [vmem:[#allocation2 + $0xad] sm:$0xff]
        %v1608 = vld [vmem:[#allocation2 + $0xb5] sm:$0xff]
        %v1609 = vld [vmem:[#allocation2 + $0xbd] sm:$0xff]
        %v1610 = vld [vmem:[#allocation2 + $0xc5] sm:$0xff]
        %v1611 = vld [vmem:[#allocation2 + $0xcd] sm:$0xff]
        %v1612 = vld [vmem:[#allocation2 + $0xd5] sm:$0xff]
        %v1613 = vld [vmem:[#allocation2 + $0xdd] sm:$0xff]
        %v1614 = vld [vmem:[#allocation2 + $0xe5] sm:$0xff]
        %v1615 = vld [vmem:[#allocation2 + $0xed] sm:$0xff]
        %v1616 = vld [vmem:[#allocation2 + $0xf5] sm:$0xff]
        %v1617 = vld [vmem:[#allocation2 + $0xfd] sm:$0xff]
        %v1618 = vld [vmem:[#allocation2 + $0x105] sm:$0xff]
        %v1619 = vld [vmem:[#allocation2 + $0x16] sm:$0xff]
        %v1620 = vld [vmem:[#allocation2 + $0x1e] sm:$0xff]
        %v1621 = vld [vmem:[#allocation2 + $0x26] sm:$0xff]
        %v1622 = vld [vmem:[#allocation2 + $0x2e] sm:$0xff]
        %v1623 = vld [vmem:[#allocation2 + $0x36] sm:$0xff]
        %v1624 = vld [vmem:[#allocation2 + $0x3e] sm:$0xff]
        %v1625 = vld [vmem:[#allocation2 + $0x46] sm:$0xff]
        %v1626 = vld [vmem:[#allocation2 + $0x4e] sm:$0xff]
        %v1627 = vld [vmem:[#allocation2 + $0x56] sm:$0xff]
        %v1628 = vld [vmem:[#allocation2 + $0x5e] sm:$0xff]
        %v1629 = vld [vmem:[#allocation2 + $0x66] sm:$0xff]
        %v1630 = vld [vmem:[#allocation2 + $0x6e] sm:$0xff]
        %v1631 = vld [vmem:[#allocation2 + $0x76] sm:$0xff]
        %v1632 = vld [vmem:[#allocation2 + $0x7e] sm:$0xff]
        %v1633 = vld [vmem:[#allocation2 + $0x86] sm:$0xff]
        %v1634 = vld [vmem:[#allocation2 + $0x8e] sm:$0xff]
        %v1635 = vld [vmem:[#allocation2 + $0x96] sm:$0xff]
        %v1636 = vld [vmem:[#allocation2 + $0x9e] sm:$0xff]
        %v1637 = vld [vmem:[#allocation2 + $0xa6] sm:$0xff]
        %v1638 = vld [vmem:[#allocation2 + $0xae] sm:$0xff]
        %v1639 = vld [vmem:[#allocation2 + $0xb6] sm:$0xff]
        %v1640 = vld [vmem:[#allocation2 + $0xbe] sm:$0xff]
        %v1641 = vld [vmem:[#allocation2 + $0xc6] sm:$0xff]
        %v1642 = vld [vmem:[#allocation2 + $0xce] sm:$0xff]
        %v1643 = vld [vmem:[#allocation2 + $0xd6] sm:$0xff]
        %v1644 = vld [vmem:[#allocation2 + $0xde] sm:$0xff]
        %v1645 = vld [vmem:[#allocation2 + $0xe6] sm:$0xff]
        %v1646 = vld [vmem:[#allocation2 + $0xee] sm:$0xff]
        %v1647 = vld [vmem:[#allocation2 + $0xf6] sm:$0xff]
        %v1648 = vld [vmem:[#allocation2 + $0xfe] sm:$0xff]
        %v1649 = vld [vmem:[#allocation2 + $0x106] sm:$0xff]
        %v1650 = vld [vmem:[#allocation2 + $0x10c] sm:$0xff]
        %v1651 = vld [vmem:[#allocation2 + $0x114] sm:$0xff]
        %v1652 = vld [vmem:[#allocation2 + $0x10d] sm:$0xff]
        %v1653 = vld [vmem:[#allocation2 + $0x115] sm:$0xff]
        %v1654 = vld [vmem:[#allocation2 + $0x10e] sm:$0xff]
        %v1655 = vld [vmem:[#allocation2 + $0x116] sm:$0xff]
        %v1656 = vld [vmem:[#allocation2 + $0x27] sm:$0xff]
        %v1657 = vld [vmem:[#allocation2 + $0x2f] sm:$0xff]
        %v1658 = vld [vmem:[#allocation2 + $0x37] sm:$0xff]
        %v1659 = vld [vmem:[#allocation2 + $0x3f] sm:$0xff]
        %v1660 = vld [vmem:[#allocation2 + $0x47] sm:$0xff]
        %v1661 = vld [vmem:[#allocation2 + $0x4f] sm:$0xff]
        %v1662 = vld [vmem:[#allocation2 + $0x57] sm:$0xff]
        %v1663 = vld [vmem:[#allocation2 + $0x5f] sm:$0xff]
        %v1664 = vld [vmem:[#allocation2 + $0x67] sm:$0xff]
        %v1665 = vld [vmem:[#allocation2 + $0x6f] sm:$0xff]
        %v1666 = vld [vmem:[#allocation2 + $0x77] sm:$0xff]
        %v1667 = vld [vmem:[#allocation2 + $0x7f] sm:$0xff]
        %v1668 = vld [vmem:[#allocation2 + $0x87] sm:$0xff]
        %v1669 = vld [vmem:[#allocation2 + $0x8f] sm:$0xff]
        %v1670 = vld [vmem:[#allocation2 + $0x97] sm:$0xff]
        %v1671 = vld [vmem:[#allocation2 + $0x9f] sm:$0xff]
        %v1672 = vld [vmem:[#allocation2 + $0xa7] sm:$0xff]
        %v1673 = vld [vmem:[#allocation2 + $0xaf] sm:$0xff]
        %v1674 = vld [vmem:[#allocation2 + $0xb7] sm:$0xff]
        %v1675 = vld [vmem:[#allocation2 + $0xbf] sm:$0xff]
        %v1676 = vld [vmem:[#allocation2 + $0xc7] sm:$0xff]
        %v1677 = vld [vmem:[#allocation2 + $0xcf] sm:$0xff]
        %v1678 = vld [vmem:[#allocation2 + $0xd7] sm:$0xff]
        %v1679 = vld [vmem:[#allocation2 + $0xdf] sm:$0xff]
        %v1680 = vld [vmem:[#allocation2 + $0xe7] sm:$0xff]
        %v1681 = vld [vmem:[#allocation2 + $0xef] sm:$0xff]
        %v1682 = vld [vmem:[#allocation2 + $0xf7] sm:$0xff]
        %v1683 = vld [vmem:[#allocation2 + $0xff] sm:$0xff]
        %v1684 = vld [vmem:[#allocation2 + $0x107] sm:$0xff]
        %v1685 = vld [vmem:[#allocation2 + $0x10f] sm:$0xff]
        %v1686 = vld [vmem:[#allocation2 + $0x117] sm:$0xff]
        %v1687 = vld [vmem:[#allocation2 + $0xf8] sm:$0xff]
        %v1688 = vld [vmem:[#allocation2 + $0x100] sm:$0xff]
        %v1689 = vld [vmem:[#allocation2 + $0x108] sm:$0xff]
        %v1690 = vld [vmem:[#allocation2 + $0x110] sm:$0xff]
        %v1691 = vld [vmem:[#allocation2 + $0x118] sm:$0xff]
        %v1692 = vld [vmem:[#allocation2 + $0x11e] sm:$0xff]
        %v1693 = vld [vmem:[#allocation2 + $0x126] sm:$0xff]
        %v1694 = vld [vmem:[#allocation2 + $0x11f] sm:$0xff]
        %v1695 = vld [vmem:[#allocation2 + $0x127] sm:$0xff]
        %v1696 = vld [vmem:[#allocation2 + $0x120] sm:$0xff]
        %v1697 = vld [vmem:[#allocation2 + $0x128] sm:$0xff]
        %v1698 = vld [vmem:[#allocation2 + $0xf9] sm:$0xff]
        %v1699 = vld [vmem:[#allocation2 + $0x101] sm:$0xff]
        %v1700 = vld [vmem:[#allocation2 + $0x109] sm:$0xff]
        %v1701 = vld [vmem:[#allocation2 + $0x111] sm:$0xff]
        %v1702 = vld [vmem:[#allocation2 + $0x119] sm:$0xff]
        %v1703 = vld [vmem:[#allocation2 + $0x121] sm:$0xff]
        %v1704 = vld [vmem:[#allocation2 + $0x129] sm:$0xff]
        %v1705 = vld [vmem:[#allocation2 + $0x10a] sm:$0xff]
        %v1706 = vld [vmem:[#allocation2 + $0x112] sm:$0xff]
        %v1707 = vld [vmem:[#allocation2 + $0x11a] sm:$0xff]
        %v1708 = vld [vmem:[#allocation2 + $0x122] sm:$0xff]
        %v1709 = vld [vmem:[#allocation2 + $0x12a] sm:$0xff]
        %v1710 = vld [vmem:[#allocation2 + $0x130] sm:$0xff]
        %v1711 = vld [vmem:[#allocation2 + $0x138] sm:$0xff]
        %v1712 = vld [vmem:[#allocation2 + $0x131] sm:$0xff]
        %v1713 = vld [vmem:[#allocation2 + $0x139] sm:$0xff]
        %v1714 = vld [vmem:[#allocation2 + $0x132] sm:$0xff]
        %v1715 = vld [vmem:[#allocation2 + $0x13a] sm:$0xff]
        %v1716 = vld [vmem:[#allocation2 + $0x10b] sm:$0xff]
        %v1717 = vld [vmem:[#allocation2 + $0x113] sm:$0xff]
        %v1718 = vld [vmem:[#allocation2 + $0x11b] sm:$0xff]
        %v1719 = vld [vmem:[#allocation2 + $0x123] sm:$0xff]
        %v1720 = vld [vmem:[#allocation2 + $0x12b] sm:$0xff]
        %v1721 = vld [vmem:[#allocation2 + $0x133] sm:$0xff]
        %v1722 = vld [vmem:[#allocation2 + $0x13b] sm:$0xff]
        %v1723 = vld [vmem:[#allocation2 + $0x11c] sm:$0xff]
        %v1724 = vld [vmem:[#allocation2 + $0x124] sm:$0xff]
        %v1725 = vld [vmem:[#allocation2 + $0x12c] sm:$0xff]
        %v1726 = vld [vmem:[#allocation2 + $0x134] sm:$0xff]
        %v1727 = vld [vmem:[#allocation2 + $0x13c] sm:$0xff]
        %1728 = vmatpush.msra.mxu0 %v335
        %1729 = vmatpush.msra.mxu0 %v334
        %1730 = vmatpush.msra.mxu0 %v333
        %1731 = vmatpush.msra.mxu0 %v332
        %1732 = vmatpush.msra.mxu0 %v331
        %1733 = vmatpush.msra.mxu0 %v330
        %1734 = vmatpush.msra.mxu0 %v329
        %1735 = vmatpush.msra.mxu0 %v328
        %1736 = vmatpush.msra.mxu0 %v327
        %1737 = vmatpush.msra.mxu0 %v326
        %1738 = vmatpush.msra.mxu0 %v325
        %1739 = vmatpush.msra.mxu0 %v324
        %1740 = vmatpush.msra.mxu0 %v323
        %1741 = vmatpush.msra.mxu0 %v322
        %1742 = vmatpush.msra.mxu0 %v321
        %1743 = vmatpush.msra.mxu0 %v320
        %1744 = vmatmul.f32.gmra.mxu0 %v1427
        %v1745 = vpop.f32.mrf.mxu0
        %v1746 = vadd.f32 0.0, %v1745
        %1747 = vmatmul.f32.gmra.mxu0 %v1428
        %v1748 = vpop.f32.mrf.mxu0
        %v1749 = vadd.f32 0.0, %v1748
        %1750 = vmatmul.f32.gmra.mxu0 %v1429
        %v1751 = vpop.f32.mrf.mxu0
        %v1752 = vadd.f32 0.0, %v1751
        %1753 = vmatmul.f32.gmra.mxu0 %v1430
        %v1754 = vpop.f32.mrf.mxu0
        %v1755 = vadd.f32 0.0, %v1754
        %1756 = vmatmul.f32.gmra.mxu0 %v1431
        %v1757 = vpop.f32.mrf.mxu0
        %v1758 = vadd.f32 0.0, %v1757
        %1759 = vmatmul.f32.gmra.mxu0 %v1432
        %v1760 = vpop.f32.mrf.mxu0
        %v1761 = vadd.f32 0.0, %v1760
        %1762 = vmatmul.f32.gmra.mxu0 %v1433
        %v1763 = vpop.f32.mrf.mxu0
        %v1764 = vadd.f32 0.0, %v1763
        %1765 = vmatmul.f32.gmra.mxu0 %v1434
        %v1766 = vpop.f32.mrf.mxu0
        %v1767 = vadd.f32 0.0, %v1766
        %1768 = vmatmul.f32.gmra.mxu0 %v1435
        %v1769 = vpop.f32.mrf.mxu0
        %v1770 = vadd.f32 0.0, %v1769
        %1771 = vmatmul.f32.gmra.mxu0 %v1436
        %v1772 = vpop.f32.mrf.mxu0
        %v1773 = vadd.f32 0.0, %v1772
        %1774 = vmatmul.f32.gmra.mxu0 %v1437
        %v1775 = vpop.f32.mrf.mxu0
        %v1776 = vadd.f32 0.0, %v1775
        %1777 = vmatmul.f32.gmra.mxu0 %v1438
        %v1778 = vpop.f32.mrf.mxu0
        %v1779 = vadd.f32 0.0, %v1778
        %1780 = vmatmul.f32.gmra.mxu0 %v1439
        %v1781 = vpop.f32.mrf.mxu0
        %v1782 = vadd.f32 0.0, %v1781
        %1783 = vmatmul.f32.gmra.mxu0 %v1440
        %v1784 = vpop.f32.mrf.mxu0
        %v1785 = vadd.f32 0.0, %v1784
        %1786 = vmatmul.f32.gmra.mxu0 %v1441
        %v1787 = vpop.f32.mrf.mxu0
        %v1788 = vadd.f32 0.0, %v1787
        %1789 = vmatmul.f32.gmra.mxu0 %v1442
        %v1790 = vpop.f32.mrf.mxu0
        %v1791 = vadd.f32 0.0, %v1790
        %1792 = vmatmul.f32.gmra.mxu0 %v1443
        %v1793 = vpop.f32.mrf.mxu0
        %v1794 = vadd.f32 0.0, %v1793
        %1795 = vmatmul.f32.gmra.mxu0 %v1444
        %v1796 = vpop.f32.mrf.mxu0
        %v1797 = vadd.f32 0.0, %v1796
        %1798 = vmatmul.f32.gmra.mxu0 %v1445
        %v1799 = vpop.f32.mrf.mxu0
        %v1800 = vadd.f32 0.0, %v1799
        %1801 = vmatmul.f32.gmra.mxu0 %v1446
        %v1802 = vpop.f32.mrf.mxu0
        %v1803 = vadd.f32 0.0, %v1802
        %1804 = vmatmul.f32.gmra.mxu0 %v1447
        %v1805 = vpop.f32.mrf.mxu0
        %v1806 = vadd.f32 0.0, %v1805
        %1807 = vmatmul.f32.gmra.mxu0 %v1448
        %v1808 = vpop.f32.mrf.mxu0
        %v1809 = vadd.f32 0.0, %v1808
        %1810 = vmatmul.f32.gmra.mxu0 %v1449
        %v1811 = vpop.f32.mrf.mxu0
        %v1812 = vadd.f32 0.0, %v1811
        %1813 = vmatmul.f32.gmra.mxu0 %v1450
        %v1814 = vpop.f32.mrf.mxu0
        %v1815 = vadd.f32 0.0, %v1814
        %1816 = vmatmul.f32.gmra.mxu0 %v1451
        %v1817 = vpop.f32.mrf.mxu0
        %v1818 = vadd.f32 0.0, %v1817
        %1819 = vmatmul.f32.gmra.mxu0 %v1452
        %v1820 = vpop.f32.mrf.mxu0
        %v1821 = vadd.f32 0.0, %v1820
        %1822 = vmatmul.f32.gmra.mxu0 %v1453
        %v1823 = vpop.f32.mrf.mxu0
        %v1824 = vadd.f32 0.0, %v1823
        %1825 = vmatmul.f32.gmra.mxu0 %v1454
        %v1826 = vpop.f32.mrf.mxu0
        %v1827 = vadd.f32 0.0, %v1826
        %1828 = vmatmul.f32.gmra.mxu0 %v1455
        %v1829 = vpop.f32.mrf.mxu0
        %v1830 = vadd.f32 0.0, %v1829
        %1831 = vmatmul.f32.gmra.mxu0 %v1456
        %v1832 = vpop.f32.mrf.mxu0
        %v1833 = vadd.f32 0.0, %v1832
        %1834 = vmatmul.f32.gmra.mxu0 %v1457
        %v1835 = vpop.f32.mrf.mxu0
        %v1836 = vadd.f32 0.0, %v1835
        %1837 = vdwg.mxu0
        %1838 = vmatpush.msra.mxu0 %v351
        %1839 = vmatpush.msra.mxu0 %v350
        %1840 = vmatpush.msra.mxu0 %v349
        %1841 = vmatpush.msra.mxu0 %v348
        %1842 = vmatpush.msra.mxu0 %v347
        %1843 = vmatpush.msra.mxu0 %v346
        %1844 = vmatpush.msra.mxu0 %v345
        %1845 = vmatpush.msra.mxu0 %v344
        %1846 = vmatpush.msra.mxu0 %v343
        %1847 = vmatpush.msra.mxu0 %v342
        %1848 = vmatpush.msra.mxu0 %v341
        %1849 = vmatpush.msra.mxu0 %v340
        %1850 = vmatpush.msra.mxu0 %v339
        %1851 = vmatpush.msra.mxu0 %v338
        %1852 = vmatpush.msra.mxu0 %v337
        %1853 = vmatpush.msra.mxu0 %v336
        %1854 = vmatmul.f32.gmra.mxu0 %v1458
        %v1855 = vpop.f32.mrf.mxu0
        %v1856 = vadd.f32 %v1746, %v1855
        %1857 = vmatmul.f32.gmra.mxu0 %v1459
        %v1858 = vpop.f32.mrf.mxu0
        %v1859 = vadd.f32 %v1749, %v1858
        %1860 = vmatmul.f32.gmra.mxu0 %v1460
        %v1861 = vpop.f32.mrf.mxu0
        %v1862 = vadd.f32 %v1752, %v1861
        %1863 = vmatmul.f32.gmra.mxu0 %v1461
        %v1864 = vpop.f32.mrf.mxu0
        %v1865 = vadd.f32 %v1755, %v1864
        %1866 = vmatmul.f32.gmra.mxu0 %v1462
        %v1867 = vpop.f32.mrf.mxu0
        %v1868 = vadd.f32 %v1758, %v1867
        %1869 = vmatmul.f32.gmra.mxu0 %v1463
        %v1870 = vpop.f32.mrf.mxu0
        %v1871 = vadd.f32 %v1761, %v1870
        %1872 = vmatmul.f32.gmra.mxu0 %v1464
        %v1873 = vpop.f32.mrf.mxu0
        %v1874 = vadd.f32 %v1764, %v1873
        %1875 = vmatmul.f32.gmra.mxu0 %v1465
        %v1876 = vpop.f32.mrf.mxu0
        %v1877 = vadd.f32 %v1767, %v1876
        %1878 = vmatmul.f32.gmra.mxu0 %v1466
        %v1879 = vpop.f32.mrf.mxu0
        %v1880 = vadd.f32 %v1770, %v1879
        %1881 = vmatmul.f32.gmra.mxu0 %v1467
        %v1882 = vpop.f32.mrf.mxu0
        %v1883 = vadd.f32 %v1773, %v1882
        %1884 = vmatmul.f32.gmra.mxu0 %v1468
        %v1885 = vpop.f32.mrf.mxu0
        %v1886 = vadd.f32 %v1776, %v1885
        %1887 = vmatmul.f32.gmra.mxu0 %v1469
        %v1888 = vpop.f32.mrf.mxu0
        %v1889 = vadd.f32 %v1779, %v1888
        %1890 = vmatmul.f32.gmra.mxu0 %v1470
        %v1891 = vpop.f32.mrf.mxu0
        %v1892 = vadd.f32 %v1782, %v1891
        %1893 = vmatmul.f32.gmra.mxu0 %v1471
        %v1894 = vpop.f32.mrf.mxu0
        %v1895 = vadd.f32 %v1785, %v1894
        %1896 = vmatmul.f32.gmra.mxu0 %v1472
        %v1897 = vpop.f32.mrf.mxu0
        %v1898 = vadd.f32 %v1788, %v1897
        %1899 = vmatmul.f32.gmra.mxu0 %v1473
        %v1900 = vpop.f32.mrf.mxu0
        %v1901 = vadd.f32 %v1791, %v1900
        %1902 = vmatmul.f32.gmra.mxu0 %v1474
        %v1903 = vpop.f32.mrf.mxu0
        %v1904 = vadd.f32 %v1794, %v1903
        %1905 = vmatmul.f32.gmra.mxu0 %v1475
        %v1906 = vpop.f32.mrf.mxu0
        %v1907 = vadd.f32 %v1797, %v1906
        %1908 = vmatmul.f32.gmra.mxu0 %v1476
        %v1909 = vpop.f32.mrf.mxu0
        %v1910 = vadd.f32 %v1800, %v1909
        %1911 = vmatmul.f32.gmra.mxu0 %v1477
        %v1912 = vpop.f32.mrf.mxu0
        %v1913 = vadd.f32 %v1803, %v1912
        %1914 = vmatmul.f32.gmra.mxu0 %v1478
        %v1915 = vpop.f32.mrf.mxu0
        %v1916 = vadd.f32 %v1806, %v1915
        %1917 = vmatmul.f32.gmra.mxu0 %v1479
        %v1918 = vpop.f32.mrf.mxu0
        %v1919 = vadd.f32 %v1809, %v1918
        %1920 = vmatmul.f32.gmra.mxu0 %v1480
        %v1921 = vpop.f32.mrf.mxu0
        %v1922 = vadd.f32 %v1812, %v1921
        %1923 = vmatmul.f32.gmra.mxu0 %v1481
        %v1924 = vpop.f32.mrf.mxu0
        %v1925 = vadd.f32 %v1815, %v1924
        %1926 = vmatmul.f32.gmra.mxu0 %v1482
        %v1927 = vpop.f32.mrf.mxu0
        %v1928 = vadd.f32 %v1818, %v1927
        %1929 = vmatmul.f32.gmra.mxu0 %v1483
        %v1930 = vpop.f32.mrf.mxu0
        %v1931 = vadd.f32 %v1821, %v1930
        %1932 = vmatmul.f32.gmra.mxu0 %v1484
        %v1933 = vpop.f32.mrf.mxu0
        %v1934 = vadd.f32 %v1824, %v1933
        %1935 = vmatmul.f32.gmra.mxu0 %v1485
        %v1936 = vpop.f32.mrf.mxu0
        %v1937 = vadd.f32 %v1827, %v1936
        %1938 = vmatmul.f32.gmra.mxu0 %v1486
        %v1939 = vpop.f32.mrf.mxu0
        %v1940 = vadd.f32 %v1830, %v1939
        %1941 = vmatmul.f32.gmra.mxu0 %v1487
        %v1942 = vpop.f32.mrf.mxu0
        %v1943 = vadd.f32 %v1833, %v1942
        %1944 = vmatmul.f32.gmra.mxu0 %v1488
        %v1945 = vpop.f32.mrf.mxu0
        %v1946 = vadd.f32 %v1836, %v1945
        %1947 = vdwg.mxu0
        %1948 = vmatpush.msra.mxu0 %v367
        %1949 = vmatpush.msra.mxu0 %v366
        %1950 = vmatpush.msra.mxu0 %v365
        %1951 = vmatpush.msra.mxu0 %v364
        %1952 = vmatpush.msra.mxu0 %v363
        %1953 = vmatpush.msra.mxu0 %v362
        %1954 = vmatpush.msra.mxu0 %v361
        %1955 = vmatpush.msra.mxu0 %v360
        %1956 = vmatpush.msra.mxu0 %v359
        %1957 = vmatpush.msra.mxu0 %v358
        %1958 = vmatpush.msra.mxu0 %v357
        %1959 = vmatpush.msra.mxu0 %v356
        %1960 = vmatpush.msra.mxu0 %v355
        %1961 = vmatpush.msra.mxu0 %v354
        %1962 = vmatpush.msra.mxu0 %v353
        %1963 = vmatpush.msra.mxu0 %v352
        %1964 = vmatmul.f32.gmra.mxu0 %v1489
        %v1965 = vpop.f32.mrf.mxu0
        %v1966 = vadd.f32 %v1856, %v1965
        %1967 = vmatmul.f32.gmra.mxu0 %v1490
        %v1968 = vpop.f32.mrf.mxu0
        %v1969 = vadd.f32 %v1859, %v1968
        %1970 = vmatmul.f32.gmra.mxu0 %v1491
        %v1971 = vpop.f32.mrf.mxu0
        %v1972 = vadd.f32 %v1862, %v1971
        %1973 = vmatmul.f32.gmra.mxu0 %v1492
        %v1974 = vpop.f32.mrf.mxu0
        %v1975 = vadd.f32 %v1865, %v1974
        %1976 = vmatmul.f32.gmra.mxu0 %v1493
        %v1977 = vpop.f32.mrf.mxu0
        %v1978 = vadd.f32 %v1868, %v1977
        %1979 = vmatmul.f32.gmra.mxu0 %v1494
        %v1980 = vpop.f32.mrf.mxu0
        %v1981 = vadd.f32 %v1871, %v1980
        %1982 = vmatmul.f32.gmra.mxu0 %v1495
        %v1983 = vpop.f32.mrf.mxu0
        %v1984 = vadd.f32 %v1874, %v1983
        %1985 = vmatmul.f32.gmra.mxu0 %v1496
        %v1986 = vpop.f32.mrf.mxu0
        %v1987 = vadd.f32 %v1877, %v1986
        %1988 = vmatmul.f32.gmra.mxu0 %v1497
        %v1989 = vpop.f32.mrf.mxu0
        %v1990 = vadd.f32 %v1880, %v1989
        %1991 = vmatmul.f32.gmra.mxu0 %v1498
        %v1992 = vpop.f32.mrf.mxu0
        %v1993 = vadd.f32 %v1883, %v1992
        %1994 = vmatmul.f32.gmra.mxu0 %v1499
        %v1995 = vpop.f32.mrf.mxu0
        %v1996 = vadd.f32 %v1886, %v1995
        %1997 = vmatmul.f32.gmra.mxu0 %v1500
        %v1998 = vpop.f32.mrf.mxu0
        %v1999 = vadd.f32 %v1889, %v1998
        %2000 = vmatmul.f32.gmra.mxu0 %v1501
        %v2001 = vpop.f32.mrf.mxu0
        %v2002 = vadd.f32 %v1892, %v2001
        %2003 = vmatmul.f32.gmra.mxu0 %v1502
        %v2004 = vpop.f32.mrf.mxu0
        %v2005 = vadd.f32 %v1895, %v2004
        %2006 = vmatmul.f32.gmra.mxu0 %v1503
        %v2007 = vpop.f32.mrf.mxu0
        %v2008 = vadd.f32 %v1898, %v2007
        %2009 = vmatmul.f32.gmra.mxu0 %v1504
        %v2010 = vpop.f32.mrf.mxu0
        %v2011 = vadd.f32 %v1901, %v2010
        %2012 = vmatmul.f32.gmra.mxu0 %v1505
        %v2013 = vpop.f32.mrf.mxu0
        %v2014 = vadd.f32 %v1904, %v2013
        %2015 = vmatmul.f32.gmra.mxu0 %v1506
        %v2016 = vpop.f32.mrf.mxu0
        %v2017 = vadd.f32 %v1907, %v2016
        %2018 = vmatmul.f32.gmra.mxu0 %v1507
        %v2019 = vpop.f32.mrf.mxu0
        %v2020 = vadd.f32 %v1910, %v2019
        %2021 = vmatmul.f32.gmra.mxu0 %v1508
        %v2022 = vpop.f32.mrf.mxu0
        %v2023 = vadd.f32 %v1913, %v2022
        %2024 = vmatmul.f32.gmra.mxu0 %v1509
        %v2025 = vpop.f32.mrf.mxu0
        %v2026 = vadd.f32 %v1916, %v2025
        %2027 = vmatmul.f32.gmra.mxu0 %v1510
        %v2028 = vpop.f32.mrf.mxu0
        %v2029 = vadd.f32 %v1919, %v2028
        %2030 = vmatmul.f32.gmra.mxu0 %v1511
        %v2031 = vpop.f32.mrf.mxu0
        %v2032 = vadd.f32 %v1922, %v2031
        %2033 = vmatmul.f32.gmra.mxu0 %v1512
        %v2034 = vpop.f32.mrf.mxu0
        %v2035 = vadd.f32 %v1925, %v2034
        %2036 = vmatmul.f32.gmra.mxu0 %v1513
        %v2037 = vpop.f32.mrf.mxu0
        %v2038 = vadd.f32 %v1928, %v2037
        %2039 = vmatmul.f32.gmra.mxu0 %v1514
        %v2040 = vpop.f32.mrf.mxu0
        %v2041 = vadd.f32 %v1931, %v2040
        %2042 = vmatmul.f32.gmra.mxu0 %v1515
        %v2043 = vpop.f32.mrf.mxu0
        %v2044 = vadd.f32 %v1934, %v2043
        %2045 = vmatmul.f32.gmra.mxu0 %v1516
        %v2046 = vpop.f32.mrf.mxu0
        %v2047 = vadd.f32 %v1937, %v2046
        %2048 = vmatmul.f32.gmra.mxu0 %v1517
        %v2049 = vpop.f32.mrf.mxu0
        %v2050 = vadd.f32 %v1940, %v2049
        %2051 = vmatmul.f32.gmra.mxu0 %v1518
        %v2052 = vpop.f32.mrf.mxu0
        %v2053 = vadd.f32 %v1943, %v2052
        %2054 = vmatmul.f32.gmra.mxu0 %v1519
        %v2055 = vpop.f32.mrf.mxu0
        %v2056 = vadd.f32 %v1946, %v2055
        %2057 = vdwg.mxu0
        %2058 = vmatpush.msra.mxu0 %v383
        %2059 = vmatpush.msra.mxu0 %v382
        %2060 = vmatpush.msra.mxu0 %v381
        %2061 = vmatpush.msra.mxu0 %v380
        %2062 = vmatpush.msra.mxu0 %v379
        %2063 = vmatpush.msra.mxu0 %v378
        %2064 = vmatpush.msra.mxu0 %v377
        %2065 = vmatpush.msra.mxu0 %v376
        %2066 = vmatpush.msra.mxu0 %v375
        %2067 = vmatpush.msra.mxu0 %v374
        %2068 = vmatpush.msra.mxu0 %v373
        %2069 = vmatpush.msra.mxu0 %v372
        %2070 = vmatpush.msra.mxu0 %v371
        %2071 = vmatpush.msra.mxu0 %v370
        %2072 = vmatpush.msra.mxu0 %v369
        %2073 = vmatpush.msra.mxu0 %v368
        %2074 = vmatmul.f32.gmra.mxu0 %v1520
        %v2075 = vpop.f32.mrf.mxu0
        %v2076 = vadd.f32 %v1966, %v2075
        %2077 = vmatmul.f32.gmra.mxu0 %v1521
        %v2078 = vpop.f32.mrf.mxu0
        %v2079 = vadd.f32 %v1969, %v2078
        %2080 = vmatmul.f32.gmra.mxu0 %v1522
        %v2081 = vpop.f32.mrf.mxu0
        %v2082 = vadd.f32 %v1972, %v2081
        %2083 = vmatmul.f32.gmra.mxu0 %v1523
        %v2084 = vpop.f32.mrf.mxu0
        %v2085 = vadd.f32 %v1975, %v2084
        %2086 = vmatmul.f32.gmra.mxu0 %v1524
        %v2087 = vpop.f32.mrf.mxu0
        %v2088 = vadd.f32 %v1978, %v2087
        %2089 = vmatmul.f32.gmra.mxu0 %v1525
        %v2090 = vpop.f32.mrf.mxu0
        %v2091 = vadd.f32 %v1981, %v2090
        %2092 = vmatmul.f32.gmra.mxu0 %v1526
        %v2093 = vpop.f32.mrf.mxu0
        %v2094 = vadd.f32 %v1984, %v2093
        %2095 = vmatmul.f32.gmra.mxu0 %v1527
        %v2096 = vpop.f32.mrf.mxu0
        %v2097 = vadd.f32 %v1987, %v2096
        %2098 = vmatmul.f32.gmra.mxu0 %v1528
        %v2099 = vpop.f32.mrf.mxu0
        %v2100 = vadd.f32 %v1990, %v2099
        %2101 = vmatmul.f32.gmra.mxu0 %v1529
        %v2102 = vpop.f32.mrf.mxu0
        %v2103 = vadd.f32 %v1993, %v2102
        %2104 = vmatmul.f32.gmra.mxu0 %v1530
        %v2105 = vpop.f32.mrf.mxu0
        %v2106 = vadd.f32 %v1996, %v2105
        %2107 = vmatmul.f32.gmra.mxu0 %v1531
        %v2108 = vpop.f32.mrf.mxu0
        %v2109 = vadd.f32 %v1999, %v2108
        %2110 = vmatmul.f32.gmra.mxu0 %v1532
        %v2111 = vpop.f32.mrf.mxu0
        %v2112 = vadd.f32 %v2002, %v2111
        %2113 = vmatmul.f32.gmra.mxu0 %v1533
        %v2114 = vpop.f32.mrf.mxu0
        %v2115 = vadd.f32 %v2005, %v2114
        %2116 = vmatmul.f32.gmra.mxu0 %v1534
        %v2117 = vpop.f32.mrf.mxu0
        %v2118 = vadd.f32 %v2008, %v2117
        %2119 = vmatmul.f32.gmra.mxu0 %v1535
        %v2120 = vpop.f32.mrf.mxu0
        %v2121 = vadd.f32 %v2011, %v2120
        %2122 = vmatmul.f32.gmra.mxu0 %v1536
        %v2123 = vpop.f32.mrf.mxu0
        %v2124 = vadd.f32 %v2014, %v2123
        %2125 = vmatmul.f32.gmra.mxu0 %v1537
        %v2126 = vpop.f32.mrf.mxu0
        %v2127 = vadd.f32 %v2017, %v2126
        %2128 = vmatmul.f32.gmra.mxu0 %v1538
        %v2129 = vpop.f32.mrf.mxu0
        %v2130 = vadd.f32 %v2020, %v2129
        %2131 = vmatmul.f32.gmra.mxu0 %v1539
        %v2132 = vpop.f32.mrf.mxu0
        %v2133 = vadd.f32 %v2023, %v2132
        %2134 = vmatmul.f32.gmra.mxu0 %v1540
        %v2135 = vpop.f32.mrf.mxu0
        %v2136 = vadd.f32 %v2026, %v2135
        %2137 = vmatmul.f32.gmra.mxu0 %v1541
        %v2138 = vpop.f32.mrf.mxu0
        %v2139 = vadd.f32 %v2029, %v2138
        %2140 = vmatmul.f32.gmra.mxu0 %v1542
        %v2141 = vpop.f32.mrf.mxu0
        %v2142 = vadd.f32 %v2032, %v2141
        %2143 = vmatmul.f32.gmra.mxu0 %v1543
        %v2144 = vpop.f32.mrf.mxu0
        %v2145 = vadd.f32 %v2035, %v2144
        %2146 = vmatmul.f32.gmra.mxu0 %v1544
        %v2147 = vpop.f32.mrf.mxu0
        %v2148 = vadd.f32 %v2038, %v2147
        %2149 = vmatmul.f32.gmra.mxu0 %v1545
        %v2150 = vpop.f32.mrf.mxu0
        %v2151 = vadd.f32 %v2041, %v2150
        %2152 = vmatmul.f32.gmra.mxu0 %v1546
        %v2153 = vpop.f32.mrf.mxu0
        %v2154 = vadd.f32 %v2044, %v2153
        %2155 = vmatmul.f32.gmra.mxu0 %v1547
        %v2156 = vpop.f32.mrf.mxu0
        %v2157 = vadd.f32 %v2047, %v2156
        %2158 = vmatmul.f32.gmra.mxu0 %v1548
        %v2159 = vpop.f32.mrf.mxu0
        %v2160 = vadd.f32 %v2050, %v2159
        %2161 = vmatmul.f32.gmra.mxu0 %v1549
        %v2162 = vpop.f32.mrf.mxu0
        %v2163 = vadd.f32 %v2053, %v2162
        %2164 = vmatmul.f32.gmra.mxu0 %v1550
        %v2165 = vpop.f32.mrf.mxu0
        %v2166 = vadd.f32 %v2056, %v2165
        %2167 = vdwg.mxu0
        %2168 = vmatpush.msra.mxu0 %v399
        %2169 = vmatpush.msra.mxu0 %v398
        %2170 = vmatpush.msra.mxu0 %v397
        %2171 = vmatpush.msra.mxu0 %v396
        %2172 = vmatpush.msra.mxu0 %v395
        %2173 = vmatpush.msra.mxu0 %v394
        %2174 = vmatpush.msra.mxu0 %v393
        %2175 = vmatpush.msra.mxu0 %v392
        %2176 = vmatpush.msra.mxu0 %v391
        %2177 = vmatpush.msra.mxu0 %v390
        %2178 = vmatpush.msra.mxu0 %v389
        %2179 = vmatpush.msra.mxu0 %v388
        %2180 = vmatpush.msra.mxu0 %v387
        %2181 = vmatpush.msra.mxu0 %v386
        %2182 = vmatpush.msra.mxu0 %v385
        %2183 = vmatpush.msra.mxu0 %v384
        %2184 = vmatmul.f32.gmra.mxu0 %v1551
        %v2185 = vpop.f32.mrf.mxu0
        %v2186 = vadd.f32 %v2076, %v2185
        %2187 = vmatmul.f32.gmra.mxu0 %v1552
        %v2188 = vpop.f32.mrf.mxu0
        %v2189 = vadd.f32 %v2079, %v2188
        %2190 = vmatmul.f32.gmra.mxu0 %v1553
        %v2191 = vpop.f32.mrf.mxu0
        %v2192 = vadd.f32 %v2082, %v2191
        %2193 = vmatmul.f32.gmra.mxu0 %v1554
        %v2194 = vpop.f32.mrf.mxu0
        %v2195 = vadd.f32 %v2085, %v2194
        %2196 = vmatmul.f32.gmra.mxu0 %v1555
        %v2197 = vpop.f32.mrf.mxu0
        %v2198 = vadd.f32 %v2088, %v2197
        %2199 = vmatmul.f32.gmra.mxu0 %v1556
        %v2200 = vpop.f32.mrf.mxu0
        %v2201 = vadd.f32 %v2091, %v2200
        %2202 = vmatmul.f32.gmra.mxu0 %v1557
        %v2203 = vpop.f32.mrf.mxu0
        %v2204 = vadd.f32 %v2094, %v2203
        %2205 = vmatmul.f32.gmra.mxu0 %v1558
        %v2206 = vpop.f32.mrf.mxu0
        %v2207 = vadd.f32 %v2097, %v2206
        %2208 = vmatmul.f32.gmra.mxu0 %v1559
        %v2209 = vpop.f32.mrf.mxu0
        %v2210 = vadd.f32 %v2100, %v2209
        %2211 = vmatmul.f32.gmra.mxu0 %v1560
        %v2212 = vpop.f32.mrf.mxu0
        %v2213 = vadd.f32 %v2103, %v2212
        %2214 = vmatmul.f32.gmra.mxu0 %v1561
        %v2215 = vpop.f32.mrf.mxu0
        %v2216 = vadd.f32 %v2106, %v2215
        %2217 = vmatmul.f32.gmra.mxu0 %v1562
        %v2218 = vpop.f32.mrf.mxu0
        %v2219 = vadd.f32 %v2109, %v2218
        %2220 = vmatmul.f32.gmra.mxu0 %v1563
        %v2221 = vpop.f32.mrf.mxu0
        %v2222 = vadd.f32 %v2112, %v2221
        %2223 = vmatmul.f32.gmra.mxu0 %v1564
        %v2224 = vpop.f32.mrf.mxu0
        %v2225 = vadd.f32 %v2115, %v2224
        %2226 = vmatmul.f32.gmra.mxu0 %v1565
        %v2227 = vpop.f32.mrf.mxu0
        %v2228 = vadd.f32 %v2118, %v2227
        %2229 = vmatmul.f32.gmra.mxu0 %v1566
        %v2230 = vpop.f32.mrf.mxu0
        %v2231 = vadd.f32 %v2121, %v2230
        %2232 = vmatmul.f32.gmra.mxu0 %v1567
        %v2233 = vpop.f32.mrf.mxu0
        %v2234 = vadd.f32 %v2124, %v2233
        %2235 = vmatmul.f32.gmra.mxu0 %v1568
        %v2236 = vpop.f32.mrf.mxu0
        %v2237 = vadd.f32 %v2127, %v2236
        %2238 = vmatmul.f32.gmra.mxu0 %v1569
        %v2239 = vpop.f32.mrf.mxu0
        %v2240 = vadd.f32 %v2130, %v2239
        %2241 = vmatmul.f32.gmra.mxu0 %v1570
        %v2242 = vpop.f32.mrf.mxu0
        %v2243 = vadd.f32 %v2133, %v2242
        %2244 = vmatmul.f32.gmra.mxu0 %v1571
        %v2245 = vpop.f32.mrf.mxu0
        %v2246 = vadd.f32 %v2136, %v2245
        %2247 = vmatmul.f32.gmra.mxu0 %v1572
        %v2248 = vpop.f32.mrf.mxu0
        %v2249 = vadd.f32 %v2139, %v2248
        %2250 = vmatmul.f32.gmra.mxu0 %v1573
        %v2251 = vpop.f32.mrf.mxu0
        %v2252 = vadd.f32 %v2142, %v2251
        %2253 = vmatmul.f32.gmra.mxu0 %v1574
        %v2254 = vpop.f32.mrf.mxu0
        %v2255 = vadd.f32 %v2145, %v2254
        %2256 = vmatmul.f32.gmra.mxu0 %v1575
        %v2257 = vpop.f32.mrf.mxu0
        %v2258 = vadd.f32 %v2148, %v2257
        %2259 = vmatmul.f32.gmra.mxu0 %v1576
        %v2260 = vpop.f32.mrf.mxu0
        %v2261 = vadd.f32 %v2151, %v2260
        %2262 = vmatmul.f32.gmra.mxu0 %v1577
        %v2263 = vpop.f32.mrf.mxu0
        %v2264 = vadd.f32 %v2154, %v2263
        %2265 = vmatmul.f32.gmra.mxu0 %v1578
        %v2266 = vpop.f32.mrf.mxu0
        %v2267 = vadd.f32 %v2157, %v2266
        %2268 = vmatmul.f32.gmra.mxu0 %v1579
        %v2269 = vpop.f32.mrf.mxu0
        %v2270 = vadd.f32 %v2160, %v2269
        %2271 = vmatmul.f32.gmra.mxu0 %v1580
        %v2272 = vpop.f32.mrf.mxu0
        %v2273 = vadd.f32 %v2163, %v2272
        %2274 = vmatmul.f32.gmra.mxu0 %v1581
        %v2275 = vpop.f32.mrf.mxu0
        %v2276 = vadd.f32 %v2166, %v2275
        %2277 = vdwg.mxu0
        %2278 = vmatpush.msra.mxu0 %v415
        %2279 = vmatpush.msra.mxu0 %v414
        %2280 = vmatpush.msra.mxu0 %v413
        %2281 = vmatpush.msra.mxu0 %v412
        %2282 = vmatpush.msra.mxu0 %v411
        %2283 = vmatpush.msra.mxu0 %v410
        %2284 = vmatpush.msra.mxu0 %v409
        %2285 = vmatpush.msra.mxu0 %v408
        %2286 = vmatpush.msra.mxu0 %v407
        %2287 = vmatpush.msra.mxu0 %v406
        %2288 = vmatpush.msra.mxu0 %v405
        %2289 = vmatpush.msra.mxu0 %v404
        %2290 = vmatpush.msra.mxu0 %v403
        %2291 = vmatpush.msra.mxu0 %v402
        %2292 = vmatpush.msra.mxu0 %v401
        %2293 = vmatpush.msra.mxu0 %v400
        %2294 = vmatmul.f32.gmra.mxu0 %v1491
        %v2295 = vpop.f32.mrf.mxu0
        %v2296 = vadd.f32 %v2186, %v2295
        %2297 = vmatmul.f32.gmra.mxu0 %v1492
        %v2298 = vpop.f32.mrf.mxu0
        %v2299 = vadd.f32 %v2189, %v2298
        %2300 = vmatmul.f32.gmra.mxu0 %v1493
        %v2301 = vpop.f32.mrf.mxu0
        %v2302 = vadd.f32 %v2192, %v2301
        %2303 = vmatmul.f32.gmra.mxu0 %v1494
        %v2304 = vpop.f32.mrf.mxu0
        %v2305 = vadd.f32 %v2195, %v2304
        %2306 = vmatmul.f32.gmra.mxu0 %v1495
        %v2307 = vpop.f32.mrf.mxu0
        %v2308 = vadd.f32 %v2198, %v2307
        %2309 = vmatmul.f32.gmra.mxu0 %v1496
        %v2310 = vpop.f32.mrf.mxu0
        %v2311 = vadd.f32 %v2201, %v2310
        %2312 = vmatmul.f32.gmra.mxu0 %v1497
        %v2313 = vpop.f32.mrf.mxu0
        %v2314 = vadd.f32 %v2204, %v2313
        %2315 = vmatmul.f32.gmra.mxu0 %v1498
        %v2316 = vpop.f32.mrf.mxu0
        %v2317 = vadd.f32 %v2207, %v2316
        %2318 = vmatmul.f32.gmra.mxu0 %v1499
        %v2319 = vpop.f32.mrf.mxu0
        %v2320 = vadd.f32 %v2210, %v2319
        %2321 = vmatmul.f32.gmra.mxu0 %v1500
        %v2322 = vpop.f32.mrf.mxu0
        %v2323 = vadd.f32 %v2213, %v2322
        %2324 = vmatmul.f32.gmra.mxu0 %v1501
        %v2325 = vpop.f32.mrf.mxu0
        %v2326 = vadd.f32 %v2216, %v2325
        %2327 = vmatmul.f32.gmra.mxu0 %v1502
        %v2328 = vpop.f32.mrf.mxu0
        %v2329 = vadd.f32 %v2219, %v2328
        %2330 = vmatmul.f32.gmra.mxu0 %v1503
        %v2331 = vpop.f32.mrf.mxu0
        %v2332 = vadd.f32 %v2222, %v2331
        %2333 = vmatmul.f32.gmra.mxu0 %v1504
        %v2334 = vpop.f32.mrf.mxu0
        %v2335 = vadd.f32 %v2225, %v2334
        %2336 = vmatmul.f32.gmra.mxu0 %v1505
        %v2337 = vpop.f32.mrf.mxu0
        %v2338 = vadd.f32 %v2228, %v2337
        %2339 = vmatmul.f32.gmra.mxu0 %v1506
        %v2340 = vpop.f32.mrf.mxu0
        %v2341 = vadd.f32 %v2231, %v2340
        %2342 = vmatmul.f32.gmra.mxu0 %v1507
        %v2343 = vpop.f32.mrf.mxu0
        %v2344 = vadd.f32 %v2234, %v2343
        %2345 = vmatmul.f32.gmra.mxu0 %v1508
        %v2346 = vpop.f32.mrf.mxu0
        %v2347 = vadd.f32 %v2237, %v2346
        %2348 = vmatmul.f32.gmra.mxu0 %v1509
        %v2349 = vpop.f32.mrf.mxu0
        %v2350 = vadd.f32 %v2240, %v2349
        %2351 = vmatmul.f32.gmra.mxu0 %v1510
        %v2352 = vpop.f32.mrf.mxu0
        %v2353 = vadd.f32 %v2243, %v2352
        %2354 = vmatmul.f32.gmra.mxu0 %v1511
        %v2355 = vpop.f32.mrf.mxu0
        %v2356 = vadd.f32 %v2246, %v2355
        %2357 = vmatmul.f32.gmra.mxu0 %v1512
        %v2358 = vpop.f32.mrf.mxu0
        %v2359 = vadd.f32 %v2249, %v2358
        %2360 = vmatmul.f32.gmra.mxu0 %v1513
        %v2361 = vpop.f32.mrf.mxu0
        %v2362 = vadd.f32 %v2252, %v2361
        %2363 = vmatmul.f32.gmra.mxu0 %v1514
        %v2364 = vpop.f32.mrf.mxu0
        %v2365 = vadd.f32 %v2255, %v2364
        %2366 = vmatmul.f32.gmra.mxu0 %v1515
        %v2367 = vpop.f32.mrf.mxu0
        %v2368 = vadd.f32 %v2258, %v2367
        %2369 = vmatmul.f32.gmra.mxu0 %v1516
        %v2370 = vpop.f32.mrf.mxu0
        %v2371 = vadd.f32 %v2261, %v2370
        %2372 = vmatmul.f32.gmra.mxu0 %v1517
        %v2373 = vpop.f32.mrf.mxu0
        %v2374 = vadd.f32 %v2264, %v2373
        %2375 = vmatmul.f32.gmra.mxu0 %v1518
        %v2376 = vpop.f32.mrf.mxu0
        %v2377 = vadd.f32 %v2267, %v2376
        %2378 = vmatmul.f32.gmra.mxu0 %v1519
        %v2379 = vpop.f32.mrf.mxu0
        %v2380 = vadd.f32 %v2270, %v2379
        %2381 = vmatmul.f32.gmra.mxu0 %v1582
        %v2382 = vpop.f32.mrf.mxu0
        %v2383 = vadd.f32 %v2273, %v2382
        %2384 = vmatmul.f32.gmra.mxu0 %v1583
        %v2385 = vpop.f32.mrf.mxu0
        %v2386 = vadd.f32 %v2276, %v2385
        %2387 = vdwg.mxu0
        %2388 = vmatpush.msra.mxu0 %v431
        %2389 = vmatpush.msra.mxu0 %v430
        %2390 = vmatpush.msra.mxu0 %v429
        %2391 = vmatpush.msra.mxu0 %v428
        %2392 = vmatpush.msra.mxu0 %v427
        %2393 = vmatpush.msra.mxu0 %v426
        %2394 = vmatpush.msra.mxu0 %v425
        %2395 = vmatpush.msra.mxu0 %v424
        %2396 = vmatpush.msra.mxu0 %v423
        %2397 = vmatpush.msra.mxu0 %v422
        %2398 = vmatpush.msra.mxu0 %v421
        %2399 = vmatpush.msra.mxu0 %v420
        %2400 = vmatpush.msra.mxu0 %v419
        %2401 = vmatpush.msra.mxu0 %v418
        %2402 = vmatpush.msra.mxu0 %v417
        %2403 = vmatpush.msra.mxu0 %v416
        %2404 = vmatmul.f32.gmra.mxu0 %v1522
        %v2405 = vpop.f32.mrf.mxu0
        %v2406 = vadd.f32 %v2296, %v2405
        %2407 = vmatmul.f32.gmra.mxu0 %v1523
        %v2408 = vpop.f32.mrf.mxu0
        %v2409 = vadd.f32 %v2299, %v2408
        %2410 = vmatmul.f32.gmra.mxu0 %v1524
        %v2411 = vpop.f32.mrf.mxu0
        %v2412 = vadd.f32 %v2302, %v2411
        %2413 = vmatmul.f32.gmra.mxu0 %v1525
        %v2414 = vpop.f32.mrf.mxu0
        %v2415 = vadd.f32 %v2305, %v2414
        %2416 = vmatmul.f32.gmra.mxu0 %v1526
        %v2417 = vpop.f32.mrf.mxu0
        %v2418 = vadd.f32 %v2308, %v2417
        %2419 = vmatmul.f32.gmra.mxu0 %v1527
        %v2420 = vpop.f32.mrf.mxu0
        %v2421 = vadd.f32 %v2311, %v2420
        %2422 = vmatmul.f32.gmra.mxu0 %v1528
        %v2423 = vpop.f32.mrf.mxu0
        %v2424 = vadd.f32 %v2314, %v2423
        %2425 = vmatmul.f32.gmra.mxu0 %v1529
        %v2426 = vpop.f32.mrf.mxu0
        %v2427 = vadd.f32 %v2317, %v2426
        %2428 = vmatmul.f32.gmra.mxu0 %v1530
        %v2429 = vpop.f32.mrf.mxu0
        %v2430 = vadd.f32 %v2320, %v2429
        %2431 = vmatmul.f32.gmra.mxu0 %v1531
        %v2432 = vpop.f32.mrf.mxu0
        %v2433 = vadd.f32 %v2323, %v2432
        %2434 = vmatmul.f32.gmra.mxu0 %v1532
        %v2435 = vpop.f32.mrf.mxu0
        %v2436 = vadd.f32 %v2326, %v2435
        %2437 = vmatmul.f32.gmra.mxu0 %v1533
        %v2438 = vpop.f32.mrf.mxu0
        %v2439 = vadd.f32 %v2329, %v2438
        %2440 = vmatmul.f32.gmra.mxu0 %v1534
        %v2441 = vpop.f32.mrf.mxu0
        %v2442 = vadd.f32 %v2332, %v2441
        %2443 = vmatmul.f32.gmra.mxu0 %v1535
        %v2444 = vpop.f32.mrf.mxu0
        %v2445 = vadd.f32 %v2335, %v2444
        %2446 = vmatmul.f32.gmra.mxu0 %v1536
        %v2447 = vpop.f32.mrf.mxu0
        %v2448 = vadd.f32 %v2338, %v2447
        %2449 = vmatmul.f32.gmra.mxu0 %v1537
        %v2450 = vpop.f32.mrf.mxu0
        %v2451 = vadd.f32 %v2341, %v2450
        %2452 = vmatmul.f32.gmra.mxu0 %v1538
        %v2453 = vpop.f32.mrf.mxu0
        %v2454 = vadd.f32 %v2344, %v2453
        %2455 = vmatmul.f32.gmra.mxu0 %v1539
        %v2456 = vpop.f32.mrf.mxu0
        %v2457 = vadd.f32 %v2347, %v2456
        %2458 = vmatmul.f32.gmra.mxu0 %v1540
        %v2459 = vpop.f32.mrf.mxu0
        %v2460 = vadd.f32 %v2350, %v2459
        %2461 = vmatmul.f32.gmra.mxu0 %v1541
        %v2462 = vpop.f32.mrf.mxu0
        %v2463 = vadd.f32 %v2353, %v2462
        %2464 = vmatmul.f32.gmra.mxu0 %v1542
        %v2465 = vpop.f32.mrf.mxu0
        %v2466 = vadd.f32 %v2356, %v2465
        %2467 = vmatmul.f32.gmra.mxu0 %v1543
        %v2468 = vpop.f32.mrf.mxu0
        %v2469 = vadd.f32 %v2359, %v2468
        %2470 = vmatmul.f32.gmra.mxu0 %v1544
        %v2471 = vpop.f32.mrf.mxu0
        %v2472 = vadd.f32 %v2362, %v2471
        %2473 = vmatmul.f32.gmra.mxu0 %v1545
        %v2474 = vpop.f32.mrf.mxu0
        %v2475 = vadd.f32 %v2365, %v2474
        %2476 = vmatmul.f32.gmra.mxu0 %v1546
        %v2477 = vpop.f32.mrf.mxu0
        %v2478 = vadd.f32 %v2368, %v2477
        %2479 = vmatmul.f32.gmra.mxu0 %v1547
        %v2480 = vpop.f32.mrf.mxu0
        %v2481 = vadd.f32 %v2371, %v2480
        %2482 = vmatmul.f32.gmra.mxu0 %v1548
        %v2483 = vpop.f32.mrf.mxu0
        %v2484 = vadd.f32 %v2374, %v2483
        %2485 = vmatmul.f32.gmra.mxu0 %v1549
        %v2486 = vpop.f32.mrf.mxu0
        %v2487 = vadd.f32 %v2377, %v2486
        %2488 = vmatmul.f32.gmra.mxu0 %v1550
        %v2489 = vpop.f32.mrf.mxu0
        %v2490 = vadd.f32 %v2380, %v2489
        %2491 = vmatmul.f32.gmra.mxu0 %v1584
        %v2492 = vpop.f32.mrf.mxu0
        %v2493 = vadd.f32 %v2383, %v2492
        %2494 = vmatmul.f32.gmra.mxu0 %v1585
        %v2495 = vpop.f32.mrf.mxu0
        %v2496 = vadd.f32 %v2386, %v2495
        %2497 = vdwg.mxu0
        %2498 = vmatpush.msra.mxu0 %v447
        %2499 = vmatpush.msra.mxu0 %v446
        %2500 = vmatpush.msra.mxu0 %v445
        %2501 = vmatpush.msra.mxu0 %v444
        %2502 = vmatpush.msra.mxu0 %v443
        %2503 = vmatpush.msra.mxu0 %v442
        %2504 = vmatpush.msra.mxu0 %v441
        %2505 = vmatpush.msra.mxu0 %v440
        %2506 = vmatpush.msra.mxu0 %v439
        %2507 = vmatpush.msra.mxu0 %v438
        %2508 = vmatpush.msra.mxu0 %v437
        %2509 = vmatpush.msra.mxu0 %v436
        %2510 = vmatpush.msra.mxu0 %v435
        %2511 = vmatpush.msra.mxu0 %v434
        %2512 = vmatpush.msra.mxu0 %v433
        %2513 = vmatpush.msra.mxu0 %v432
        %2514 = vmatmul.f32.gmra.mxu0 %v1553
        %v2515 = vpop.f32.mrf.mxu0
        %v2516 = vadd.f32 %v2406, %v2515
        %2517 = vmatmul.f32.gmra.mxu0 %v1554
        %v2518 = vpop.f32.mrf.mxu0
        %v2519 = vadd.f32 %v2409, %v2518
        %2520 = vmatmul.f32.gmra.mxu0 %v1555
        %v2521 = vpop.f32.mrf.mxu0
        %v2522 = vadd.f32 %v2412, %v2521
        %2523 = vmatmul.f32.gmra.mxu0 %v1556
        %v2524 = vpop.f32.mrf.mxu0
        %v2525 = vadd.f32 %v2415, %v2524
        %2526 = vmatmul.f32.gmra.mxu0 %v1557
        %v2527 = vpop.f32.mrf.mxu0
        %v2528 = vadd.f32 %v2418, %v2527
        %2529 = vmatmul.f32.gmra.mxu0 %v1558
        %v2530 = vpop.f32.mrf.mxu0
        %v2531 = vadd.f32 %v2421, %v2530
        %2532 = vmatmul.f32.gmra.mxu0 %v1559
        %v2533 = vpop.f32.mrf.mxu0
        %v2534 = vadd.f32 %v2424, %v2533
        %2535 = vmatmul.f32.gmra.mxu0 %v1560
        %v2536 = vpop.f32.mrf.mxu0
        %v2537 = vadd.f32 %v2427, %v2536
        %2538 = vmatmul.f32.gmra.mxu0 %v1561
        %v2539 = vpop.f32.mrf.mxu0
        %v2540 = vadd.f32 %v2430, %v2539
        %2541 = vmatmul.f32.gmra.mxu0 %v1562
        %v2542 = vpop.f32.mrf.mxu0
        %v2543 = vadd.f32 %v2433, %v2542
        %2544 = vmatmul.f32.gmra.mxu0 %v1563
        %v2545 = vpop.f32.mrf.mxu0
        %v2546 = vadd.f32 %v2436, %v2545
        %2547 = vmatmul.f32.gmra.mxu0 %v1564
        %v2548 = vpop.f32.mrf.mxu0
        %v2549 = vadd.f32 %v2439, %v2548
        %2550 = vmatmul.f32.gmra.mxu0 %v1565
        %v2551 = vpop.f32.mrf.mxu0
        %v2552 = vadd.f32 %v2442, %v2551
        %2553 = vmatmul.f32.gmra.mxu0 %v1566
        %v2554 = vpop.f32.mrf.mxu0
        %v2555 = vadd.f32 %v2445, %v2554
        %2556 = vmatmul.f32.gmra.mxu0 %v1567
        %v2557 = vpop.f32.mrf.mxu0
        %v2558 = vadd.f32 %v2448, %v2557
        %2559 = vmatmul.f32.gmra.mxu0 %v1568
        %v2560 = vpop.f32.mrf.mxu0
        %v2561 = vadd.f32 %v2451, %v2560
        %2562 = vmatmul.f32.gmra.mxu0 %v1569
        %v2563 = vpop.f32.mrf.mxu0
        %v2564 = vadd.f32 %v2454, %v2563
        %2565 = vmatmul.f32.gmra.mxu0 %v1570
        %v2566 = vpop.f32.mrf.mxu0
        %v2567 = vadd.f32 %v2457, %v2566
        %2568 = vmatmul.f32.gmra.mxu0 %v1571
        %v2569 = vpop.f32.mrf.mxu0
        %v2570 = vadd.f32 %v2460, %v2569
        %2571 = vmatmul.f32.gmra.mxu0 %v1572
        %v2572 = vpop.f32.mrf.mxu0
        %v2573 = vadd.f32 %v2463, %v2572
        %2574 = vmatmul.f32.gmra.mxu0 %v1573
        %v2575 = vpop.f32.mrf.mxu0
        %v2576 = vadd.f32 %v2466, %v2575
        %2577 = vmatmul.f32.gmra.mxu0 %v1574
        %v2578 = vpop.f32.mrf.mxu0
        %v2579 = vadd.f32 %v2469, %v2578
        %2580 = vmatmul.f32.gmra.mxu0 %v1575
        %v2581 = vpop.f32.mrf.mxu0
        %v2582 = vadd.f32 %v2472, %v2581
        %2583 = vmatmul.f32.gmra.mxu0 %v1576
        %v2584 = vpop.f32.mrf.mxu0
        %v2585 = vadd.f32 %v2475, %v2584
        %2586 = vmatmul.f32.gmra.mxu0 %v1577
        %v2587 = vpop.f32.mrf.mxu0
        %v2588 = vadd.f32 %v2478, %v2587
        %2589 = vmatmul.f32.gmra.mxu0 %v1578
        %v2590 = vpop.f32.mrf.mxu0
        %v2591 = vadd.f32 %v2481, %v2590
        %2592 = vmatmul.f32.gmra.mxu0 %v1579
        %v2593 = vpop.f32.mrf.mxu0
        %v2594 = vadd.f32 %v2484, %v2593
        %2595 = vmatmul.f32.gmra.mxu0 %v1580
        %v2596 = vpop.f32.mrf.mxu0
        %v2597 = vadd.f32 %v2487, %v2596
        %2598 = vmatmul.f32.gmra.mxu0 %v1581
        %v2599 = vpop.f32.mrf.mxu0
        %v2600 = vadd.f32 %v2490, %v2599
        %2601 = vmatmul.f32.gmra.mxu0 %v1586
        %v2602 = vpop.f32.mrf.mxu0
        %v2603 = vadd.f32 %v2493, %v2602
        %2604 = vmatmul.f32.gmra.mxu0 %v1587
        %v2605 = vpop.f32.mrf.mxu0
        %v2606 = vadd.f32 %v2496, %v2605
        %2607 = vdwg.mxu0
        %2608 = vmatpush.msra.mxu0 %v463
        %2609 = vmatpush.msra.mxu0 %v462
        %2610 = vmatpush.msra.mxu0 %v461
        %2611 = vmatpush.msra.mxu0 %v460
        %2612 = vmatpush.msra.mxu0 %v459
        %2613 = vmatpush.msra.mxu0 %v458
        %2614 = vmatpush.msra.mxu0 %v457
        %2615 = vmatpush.msra.mxu0 %v456
        %2616 = vmatpush.msra.mxu0 %v455
        %2617 = vmatpush.msra.mxu0 %v454
        %2618 = vmatpush.msra.mxu0 %v453
        %2619 = vmatpush.msra.mxu0 %v452
        %2620 = vmatpush.msra.mxu0 %v451
        %2621 = vmatpush.msra.mxu0 %v450
        %2622 = vmatpush.msra.mxu0 %v449
        %2623 = vmatpush.msra.mxu0 %v448
        %2624 = vmatmul.f32.gmra.mxu0 %v1588
        %v2625 = vpop.f32.mrf.mxu0
        %v2626 = vadd.f32 %v2516, %v2625
        %2627 = vmatmul.f32.gmra.mxu0 %v1589
        %v2628 = vpop.f32.mrf.mxu0
        %v2629 = vadd.f32 %v2519, %v2628
        %2630 = vmatmul.f32.gmra.mxu0 %v1590
        %v2631 = vpop.f32.mrf.mxu0
        %v2632 = vadd.f32 %v2522, %v2631
        %2633 = vmatmul.f32.gmra.mxu0 %v1591
        %v2634 = vpop.f32.mrf.mxu0
        %v2635 = vadd.f32 %v2525, %v2634
        %2636 = vmatmul.f32.gmra.mxu0 %v1592
        %v2637 = vpop.f32.mrf.mxu0
        %v2638 = vadd.f32 %v2528, %v2637
        %2639 = vmatmul.f32.gmra.mxu0 %v1593
        %v2640 = vpop.f32.mrf.mxu0
        %v2641 = vadd.f32 %v2531, %v2640
        %2642 = vmatmul.f32.gmra.mxu0 %v1594
        %v2643 = vpop.f32.mrf.mxu0
        %v2644 = vadd.f32 %v2534, %v2643
        %2645 = vmatmul.f32.gmra.mxu0 %v1595
        %v2646 = vpop.f32.mrf.mxu0
        %v2647 = vadd.f32 %v2537, %v2646
        %2648 = vmatmul.f32.gmra.mxu0 %v1596
        %v2649 = vpop.f32.mrf.mxu0
        %v2650 = vadd.f32 %v2540, %v2649
        %2651 = vmatmul.f32.gmra.mxu0 %v1597
        %v2652 = vpop.f32.mrf.mxu0
        %v2653 = vadd.f32 %v2543, %v2652
        %2654 = vmatmul.f32.gmra.mxu0 %v1598
        %v2655 = vpop.f32.mrf.mxu0
        %v2656 = vadd.f32 %v2546, %v2655
        %2657 = vmatmul.f32.gmra.mxu0 %v1599
        %v2658 = vpop.f32.mrf.mxu0
        %v2659 = vadd.f32 %v2549, %v2658
        %2660 = vmatmul.f32.gmra.mxu0 %v1600
        %v2661 = vpop.f32.mrf.mxu0
        %v2662 = vadd.f32 %v2552, %v2661
        %2663 = vmatmul.f32.gmra.mxu0 %v1601
        %v2664 = vpop.f32.mrf.mxu0
        %v2665 = vadd.f32 %v2555, %v2664
        %2666 = vmatmul.f32.gmra.mxu0 %v1602
        %v2667 = vpop.f32.mrf.mxu0
        %v2668 = vadd.f32 %v2558, %v2667
        %2669 = vmatmul.f32.gmra.mxu0 %v1603
        %v2670 = vpop.f32.mrf.mxu0
        %v2671 = vadd.f32 %v2561, %v2670
        %2672 = vmatmul.f32.gmra.mxu0 %v1604
        %v2673 = vpop.f32.mrf.mxu0
        %v2674 = vadd.f32 %v2564, %v2673
        %2675 = vmatmul.f32.gmra.mxu0 %v1605
        %v2676 = vpop.f32.mrf.mxu0
        %v2677 = vadd.f32 %v2567, %v2676
        %2678 = vmatmul.f32.gmra.mxu0 %v1606
        %v2679 = vpop.f32.mrf.mxu0
        %v2680 = vadd.f32 %v2570, %v2679
        %2681 = vmatmul.f32.gmra.mxu0 %v1607
        %v2682 = vpop.f32.mrf.mxu0
        %v2683 = vadd.f32 %v2573, %v2682
        %2684 = vmatmul.f32.gmra.mxu0 %v1608
        %v2685 = vpop.f32.mrf.mxu0
        %v2686 = vadd.f32 %v2576, %v2685
        %2687 = vmatmul.f32.gmra.mxu0 %v1609
        %v2688 = vpop.f32.mrf.mxu0
        %v2689 = vadd.f32 %v2579, %v2688
        %2690 = vmatmul.f32.gmra.mxu0 %v1610
        %v2691 = vpop.f32.mrf.mxu0
        %v2692 = vadd.f32 %v2582, %v2691
        %2693 = vmatmul.f32.gmra.mxu0 %v1611
        %v2694 = vpop.f32.mrf.mxu0
        %v2695 = vadd.f32 %v2585, %v2694
        %2696 = vmatmul.f32.gmra.mxu0 %v1612
        %v2697 = vpop.f32.mrf.mxu0
        %v2698 = vadd.f32 %v2588, %v2697
        %2699 = vmatmul.f32.gmra.mxu0 %v1613
        %v2700 = vpop.f32.mrf.mxu0
        %v2701 = vadd.f32 %v2591, %v2700
        %2702 = vmatmul.f32.gmra.mxu0 %v1614
        %v2703 = vpop.f32.mrf.mxu0
        %v2704 = vadd.f32 %v2594, %v2703
        %2705 = vmatmul.f32.gmra.mxu0 %v1615
        %v2706 = vpop.f32.mrf.mxu0
        %v2707 = vadd.f32 %v2597, %v2706
        %2708 = vmatmul.f32.gmra.mxu0 %v1616
        %v2709 = vpop.f32.mrf.mxu0
        %v2710 = vadd.f32 %v2600, %v2709
        %2711 = vmatmul.f32.gmra.mxu0 %v1617
        %v2712 = vpop.f32.mrf.mxu0
        %v2713 = vadd.f32 %v2603, %v2712
        %2714 = vmatmul.f32.gmra.mxu0 %v1618
        %v2715 = vpop.f32.mrf.mxu0
        %v2716 = vadd.f32 %v2606, %v2715
        %2717 = vdwg.mxu0
        %2718 = vmatpush.msra.mxu0 %v479
        %2719 = vmatpush.msra.mxu0 %v478
        %2720 = vmatpush.msra.mxu0 %v477
        %2721 = vmatpush.msra.mxu0 %v476
        %2722 = vmatpush.msra.mxu0 %v475
        %2723 = vmatpush.msra.mxu0 %v474
        %2724 = vmatpush.msra.mxu0 %v473
        %2725 = vmatpush.msra.mxu0 %v472
        %2726 = vmatpush.msra.mxu0 %v471
        %2727 = vmatpush.msra.mxu0 %v470
        %2728 = vmatpush.msra.mxu0 %v469
        %2729 = vmatpush.msra.mxu0 %v468
        %2730 = vmatpush.msra.mxu0 %v467
        %2731 = vmatpush.msra.mxu0 %v466
        %2732 = vmatpush.msra.mxu0 %v465
        %2733 = vmatpush.msra.mxu0 %v464
        %2734 = vmatmul.f32.gmra.mxu0 %v1619
        %v2735 = vpop.f32.mrf.mxu0
        %v2736 = vadd.f32 %v2626, %v2735
        %2737 = vmatmul.f32.gmra.mxu0 %v1620
        %v2738 = vpop.f32.mrf.mxu0
        %v2739 = vadd.f32 %v2629, %v2738
        %2740 = vmatmul.f32.gmra.mxu0 %v1621
        %v2741 = vpop.f32.mrf.mxu0
        %v2742 = vadd.f32 %v2632, %v2741
        %2743 = vmatmul.f32.gmra.mxu0 %v1622
        %v2744 = vpop.f32.mrf.mxu0
        %v2745 = vadd.f32 %v2635, %v2744
        %2746 = vmatmul.f32.gmra.mxu0 %v1623
        %v2747 = vpop.f32.mrf.mxu0
        %v2748 = vadd.f32 %v2638, %v2747
        %2749 = vmatmul.f32.gmra.mxu0 %v1624
        %v2750 = vpop.f32.mrf.mxu0
        %v2751 = vadd.f32 %v2641, %v2750
        %2752 = vmatmul.f32.gmra.mxu0 %v1625
        %v2753 = vpop.f32.mrf.mxu0
        %v2754 = vadd.f32 %v2644, %v2753
        %2755 = vmatmul.f32.gmra.mxu0 %v1626
        %v2756 = vpop.f32.mrf.mxu0
        %v2757 = vadd.f32 %v2647, %v2756
        %2758 = vmatmul.f32.gmra.mxu0 %v1627
        %v2759 = vpop.f32.mrf.mxu0
        %v2760 = vadd.f32 %v2650, %v2759
        %2761 = vmatmul.f32.gmra.mxu0 %v1628
        %v2762 = vpop.f32.mrf.mxu0
        %v2763 = vadd.f32 %v2653, %v2762
        %2764 = vmatmul.f32.gmra.mxu0 %v1629
        %v2765 = vpop.f32.mrf.mxu0
        %v2766 = vadd.f32 %v2656, %v2765
        %2767 = vmatmul.f32.gmra.mxu0 %v1630
        %v2768 = vpop.f32.mrf.mxu0
        %v2769 = vadd.f32 %v2659, %v2768
        %2770 = vmatmul.f32.gmra.mxu0 %v1631
        %v2771 = vpop.f32.mrf.mxu0
        %v2772 = vadd.f32 %v2662, %v2771
        %2773 = vmatmul.f32.gmra.mxu0 %v1632
        %v2774 = vpop.f32.mrf.mxu0
        %v2775 = vadd.f32 %v2665, %v2774
        %2776 = vmatmul.f32.gmra.mxu0 %v1633
        %v2777 = vpop.f32.mrf.mxu0
        %v2778 = vadd.f32 %v2668, %v2777
        %2779 = vmatmul.f32.gmra.mxu0 %v1634
        %v2780 = vpop.f32.mrf.mxu0
        %v2781 = vadd.f32 %v2671, %v2780
        %2782 = vmatmul.f32.gmra.mxu0 %v1635
        %v2783 = vpop.f32.mrf.mxu0
        %v2784 = vadd.f32 %v2674, %v2783
        %2785 = vmatmul.f32.gmra.mxu0 %v1636
        %v2786 = vpop.f32.mrf.mxu0
        %v2787 = vadd.f32 %v2677, %v2786
        %2788 = vmatmul.f32.gmra.mxu0 %v1637
        %v2789 = vpop.f32.mrf.mxu0
        %v2790 = vadd.f32 %v2680, %v2789
        %2791 = vmatmul.f32.gmra.mxu0 %v1638
        %v2792 = vpop.f32.mrf.mxu0
        %v2793 = vadd.f32 %v2683, %v2792
        %2794 = vmatmul.f32.gmra.mxu0 %v1639
        %v2795 = vpop.f32.mrf.mxu0
        %v2796 = vadd.f32 %v2686, %v2795
        %2797 = vmatmul.f32.gmra.mxu0 %v1640
        %v2798 = vpop.f32.mrf.mxu0
        %v2799 = vadd.f32 %v2689, %v2798
        %2800 = vmatmul.f32.gmra.mxu0 %v1641
        %v2801 = vpop.f32.mrf.mxu0
        %v2802 = vadd.f32 %v2692, %v2801
        %2803 = vmatmul.f32.gmra.mxu0 %v1642
        %v2804 = vpop.f32.mrf.mxu0
        %v2805 = vadd.f32 %v2695, %v2804
        %2806 = vmatmul.f32.gmra.mxu0 %v1643
        %v2807 = vpop.f32.mrf.mxu0
        %v2808 = vadd.f32 %v2698, %v2807
        %2809 = vmatmul.f32.gmra.mxu0 %v1644
        %v2810 = vpop.f32.mrf.mxu0
        %v2811 = vadd.f32 %v2701, %v2810
        %2812 = vmatmul.f32.gmra.mxu0 %v1645
        %v2813 = vpop.f32.mrf.mxu0
        %v2814 = vadd.f32 %v2704, %v2813
        %2815 = vmatmul.f32.gmra.mxu0 %v1646
        %v2816 = vpop.f32.mrf.mxu0
        %v2817 = vadd.f32 %v2707, %v2816
        %2818 = vmatmul.f32.gmra.mxu0 %v1647
        %v2819 = vpop.f32.mrf.mxu0
        %v2820 = vadd.f32 %v2710, %v2819
        %2821 = vmatmul.f32.gmra.mxu0 %v1648
        %v2822 = vpop.f32.mrf.mxu0
        %v2823 = vadd.f32 %v2713, %v2822
        %2824 = vmatmul.f32.gmra.mxu0 %v1649
        %v2825 = vpop.f32.mrf.mxu0
        %v2826 = vadd.f32 %v2716, %v2825
        %2827 = vdwg.mxu0
        %2828 = vmatpush.msra.mxu0 %v495
        %2829 = vmatpush.msra.mxu0 %v494
        %2830 = vmatpush.msra.mxu0 %v493
        %2831 = vmatpush.msra.mxu0 %v492
        %2832 = vmatpush.msra.mxu0 %v491
        %2833 = vmatpush.msra.mxu0 %v490
        %2834 = vmatpush.msra.mxu0 %v489
        %2835 = vmatpush.msra.mxu0 %v488
        %2836 = vmatpush.msra.mxu0 %v487
        %2837 = vmatpush.msra.mxu0 %v486
        %2838 = vmatpush.msra.mxu0 %v485
        %2839 = vmatpush.msra.mxu0 %v484
        %2840 = vmatpush.msra.mxu0 %v483
        %2841 = vmatpush.msra.mxu0 %v482
        %2842 = vmatpush.msra.mxu0 %v481
        %2843 = vmatpush.msra.mxu0 %v480
        %2844 = vmatmul.f32.gmra.mxu0 %v1555
        %v2845 = vpop.f32.mrf.mxu0
        %v2846 = vadd.f32 %v2736, %v2845
        %2847 = vmatmul.f32.gmra.mxu0 %v1556
        %v2848 = vpop.f32.mrf.mxu0
        %v2849 = vadd.f32 %v2739, %v2848
        %2850 = vmatmul.f32.gmra.mxu0 %v1557
        %v2851 = vpop.f32.mrf.mxu0
        %v2852 = vadd.f32 %v2742, %v2851
        %2853 = vmatmul.f32.gmra.mxu0 %v1558
        %v2854 = vpop.f32.mrf.mxu0
        %v2855 = vadd.f32 %v2745, %v2854
        %2856 = vmatmul.f32.gmra.mxu0 %v1559
        %v2857 = vpop.f32.mrf.mxu0
        %v2858 = vadd.f32 %v2748, %v2857
        %2859 = vmatmul.f32.gmra.mxu0 %v1560
        %v2860 = vpop.f32.mrf.mxu0
        %v2861 = vadd.f32 %v2751, %v2860
        %2862 = vmatmul.f32.gmra.mxu0 %v1561
        %v2863 = vpop.f32.mrf.mxu0
        %v2864 = vadd.f32 %v2754, %v2863
        %2865 = vmatmul.f32.gmra.mxu0 %v1562
        %v2866 = vpop.f32.mrf.mxu0
        %v2867 = vadd.f32 %v2757, %v2866
        %2868 = vmatmul.f32.gmra.mxu0 %v1563
        %v2869 = vpop.f32.mrf.mxu0
        %v2870 = vadd.f32 %v2760, %v2869
        %2871 = vmatmul.f32.gmra.mxu0 %v1564
        %v2872 = vpop.f32.mrf.mxu0
        %v2873 = vadd.f32 %v2763, %v2872
        %2874 = vmatmul.f32.gmra.mxu0 %v1565
        %v2875 = vpop.f32.mrf.mxu0
        %v2876 = vadd.f32 %v2766, %v2875
        %2877 = vmatmul.f32.gmra.mxu0 %v1566
        %v2878 = vpop.f32.mrf.mxu0
        %v2879 = vadd.f32 %v2769, %v2878
        %2880 = vmatmul.f32.gmra.mxu0 %v1567
        %v2881 = vpop.f32.mrf.mxu0
        %v2882 = vadd.f32 %v2772, %v2881
        %2883 = vmatmul.f32.gmra.mxu0 %v1568
        %v2884 = vpop.f32.mrf.mxu0
        %v2885 = vadd.f32 %v2775, %v2884
        %2886 = vmatmul.f32.gmra.mxu0 %v1569
        %v2887 = vpop.f32.mrf.mxu0
        %v2888 = vadd.f32 %v2778, %v2887
        %2889 = vmatmul.f32.gmra.mxu0 %v1570
        %v2890 = vpop.f32.mrf.mxu0
        %v2891 = vadd.f32 %v2781, %v2890
        %2892 = vmatmul.f32.gmra.mxu0 %v1571
        %v2893 = vpop.f32.mrf.mxu0
        %v2894 = vadd.f32 %v2784, %v2893
        %2895 = vmatmul.f32.gmra.mxu0 %v1572
        %v2896 = vpop.f32.mrf.mxu0
        %v2897 = vadd.f32 %v2787, %v2896
        %2898 = vmatmul.f32.gmra.mxu0 %v1573
        %v2899 = vpop.f32.mrf.mxu0
        %v2900 = vadd.f32 %v2790, %v2899
        %2901 = vmatmul.f32.gmra.mxu0 %v1574
        %v2902 = vpop.f32.mrf.mxu0
        %v2903 = vadd.f32 %v2793, %v2902
        %2904 = vmatmul.f32.gmra.mxu0 %v1575
        %v2905 = vpop.f32.mrf.mxu0
        %v2906 = vadd.f32 %v2796, %v2905
        %2907 = vmatmul.f32.gmra.mxu0 %v1576
        %v2908 = vpop.f32.mrf.mxu0
        %v2909 = vadd.f32 %v2799, %v2908
        %2910 = vmatmul.f32.gmra.mxu0 %v1577
        %v2911 = vpop.f32.mrf.mxu0
        %v2912 = vadd.f32 %v2802, %v2911
        %2913 = vmatmul.f32.gmra.mxu0 %v1578
        %v2914 = vpop.f32.mrf.mxu0
        %v2915 = vadd.f32 %v2805, %v2914
        %2916 = vmatmul.f32.gmra.mxu0 %v1579
        %v2917 = vpop.f32.mrf.mxu0
        %v2918 = vadd.f32 %v2808, %v2917
        %2919 = vmatmul.f32.gmra.mxu0 %v1580
        %v2920 = vpop.f32.mrf.mxu0
        %v2921 = vadd.f32 %v2811, %v2920
        %2922 = vmatmul.f32.gmra.mxu0 %v1581
        %v2923 = vpop.f32.mrf.mxu0
        %v2924 = vadd.f32 %v2814, %v2923
        %2925 = vmatmul.f32.gmra.mxu0 %v1586
        %v2926 = vpop.f32.mrf.mxu0
        %v2927 = vadd.f32 %v2817, %v2926
        %2928 = vmatmul.f32.gmra.mxu0 %v1587
        %v2929 = vpop.f32.mrf.mxu0
        %v2930 = vadd.f32 %v2820, %v2929
        %2931 = vmatmul.f32.gmra.mxu0 %v1650
        %v2932 = vpop.f32.mrf.mxu0
        %v2933 = vadd.f32 %v2823, %v2932
        %2934 = vmatmul.f32.gmra.mxu0 %v1651
        %v2935 = vpop.f32.mrf.mxu0
        %v2936 = vadd.f32 %v2826, %v2935
        %2937 = vdwg.mxu0
        %2938 = vmatpush.msra.mxu0 %v511
        %2939 = vmatpush.msra.mxu0 %v510
        %2940 = vmatpush.msra.mxu0 %v509
        %2941 = vmatpush.msra.mxu0 %v508
        %2942 = vmatpush.msra.mxu0 %v507
        %2943 = vmatpush.msra.mxu0 %v506
        %2944 = vmatpush.msra.mxu0 %v505
        %2945 = vmatpush.msra.mxu0 %v504
        %2946 = vmatpush.msra.mxu0 %v503
        %2947 = vmatpush.msra.mxu0 %v502
        %2948 = vmatpush.msra.mxu0 %v501
        %2949 = vmatpush.msra.mxu0 %v500
        %2950 = vmatpush.msra.mxu0 %v499
        %2951 = vmatpush.msra.mxu0 %v498
        %2952 = vmatpush.msra.mxu0 %v497
        %2953 = vmatpush.msra.mxu0 %v496
        %2954 = vmatmul.f32.gmra.mxu0 %v1590
        %v2955 = vpop.f32.mrf.mxu0
        %v2956 = vadd.f32 %v2846, %v2955
        %2957 = vmatmul.f32.gmra.mxu0 %v1591
        %v2958 = vpop.f32.mrf.mxu0
        %v2959 = vadd.f32 %v2849, %v2958
        %2960 = vmatmul.f32.gmra.mxu0 %v1592
        %v2961 = vpop.f32.mrf.mxu0
        %v2962 = vadd.f32 %v2852, %v2961
        %2963 = vmatmul.f32.gmra.mxu0 %v1593
        %v2964 = vpop.f32.mrf.mxu0
        %v2965 = vadd.f32 %v2855, %v2964
        %2966 = vmatmul.f32.gmra.mxu0 %v1594
        %v2967 = vpop.f32.mrf.mxu0
        %v2968 = vadd.f32 %v2858, %v2967
        %2969 = vmatmul.f32.gmra.mxu0 %v1595
        %v2970 = vpop.f32.mrf.mxu0
        %v2971 = vadd.f32 %v2861, %v2970
        %2972 = vmatmul.f32.gmra.mxu0 %v1596
        %v2973 = vpop.f32.mrf.mxu0
        %v2974 = vadd.f32 %v2864, %v2973
        %2975 = vmatmul.f32.gmra.mxu0 %v1597
        %v2976 = vpop.f32.mrf.mxu0
        %v2977 = vadd.f32 %v2867, %v2976
        %2978 = vmatmul.f32.gmra.mxu0 %v1598
        %v2979 = vpop.f32.mrf.mxu0
        %v2980 = vadd.f32 %v2870, %v2979
        %2981 = vmatmul.f32.gmra.mxu0 %v1599
        %v2982 = vpop.f32.mrf.mxu0
        %v2983 = vadd.f32 %v2873, %v2982
        %2984 = vmatmul.f32.gmra.mxu0 %v1600
        %v2985 = vpop.f32.mrf.mxu0
        %v2986 = vadd.f32 %v2876, %v2985
        %2987 = vmatmul.f32.gmra.mxu0 %v1601
        %v2988 = vpop.f32.mrf.mxu0
        %v2989 = vadd.f32 %v2879, %v2988
        %2990 = vmatmul.f32.gmra.mxu0 %v1602
        %v2991 = vpop.f32.mrf.mxu0
        %v2992 = vadd.f32 %v2882, %v2991
        %2993 = vmatmul.f32.gmra.mxu0 %v1603
        %v2994 = vpop.f32.mrf.mxu0
        %v2995 = vadd.f32 %v2885, %v2994
        %2996 = vmatmul.f32.gmra.mxu0 %v1604
        %v2997 = vpop.f32.mrf.mxu0
        %v2998 = vadd.f32 %v2888, %v2997
        %2999 = vmatmul.f32.gmra.mxu0 %v1605
        %v3000 = vpop.f32.mrf.mxu0
        %v3001 = vadd.f32 %v2891, %v3000
        %3002 = vmatmul.f32.gmra.mxu0 %v1606
        %v3003 = vpop.f32.mrf.mxu0
        %v3004 = vadd.f32 %v2894, %v3003
        %3005 = vmatmul.f32.gmra.mxu0 %v1607
        %v3006 = vpop.f32.mrf.mxu0
        %v3007 = vadd.f32 %v2897, %v3006
        %3008 = vmatmul.f32.gmra.mxu0 %v1608
        %v3009 = vpop.f32.mrf.mxu0
        %v3010 = vadd.f32 %v2900, %v3009
        %3011 = vmatmul.f32.gmra.mxu0 %v1609
        %v3012 = vpop.f32.mrf.mxu0
        %v3013 = vadd.f32 %v2903, %v3012
        %3014 = vmatmul.f32.gmra.mxu0 %v1610
        %v3015 = vpop.f32.mrf.mxu0
        %v3016 = vadd.f32 %v2906, %v3015
        %3017 = vmatmul.f32.gmra.mxu0 %v1611
        %v3018 = vpop.f32.mrf.mxu0
        %v3019 = vadd.f32 %v2909, %v3018
        %3020 = vmatmul.f32.gmra.mxu0 %v1612
        %v3021 = vpop.f32.mrf.mxu0
        %v3022 = vadd.f32 %v2912, %v3021
        %3023 = vmatmul.f32.gmra.mxu0 %v1613
        %v3024 = vpop.f32.mrf.mxu0
        %v3025 = vadd.f32 %v2915, %v3024
        %3026 = vmatmul.f32.gmra.mxu0 %v1614
        %v3027 = vpop.f32.mrf.mxu0
        %v3028 = vadd.f32 %v2918, %v3027
        %3029 = vmatmul.f32.gmra.mxu0 %v1615
        %v3030 = vpop.f32.mrf.mxu0
        %v3031 = vadd.f32 %v2921, %v3030
        %3032 = vmatmul.f32.gmra.mxu0 %v1616
        %v3033 = vpop.f32.mrf.mxu0
        %v3034 = vadd.f32 %v2924, %v3033
        %3035 = vmatmul.f32.gmra.mxu0 %v1617
        %v3036 = vpop.f32.mrf.mxu0
        %v3037 = vadd.f32 %v2927, %v3036
        %3038 = vmatmul.f32.gmra.mxu0 %v1618
        %v3039 = vpop.f32.mrf.mxu0
        %v3040 = vadd.f32 %v2930, %v3039
        %3041 = vmatmul.f32.gmra.mxu0 %v1652
        %v3042 = vpop.f32.mrf.mxu0
        %v3043 = vadd.f32 %v2933, %v3042
        %3044 = vmatmul.f32.gmra.mxu0 %v1653
        %v3045 = vpop.f32.mrf.mxu0
        %v3046 = vadd.f32 %v2936, %v3045
        %3047 = vdwg.mxu0
        %3048 = vmatpush.msra.mxu0 %v527
        %3049 = vmatpush.msra.mxu0 %v526
        %3050 = vmatpush.msra.mxu0 %v525
        %3051 = vmatpush.msra.mxu0 %v524
        %3052 = vmatpush.msra.mxu0 %v523
        %3053 = vmatpush.msra.mxu0 %v522
        %3054 = vmatpush.msra.mxu0 %v521
        %3055 = vmatpush.msra.mxu0 %v520
        %3056 = vmatpush.msra.mxu0 %v519
        %3057 = vmatpush.msra.mxu0 %v518
        %3058 = vmatpush.msra.mxu0 %v517
        %3059 = vmatpush.msra.mxu0 %v516
        %3060 = vmatpush.msra.mxu0 %v515
        %3061 = vmatpush.msra.mxu0 %v514
        %3062 = vmatpush.msra.mxu0 %v513
        %3063 = vmatpush.msra.mxu0 %v512
        %3064 = vmatmul.f32.gmra.mxu0 %v1621
        %v3065 = vpop.f32.mrf.mxu0
        %v3066 = vadd.f32 %v2956, %v3065
        %3067 = vmatmul.f32.gmra.mxu0 %v1622
        %v3068 = vpop.f32.mrf.mxu0
        %v3069 = vadd.f32 %v2959, %v3068
        %3070 = vmatmul.f32.gmra.mxu0 %v1623
        %v3071 = vpop.f32.mrf.mxu0
        %v3072 = vadd.f32 %v2962, %v3071
        %3073 = vmatmul.f32.gmra.mxu0 %v1624
        %v3074 = vpop.f32.mrf.mxu0
        %v3075 = vadd.f32 %v2965, %v3074
        %3076 = vmatmul.f32.gmra.mxu0 %v1625
        %v3077 = vpop.f32.mrf.mxu0
        %v3078 = vadd.f32 %v2968, %v3077
        %3079 = vmatmul.f32.gmra.mxu0 %v1626
        %v3080 = vpop.f32.mrf.mxu0
        %v3081 = vadd.f32 %v2971, %v3080
        %3082 = vmatmul.f32.gmra.mxu0 %v1627
        %v3083 = vpop.f32.mrf.mxu0
        %v3084 = vadd.f32 %v2974, %v3083
        %3085 = vmatmul.f32.gmra.mxu0 %v1628
        %v3086 = vpop.f32.mrf.mxu0
        %v3087 = vadd.f32 %v2977, %v3086
        %3088 = vmatmul.f32.gmra.mxu0 %v1629
        %v3089 = vpop.f32.mrf.mxu0
        %v3090 = vadd.f32 %v2980, %v3089
        %3091 = vmatmul.f32.gmra.mxu0 %v1630
        %v3092 = vpop.f32.mrf.mxu0
        %v3093 = vadd.f32 %v2983, %v3092
        %3094 = vmatmul.f32.gmra.mxu0 %v1631
        %v3095 = vpop.f32.mrf.mxu0
        %v3096 = vadd.f32 %v2986, %v3095
        %3097 = vmatmul.f32.gmra.mxu0 %v1632
        %v3098 = vpop.f32.mrf.mxu0
        %v3099 = vadd.f32 %v2989, %v3098
        %3100 = vmatmul.f32.gmra.mxu0 %v1633
        %v3101 = vpop.f32.mrf.mxu0
        %v3102 = vadd.f32 %v2992, %v3101
        %3103 = vmatmul.f32.gmra.mxu0 %v1634
        %v3104 = vpop.f32.mrf.mxu0
        %v3105 = vadd.f32 %v2995, %v3104
        %3106 = vmatmul.f32.gmra.mxu0 %v1635
        %v3107 = vpop.f32.mrf.mxu0
        %v3108 = vadd.f32 %v2998, %v3107
        %3109 = vmatmul.f32.gmra.mxu0 %v1636
        %v3110 = vpop.f32.mrf.mxu0
        %v3111 = vadd.f32 %v3001, %v3110
        %3112 = vmatmul.f32.gmra.mxu0 %v1637
        %v3113 = vpop.f32.mrf.mxu0
        %v3114 = vadd.f32 %v3004, %v3113
        %3115 = vmatmul.f32.gmra.mxu0 %v1638
        %v3116 = vpop.f32.mrf.mxu0
        %v3117 = vadd.f32 %v3007, %v3116
        %3118 = vmatmul.f32.gmra.mxu0 %v1639
        %v3119 = vpop.f32.mrf.mxu0
        %v3120 = vadd.f32 %v3010, %v3119
        %3121 = vmatmul.f32.gmra.mxu0 %v1640
        %v3122 = vpop.f32.mrf.mxu0
        %v3123 = vadd.f32 %v3013, %v3122
        %3124 = vmatmul.f32.gmra.mxu0 %v1641
        %v3125 = vpop.f32.mrf.mxu0
        %v3126 = vadd.f32 %v3016, %v3125
        %3127 = vmatmul.f32.gmra.mxu0 %v1642
        %v3128 = vpop.f32.mrf.mxu0
        %v3129 = vadd.f32 %v3019, %v3128
        %3130 = vmatmul.f32.gmra.mxu0 %v1643
        %v3131 = vpop.f32.mrf.mxu0
        %v3132 = vadd.f32 %v3022, %v3131
        %3133 = vmatmul.f32.gmra.mxu0 %v1644
        %v3134 = vpop.f32.mrf.mxu0
        %v3135 = vadd.f32 %v3025, %v3134
        %3136 = vmatmul.f32.gmra.mxu0 %v1645
        %v3137 = vpop.f32.mrf.mxu0
        %v3138 = vadd.f32 %v3028, %v3137
        %3139 = vmatmul.f32.gmra.mxu0 %v1646
        %v3140 = vpop.f32.mrf.mxu0
        %v3141 = vadd.f32 %v3031, %v3140
        %3142 = vmatmul.f32.gmra.mxu0 %v1647
        %v3143 = vpop.f32.mrf.mxu0
        %v3144 = vadd.f32 %v3034, %v3143
        %3145 = vmatmul.f32.gmra.mxu0 %v1648
        %v3146 = vpop.f32.mrf.mxu0
        %v3147 = vadd.f32 %v3037, %v3146
        %3148 = vmatmul.f32.gmra.mxu0 %v1649
        %v3149 = vpop.f32.mrf.mxu0
        %v3150 = vadd.f32 %v3040, %v3149
        %3151 = vmatmul.f32.gmra.mxu0 %v1654
        %v3152 = vpop.f32.mrf.mxu0
        %v3153 = vadd.f32 %v3043, %v3152
        %3154 = vmatmul.f32.gmra.mxu0 %v1655
        %v3155 = vpop.f32.mrf.mxu0
        %v3156 = vadd.f32 %v3046, %v3155
        %3157 = vdwg.mxu0
        %3158 = vmatpush.msra.mxu0 %v543
        %3159 = vmatpush.msra.mxu0 %v542
        %3160 = vmatpush.msra.mxu0 %v541
        %3161 = vmatpush.msra.mxu0 %v540
        %3162 = vmatpush.msra.mxu0 %v539
        %3163 = vmatpush.msra.mxu0 %v538
        %3164 = vmatpush.msra.mxu0 %v537
        %3165 = vmatpush.msra.mxu0 %v536
        %3166 = vmatpush.msra.mxu0 %v535
        %3167 = vmatpush.msra.mxu0 %v534
        %3168 = vmatpush.msra.mxu0 %v533
        %3169 = vmatpush.msra.mxu0 %v532
        %3170 = vmatpush.msra.mxu0 %v531
        %3171 = vmatpush.msra.mxu0 %v530
        %3172 = vmatpush.msra.mxu0 %v529
        %3173 = vmatpush.msra.mxu0 %v528
        %3174 = vmatmul.f32.gmra.mxu0 %v1656
        %v3175 = vpop.f32.mrf.mxu0
        %v3176 = vadd.f32 %v3066, %v3175
        %3177 = vmatmul.f32.gmra.mxu0 %v1657
        %v3178 = vpop.f32.mrf.mxu0
        %v3179 = vadd.f32 %v3069, %v3178
        %3180 = vmatmul.f32.gmra.mxu0 %v1658
        %v3181 = vpop.f32.mrf.mxu0
        %v3182 = vadd.f32 %v3072, %v3181
        %3183 = vmatmul.f32.gmra.mxu0 %v1659
        %v3184 = vpop.f32.mrf.mxu0
        %v3185 = vadd.f32 %v3075, %v3184
        %3186 = vmatmul.f32.gmra.mxu0 %v1660
        %v3187 = vpop.f32.mrf.mxu0
        %v3188 = vadd.f32 %v3078, %v3187
        %3189 = vmatmul.f32.gmra.mxu0 %v1661
        %v3190 = vpop.f32.mrf.mxu0
        %v3191 = vadd.f32 %v3081, %v3190
        %3192 = vmatmul.f32.gmra.mxu0 %v1662
        %v3193 = vpop.f32.mrf.mxu0
        %v3194 = vadd.f32 %v3084, %v3193
        %3195 = vmatmul.f32.gmra.mxu0 %v1663
        %v3196 = vpop.f32.mrf.mxu0
        %v3197 = vadd.f32 %v3087, %v3196
        %3198 = vmatmul.f32.gmra.mxu0 %v1664
        %v3199 = vpop.f32.mrf.mxu0
        %v3200 = vadd.f32 %v3090, %v3199
        %3201 = vmatmul.f32.gmra.mxu0 %v1665
        %v3202 = vpop.f32.mrf.mxu0
        %v3203 = vadd.f32 %v3093, %v3202
        %3204 = vmatmul.f32.gmra.mxu0 %v1666
        %v3205 = vpop.f32.mrf.mxu0
        %v3206 = vadd.f32 %v3096, %v3205
        %3207 = vmatmul.f32.gmra.mxu0 %v1667
        %v3208 = vpop.f32.mrf.mxu0
        %v3209 = vadd.f32 %v3099, %v3208
        %3210 = vmatmul.f32.gmra.mxu0 %v1668
        %v3211 = vpop.f32.mrf.mxu0
        %v3212 = vadd.f32 %v3102, %v3211
        %3213 = vmatmul.f32.gmra.mxu0 %v1669
        %v3214 = vpop.f32.mrf.mxu0
        %v3215 = vadd.f32 %v3105, %v3214
        %3216 = vmatmul.f32.gmra.mxu0 %v1670
        %v3217 = vpop.f32.mrf.mxu0
        %v3218 = vadd.f32 %v3108, %v3217
        %3219 = vmatmul.f32.gmra.mxu0 %v1671
        %v3220 = vpop.f32.mrf.mxu0
        %v3221 = vadd.f32 %v3111, %v3220
        %3222 = vmatmul.f32.gmra.mxu0 %v1672
        %v3223 = vpop.f32.mrf.mxu0
        %v3224 = vadd.f32 %v3114, %v3223
        %3225 = vmatmul.f32.gmra.mxu0 %v1673
        %v3226 = vpop.f32.mrf.mxu0
        %v3227 = vadd.f32 %v3117, %v3226
        %3228 = vmatmul.f32.gmra.mxu0 %v1674
        %v3229 = vpop.f32.mrf.mxu0
        %v3230 = vadd.f32 %v3120, %v3229
        %3231 = vmatmul.f32.gmra.mxu0 %v1675
        %v3232 = vpop.f32.mrf.mxu0
        %v3233 = vadd.f32 %v3123, %v3232
        %3234 = vmatmul.f32.gmra.mxu0 %v1676
        %v3235 = vpop.f32.mrf.mxu0
        %v3236 = vadd.f32 %v3126, %v3235
        %3237 = vmatmul.f32.gmra.mxu0 %v1677
        %v3238 = vpop.f32.mrf.mxu0
        %v3239 = vadd.f32 %v3129, %v3238
        %3240 = vmatmul.f32.gmra.mxu0 %v1678
        %v3241 = vpop.f32.mrf.mxu0
        %v3242 = vadd.f32 %v3132, %v3241
        %3243 = vmatmul.f32.gmra.mxu0 %v1679
        %v3244 = vpop.f32.mrf.mxu0
        %v3245 = vadd.f32 %v3135, %v3244
        %3246 = vmatmul.f32.gmra.mxu0 %v1680
        %v3247 = vpop.f32.mrf.mxu0
        %v3248 = vadd.f32 %v3138, %v3247
        %3249 = vmatmul.f32.gmra.mxu0 %v1681
        %v3250 = vpop.f32.mrf.mxu0
        %v3251 = vadd.f32 %v3141, %v3250
        %3252 = vmatmul.f32.gmra.mxu0 %v1682
        %v3253 = vpop.f32.mrf.mxu0
        %v3254 = vadd.f32 %v3144, %v3253
        %3255 = vmatmul.f32.gmra.mxu0 %v1683
        %v3256 = vpop.f32.mrf.mxu0
        %v3257 = vadd.f32 %v3147, %v3256
        %3258 = vmatmul.f32.gmra.mxu0 %v1684
        %v3259 = vpop.f32.mrf.mxu0
        %v3260 = vadd.f32 %v3150, %v3259
        %3261 = vmatmul.f32.gmra.mxu0 %v1685
        %v3262 = vpop.f32.mrf.mxu0
        %v3263 = vadd.f32 %v3153, %v3262
        %3264 = vmatmul.f32.gmra.mxu0 %v1686
        %v3265 = vpop.f32.mrf.mxu0
        %v3266 = vadd.f32 %v3156, %v3265
        %3267 = vdwg.mxu0
        %3268 = vmatpush.msra.mxu0 %v559
        %3269 = vmatpush.msra.mxu0 %v558
        %3270 = vmatpush.msra.mxu0 %v557
        %3271 = vmatpush.msra.mxu0 %v556
        %3272 = vmatpush.msra.mxu0 %v555
        %3273 = vmatpush.msra.mxu0 %v554
        %3274 = vmatpush.msra.mxu0 %v553
        %3275 = vmatpush.msra.mxu0 %v552
        %3276 = vmatpush.msra.mxu0 %v551
        %3277 = vmatpush.msra.mxu0 %v550
        %3278 = vmatpush.msra.mxu0 %v549
        %3279 = vmatpush.msra.mxu0 %v548
        %3280 = vmatpush.msra.mxu0 %v547
        %3281 = vmatpush.msra.mxu0 %v546
        %3282 = vmatpush.msra.mxu0 %v545
        %3283 = vmatpush.msra.mxu0 %v544
        %3284 = vmatmul.f32.gmra.mxu0 %v1432
        %v3285 = vpop.f32.mrf.mxu0
        %v3286 = vadd.f32 %v3176, %v3285
        %3287 = vmatmul.f32.gmra.mxu0 %v1433
        %v3288 = vpop.f32.mrf.mxu0
        %v3289 = vadd.f32 %v3179, %v3288
        %3290 = vmatmul.f32.gmra.mxu0 %v1434
        %v3291 = vpop.f32.mrf.mxu0
        %v3292 = vadd.f32 %v3182, %v3291
        %3293 = vmatmul.f32.gmra.mxu0 %v1435
        %v3294 = vpop.f32.mrf.mxu0
        %v3295 = vadd.f32 %v3185, %v3294
        %3296 = vmatmul.f32.gmra.mxu0 %v1436
        %v3297 = vpop.f32.mrf.mxu0
        %v3298 = vadd.f32 %v3188, %v3297
        %3299 = vmatmul.f32.gmra.mxu0 %v1437
        %v3300 = vpop.f32.mrf.mxu0
        %v3301 = vadd.f32 %v3191, %v3300
        %3302 = vmatmul.f32.gmra.mxu0 %v1438
        %v3303 = vpop.f32.mrf.mxu0
        %v3304 = vadd.f32 %v3194, %v3303
        %3305 = vmatmul.f32.gmra.mxu0 %v1439
        %v3306 = vpop.f32.mrf.mxu0
        %v3307 = vadd.f32 %v3197, %v3306
        %3308 = vmatmul.f32.gmra.mxu0 %v1440
        %v3309 = vpop.f32.mrf.mxu0
        %v3310 = vadd.f32 %v3200, %v3309
        %3311 = vmatmul.f32.gmra.mxu0 %v1441
        %v3312 = vpop.f32.mrf.mxu0
        %v3313 = vadd.f32 %v3203, %v3312
        %3314 = vmatmul.f32.gmra.mxu0 %v1442
        %v3315 = vpop.f32.mrf.mxu0
        %v3316 = vadd.f32 %v3206, %v3315
        %3317 = vmatmul.f32.gmra.mxu0 %v1443
        %v3318 = vpop.f32.mrf.mxu0
        %v3319 = vadd.f32 %v3209, %v3318
        %3320 = vmatmul.f32.gmra.mxu0 %v1444
        %v3321 = vpop.f32.mrf.mxu0
        %v3322 = vadd.f32 %v3212, %v3321
        %3323 = vmatmul.f32.gmra.mxu0 %v1445
        %v3324 = vpop.f32.mrf.mxu0
        %v3325 = vadd.f32 %v3215, %v3324
        %3326 = vmatmul.f32.gmra.mxu0 %v1446
        %v3327 = vpop.f32.mrf.mxu0
        %v3328 = vadd.f32 %v3218, %v3327
        %3329 = vmatmul.f32.gmra.mxu0 %v1447
        %v3330 = vpop.f32.mrf.mxu0
        %v3331 = vadd.f32 %v3221, %v3330
        %3332 = vmatmul.f32.gmra.mxu0 %v1448
        %v3333 = vpop.f32.mrf.mxu0
        %v3334 = vadd.f32 %v3224, %v3333
        %3335 = vmatmul.f32.gmra.mxu0 %v1449
        %v3336 = vpop.f32.mrf.mxu0
        %v3337 = vadd.f32 %v3227, %v3336
        %3338 = vmatmul.f32.gmra.mxu0 %v1450
        %v3339 = vpop.f32.mrf.mxu0
        %v3340 = vadd.f32 %v3230, %v3339
        %3341 = vmatmul.f32.gmra.mxu0 %v1451
        %v3342 = vpop.f32.mrf.mxu0
        %v3343 = vadd.f32 %v3233, %v3342
        %3344 = vmatmul.f32.gmra.mxu0 %v1452
        %v3345 = vpop.f32.mrf.mxu0
        %v3346 = vadd.f32 %v3236, %v3345
        %3347 = vmatmul.f32.gmra.mxu0 %v1453
        %v3348 = vpop.f32.mrf.mxu0
        %v3349 = vadd.f32 %v3239, %v3348
        %3350 = vmatmul.f32.gmra.mxu0 %v1454
        %v3351 = vpop.f32.mrf.mxu0
        %v3352 = vadd.f32 %v3242, %v3351
        %3353 = vmatmul.f32.gmra.mxu0 %v1455
        %v3354 = vpop.f32.mrf.mxu0
        %v3355 = vadd.f32 %v3245, %v3354
        %3356 = vmatmul.f32.gmra.mxu0 %v1456
        %v3357 = vpop.f32.mrf.mxu0
        %v3358 = vadd.f32 %v3248, %v3357
        %3359 = vmatmul.f32.gmra.mxu0 %v1457
        %v3360 = vpop.f32.mrf.mxu0
        %v3361 = vadd.f32 %v3251, %v3360
        %3362 = vmatmul.f32.gmra.mxu0 %v1687
        %v3363 = vpop.f32.mrf.mxu0
        %v3364 = vadd.f32 %v3254, %v3363
        %3365 = vmatmul.f32.gmra.mxu0 %v1688
        %v3366 = vpop.f32.mrf.mxu0
        %v3367 = vadd.f32 %v3257, %v3366
        %3368 = vmatmul.f32.gmra.mxu0 %v1689
        %v3369 = vpop.f32.mrf.mxu0
        %v3370 = vadd.f32 %v3260, %v3369
        %3371 = vmatmul.f32.gmra.mxu0 %v1690
        %v3372 = vpop.f32.mrf.mxu0
        %v3373 = vadd.f32 %v3263, %v3372
        %3374 = vmatmul.f32.gmra.mxu0 %v1691
        %v3375 = vpop.f32.mrf.mxu0
        %v3376 = vadd.f32 %v3266, %v3375
        %3377 = vdwg.mxu0
        %3378 = vmatpush.msra.mxu0 %v575
        %3379 = vmatpush.msra.mxu0 %v574
        %3380 = vmatpush.msra.mxu0 %v573
        %3381 = vmatpush.msra.mxu0 %v572
        %3382 = vmatpush.msra.mxu0 %v571
        %3383 = vmatpush.msra.mxu0 %v570
        %3384 = vmatpush.msra.mxu0 %v569
        %3385 = vmatpush.msra.mxu0 %v568
        %3386 = vmatpush.msra.mxu0 %v567
        %3387 = vmatpush.msra.mxu0 %v566
        %3388 = vmatpush.msra.mxu0 %v565
        %3389 = vmatpush.msra.mxu0 %v564
        %3390 = vmatpush.msra.mxu0 %v563
        %3391 = vmatpush.msra.mxu0 %v562
        %3392 = vmatpush.msra.mxu0 %v561
        %3393 = vmatpush.msra.mxu0 %v560
        %3394 = vmatmul.f32.gmra.mxu0 %v1623
        %v3395 = vpop.f32.mrf.mxu0
        %v3396 = vadd.f32 %v3286, %v3395
        %3397 = vmatmul.f32.gmra.mxu0 %v1624
        %v3398 = vpop.f32.mrf.mxu0
        %v3399 = vadd.f32 %v3289, %v3398
        %3400 = vmatmul.f32.gmra.mxu0 %v1625
        %v3401 = vpop.f32.mrf.mxu0
        %v3402 = vadd.f32 %v3292, %v3401
        %3403 = vmatmul.f32.gmra.mxu0 %v1626
        %v3404 = vpop.f32.mrf.mxu0
        %v3405 = vadd.f32 %v3295, %v3404
        %3406 = vmatmul.f32.gmra.mxu0 %v1627
        %v3407 = vpop.f32.mrf.mxu0
        %v3408 = vadd.f32 %v3298, %v3407
        %3409 = vmatmul.f32.gmra.mxu0 %v1628
        %v3410 = vpop.f32.mrf.mxu0
        %v3411 = vadd.f32 %v3301, %v3410
        %3412 = vmatmul.f32.gmra.mxu0 %v1629
        %v3413 = vpop.f32.mrf.mxu0
        %v3414 = vadd.f32 %v3304, %v3413
        %3415 = vmatmul.f32.gmra.mxu0 %v1630
        %v3416 = vpop.f32.mrf.mxu0
        %v3417 = vadd.f32 %v3307, %v3416
        %3418 = vmatmul.f32.gmra.mxu0 %v1631
        %v3419 = vpop.f32.mrf.mxu0
        %v3420 = vadd.f32 %v3310, %v3419
        %3421 = vmatmul.f32.gmra.mxu0 %v1632
        %v3422 = vpop.f32.mrf.mxu0
        %v3423 = vadd.f32 %v3313, %v3422
        %3424 = vmatmul.f32.gmra.mxu0 %v1633
        %v3425 = vpop.f32.mrf.mxu0
        %v3426 = vadd.f32 %v3316, %v3425
        %3427 = vmatmul.f32.gmra.mxu0 %v1634
        %v3428 = vpop.f32.mrf.mxu0
        %v3429 = vadd.f32 %v3319, %v3428
        %3430 = vmatmul.f32.gmra.mxu0 %v1635
        %v3431 = vpop.f32.mrf.mxu0
        %v3432 = vadd.f32 %v3322, %v3431
        %3433 = vmatmul.f32.gmra.mxu0 %v1636
        %v3434 = vpop.f32.mrf.mxu0
        %v3435 = vadd.f32 %v3325, %v3434
        %3436 = vmatmul.f32.gmra.mxu0 %v1637
        %v3437 = vpop.f32.mrf.mxu0
        %v3438 = vadd.f32 %v3328, %v3437
        %3439 = vmatmul.f32.gmra.mxu0 %v1638
        %v3440 = vpop.f32.mrf.mxu0
        %v3441 = vadd.f32 %v3331, %v3440
        %3442 = vmatmul.f32.gmra.mxu0 %v1639
        %v3443 = vpop.f32.mrf.mxu0
        %v3444 = vadd.f32 %v3334, %v3443
        %3445 = vmatmul.f32.gmra.mxu0 %v1640
        %v3446 = vpop.f32.mrf.mxu0
        %v3447 = vadd.f32 %v3337, %v3446
        %3448 = vmatmul.f32.gmra.mxu0 %v1641
        %v3449 = vpop.f32.mrf.mxu0
        %v3450 = vadd.f32 %v3340, %v3449
        %3451 = vmatmul.f32.gmra.mxu0 %v1642
        %v3452 = vpop.f32.mrf.mxu0
        %v3453 = vadd.f32 %v3343, %v3452
        %3454 = vmatmul.f32.gmra.mxu0 %v1643
        %v3455 = vpop.f32.mrf.mxu0
        %v3456 = vadd.f32 %v3346, %v3455
        %3457 = vmatmul.f32.gmra.mxu0 %v1644
        %v3458 = vpop.f32.mrf.mxu0
        %v3459 = vadd.f32 %v3349, %v3458
        %3460 = vmatmul.f32.gmra.mxu0 %v1645
        %v3461 = vpop.f32.mrf.mxu0
        %v3462 = vadd.f32 %v3352, %v3461
        %3463 = vmatmul.f32.gmra.mxu0 %v1646
        %v3464 = vpop.f32.mrf.mxu0
        %v3465 = vadd.f32 %v3355, %v3464
        %3466 = vmatmul.f32.gmra.mxu0 %v1647
        %v3467 = vpop.f32.mrf.mxu0
        %v3468 = vadd.f32 %v3358, %v3467
        %3469 = vmatmul.f32.gmra.mxu0 %v1648
        %v3470 = vpop.f32.mrf.mxu0
        %v3471 = vadd.f32 %v3361, %v3470
        %3472 = vmatmul.f32.gmra.mxu0 %v1649
        %v3473 = vpop.f32.mrf.mxu0
        %v3474 = vadd.f32 %v3364, %v3473
        %3475 = vmatmul.f32.gmra.mxu0 %v1654
        %v3476 = vpop.f32.mrf.mxu0
        %v3477 = vadd.f32 %v3367, %v3476
        %3478 = vmatmul.f32.gmra.mxu0 %v1655
        %v3479 = vpop.f32.mrf.mxu0
        %v3480 = vadd.f32 %v3370, %v3479
        %3481 = vmatmul.f32.gmra.mxu0 %v1692
        %v3482 = vpop.f32.mrf.mxu0
        %v3483 = vadd.f32 %v3373, %v3482
        %3484 = vmatmul.f32.gmra.mxu0 %v1693
        %v3485 = vpop.f32.mrf.mxu0
        %v3486 = vadd.f32 %v3376, %v3485
        %3487 = vdwg.mxu0
        %3488 = vmatpush.msra.mxu0 %v591
        %3489 = vmatpush.msra.mxu0 %v590
        %3490 = vmatpush.msra.mxu0 %v589
        %3491 = vmatpush.msra.mxu0 %v588
        %3492 = vmatpush.msra.mxu0 %v587
        %3493 = vmatpush.msra.mxu0 %v586
        %3494 = vmatpush.msra.mxu0 %v585
        %3495 = vmatpush.msra.mxu0 %v584
        %3496 = vmatpush.msra.mxu0 %v583
        %3497 = vmatpush.msra.mxu0 %v582
        %3498 = vmatpush.msra.mxu0 %v581
        %3499 = vmatpush.msra.mxu0 %v580
        %3500 = vmatpush.msra.mxu0 %v579
        %3501 = vmatpush.msra.mxu0 %v578
        %3502 = vmatpush.msra.mxu0 %v577
        %3503 = vmatpush.msra.mxu0 %v576
        %3504 = vmatmul.f32.gmra.mxu0 %v1658
        %v3505 = vpop.f32.mrf.mxu0
        %v3506 = vadd.f32 %v3396, %v3505
        %3507 = vmatmul.f32.gmra.mxu0 %v1659
        %v3508 = vpop.f32.mrf.mxu0
        %v3509 = vadd.f32 %v3399, %v3508
        %3510 = vmatmul.f32.gmra.mxu0 %v1660
        %v3511 = vpop.f32.mrf.mxu0
        %v3512 = vadd.f32 %v3402, %v3511
        %3513 = vmatmul.f32.gmra.mxu0 %v1661
        %v3514 = vpop.f32.mrf.mxu0
        %v3515 = vadd.f32 %v3405, %v3514
        %3516 = vmatmul.f32.gmra.mxu0 %v1662
        %v3517 = vpop.f32.mrf.mxu0
        %v3518 = vadd.f32 %v3408, %v3517
        %3519 = vmatmul.f32.gmra.mxu0 %v1663
        %v3520 = vpop.f32.mrf.mxu0
        %v3521 = vadd.f32 %v3411, %v3520
        %3522 = vmatmul.f32.gmra.mxu0 %v1664
        %v3523 = vpop.f32.mrf.mxu0
        %v3524 = vadd.f32 %v3414, %v3523
        %3525 = vmatmul.f32.gmra.mxu0 %v1665
        %v3526 = vpop.f32.mrf.mxu0
        %v3527 = vadd.f32 %v3417, %v3526
        %3528 = vmatmul.f32.gmra.mxu0 %v1666
        %v3529 = vpop.f32.mrf.mxu0
        %v3530 = vadd.f32 %v3420, %v3529
        %3531 = vmatmul.f32.gmra.mxu0 %v1667
        %v3532 = vpop.f32.mrf.mxu0
        %v3533 = vadd.f32 %v3423, %v3532
        %3534 = vmatmul.f32.gmra.mxu0 %v1668
        %v3535 = vpop.f32.mrf.mxu0
        %v3536 = vadd.f32 %v3426, %v3535
        %3537 = vmatmul.f32.gmra.mxu0 %v1669
        %v3538 = vpop.f32.mrf.mxu0
        %v3539 = vadd.f32 %v3429, %v3538
        %3540 = vmatmul.f32.gmra.mxu0 %v1670
        %v3541 = vpop.f32.mrf.mxu0
        %v3542 = vadd.f32 %v3432, %v3541
        %3543 = vmatmul.f32.gmra.mxu0 %v1671
        %v3544 = vpop.f32.mrf.mxu0
        %v3545 = vadd.f32 %v3435, %v3544
        %3546 = vmatmul.f32.gmra.mxu0 %v1672
        %v3547 = vpop.f32.mrf.mxu0
        %v3548 = vadd.f32 %v3438, %v3547
        %3549 = vmatmul.f32.gmra.mxu0 %v1673
        %v3550 = vpop.f32.mrf.mxu0
        %v3551 = vadd.f32 %v3441, %v3550
        %3552 = vmatmul.f32.gmra.mxu0 %v1674
        %v3553 = vpop.f32.mrf.mxu0
        %v3554 = vadd.f32 %v3444, %v3553
        %3555 = vmatmul.f32.gmra.mxu0 %v1675
        %v3556 = vpop.f32.mrf.mxu0
        %v3557 = vadd.f32 %v3447, %v3556
        %3558 = vmatmul.f32.gmra.mxu0 %v1676
        %v3559 = vpop.f32.mrf.mxu0
        %v3560 = vadd.f32 %v3450, %v3559
        %3561 = vmatmul.f32.gmra.mxu0 %v1677
        %v3562 = vpop.f32.mrf.mxu0
        %v3563 = vadd.f32 %v3453, %v3562
        %3564 = vmatmul.f32.gmra.mxu0 %v1678
        %v3565 = vpop.f32.mrf.mxu0
        %v3566 = vadd.f32 %v3456, %v3565
        %3567 = vmatmul.f32.gmra.mxu0 %v1679
        %v3568 = vpop.f32.mrf.mxu0
        %v3569 = vadd.f32 %v3459, %v3568
        %3570 = vmatmul.f32.gmra.mxu0 %v1680
        %v3571 = vpop.f32.mrf.mxu0
        %v3572 = vadd.f32 %v3462, %v3571
        %3573 = vmatmul.f32.gmra.mxu0 %v1681
        %v3574 = vpop.f32.mrf.mxu0
        %v3575 = vadd.f32 %v3465, %v3574
        %3576 = vmatmul.f32.gmra.mxu0 %v1682
        %v3577 = vpop.f32.mrf.mxu0
        %v3578 = vadd.f32 %v3468, %v3577
        %3579 = vmatmul.f32.gmra.mxu0 %v1683
        %v3580 = vpop.f32.mrf.mxu0
        %v3581 = vadd.f32 %v3471, %v3580
        %3582 = vmatmul.f32.gmra.mxu0 %v1684
        %v3583 = vpop.f32.mrf.mxu0
        %v3584 = vadd.f32 %v3474, %v3583
        %3585 = vmatmul.f32.gmra.mxu0 %v1685
        %v3586 = vpop.f32.mrf.mxu0
        %v3587 = vadd.f32 %v3477, %v3586
        %3588 = vmatmul.f32.gmra.mxu0 %v1686
        %v3589 = vpop.f32.mrf.mxu0
        %v3590 = vadd.f32 %v3480, %v3589
        %3591 = vmatmul.f32.gmra.mxu0 %v1694
        %v3592 = vpop.f32.mrf.mxu0
        %v3593 = vadd.f32 %v3483, %v3592
        %3594 = vmatmul.f32.gmra.mxu0 %v1695
        %v3595 = vpop.f32.mrf.mxu0
        %v3596 = vadd.f32 %v3486, %v3595
        %3597 = vdwg.mxu0
        %3598 = vmatpush.msra.mxu0 %v607
        %3599 = vmatpush.msra.mxu0 %v606
        %3600 = vmatpush.msra.mxu0 %v605
        %3601 = vmatpush.msra.mxu0 %v604
        %3602 = vmatpush.msra.mxu0 %v603
        %3603 = vmatpush.msra.mxu0 %v602
        %3604 = vmatpush.msra.mxu0 %v601
        %3605 = vmatpush.msra.mxu0 %v600
        %3606 = vmatpush.msra.mxu0 %v599
        %3607 = vmatpush.msra.mxu0 %v598
        %3608 = vmatpush.msra.mxu0 %v597
        %3609 = vmatpush.msra.mxu0 %v596
        %3610 = vmatpush.msra.mxu0 %v595
        %3611 = vmatpush.msra.mxu0 %v594
        %3612 = vmatpush.msra.mxu0 %v593
        %3613 = vmatpush.msra.mxu0 %v592
        %3614 = vmatmul.f32.gmra.mxu0 %v1434
        %v3615 = vpop.f32.mrf.mxu0
        %v3616 = vadd.f32 %v3506, %v3615
        %3617 = vmatmul.f32.gmra.mxu0 %v1435
        %v3618 = vpop.f32.mrf.mxu0
        %v3619 = vadd.f32 %v3509, %v3618
        %3620 = vmatmul.f32.gmra.mxu0 %v1436
        %v3621 = vpop.f32.mrf.mxu0
        %v3622 = vadd.f32 %v3512, %v3621
        %3623 = vmatmul.f32.gmra.mxu0 %v1437
        %v3624 = vpop.f32.mrf.mxu0
        %v3625 = vadd.f32 %v3515, %v3624
        %3626 = vmatmul.f32.gmra.mxu0 %v1438
        %v3627 = vpop.f32.mrf.mxu0
        %v3628 = vadd.f32 %v3518, %v3627
        %3629 = vmatmul.f32.gmra.mxu0 %v1439
        %v3630 = vpop.f32.mrf.mxu0
        %v3631 = vadd.f32 %v3521, %v3630
        %3632 = vmatmul.f32.gmra.mxu0 %v1440
        %v3633 = vpop.f32.mrf.mxu0
        %v3634 = vadd.f32 %v3524, %v3633
        %3635 = vmatmul.f32.gmra.mxu0 %v1441
        %v3636 = vpop.f32.mrf.mxu0
        %v3637 = vadd.f32 %v3527, %v3636
        %3638 = vmatmul.f32.gmra.mxu0 %v1442
        %v3639 = vpop.f32.mrf.mxu0
        %v3640 = vadd.f32 %v3530, %v3639
        %3641 = vmatmul.f32.gmra.mxu0 %v1443
        %v3642 = vpop.f32.mrf.mxu0
        %v3643 = vadd.f32 %v3533, %v3642
        %3644 = vmatmul.f32.gmra.mxu0 %v1444
        %v3645 = vpop.f32.mrf.mxu0
        %v3646 = vadd.f32 %v3536, %v3645
        %3647 = vmatmul.f32.gmra.mxu0 %v1445
        %v3648 = vpop.f32.mrf.mxu0
        %v3649 = vadd.f32 %v3539, %v3648
        %3650 = vmatmul.f32.gmra.mxu0 %v1446
        %v3651 = vpop.f32.mrf.mxu0
        %v3652 = vadd.f32 %v3542, %v3651
        %3653 = vmatmul.f32.gmra.mxu0 %v1447
        %v3654 = vpop.f32.mrf.mxu0
        %v3655 = vadd.f32 %v3545, %v3654
        %3656 = vmatmul.f32.gmra.mxu0 %v1448
        %v3657 = vpop.f32.mrf.mxu0
        %v3658 = vadd.f32 %v3548, %v3657
        %3659 = vmatmul.f32.gmra.mxu0 %v1449
        %v3660 = vpop.f32.mrf.mxu0
        %v3661 = vadd.f32 %v3551, %v3660
        %3662 = vmatmul.f32.gmra.mxu0 %v1450
        %v3663 = vpop.f32.mrf.mxu0
        %v3664 = vadd.f32 %v3554, %v3663
        %3665 = vmatmul.f32.gmra.mxu0 %v1451
        %v3666 = vpop.f32.mrf.mxu0
        %v3667 = vadd.f32 %v3557, %v3666
        %3668 = vmatmul.f32.gmra.mxu0 %v1452
        %v3669 = vpop.f32.mrf.mxu0
        %v3670 = vadd.f32 %v3560, %v3669
        %3671 = vmatmul.f32.gmra.mxu0 %v1453
        %v3672 = vpop.f32.mrf.mxu0
        %v3673 = vadd.f32 %v3563, %v3672
        %3674 = vmatmul.f32.gmra.mxu0 %v1454
        %v3675 = vpop.f32.mrf.mxu0
        %v3676 = vadd.f32 %v3566, %v3675
        %3677 = vmatmul.f32.gmra.mxu0 %v1455
        %v3678 = vpop.f32.mrf.mxu0
        %v3679 = vadd.f32 %v3569, %v3678
        %3680 = vmatmul.f32.gmra.mxu0 %v1456
        %v3681 = vpop.f32.mrf.mxu0
        %v3682 = vadd.f32 %v3572, %v3681
        %3683 = vmatmul.f32.gmra.mxu0 %v1457
        %v3684 = vpop.f32.mrf.mxu0
        %v3685 = vadd.f32 %v3575, %v3684
        %3686 = vmatmul.f32.gmra.mxu0 %v1687
        %v3687 = vpop.f32.mrf.mxu0
        %v3688 = vadd.f32 %v3578, %v3687
        %3689 = vmatmul.f32.gmra.mxu0 %v1688
        %v3690 = vpop.f32.mrf.mxu0
        %v3691 = vadd.f32 %v3581, %v3690
        %3692 = vmatmul.f32.gmra.mxu0 %v1689
        %v3693 = vpop.f32.mrf.mxu0
        %v3694 = vadd.f32 %v3584, %v3693
        %3695 = vmatmul.f32.gmra.mxu0 %v1690
        %v3696 = vpop.f32.mrf.mxu0
        %v3697 = vadd.f32 %v3587, %v3696
        %3698 = vmatmul.f32.gmra.mxu0 %v1691
        %v3699 = vpop.f32.mrf.mxu0
        %v3700 = vadd.f32 %v3590, %v3699
        %3701 = vmatmul.f32.gmra.mxu0 %v1696
        %v3702 = vpop.f32.mrf.mxu0
        %v3703 = vadd.f32 %v3593, %v3702
        %3704 = vmatmul.f32.gmra.mxu0 %v1697
        %v3705 = vpop.f32.mrf.mxu0
        %v3706 = vadd.f32 %v3596, %v3705
        %3707 = vdwg.mxu0
        %3708 = vmatpush.msra.mxu0 %v623
        %3709 = vmatpush.msra.mxu0 %v622
        %3710 = vmatpush.msra.mxu0 %v621
        %3711 = vmatpush.msra.mxu0 %v620
        %3712 = vmatpush.msra.mxu0 %v619
        %3713 = vmatpush.msra.mxu0 %v618
        %3714 = vmatpush.msra.mxu0 %v617
        %3715 = vmatpush.msra.mxu0 %v616
        %3716 = vmatpush.msra.mxu0 %v615
        %3717 = vmatpush.msra.mxu0 %v614
        %3718 = vmatpush.msra.mxu0 %v613
        %3719 = vmatpush.msra.mxu0 %v612
        %3720 = vmatpush.msra.mxu0 %v611
        %3721 = vmatpush.msra.mxu0 %v610
        %3722 = vmatpush.msra.mxu0 %v609
        %3723 = vmatpush.msra.mxu0 %v608
        %3724 = vmatmul.f32.gmra.mxu0 %v1465
        %v3725 = vpop.f32.mrf.mxu0
        %v3726 = vadd.f32 %v3616, %v3725
        %3727 = vmatmul.f32.gmra.mxu0 %v1466
        %v3728 = vpop.f32.mrf.mxu0
        %v3729 = vadd.f32 %v3619, %v3728
        %3730 = vmatmul.f32.gmra.mxu0 %v1467
        %v3731 = vpop.f32.mrf.mxu0
        %v3732 = vadd.f32 %v3622, %v3731
        %3733 = vmatmul.f32.gmra.mxu0 %v1468
        %v3734 = vpop.f32.mrf.mxu0
        %v3735 = vadd.f32 %v3625, %v3734
        %3736 = vmatmul.f32.gmra.mxu0 %v1469
        %v3737 = vpop.f32.mrf.mxu0
        %v3738 = vadd.f32 %v3628, %v3737
        %3739 = vmatmul.f32.gmra.mxu0 %v1470
        %v3740 = vpop.f32.mrf.mxu0
        %v3741 = vadd.f32 %v3631, %v3740
        %3742 = vmatmul.f32.gmra.mxu0 %v1471
        %v3743 = vpop.f32.mrf.mxu0
        %v3744 = vadd.f32 %v3634, %v3743
        %3745 = vmatmul.f32.gmra.mxu0 %v1472
        %v3746 = vpop.f32.mrf.mxu0
        %v3747 = vadd.f32 %v3637, %v3746
        %3748 = vmatmul.f32.gmra.mxu0 %v1473
        %v3749 = vpop.f32.mrf.mxu0
        %v3750 = vadd.f32 %v3640, %v3749
        %3751 = vmatmul.f32.gmra.mxu0 %v1474
        %v3752 = vpop.f32.mrf.mxu0
        %v3753 = vadd.f32 %v3643, %v3752
        %3754 = vmatmul.f32.gmra.mxu0 %v1475
        %v3755 = vpop.f32.mrf.mxu0
        %v3756 = vadd.f32 %v3646, %v3755
        %3757 = vmatmul.f32.gmra.mxu0 %v1476
        %v3758 = vpop.f32.mrf.mxu0
        %v3759 = vadd.f32 %v3649, %v3758
        %3760 = vmatmul.f32.gmra.mxu0 %v1477
        %v3761 = vpop.f32.mrf.mxu0
        %v3762 = vadd.f32 %v3652, %v3761
        %3763 = vmatmul.f32.gmra.mxu0 %v1478
        %v3764 = vpop.f32.mrf.mxu0
        %v3765 = vadd.f32 %v3655, %v3764
        %3766 = vmatmul.f32.gmra.mxu0 %v1479
        %v3767 = vpop.f32.mrf.mxu0
        %v3768 = vadd.f32 %v3658, %v3767
        %3769 = vmatmul.f32.gmra.mxu0 %v1480
        %v3770 = vpop.f32.mrf.mxu0
        %v3771 = vadd.f32 %v3661, %v3770
        %3772 = vmatmul.f32.gmra.mxu0 %v1481
        %v3773 = vpop.f32.mrf.mxu0
        %v3774 = vadd.f32 %v3664, %v3773
        %3775 = vmatmul.f32.gmra.mxu0 %v1482
        %v3776 = vpop.f32.mrf.mxu0
        %v3777 = vadd.f32 %v3667, %v3776
        %3778 = vmatmul.f32.gmra.mxu0 %v1483
        %v3779 = vpop.f32.mrf.mxu0
        %v3780 = vadd.f32 %v3670, %v3779
        %3781 = vmatmul.f32.gmra.mxu0 %v1484
        %v3782 = vpop.f32.mrf.mxu0
        %v3783 = vadd.f32 %v3673, %v3782
        %3784 = vmatmul.f32.gmra.mxu0 %v1485
        %v3785 = vpop.f32.mrf.mxu0
        %v3786 = vadd.f32 %v3676, %v3785
        %3787 = vmatmul.f32.gmra.mxu0 %v1486
        %v3788 = vpop.f32.mrf.mxu0
        %v3789 = vadd.f32 %v3679, %v3788
        %3790 = vmatmul.f32.gmra.mxu0 %v1487
        %v3791 = vpop.f32.mrf.mxu0
        %v3792 = vadd.f32 %v3682, %v3791
        %3793 = vmatmul.f32.gmra.mxu0 %v1488
        %v3794 = vpop.f32.mrf.mxu0
        %v3795 = vadd.f32 %v3685, %v3794
        %3796 = vmatmul.f32.gmra.mxu0 %v1698
        %v3797 = vpop.f32.mrf.mxu0
        %v3798 = vadd.f32 %v3688, %v3797
        %3799 = vmatmul.f32.gmra.mxu0 %v1699
        %v3800 = vpop.f32.mrf.mxu0
        %v3801 = vadd.f32 %v3691, %v3800
        %3802 = vmatmul.f32.gmra.mxu0 %v1700
        %v3803 = vpop.f32.mrf.mxu0
        %v3804 = vadd.f32 %v3694, %v3803
        %3805 = vmatmul.f32.gmra.mxu0 %v1701
        %v3806 = vpop.f32.mrf.mxu0
        %v3807 = vadd.f32 %v3697, %v3806
        %3808 = vmatmul.f32.gmra.mxu0 %v1702
        %v3809 = vpop.f32.mrf.mxu0
        %v3810 = vadd.f32 %v3700, %v3809
        %3811 = vmatmul.f32.gmra.mxu0 %v1703
        %v3812 = vpop.f32.mrf.mxu0
        %v3813 = vadd.f32 %v3703, %v3812
        %3814 = vmatmul.f32.gmra.mxu0 %v1704
        %v3815 = vpop.f32.mrf.mxu0
        %v3816 = vadd.f32 %v3706, %v3815
        %3817 = vdwg.mxu0
        %3818 = vmatpush.msra.mxu0 %v639
        %3819 = vmatpush.msra.mxu0 %v638
        %3820 = vmatpush.msra.mxu0 %v637
        %3821 = vmatpush.msra.mxu0 %v636
        %3822 = vmatpush.msra.mxu0 %v635
        %3823 = vmatpush.msra.mxu0 %v634
        %3824 = vmatpush.msra.mxu0 %v633
        %3825 = vmatpush.msra.mxu0 %v632
        %3826 = vmatpush.msra.mxu0 %v631
        %3827 = vmatpush.msra.mxu0 %v630
        %3828 = vmatpush.msra.mxu0 %v629
        %3829 = vmatpush.msra.mxu0 %v628
        %3830 = vmatpush.msra.mxu0 %v627
        %3831 = vmatpush.msra.mxu0 %v626
        %3832 = vmatpush.msra.mxu0 %v625
        %3833 = vmatpush.msra.mxu0 %v624
        %3834 = vmatmul.f32.gmra.mxu0 %v1496
        %v3835 = vpop.f32.mrf.mxu0
        %v3836 = vadd.f32 %v3726, %v3835
        %3837 = vmatmul.f32.gmra.mxu0 %v1497
        %v3838 = vpop.f32.mrf.mxu0
        %v3839 = vadd.f32 %v3729, %v3838
        %3840 = vmatmul.f32.gmra.mxu0 %v1498
        %v3841 = vpop.f32.mrf.mxu0
        %v3842 = vadd.f32 %v3732, %v3841
        %3843 = vmatmul.f32.gmra.mxu0 %v1499
        %v3844 = vpop.f32.mrf.mxu0
        %v3845 = vadd.f32 %v3735, %v3844
        %3846 = vmatmul.f32.gmra.mxu0 %v1500
        %v3847 = vpop.f32.mrf.mxu0
        %v3848 = vadd.f32 %v3738, %v3847
        %3849 = vmatmul.f32.gmra.mxu0 %v1501
        %v3850 = vpop.f32.mrf.mxu0
        %v3851 = vadd.f32 %v3741, %v3850
        %3852 = vmatmul.f32.gmra.mxu0 %v1502
        %v3853 = vpop.f32.mrf.mxu0
        %v3854 = vadd.f32 %v3744, %v3853
        %3855 = vmatmul.f32.gmra.mxu0 %v1503
        %v3856 = vpop.f32.mrf.mxu0
        %v3857 = vadd.f32 %v3747, %v3856
        %3858 = vmatmul.f32.gmra.mxu0 %v1504
        %v3859 = vpop.f32.mrf.mxu0
        %v3860 = vadd.f32 %v3750, %v3859
        %3861 = vmatmul.f32.gmra.mxu0 %v1505
        %v3862 = vpop.f32.mrf.mxu0
        %v3863 = vadd.f32 %v3753, %v3862
        %3864 = vmatmul.f32.gmra.mxu0 %v1506
        %v3865 = vpop.f32.mrf.mxu0
        %v3866 = vadd.f32 %v3756, %v3865
        %3867 = vmatmul.f32.gmra.mxu0 %v1507
        %v3868 = vpop.f32.mrf.mxu0
        %v3869 = vadd.f32 %v3759, %v3868
        %3870 = vmatmul.f32.gmra.mxu0 %v1508
        %v3871 = vpop.f32.mrf.mxu0
        %v3872 = vadd.f32 %v3762, %v3871
        %3873 = vmatmul.f32.gmra.mxu0 %v1509
        %v3874 = vpop.f32.mrf.mxu0
        %v3875 = vadd.f32 %v3765, %v3874
        %3876 = vmatmul.f32.gmra.mxu0 %v1510
        %v3877 = vpop.f32.mrf.mxu0
        %v3878 = vadd.f32 %v3768, %v3877
        %3879 = vmatmul.f32.gmra.mxu0 %v1511
        %v3880 = vpop.f32.mrf.mxu0
        %v3881 = vadd.f32 %v3771, %v3880
        %3882 = vmatmul.f32.gmra.mxu0 %v1512
        %v3883 = vpop.f32.mrf.mxu0
        %v3884 = vadd.f32 %v3774, %v3883
        %3885 = vmatmul.f32.gmra.mxu0 %v1513
        %v3886 = vpop.f32.mrf.mxu0
        %v3887 = vadd.f32 %v3777, %v3886
        %3888 = vmatmul.f32.gmra.mxu0 %v1514
        %v3889 = vpop.f32.mrf.mxu0
        %v3890 = vadd.f32 %v3780, %v3889
        %3891 = vmatmul.f32.gmra.mxu0 %v1515
        %v3892 = vpop.f32.mrf.mxu0
        %v3893 = vadd.f32 %v3783, %v3892
        %3894 = vmatmul.f32.gmra.mxu0 %v1516
        %v3895 = vpop.f32.mrf.mxu0
        %v3896 = vadd.f32 %v3786, %v3895
        %3897 = vmatmul.f32.gmra.mxu0 %v1517
        %v3898 = vpop.f32.mrf.mxu0
        %v3899 = vadd.f32 %v3789, %v3898
        %3900 = vmatmul.f32.gmra.mxu0 %v1518
        %v3901 = vpop.f32.mrf.mxu0
        %v3902 = vadd.f32 %v3792, %v3901
        %3903 = vmatmul.f32.gmra.mxu0 %v1519
        %v3904 = vpop.f32.mrf.mxu0
        %v3905 = vadd.f32 %v3795, %v3904
        %3906 = vmatmul.f32.gmra.mxu0 %v1582
        %v3907 = vpop.f32.mrf.mxu0
        %v3908 = vadd.f32 %v3798, %v3907
        %3909 = vmatmul.f32.gmra.mxu0 %v1583
        %v3910 = vpop.f32.mrf.mxu0
        %v3911 = vadd.f32 %v3801, %v3910
        %3912 = vmatmul.f32.gmra.mxu0 %v1705
        %v3913 = vpop.f32.mrf.mxu0
        %v3914 = vadd.f32 %v3804, %v3913
        %3915 = vmatmul.f32.gmra.mxu0 %v1706
        %v3916 = vpop.f32.mrf.mxu0
        %v3917 = vadd.f32 %v3807, %v3916
        %3918 = vmatmul.f32.gmra.mxu0 %v1707
        %v3919 = vpop.f32.mrf.mxu0
        %v3920 = vadd.f32 %v3810, %v3919
        %3921 = vmatmul.f32.gmra.mxu0 %v1708
        %v3922 = vpop.f32.mrf.mxu0
        %v3923 = vadd.f32 %v3813, %v3922
        %3924 = vmatmul.f32.gmra.mxu0 %v1709
        %v3925 = vpop.f32.mrf.mxu0
        %v3926 = vadd.f32 %v3816, %v3925
        %3927 = vdwg.mxu0
        %3928 = vmatpush.msra.mxu0 %v655
        %3929 = vmatpush.msra.mxu0 %v654
        %3930 = vmatpush.msra.mxu0 %v653
        %3931 = vmatpush.msra.mxu0 %v652
        %3932 = vmatpush.msra.mxu0 %v651
        %3933 = vmatpush.msra.mxu0 %v650
        %3934 = vmatpush.msra.mxu0 %v649
        %3935 = vmatpush.msra.mxu0 %v648
        %3936 = vmatpush.msra.mxu0 %v647
        %3937 = vmatpush.msra.mxu0 %v646
        %3938 = vmatpush.msra.mxu0 %v645
        %3939 = vmatpush.msra.mxu0 %v644
        %3940 = vmatpush.msra.mxu0 %v643
        %3941 = vmatpush.msra.mxu0 %v642
        %3942 = vmatpush.msra.mxu0 %v641
        %3943 = vmatpush.msra.mxu0 %v640
        %3944 = vmatmul.f32.gmra.mxu0 %v1436
        %v3945 = vpop.f32.mrf.mxu0
        %v3946 = vadd.f32 %v3836, %v3945
        %3947 = vmatmul.f32.gmra.mxu0 %v1437
        %v3948 = vpop.f32.mrf.mxu0
        %v3949 = vadd.f32 %v3839, %v3948
        %3950 = vmatmul.f32.gmra.mxu0 %v1438
        %v3951 = vpop.f32.mrf.mxu0
        %v3952 = vadd.f32 %v3842, %v3951
        %3953 = vmatmul.f32.gmra.mxu0 %v1439
        %v3954 = vpop.f32.mrf.mxu0
        %v3955 = vadd.f32 %v3845, %v3954
        %3956 = vmatmul.f32.gmra.mxu0 %v1440
        %v3957 = vpop.f32.mrf.mxu0
        %v3958 = vadd.f32 %v3848, %v3957
        %3959 = vmatmul.f32.gmra.mxu0 %v1441
        %v3960 = vpop.f32.mrf.mxu0
        %v3961 = vadd.f32 %v3851, %v3960
        %3962 = vmatmul.f32.gmra.mxu0 %v1442
        %v3963 = vpop.f32.mrf.mxu0
        %v3964 = vadd.f32 %v3854, %v3963
        %3965 = vmatmul.f32.gmra.mxu0 %v1443
        %v3966 = vpop.f32.mrf.mxu0
        %v3967 = vadd.f32 %v3857, %v3966
        %3968 = vmatmul.f32.gmra.mxu0 %v1444
        %v3969 = vpop.f32.mrf.mxu0
        %v3970 = vadd.f32 %v3860, %v3969
        %3971 = vmatmul.f32.gmra.mxu0 %v1445
        %v3972 = vpop.f32.mrf.mxu0
        %v3973 = vadd.f32 %v3863, %v3972
        %3974 = vmatmul.f32.gmra.mxu0 %v1446
        %v3975 = vpop.f32.mrf.mxu0
        %v3976 = vadd.f32 %v3866, %v3975
        %3977 = vmatmul.f32.gmra.mxu0 %v1447
        %v3978 = vpop.f32.mrf.mxu0
        %v3979 = vadd.f32 %v3869, %v3978
        %3980 = vmatmul.f32.gmra.mxu0 %v1448
        %v3981 = vpop.f32.mrf.mxu0
        %v3982 = vadd.f32 %v3872, %v3981
        %3983 = vmatmul.f32.gmra.mxu0 %v1449
        %v3984 = vpop.f32.mrf.mxu0
        %v3985 = vadd.f32 %v3875, %v3984
        %3986 = vmatmul.f32.gmra.mxu0 %v1450
        %v3987 = vpop.f32.mrf.mxu0
        %v3988 = vadd.f32 %v3878, %v3987
        %3989 = vmatmul.f32.gmra.mxu0 %v1451
        %v3990 = vpop.f32.mrf.mxu0
        %v3991 = vadd.f32 %v3881, %v3990
        %3992 = vmatmul.f32.gmra.mxu0 %v1452
        %v3993 = vpop.f32.mrf.mxu0
        %v3994 = vadd.f32 %v3884, %v3993
        %3995 = vmatmul.f32.gmra.mxu0 %v1453
        %v3996 = vpop.f32.mrf.mxu0
        %v3997 = vadd.f32 %v3887, %v3996
        %3998 = vmatmul.f32.gmra.mxu0 %v1454
        %v3999 = vpop.f32.mrf.mxu0
        %v4000 = vadd.f32 %v3890, %v3999
        %4001 = vmatmul.f32.gmra.mxu0 %v1455
        %v4002 = vpop.f32.mrf.mxu0
        %v4003 = vadd.f32 %v3893, %v4002
        %4004 = vmatmul.f32.gmra.mxu0 %v1456
        %v4005 = vpop.f32.mrf.mxu0
        %v4006 = vadd.f32 %v3896, %v4005
        %4007 = vmatmul.f32.gmra.mxu0 %v1457
        %v4008 = vpop.f32.mrf.mxu0
        %v4009 = vadd.f32 %v3899, %v4008
        %4010 = vmatmul.f32.gmra.mxu0 %v1687
        %v4011 = vpop.f32.mrf.mxu0
        %v4012 = vadd.f32 %v3902, %v4011
        %4013 = vmatmul.f32.gmra.mxu0 %v1688
        %v4014 = vpop.f32.mrf.mxu0
        %v4015 = vadd.f32 %v3905, %v4014
        %4016 = vmatmul.f32.gmra.mxu0 %v1689
        %v4017 = vpop.f32.mrf.mxu0
        %v4018 = vadd.f32 %v3908, %v4017
        %4019 = vmatmul.f32.gmra.mxu0 %v1690
        %v4020 = vpop.f32.mrf.mxu0
        %v4021 = vadd.f32 %v3911, %v4020
        %4022 = vmatmul.f32.gmra.mxu0 %v1691
        %v4023 = vpop.f32.mrf.mxu0
        %v4024 = vadd.f32 %v3914, %v4023
        %4025 = vmatmul.f32.gmra.mxu0 %v1696
        %v4026 = vpop.f32.mrf.mxu0
        %v4027 = vadd.f32 %v3917, %v4026
        %4028 = vmatmul.f32.gmra.mxu0 %v1697
        %v4029 = vpop.f32.mrf.mxu0
        %v4030 = vadd.f32 %v3920, %v4029
        %4031 = vmatmul.f32.gmra.mxu0 %v1710
        %v4032 = vpop.f32.mrf.mxu0
        %v4033 = vadd.f32 %v3923, %v4032
        %4034 = vmatmul.f32.gmra.mxu0 %v1711
        %v4035 = vpop.f32.mrf.mxu0
        %v4036 = vadd.f32 %v3926, %v4035
        %4037 = vdwg.mxu0
        %4038 = vmatpush.msra.mxu0 %v671
        %4039 = vmatpush.msra.mxu0 %v670
        %4040 = vmatpush.msra.mxu0 %v669
        %4041 = vmatpush.msra.mxu0 %v668
        %4042 = vmatpush.msra.mxu0 %v667
        %4043 = vmatpush.msra.mxu0 %v666
        %4044 = vmatpush.msra.mxu0 %v665
        %4045 = vmatpush.msra.mxu0 %v664
        %4046 = vmatpush.msra.mxu0 %v663
        %4047 = vmatpush.msra.mxu0 %v662
        %4048 = vmatpush.msra.mxu0 %v661
        %4049 = vmatpush.msra.mxu0 %v660
        %4050 = vmatpush.msra.mxu0 %v659
        %4051 = vmatpush.msra.mxu0 %v658
        %4052 = vmatpush.msra.mxu0 %v657
        %4053 = vmatpush.msra.mxu0 %v656
        %4054 = vmatmul.f32.gmra.mxu0 %v1467
        %v4055 = vpop.f32.mrf.mxu0
        %v4056 = vadd.f32 %v3946, %v4055
        %4057 = vmatmul.f32.gmra.mxu0 %v1468
        %v4058 = vpop.f32.mrf.mxu0
        %v4059 = vadd.f32 %v3949, %v4058
        %4060 = vmatmul.f32.gmra.mxu0 %v1469
        %v4061 = vpop.f32.mrf.mxu0
        %v4062 = vadd.f32 %v3952, %v4061
        %4063 = vmatmul.f32.gmra.mxu0 %v1470
        %v4064 = vpop.f32.mrf.mxu0
        %v4065 = vadd.f32 %v3955, %v4064
        %4066 = vmatmul.f32.gmra.mxu0 %v1471
        %v4067 = vpop.f32.mrf.mxu0
        %v4068 = vadd.f32 %v3958, %v4067
        %4069 = vmatmul.f32.gmra.mxu0 %v1472
        %v4070 = vpop.f32.mrf.mxu0
        %v4071 = vadd.f32 %v3961, %v4070
        %4072 = vmatmul.f32.gmra.mxu0 %v1473
        %v4073 = vpop.f32.mrf.mxu0
        %v4074 = vadd.f32 %v3964, %v4073
        %4075 = vmatmul.f32.gmra.mxu0 %v1474
        %v4076 = vpop.f32.mrf.mxu0
        %v4077 = vadd.f32 %v3967, %v4076
        %4078 = vmatmul.f32.gmra.mxu0 %v1475
        %v4079 = vpop.f32.mrf.mxu0
        %v4080 = vadd.f32 %v3970, %v4079
        %4081 = vmatmul.f32.gmra.mxu0 %v1476
        %v4082 = vpop.f32.mrf.mxu0
        %v4083 = vadd.f32 %v3973, %v4082
        %4084 = vmatmul.f32.gmra.mxu0 %v1477
        %v4085 = vpop.f32.mrf.mxu0
        %v4086 = vadd.f32 %v3976, %v4085
        %4087 = vmatmul.f32.gmra.mxu0 %v1478
        %v4088 = vpop.f32.mrf.mxu0
        %v4089 = vadd.f32 %v3979, %v4088
        %4090 = vmatmul.f32.gmra.mxu0 %v1479
        %v4091 = vpop.f32.mrf.mxu0
        %v4092 = vadd.f32 %v3982, %v4091
        %4093 = vmatmul.f32.gmra.mxu0 %v1480
        %v4094 = vpop.f32.mrf.mxu0
        %v4095 = vadd.f32 %v3985, %v4094
        %4096 = vmatmul.f32.gmra.mxu0 %v1481
        %v4097 = vpop.f32.mrf.mxu0
        %v4098 = vadd.f32 %v3988, %v4097
        %4099 = vmatmul.f32.gmra.mxu0 %v1482
        %v4100 = vpop.f32.mrf.mxu0
        %v4101 = vadd.f32 %v3991, %v4100
        %4102 = vmatmul.f32.gmra.mxu0 %v1483
        %v4103 = vpop.f32.mrf.mxu0
        %v4104 = vadd.f32 %v3994, %v4103
        %4105 = vmatmul.f32.gmra.mxu0 %v1484
        %v4106 = vpop.f32.mrf.mxu0
        %v4107 = vadd.f32 %v3997, %v4106
        %4108 = vmatmul.f32.gmra.mxu0 %v1485
        %v4109 = vpop.f32.mrf.mxu0
        %v4110 = vadd.f32 %v4000, %v4109
        %4111 = vmatmul.f32.gmra.mxu0 %v1486
        %v4112 = vpop.f32.mrf.mxu0
        %v4113 = vadd.f32 %v4003, %v4112
        %4114 = vmatmul.f32.gmra.mxu0 %v1487
        %v4115 = vpop.f32.mrf.mxu0
        %v4116 = vadd.f32 %v4006, %v4115
        %4117 = vmatmul.f32.gmra.mxu0 %v1488
        %v4118 = vpop.f32.mrf.mxu0
        %v4119 = vadd.f32 %v4009, %v4118
        %4120 = vmatmul.f32.gmra.mxu0 %v1698
        %v4121 = vpop.f32.mrf.mxu0
        %v4122 = vadd.f32 %v4012, %v4121
        %4123 = vmatmul.f32.gmra.mxu0 %v1699
        %v4124 = vpop.f32.mrf.mxu0
        %v4125 = vadd.f32 %v4015, %v4124
        %4126 = vmatmul.f32.gmra.mxu0 %v1700
        %v4127 = vpop.f32.mrf.mxu0
        %v4128 = vadd.f32 %v4018, %v4127
        %4129 = vmatmul.f32.gmra.mxu0 %v1701
        %v4130 = vpop.f32.mrf.mxu0
        %v4131 = vadd.f32 %v4021, %v4130
        %4132 = vmatmul.f32.gmra.mxu0 %v1702
        %v4133 = vpop.f32.mrf.mxu0
        %v4134 = vadd.f32 %v4024, %v4133
        %4135 = vmatmul.f32.gmra.mxu0 %v1703
        %v4136 = vpop.f32.mrf.mxu0
        %v4137 = vadd.f32 %v4027, %v4136
        %4138 = vmatmul.f32.gmra.mxu0 %v1704
        %v4139 = vpop.f32.mrf.mxu0
        %v4140 = vadd.f32 %v4030, %v4139
        %4141 = vmatmul.f32.gmra.mxu0 %v1712
        %v4142 = vpop.f32.mrf.mxu0
        %v4143 = vadd.f32 %v4033, %v4142
        %4144 = vmatmul.f32.gmra.mxu0 %v1713
        %v4145 = vpop.f32.mrf.mxu0
        %v4146 = vadd.f32 %v4036, %v4145
        %4147 = vdwg.mxu0
        %4148 = vmatpush.msra.mxu0 %v687
        %4149 = vmatpush.msra.mxu0 %v686
        %4150 = vmatpush.msra.mxu0 %v685
        %4151 = vmatpush.msra.mxu0 %v684
        %4152 = vmatpush.msra.mxu0 %v683
        %4153 = vmatpush.msra.mxu0 %v682
        %4154 = vmatpush.msra.mxu0 %v681
        %4155 = vmatpush.msra.mxu0 %v680
        %4156 = vmatpush.msra.mxu0 %v679
        %4157 = vmatpush.msra.mxu0 %v678
        %4158 = vmatpush.msra.mxu0 %v677
        %4159 = vmatpush.msra.mxu0 %v676
        %4160 = vmatpush.msra.mxu0 %v675
        %4161 = vmatpush.msra.mxu0 %v674
        %4162 = vmatpush.msra.mxu0 %v673
        %4163 = vmatpush.msra.mxu0 %v672
        %4164 = vmatmul.f32.gmra.mxu0 %v1498
        %v4165 = vpop.f32.mrf.mxu0
        %v4166 = vadd.f32 %v4056, %v4165
        %4167 = vmatmul.f32.gmra.mxu0 %v1499
        %v4168 = vpop.f32.mrf.mxu0
        %v4169 = vadd.f32 %v4059, %v4168
        %4170 = vmatmul.f32.gmra.mxu0 %v1500
        %v4171 = vpop.f32.mrf.mxu0
        %v4172 = vadd.f32 %v4062, %v4171
        %4173 = vmatmul.f32.gmra.mxu0 %v1501
        %v4174 = vpop.f32.mrf.mxu0
        %v4175 = vadd.f32 %v4065, %v4174
        %4176 = vmatmul.f32.gmra.mxu0 %v1502
        %v4177 = vpop.f32.mrf.mxu0
        %v4178 = vadd.f32 %v4068, %v4177
        %4179 = vmatmul.f32.gmra.mxu0 %v1503
        %v4180 = vpop.f32.mrf.mxu0
        %v4181 = vadd.f32 %v4071, %v4180
        %4182 = vmatmul.f32.gmra.mxu0 %v1504
        %v4183 = vpop.f32.mrf.mxu0
        %v4184 = vadd.f32 %v4074, %v4183
        %4185 = vmatmul.f32.gmra.mxu0 %v1505
        %v4186 = vpop.f32.mrf.mxu0
        %v4187 = vadd.f32 %v4077, %v4186
        %4188 = vmatmul.f32.gmra.mxu0 %v1506
        %v4189 = vpop.f32.mrf.mxu0
        %v4190 = vadd.f32 %v4080, %v4189
        %4191 = vmatmul.f32.gmra.mxu0 %v1507
        %v4192 = vpop.f32.mrf.mxu0
        %v4193 = vadd.f32 %v4083, %v4192
        %4194 = vmatmul.f32.gmra.mxu0 %v1508
        %v4195 = vpop.f32.mrf.mxu0
        %v4196 = vadd.f32 %v4086, %v4195
        %4197 = vmatmul.f32.gmra.mxu0 %v1509
        %v4198 = vpop.f32.mrf.mxu0
        %v4199 = vadd.f32 %v4089, %v4198
        %4200 = vmatmul.f32.gmra.mxu0 %v1510
        %v4201 = vpop.f32.mrf.mxu0
        %v4202 = vadd.f32 %v4092, %v4201
        %4203 = vmatmul.f32.gmra.mxu0 %v1511
        %v4204 = vpop.f32.mrf.mxu0
        %v4205 = vadd.f32 %v4095, %v4204
        %4206 = vmatmul.f32.gmra.mxu0 %v1512
        %v4207 = vpop.f32.mrf.mxu0
        %v4208 = vadd.f32 %v4098, %v4207
        %4209 = vmatmul.f32.gmra.mxu0 %v1513
        %v4210 = vpop.f32.mrf.mxu0
        %v4211 = vadd.f32 %v4101, %v4210
        %4212 = vmatmul.f32.gmra.mxu0 %v1514
        %v4213 = vpop.f32.mrf.mxu0
        %v4214 = vadd.f32 %v4104, %v4213
        %4215 = vmatmul.f32.gmra.mxu0 %v1515
        %v4216 = vpop.f32.mrf.mxu0
        %v4217 = vadd.f32 %v4107, %v4216
        %4218 = vmatmul.f32.gmra.mxu0 %v1516
        %v4219 = vpop.f32.mrf.mxu0
        %v4220 = vadd.f32 %v4110, %v4219
        %4221 = vmatmul.f32.gmra.mxu0 %v1517
        %v4222 = vpop.f32.mrf.mxu0
        %v4223 = vadd.f32 %v4113, %v4222
        %4224 = vmatmul.f32.gmra.mxu0 %v1518
        %v4225 = vpop.f32.mrf.mxu0
        %v4226 = vadd.f32 %v4116, %v4225
        %4227 = vmatmul.f32.gmra.mxu0 %v1519
        %v4228 = vpop.f32.mrf.mxu0
        %v4229 = vadd.f32 %v4119, %v4228
        %4230 = vmatmul.f32.gmra.mxu0 %v1582
        %v4231 = vpop.f32.mrf.mxu0
        %v4232 = vadd.f32 %v4122, %v4231
        %4233 = vmatmul.f32.gmra.mxu0 %v1583
        %v4234 = vpop.f32.mrf.mxu0
        %v4235 = vadd.f32 %v4125, %v4234
        %4236 = vmatmul.f32.gmra.mxu0 %v1705
        %v4237 = vpop.f32.mrf.mxu0
        %v4238 = vadd.f32 %v4128, %v4237
        %4239 = vmatmul.f32.gmra.mxu0 %v1706
        %v4240 = vpop.f32.mrf.mxu0
        %v4241 = vadd.f32 %v4131, %v4240
        %4242 = vmatmul.f32.gmra.mxu0 %v1707
        %v4243 = vpop.f32.mrf.mxu0
        %v4244 = vadd.f32 %v4134, %v4243
        %4245 = vmatmul.f32.gmra.mxu0 %v1708
        %v4246 = vpop.f32.mrf.mxu0
        %v4247 = vadd.f32 %v4137, %v4246
        %4248 = vmatmul.f32.gmra.mxu0 %v1709
        %v4249 = vpop.f32.mrf.mxu0
        %v4250 = vadd.f32 %v4140, %v4249
        %4251 = vmatmul.f32.gmra.mxu0 %v1714
        %v4252 = vpop.f32.mrf.mxu0
        %v4253 = vadd.f32 %v4143, %v4252
        %4254 = vmatmul.f32.gmra.mxu0 %v1715
        %v4255 = vpop.f32.mrf.mxu0
        %v4256 = vadd.f32 %v4146, %v4255
        %4257 = vdwg.mxu0
        %4258 = vmatpush.msra.mxu0 %v703
        %4259 = vmatpush.msra.mxu0 %v702
        %4260 = vmatpush.msra.mxu0 %v701
        %4261 = vmatpush.msra.mxu0 %v700
        %4262 = vmatpush.msra.mxu0 %v699
        %4263 = vmatpush.msra.mxu0 %v698
        %4264 = vmatpush.msra.mxu0 %v697
        %4265 = vmatpush.msra.mxu0 %v696
        %4266 = vmatpush.msra.mxu0 %v695
        %4267 = vmatpush.msra.mxu0 %v694
        %4268 = vmatpush.msra.mxu0 %v693
        %4269 = vmatpush.msra.mxu0 %v692
        %4270 = vmatpush.msra.mxu0 %v691
        %4271 = vmatpush.msra.mxu0 %v690
        %4272 = vmatpush.msra.mxu0 %v689
        %4273 = vmatpush.msra.mxu0 %v688
        %4274 = vmatmul.f32.gmra.mxu0 %v1529
        %v4275 = vpop.f32.mrf.mxu0
        %v4276 = vadd.f32 %v4166, %v4275
        %4277 = vmatmul.f32.gmra.mxu0 %v1530
        %v4278 = vpop.f32.mrf.mxu0
        %v4279 = vadd.f32 %v4169, %v4278
        %4280 = vmatmul.f32.gmra.mxu0 %v1531
        %v4281 = vpop.f32.mrf.mxu0
        %v4282 = vadd.f32 %v4172, %v4281
        %4283 = vmatmul.f32.gmra.mxu0 %v1532
        %v4284 = vpop.f32.mrf.mxu0
        %v4285 = vadd.f32 %v4175, %v4284
        %4286 = vmatmul.f32.gmra.mxu0 %v1533
        %v4287 = vpop.f32.mrf.mxu0
        %v4288 = vadd.f32 %v4178, %v4287
        %4289 = vmatmul.f32.gmra.mxu0 %v1534
        %v4290 = vpop.f32.mrf.mxu0
        %v4291 = vadd.f32 %v4181, %v4290
        %4292 = vmatmul.f32.gmra.mxu0 %v1535
        %v4293 = vpop.f32.mrf.mxu0
        %v4294 = vadd.f32 %v4184, %v4293
        %4295 = vmatmul.f32.gmra.mxu0 %v1536
        %v4296 = vpop.f32.mrf.mxu0
        %v4297 = vadd.f32 %v4187, %v4296
        %4298 = vmatmul.f32.gmra.mxu0 %v1537
        %v4299 = vpop.f32.mrf.mxu0
        %v4300 = vadd.f32 %v4190, %v4299
        %4301 = vmatmul.f32.gmra.mxu0 %v1538
        %v4302 = vpop.f32.mrf.mxu0
        %v4303 = vadd.f32 %v4193, %v4302
        %4304 = vmatmul.f32.gmra.mxu0 %v1539
        %v4305 = vpop.f32.mrf.mxu0
        %v4306 = vadd.f32 %v4196, %v4305
        %4307 = vmatmul.f32.gmra.mxu0 %v1540
        %v4308 = vpop.f32.mrf.mxu0
        %v4309 = vadd.f32 %v4199, %v4308
        %4310 = vmatmul.f32.gmra.mxu0 %v1541
        %v4311 = vpop.f32.mrf.mxu0
        %v4312 = vadd.f32 %v4202, %v4311
        %4313 = vmatmul.f32.gmra.mxu0 %v1542
        %v4314 = vpop.f32.mrf.mxu0
        %v4315 = vadd.f32 %v4205, %v4314
        %4316 = vmatmul.f32.gmra.mxu0 %v1543
        %v4317 = vpop.f32.mrf.mxu0
        %v4318 = vadd.f32 %v4208, %v4317
        %4319 = vmatmul.f32.gmra.mxu0 %v1544
        %v4320 = vpop.f32.mrf.mxu0
        %v4321 = vadd.f32 %v4211, %v4320
        %4322 = vmatmul.f32.gmra.mxu0 %v1545
        %v4323 = vpop.f32.mrf.mxu0
        %v4324 = vadd.f32 %v4214, %v4323
        %4325 = vmatmul.f32.gmra.mxu0 %v1546
        %v4326 = vpop.f32.mrf.mxu0
        %v4327 = vadd.f32 %v4217, %v4326
        %4328 = vmatmul.f32.gmra.mxu0 %v1547
        %v4329 = vpop.f32.mrf.mxu0
        %v4330 = vadd.f32 %v4220, %v4329
        %4331 = vmatmul.f32.gmra.mxu0 %v1548
        %v4332 = vpop.f32.mrf.mxu0
        %v4333 = vadd.f32 %v4223, %v4332
        %4334 = vmatmul.f32.gmra.mxu0 %v1549
        %v4335 = vpop.f32.mrf.mxu0
        %v4336 = vadd.f32 %v4226, %v4335
        %4337 = vmatmul.f32.gmra.mxu0 %v1550
        %v4338 = vpop.f32.mrf.mxu0
        %v4339 = vadd.f32 %v4229, %v4338
        %4340 = vmatmul.f32.gmra.mxu0 %v1584
        %v4341 = vpop.f32.mrf.mxu0
        %v4342 = vadd.f32 %v4232, %v4341
        %4343 = vmatmul.f32.gmra.mxu0 %v1585
        %v4344 = vpop.f32.mrf.mxu0
        %v4345 = vadd.f32 %v4235, %v4344
        %4346 = vmatmul.f32.gmra.mxu0 %v1716
        %v4347 = vpop.f32.mrf.mxu0
        %v4348 = vadd.f32 %v4238, %v4347
        %4349 = vmatmul.f32.gmra.mxu0 %v1717
        %v4350 = vpop.f32.mrf.mxu0
        %v4351 = vadd.f32 %v4241, %v4350
        %4352 = vmatmul.f32.gmra.mxu0 %v1718
        %v4353 = vpop.f32.mrf.mxu0
        %v4354 = vadd.f32 %v4244, %v4353
        %4355 = vmatmul.f32.gmra.mxu0 %v1719
        %v4356 = vpop.f32.mrf.mxu0
        %v4357 = vadd.f32 %v4247, %v4356
        %4358 = vmatmul.f32.gmra.mxu0 %v1720
        %v4359 = vpop.f32.mrf.mxu0
        %v4360 = vadd.f32 %v4250, %v4359
        %4361 = vmatmul.f32.gmra.mxu0 %v1721
        %v4362 = vpop.f32.mrf.mxu0
        %v4363 = vadd.f32 %v4253, %v4362
        %4364 = vmatmul.f32.gmra.mxu0 %v1722
        %v4365 = vpop.f32.mrf.mxu0
        %v4366 = vadd.f32 %v4256, %v4365
        %4367 = vdwg.mxu0
        %4368 = vmatpush.msra.mxu0 %v719
        %4369 = vmatpush.msra.mxu0 %v718
        %4370 = vmatpush.msra.mxu0 %v717
        %4371 = vmatpush.msra.mxu0 %v716
        %4372 = vmatpush.msra.mxu0 %v715
        %4373 = vmatpush.msra.mxu0 %v714
        %4374 = vmatpush.msra.mxu0 %v713
        %4375 = vmatpush.msra.mxu0 %v712
        %4376 = vmatpush.msra.mxu0 %v711
        %4377 = vmatpush.msra.mxu0 %v710
        %4378 = vmatpush.msra.mxu0 %v709
        %4379 = vmatpush.msra.mxu0 %v708
        %4380 = vmatpush.msra.mxu0 %v707
        %4381 = vmatpush.msra.mxu0 %v706
        %4382 = vmatpush.msra.mxu0 %v705
        %4383 = vmatpush.msra.mxu0 %v704
        %4384 = vmatmul.f32.gmra.mxu0 %v1560
        %v4385 = vpop.f32.mrf.mxu0
        %v4386 = vadd.f32 %v4276, %v4385
        %4387 = vmatmul.f32.gmra.mxu0 %v1561
        %v4388 = vpop.f32.mrf.mxu0
        %v4389 = vadd.f32 %v4279, %v4388
        %4390 = vmatmul.f32.gmra.mxu0 %v1562
        %v4391 = vpop.f32.mrf.mxu0
        %v4392 = vadd.f32 %v4282, %v4391
        %4393 = vmatmul.f32.gmra.mxu0 %v1563
        %v4394 = vpop.f32.mrf.mxu0
        %v4395 = vadd.f32 %v4285, %v4394
        %4396 = vmatmul.f32.gmra.mxu0 %v1564
        %v4397 = vpop.f32.mrf.mxu0
        %v4398 = vadd.f32 %v4288, %v4397
        %4399 = vmatmul.f32.gmra.mxu0 %v1565
        %v4400 = vpop.f32.mrf.mxu0
        %v4401 = vadd.f32 %v4291, %v4400
        %4402 = vmatmul.f32.gmra.mxu0 %v1566
        %v4403 = vpop.f32.mrf.mxu0
        %v4404 = vadd.f32 %v4294, %v4403
        %4405 = vmatmul.f32.gmra.mxu0 %v1567
        %v4406 = vpop.f32.mrf.mxu0
        %v4407 = vadd.f32 %v4297, %v4406
        %4408 = vmatmul.f32.gmra.mxu0 %v1568
        %v4409 = vpop.f32.mrf.mxu0
        %v4410 = vadd.f32 %v4300, %v4409
        %4411 = vmatmul.f32.gmra.mxu0 %v1569
        %v4412 = vpop.f32.mrf.mxu0
        %v4413 = vadd.f32 %v4303, %v4412
        %4414 = vmatmul.f32.gmra.mxu0 %v1570
        %v4415 = vpop.f32.mrf.mxu0
        %v4416 = vadd.f32 %v4306, %v4415
        %4417 = vmatmul.f32.gmra.mxu0 %v1571
        %v4418 = vpop.f32.mrf.mxu0
        %v4419 = vadd.f32 %v4309, %v4418
        %4420 = vmatmul.f32.gmra.mxu0 %v1572
        %v4421 = vpop.f32.mrf.mxu0
        %v4422 = vadd.f32 %v4312, %v4421
        %4423 = vmatmul.f32.gmra.mxu0 %v1573
        %v4424 = vpop.f32.mrf.mxu0
        %v4425 = vadd.f32 %v4315, %v4424
        %4426 = vmatmul.f32.gmra.mxu0 %v1574
        %v4427 = vpop.f32.mrf.mxu0
        %v4428 = vadd.f32 %v4318, %v4427
        %4429 = vmatmul.f32.gmra.mxu0 %v1575
        %v4430 = vpop.f32.mrf.mxu0
        %v4431 = vadd.f32 %v4321, %v4430
        %4432 = vmatmul.f32.gmra.mxu0 %v1576
        %v4433 = vpop.f32.mrf.mxu0
        %v4434 = vadd.f32 %v4324, %v4433
        %4435 = vmatmul.f32.gmra.mxu0 %v1577
        %v4436 = vpop.f32.mrf.mxu0
        %v4437 = vadd.f32 %v4327, %v4436
        %4438 = vmatmul.f32.gmra.mxu0 %v1578
        %v4439 = vpop.f32.mrf.mxu0
        %v4440 = vadd.f32 %v4330, %v4439
        %4441 = vmatmul.f32.gmra.mxu0 %v1579
        %v4442 = vpop.f32.mrf.mxu0
        %v4443 = vadd.f32 %v4333, %v4442
        %4444 = vmatmul.f32.gmra.mxu0 %v1580
        %v4445 = vpop.f32.mrf.mxu0
        %v4446 = vadd.f32 %v4336, %v4445
        %4447 = vmatmul.f32.gmra.mxu0 %v1581
        %v4448 = vpop.f32.mrf.mxu0
        %v4449 = vadd.f32 %v4339, %v4448
        %4450 = vmatmul.f32.gmra.mxu0 %v1586
        %v4451 = vpop.f32.mrf.mxu0
        %v4452 = vadd.f32 %v4342, %v4451
        %4453 = vmatmul.f32.gmra.mxu0 %v1587
        %v4454 = vpop.f32.mrf.mxu0
        %v4455 = vadd.f32 %v4345, %v4454
        %4456 = vmatmul.f32.gmra.mxu0 %v1650
        %v4457 = vpop.f32.mrf.mxu0
        %v4458 = vadd.f32 %v4348, %v4457
        %4459 = vmatmul.f32.gmra.mxu0 %v1651
        %v4460 = vpop.f32.mrf.mxu0
        %v4461 = vadd.f32 %v4351, %v4460
        %4462 = vmatmul.f32.gmra.mxu0 %v1723
        %v4463 = vpop.f32.mrf.mxu0
        %v4464 = vadd.f32 %v4354, %v4463
        %4465 = vmatmul.f32.gmra.mxu0 %v1724
        %v4466 = vpop.f32.mrf.mxu0
        %v4467 = vadd.f32 %v4357, %v4466
        %4468 = vmatmul.f32.gmra.mxu0 %v1725
        %v4469 = vpop.f32.mrf.mxu0
        %v4470 = vadd.f32 %v4360, %v4469
        %4471 = vmatmul.f32.gmra.mxu0 %v1726
        %v4472 = vpop.f32.mrf.mxu0
        %v4473 = vadd.f32 %v4363, %v4472
        %4474 = vmatmul.f32.gmra.mxu0 %v1727
        %v4475 = vpop.f32.mrf.mxu0
        %v4476 = vadd.f32 %v4366, %v4475
        %4477 = vdwg.mxu0
        %v4478 = vsub.f32 %v1621, %v4386
        %v4479 = vsub.f32 %v1622, %v4389
        %v4480 = vsub.f32 %v1623, %v4392
        %v4481 = vsub.f32 %v1624, %v4395
        %v4482 = vsub.f32 %v1625, %v4398
        %v4483 = vsub.f32 %v1626, %v4401
        %v4484 = vsub.f32 %v1627, %v4404
        %v4485 = vsub.f32 %v1628, %v4407
        %v4486 = vsub.f32 %v1629, %v4410
        %v4487 = vsub.f32 %v1630, %v4413
        %v4488 = vsub.f32 %v1631, %v4416
        %v4489 = vsub.f32 %v1632, %v4419
        %v4490 = vsub.f32 %v1633, %v4422
        %v4491 = vsub.f32 %v1634, %v4425
        %v4492 = vsub.f32 %v1635, %v4428
        %v4493 = vsub.f32 %v1636, %v4431
        %v4494 = vsub.f32 %v1637, %v4434
        %v4495 = vsub.f32 %v1638, %v4437
        %v4496 = vsub.f32 %v1639, %v4440
        %v4497 = vsub.f32 %v1640, %v4443
        %v4498 = vsub.f32 %v1641, %v4446
        %v4499 = vsub.f32 %v1642, %v4449
        %v4500 = vsub.f32 %v1643, %v4452
        %v4501 = vsub.f32 %v1644, %v4455
        %v4502 = vsub.f32 %v1645, %v4458
        %v4503 = vsub.f32 %v1646, %v4461
        %v4504 = vsub.f32 %v1647, %v4464
        %v4505 = vsub.f32 %v1648, %v4467
        %v4506 = vsub.f32 %v1649, %v4470
        %v4507 = vsub.f32 %v1654, %v4473
        %v4508 = vsub.f32 %v1655, %v4476
        %v4509 = vadd.f32 %v4478, %v1046
        %v4510 = vadd.f32 %v4479, %v1049
        %v4511 = vadd.f32 %v4480, %v1052
        %v4512 = vadd.f32 %v4481, %v1055
        %v4513 = vadd.f32 %v4482, %v1058
        %v4514 = vadd.f32 %v4483, %v1061
        %v4515 = vadd.f32 %v4484, %v1064
        %v4516 = vadd.f32 %v4485, %v1067
        %v4517 = vadd.f32 %v4486, %v1070
        %v4518 = vadd.f32 %v4487, %v1073
        %v4519 = vadd.f32 %v4488, %v1076
        %v4520 = vadd.f32 %v4489, %v1079
        %v4521 = vadd.f32 %v4490, %v1082
        %v4522 = vadd.f32 %v4491, %v1085
        %v4523 = vadd.f32 %v4492, %v1088
        %v4524 = vadd.f32 %v4493, %v1091
        %v4525 = vadd.f32 %v4494, %v1094
        %v4526 = vadd.f32 %v4495, %v1097
        %v4527 = vadd.f32 %v4496, %v1100
        %v4528 = vadd.f32 %v4497, %v1103
        %v4529 = vadd.f32 %v4498, %v1106
        %v4530 = vadd.f32 %v4499, %v1109
        %v4531 = vadd.f32 %v4500, %v1112
        %v4532 = vadd.f32 %v4501, %v1115
        %v4533 = vadd.f32 %v4502, %v1118
        %v4534 = vadd.f32 %v4503, %v1121
        %v4535 = vadd.f32 %v4504, %v1124
        %v4536 = vadd.f32 %v4505, %v1127
        %v4537 = vadd.f32 %v4506, %v1130
        %v4538 = vadd.f32 %v4507, %v1133
        %v4539 = vadd.f32 %v4508, %v1136
        %v4540 = vsub.f32 %v4509, %v897
        %v4541 = vsub.f32 %v4510, %v897
        %v4542 = vsub.f32 %v4511, %v897
        %v4543 = vsub.f32 %v4512, %v897
        %v4544 = vsub.f32 %v4513, %v897
        %v4545 = vsub.f32 %v4514, %v897
        %v4546 = vsub.f32 %v4515, %v897
        %v4547 = vsub.f32 %v4516, %v897
        %v4548 = vsub.f32 %v4517, %v897
        %v4549 = vsub.f32 %v4518, %v897
        %v4550 = vsub.f32 %v4519, %v897
        %v4551 = vsub.f32 %v4520, %v897
        %v4552 = vsub.f32 %v4521, %v897
        %v4553 = vsub.f32 %v4522, %v897
        %v4554 = vsub.f32 %v4523, %v897
        %v4555 = vsub.f32 %v4524, %v897
        %v4556 = vsub.f32 %v4525, %v897
        %v4557 = vsub.f32 %v4526, %v897
        %v4558 = vsub.f32 %v4527, %v897
        %v4559 = vsub.f32 %v4528, %v897
        %v4560 = vsub.f32 %v4529, %v897
        %v4561 = vsub.f32 %v4530, %v897
        %v4562 = vsub.f32 %v4531, %v897
        %v4563 = vsub.f32 %v4532, %v897
        %v4564 = vsub.f32 %v4533, %v897
        %v4565 = vsub.f32 %v4534, %v897
        %v4566 = vsub.f32 %v4535, %v897
        %v4567 = vsub.f32 %v4536, %v897
        %v4568 = vsub.f32 %v4537, %v897
        %v4569 = vsub.f32 %v4538, %v897
        %v4570 = vsub.f32 %v4539, %v897
        %v4571 = vmax.f32 %v4540, 0.0
        %v4572 = vmax.f32 %v4541, 0.0
        %v4573 = vmax.f32 %v4542, 0.0
        %v4574 = vmax.f32 %v4543, 0.0
        %v4575 = vmax.f32 %v4544, 0.0
        %v4576 = vmax.f32 %v4545, 0.0
        %v4577 = vmax.f32 %v4546, 0.0
        %v4578 = vmax.f32 %v4547, 0.0
        %v4579 = vmax.f32 %v4548, 0.0
        %v4580 = vmax.f32 %v4549, 0.0
        %v4581 = vmax.f32 %v4550, 0.0
        %v4582 = vmax.f32 %v4551, 0.0
        %v4583 = vmax.f32 %v4552, 0.0
        %v4584 = vmax.f32 %v4553, 0.0
        %v4585 = vmax.f32 %v4554, 0.0
        %v4586 = vmax.f32 %v4555, 0.0
        %v4587 = vmax.f32 %v4556, 0.0
        %v4588 = vmax.f32 %v4557, 0.0
        %v4589 = vmax.f32 %v4558, 0.0
        %v4590 = vmax.f32 %v4559, 0.0
        %v4591 = vmax.f32 %v4560, 0.0
        %v4592 = vmax.f32 %v4561, 0.0
        %v4593 = vmax.f32 %v4562, 0.0
        %v4594 = vmax.f32 %v4563, 0.0
        %v4595 = vmax.f32 %v4564, 0.0
        %v4596 = vmax.f32 %v4565, 0.0
        %v4597 = vmax.f32 %v4566, 0.0
        %v4598 = vmax.f32 %v4567, 0.0
        %v4599 = vmax.f32 %v4568, 0.0
        %v4600 = vmax.f32 %v4569, 0.0
        %v4601 = vmax.f32 %v4570, 0.0
        %v4602 = vsub.f32 0.0, %v4509
        %v4603 = vsub.f32 0.0, %v4510
        %v4604 = vsub.f32 0.0, %v4511
        %v4605 = vsub.f32 0.0, %v4512
        %v4606 = vsub.f32 0.0, %v4513
        %v4607 = vsub.f32 0.0, %v4514
        %v4608 = vsub.f32 0.0, %v4515
        %v4609 = vsub.f32 0.0, %v4516
        %v4610 = vsub.f32 0.0, %v4517
        %v4611 = vsub.f32 0.0, %v4518
        %v4612 = vsub.f32 0.0, %v4519
        %v4613 = vsub.f32 0.0, %v4520
        %v4614 = vsub.f32 0.0, %v4521
        %v4615 = vsub.f32 0.0, %v4522
        %v4616 = vsub.f32 0.0, %v4523
        %v4617 = vsub.f32 0.0, %v4524
        %v4618 = vsub.f32 0.0, %v4525
        %v4619 = vsub.f32 0.0, %v4526
        %v4620 = vsub.f32 0.0, %v4527
        %v4621 = vsub.f32 0.0, %v4528
        %v4622 = vsub.f32 0.0, %v4529
        %v4623 = vsub.f32 0.0, %v4530
        %v4624 = vsub.f32 0.0, %v4531
        %v4625 = vsub.f32 0.0, %v4532
        %v4626 = vsub.f32 0.0, %v4533
        %v4627 = vsub.f32 0.0, %v4534
        %v4628 = vsub.f32 0.0, %v4535
        %v4629 = vsub.f32 0.0, %v4536
        %v4630 = vsub.f32 0.0, %v4537
        %v4631 = vsub.f32 0.0, %v4538
        %v4632 = vsub.f32 0.0, %v4539
        %v4633 = vsub.f32 %v4602, %v897
        %v4634 = vsub.f32 %v4603, %v897
        %v4635 = vsub.f32 %v4604, %v897
        %v4636 = vsub.f32 %v4605, %v897
        %v4637 = vsub.f32 %v4606, %v897
        %v4638 = vsub.f32 %v4607, %v897
        %v4639 = vsub.f32 %v4608, %v897
        %v4640 = vsub.f32 %v4609, %v897
        %v4641 = vsub.f32 %v4610, %v897
        %v4642 = vsub.f32 %v4611, %v897
        %v4643 = vsub.f32 %v4612, %v897
        %v4644 = vsub.f32 %v4613, %v897
        %v4645 = vsub.f32 %v4614, %v897
        %v4646 = vsub.f32 %v4615, %v897
        %v4647 = vsub.f32 %v4616, %v897
        %v4648 = vsub.f32 %v4617, %v897
        %v4649 = vsub.f32 %v4618, %v897
        %v4650 = vsub.f32 %v4619, %v897
        %v4651 = vsub.f32 %v4620, %v897
        %v4652 = vsub.f32 %v4621, %v897
        %v4653 = vsub.f32 %v4622, %v897
        %v4654 = vsub.f32 %v4623, %v897
        %v4655 = vsub.f32 %v4624, %v897
        %v4656 = vsub.f32 %v4625, %v897
        %v4657 = vsub.f32 %v4626, %v897
        %v4658 = vsub.f32 %v4627, %v897
        %v4659 = vsub.f32 %v4628, %v897
        %v4660 = vsub.f32 %v4629, %v897
        %v4661 = vsub.f32 %v4630, %v897
        %v4662 = vsub.f32 %v4631, %v897
        %v4663 = vsub.f32 %v4632, %v897
        %v4664 = vmax.f32 %v4633, 0.0
        %v4665 = vmax.f32 %v4634, 0.0
        %v4666 = vmax.f32 %v4635, 0.0
        %v4667 = vmax.f32 %v4636, 0.0
        %v4668 = vmax.f32 %v4637, 0.0
        %v4669 = vmax.f32 %v4638, 0.0
        %v4670 = vmax.f32 %v4639, 0.0
        %v4671 = vmax.f32 %v4640, 0.0
        %v4672 = vmax.f32 %v4641, 0.0
        %v4673 = vmax.f32 %v4642, 0.0
        %v4674 = vmax.f32 %v4643, 0.0
        %v4675 = vmax.f32 %v4644, 0.0
        %v4676 = vmax.f32 %v4645, 0.0
        %v4677 = vmax.f32 %v4646, 0.0
        %v4678 = vmax.f32 %v4647, 0.0
        %v4679 = vmax.f32 %v4648, 0.0
        %v4680 = vmax.f32 %v4649, 0.0
        %v4681 = vmax.f32 %v4650, 0.0
        %v4682 = vmax.f32 %v4651, 0.0
        %v4683 = vmax.f32 %v4652, 0.0
        %v4684 = vmax.f32 %v4653, 0.0
        %v4685 = vmax.f32 %v4654, 0.0
        %v4686 = vmax.f32 %v4655, 0.0
        %v4687 = vmax.f32 %v4656, 0.0
        %v4688 = vmax.f32 %v4657, 0.0
        %v4689 = vmax.f32 %v4658, 0.0
        %v4690 = vmax.f32 %v4659, 0.0
        %v4691 = vmax.f32 %v4660, 0.0
        %v4692 = vmax.f32 %v4661, 0.0
        %v4693 = vmax.f32 %v4662, 0.0
        %v4694 = vmax.f32 %v4663, 0.0
        %v4695 = vsub.f32 %v4571, %v4664
        %v4696 = vsub.f32 %v4572, %v4665
        %v4697 = vsub.f32 %v4573, %v4666
        %v4698 = vsub.f32 %v4574, %v4667
        %v4699 = vsub.f32 %v4575, %v4668
        %v4700 = vsub.f32 %v4576, %v4669
        %v4701 = vsub.f32 %v4577, %v4670
        %v4702 = vsub.f32 %v4578, %v4671
        %v4703 = vsub.f32 %v4579, %v4672
        %v4704 = vsub.f32 %v4580, %v4673
        %v4705 = vsub.f32 %v4581, %v4674
        %v4706 = vsub.f32 %v4582, %v4675
        %v4707 = vsub.f32 %v4583, %v4676
        %v4708 = vsub.f32 %v4584, %v4677
        %v4709 = vsub.f32 %v4585, %v4678
        %v4710 = vsub.f32 %v4586, %v4679
        %v4711 = vsub.f32 %v4587, %v4680
        %v4712 = vsub.f32 %v4588, %v4681
        %v4713 = vsub.f32 %v4589, %v4682
        %v4714 = vsub.f32 %v4590, %v4683
        %v4715 = vsub.f32 %v4591, %v4684
        %v4716 = vsub.f32 %v4592, %v4685
        %v4717 = vsub.f32 %v4593, %v4686
        %v4718 = vsub.f32 %v4594, %v4687
        %v4719 = vsub.f32 %v4595, %v4688
        %v4720 = vsub.f32 %v4596, %v4689
        %v4721 = vsub.f32 %v4597, %v4690
        %v4722 = vsub.f32 %v4598, %v4691
        %v4723 = vsub.f32 %v4599, %v4692
        %v4724 = vsub.f32 %v4600, %v4693
        %v4725 = vsub.f32 %v4601, %v4694
        %v4726 = vmul.f32 %v4695, %v864
        %v4727 = vmul.f32 %v4696, %v865
        %v4728 = vmul.f32 %v4697, %v866
        %v4729 = vmul.f32 %v4698, %v867
        %v4730 = vmul.f32 %v4699, %v868
        %v4731 = vmul.f32 %v4700, %v869
        %v4732 = vmul.f32 %v4701, %v870
        %v4733 = vmul.f32 %v4702, %v871
        %v4734 = vmul.f32 %v4703, %v872
        %v4735 = vmul.f32 %v4704, %v873
        %v4736 = vmul.f32 %v4705, %v874
        %v4737 = vmul.f32 %v4706, %v875
        %v4738 = vmul.f32 %v4707, %v876
        %v4739 = vmul.f32 %v4708, %v877
        %v4740 = vmul.f32 %v4709, %v878
        %v4741 = vmul.f32 %v4710, %v879
        %v4742 = vmul.f32 %v4711, %v880
        %v4743 = vmul.f32 %v4712, %v881
        %v4744 = vmul.f32 %v4713, %v882
        %v4745 = vmul.f32 %v4714, %v883
        %v4746 = vmul.f32 %v4715, %v884
        %v4747 = vmul.f32 %v4716, %v885
        %v4748 = vmul.f32 %v4717, %v886
        %v4749 = vmul.f32 %v4718, %v887
        %v4750 = vmul.f32 %v4719, %v888
        %v4751 = vmul.f32 %v4720, %v889
        %v4752 = vmul.f32 %v4721, %v890
        %v4753 = vmul.f32 %v4722, %v891
        %v4754 = vmul.f32 %v4723, %v892
        %v4755 = vmul.f32 %v4724, %v893
        %v4756 = vmul.f32 %v4725, %v894
        %4757 = vst [vmem:[#allocation2 + $0x26] sm:$0xff] %v4726
        %4758 = vst [vmem:[#allocation2 + $0x2e] sm:$0xff] %v4727
        %4759 = vst [vmem:[#allocation2 + $0x36] sm:$0xff] %v4728
        %4760 = vst [vmem:[#allocation2 + $0x3e] sm:$0xff] %v4729
        %4761 = vst [vmem:[#allocation2 + $0x46] sm:$0xff] %v4730
        %4762 = vst [vmem:[#allocation2 + $0x4e] sm:$0xff] %v4731
        %4763 = vst [vmem:[#allocation2 + $0x56] sm:$0xff] %v4732
        %4764 = vst [vmem:[#allocation2 + $0x5e] sm:$0xff] %v4733
        %4765 = vst [vmem:[#allocation2 + $0x66] sm:$0xff] %v4734
        %4766 = vst [vmem:[#allocation2 + $0x6e] sm:$0xff] %v4735
        %4767 = vst [vmem:[#allocation2 + $0x76] sm:$0xff] %v4736
        %4768 = vst [vmem:[#allocation2 + $0x7e] sm:$0xff] %v4737
        %4769 = vst [vmem:[#allocation2 + $0x86] sm:$0xff] %v4738
        %4770 = vst [vmem:[#allocation2 + $0x8e] sm:$0xff] %v4739
        %4771 = vst [vmem:[#allocation2 + $0x96] sm:$0xff] %v4740
        %4772 = vst [vmem:[#allocation2 + $0x9e] sm:$0xff] %v4741
        %4773 = vst [vmem:[#allocation2 + $0xa6] sm:$0xff] %v4742
        %4774 = vst [vmem:[#allocation2 + $0xae] sm:$0xff] %v4743
        %4775 = vst [vmem:[#allocation2 + $0xb6] sm:$0xff] %v4744
        %4776 = vst [vmem:[#allocation2 + $0xbe] sm:$0xff] %v4745
        %4777 = vst [vmem:[#allocation2 + $0xc6] sm:$0xff] %v4746
        %4778 = vst [vmem:[#allocation2 + $0xce] sm:$0xff] %v4747
        %4779 = vst [vmem:[#allocation2 + $0xd6] sm:$0xff] %v4748
        %4780 = vst [vmem:[#allocation2 + $0xde] sm:$0xff] %v4749
        %4781 = vst [vmem:[#allocation2 + $0xe6] sm:$0xff] %v4750
        %4782 = vst [vmem:[#allocation2 + $0xee] sm:$0xff] %v4751
        %4783 = vst [vmem:[#allocation2 + $0xf6] sm:$0xff] %v4752
        %4784 = vst [vmem:[#allocation2 + $0xfe] sm:$0xff] %v4753
        %4785 = vst [vmem:[#allocation2 + $0x106] sm:$0xff] %v4754
        %4786 = vst [vmem:[#allocation2 + $0x10e] sm:$0xff] %v4755
        %4787 = vst [vmem:[#allocation2 + $0x116] sm:$0xff] %v4756
        %v4788 = vld [vmem:[#allocation2] sm:$0xff]
        %v4789 = vld [vmem:[#allocation2 + $0x8] sm:$0xff]
        %v4790 = vld [vmem:[#allocation2 + $0x10] sm:$0xff]
        %v4791 = vld [vmem:[#allocation2 + $0x18] sm:$0xff]
        %v4792 = vld [vmem:[#allocation2 + $0x20] sm:$0xff]
        %v4793 = vld [vmem:[#allocation2 + $0x28] sm:$0xff]
        %v4794 = vld [vmem:[#allocation2 + $0x30] sm:$0xff]
        %v4795 = vld [vmem:[#allocation2 + $0x38] sm:$0xff]
        %v4796 = vld [vmem:[#allocation2 + $0x40] sm:$0xff]
        %v4797 = vld [vmem:[#allocation2 + $0x48] sm:$0xff]
        %v4798 = vld [vmem:[#allocation2 + $0x50] sm:$0xff]
        %v4799 = vld [vmem:[#allocation2 + $0x58] sm:$0xff]
        %v4800 = vld [vmem:[#allocation2 + $0x60] sm:$0xff]
        %v4801 = vld [vmem:[#allocation2 + $0x68] sm:$0xff]
        %v4802 = vld [vmem:[#allocation2 + $0x70] sm:$0xff]
        %v4803 = vld [vmem:[#allocation2 + $0x78] sm:$0xff]
        %v4804 = vld [vmem:[#allocation2 + $0x80] sm:$0xff]
        %v4805 = vld [vmem:[#allocation2 + $0x88] sm:$0xff]
        %v4806 = vld [vmem:[#allocation2 + $0x90] sm:$0xff]
        %v4807 = vld [vmem:[#allocation2 + $0x98] sm:$0xff]
        %v4808 = vld [vmem:[#allocation2 + $0xa0] sm:$0xff]
        %v4809 = vld [vmem:[#allocation2 + $0xa8] sm:$0xff]
        %v4810 = vld [vmem:[#allocation2 + $0xb0] sm:$0xff]
        %v4811 = vld [vmem:[#allocation2 + $0xb8] sm:$0xff]
        %v4812 = vld [vmem:[#allocation2 + $0xc0] sm:$0xff]
        %v4813 = vld [vmem:[#allocation2 + $0xc8] sm:$0xff]
        %v4814 = vld [vmem:[#allocation2 + $0xd0] sm:$0xff]
        %v4815 = vld [vmem:[#allocation2 + $0xd8] sm:$0xff]
        %v4816 = vld [vmem:[#allocation2 + $0xe0] sm:$0xff]
        %v4817 = vld [vmem:[#allocation2 + $0xe8] sm:$0xff]
        %v4818 = vld [vmem:[#allocation2 + $0xf0] sm:$0xff]
        %v4819 = vld [vmem:[#allocation2 + $0x1] sm:$0xff]
        %v4820 = vld [vmem:[#allocation2 + $0x9] sm:$0xff]
        %v4821 = vld [vmem:[#allocation2 + $0x11] sm:$0xff]
        %v4822 = vld [vmem:[#allocation2 + $0x19] sm:$0xff]
        %v4823 = vld [vmem:[#allocation2 + $0x21] sm:$0xff]
        %v4824 = vld [vmem:[#allocation2 + $0x29] sm:$0xff]
        %v4825 = vld [vmem:[#allocation2 + $0x31] sm:$0xff]
        %v4826 = vld [vmem:[#allocation2 + $0x39] sm:$0xff]
        %v4827 = vld [vmem:[#allocation2 + $0x41] sm:$0xff]
        %v4828 = vld [vmem:[#allocation2 + $0x49] sm:$0xff]
        %v4829 = vld [vmem:[#allocation2 + $0x51] sm:$0xff]
        %v4830 = vld [vmem:[#allocation2 + $0x59] sm:$0xff]
        %v4831 = vld [vmem:[#allocation2 + $0x61] sm:$0xff]
        %v4832 = vld [vmem:[#allocation2 + $0x69] sm:$0xff]
        %v4833 = vld [vmem:[#allocation2 + $0x71] sm:$0xff]
        %v4834 = vld [vmem:[#allocation2 + $0x79] sm:$0xff]
        %v4835 = vld [vmem:[#allocation2 + $0x81] sm:$0xff]
        %v4836 = vld [vmem:[#allocation2 + $0x89] sm:$0xff]
        %v4837 = vld [vmem:[#allocation2 + $0x91] sm:$0xff]
        %v4838 = vld [vmem:[#allocation2 + $0x99] sm:$0xff]
        %v4839 = vld [vmem:[#allocation2 + $0xa1] sm:$0xff]
        %v4840 = vld [vmem:[#allocation2 + $0xa9] sm:$0xff]
        %v4841 = vld [vmem:[#allocation2 + $0xb1] sm:$0xff]
        %v4842 = vld [vmem:[#allocation2 + $0xb9] sm:$0xff]
        %v4843 = vld [vmem:[#allocation2 + $0xc1] sm:$0xff]
        %v4844 = vld [vmem:[#allocation2 + $0xc9] sm:$0xff]
        %v4845 = vld [vmem:[#allocation2 + $0xd1] sm:$0xff]
        %v4846 = vld [vmem:[#allocation2 + $0xd9] sm:$0xff]
        %v4847 = vld [vmem:[#allocation2 + $0xe1] sm:$0xff]
        %v4848 = vld [vmem:[#allocation2 + $0xe9] sm:$0xff]
        %v4849 = vld [vmem:[#allocation2 + $0xf1] sm:$0xff]
        %v4850 = vld [vmem:[#allocation2 + $0x2] sm:$0xff]
        %v4851 = vld [vmem:[#allocation2 + $0xa] sm:$0xff]
        %v4852 = vld [vmem:[#allocation2 + $0x12] sm:$0xff]
        %v4853 = vld [vmem:[#allocation2 + $0x1a] sm:$0xff]
        %v4854 = vld [vmem:[#allocation2 + $0x22] sm:$0xff]
        %v4855 = vld [vmem:[#allocation2 + $0x2a] sm:$0xff]
        %v4856 = vld [vmem:[#allocation2 + $0x32] sm:$0xff]
        %v4857 = vld [vmem:[#allocation2 + $0x3a] sm:$0xff]
        %v4858 = vld [vmem:[#allocation2 + $0x42] sm:$0xff]
        %v4859 = vld [vmem:[#allocation2 + $0x4a] sm:$0xff]
        %v4860 = vld [vmem:[#allocation2 + $0x52] sm:$0xff]
        %v4861 = vld [vmem:[#allocation2 + $0x5a] sm:$0xff]
        %v4862 = vld [vmem:[#allocation2 + $0x62] sm:$0xff]
        %v4863 = vld [vmem:[#allocation2 + $0x6a] sm:$0xff]
        %v4864 = vld [vmem:[#allocation2 + $0x72] sm:$0xff]
        %v4865 = vld [vmem:[#allocation2 + $0x7a] sm:$0xff]
        %v4866 = vld [vmem:[#allocation2 + $0x82] sm:$0xff]
        %v4867 = vld [vmem:[#allocation2 + $0x8a] sm:$0xff]
        %v4868 = vld [vmem:[#allocation2 + $0x92] sm:$0xff]
        %v4869 = vld [vmem:[#allocation2 + $0x9a] sm:$0xff]
        %v4870 = vld [vmem:[#allocation2 + $0xa2] sm:$0xff]
        %v4871 = vld [vmem:[#allocation2 + $0xaa] sm:$0xff]
        %v4872 = vld [vmem:[#allocation2 + $0xb2] sm:$0xff]
        %v4873 = vld [vmem:[#allocation2 + $0xba] sm:$0xff]
        %v4874 = vld [vmem:[#allocation2 + $0xc2] sm:$0xff]
        %v4875 = vld [vmem:[#allocation2 + $0xca] sm:$0xff]
        %v4876 = vld [vmem:[#allocation2 + $0xd2] sm:$0xff]
        %v4877 = vld [vmem:[#allocation2 + $0xda] sm:$0xff]
        %v4878 = vld [vmem:[#allocation2 + $0xe2] sm:$0xff]
        %v4879 = vld [vmem:[#allocation2 + $0xea] sm:$0xff]
        %v4880 = vld [vmem:[#allocation2 + $0xf2] sm:$0xff]
        %v4881 = vld [vmem:[#allocation2 + $0x3] sm:$0xff]
        %v4882 = vld [vmem:[#allocation2 + $0xb] sm:$0xff]
        %v4883 = vld [vmem:[#allocation2 + $0x13] sm:$0xff]
        %v4884 = vld [vmem:[#allocation2 + $0x1b] sm:$0xff]
        %v4885 = vld [vmem:[#allocation2 + $0x23] sm:$0xff]
        %v4886 = vld [vmem:[#allocation2 + $0x2b] sm:$0xff]
        %v4887 = vld [vmem:[#allocation2 + $0x33] sm:$0xff]
        %v4888 = vld [vmem:[#allocation2 + $0x3b] sm:$0xff]
        %v4889 = vld [vmem:[#allocation2 + $0x43] sm:$0xff]
        %v4890 = vld [vmem:[#allocation2 + $0x4b] sm:$0xff]
        %v4891 = vld [vmem:[#allocation2 + $0x53] sm:$0xff]
        %v4892 = vld [vmem:[#allocation2 + $0x5b] sm:$0xff]
        %v4893 = vld [vmem:[#allocation2 + $0x63] sm:$0xff]
        %v4894 = vld [vmem:[#allocation2 + $0x6b] sm:$0xff]
        %v4895 = vld [vmem:[#allocation2 + $0x73] sm:$0xff]
        %v4896 = vld [vmem:[#allocation2 + $0x7b] sm:$0xff]
        %v4897 = vld [vmem:[#allocation2 + $0x83] sm:$0xff]
        %v4898 = vld [vmem:[#allocation2 + $0x8b] sm:$0xff]
        %v4899 = vld [vmem:[#allocation2 + $0x93] sm:$0xff]
        %v4900 = vld [vmem:[#allocation2 + $0x9b] sm:$0xff]
        %v4901 = vld [vmem:[#allocation2 + $0xa3] sm:$0xff]
        %v4902 = vld [vmem:[#allocation2 + $0xab] sm:$0xff]
        %v4903 = vld [vmem:[#allocation2 + $0xb3] sm:$0xff]
        %v4904 = vld [vmem:[#allocation2 + $0xbb] sm:$0xff]
        %v4905 = vld [vmem:[#allocation2 + $0xc3] sm:$0xff]
        %v4906 = vld [vmem:[#allocation2 + $0xcb] sm:$0xff]
        %v4907 = vld [vmem:[#allocation2 + $0xd3] sm:$0xff]
        %v4908 = vld [vmem:[#allocation2 + $0xdb] sm:$0xff]
        %v4909 = vld [vmem:[#allocation2 + $0xe3] sm:$0xff]
        %v4910 = vld [vmem:[#allocation2 + $0xeb] sm:$0xff]
        %v4911 = vld [vmem:[#allocation2 + $0xf3] sm:$0xff]
        %v4912 = vld [vmem:[#allocation2 + $0x4] sm:$0xff]
        %v4913 = vld [vmem:[#allocation2 + $0xc] sm:$0xff]
        %v4914 = vld [vmem:[#allocation2 + $0x14] sm:$0xff]
        %v4915 = vld [vmem:[#allocation2 + $0x1c] sm:$0xff]
        %v4916 = vld [vmem:[#allocation2 + $0x24] sm:$0xff]
        %v4917 = vld [vmem:[#allocation2 + $0x2c] sm:$0xff]
        %v4918 = vld [vmem:[#allocation2 + $0x34] sm:$0xff]
        %v4919 = vld [vmem:[#allocation2 + $0x3c] sm:$0xff]
        %v4920 = vld [vmem:[#allocation2 + $0x44] sm:$0xff]
        %v4921 = vld [vmem:[#allocation2 + $0x4c] sm:$0xff]
        %v4922 = vld [vmem:[#allocation2 + $0x54] sm:$0xff]
        %v4923 = vld [vmem:[#allocation2 + $0x5c] sm:$0xff]
        %v4924 = vld [vmem:[#allocation2 + $0x64] sm:$0xff]
        %v4925 = vld [vmem:[#allocation2 + $0x6c] sm:$0xff]
        %v4926 = vld [vmem:[#allocation2 + $0x74] sm:$0xff]
        %v4927 = vld [vmem:[#allocation2 + $0x7c] sm:$0xff]
        %v4928 = vld [vmem:[#allocation2 + $0x84] sm:$0xff]
        %v4929 = vld [vmem:[#allocation2 + $0x8c] sm:$0xff]
        %v4930 = vld [vmem:[#allocation2 + $0x94] sm:$0xff]
        %v4931 = vld [vmem:[#allocation2 + $0x9c] sm:$0xff]
        %v4932 = vld [vmem:[#allocation2 + $0xa4] sm:$0xff]
        %v4933 = vld [vmem:[#allocation2 + $0xac] sm:$0xff]
        %v4934 = vld [vmem:[#allocation2 + $0xb4] sm:$0xff]
        %v4935 = vld [vmem:[#allocation2 + $0xbc] sm:$0xff]
        %v4936 = vld [vmem:[#allocation2 + $0xc4] sm:$0xff]
        %v4937 = vld [vmem:[#allocation2 + $0xcc] sm:$0xff]
        %v4938 = vld [vmem:[#allocation2 + $0xd4] sm:$0xff]
        %v4939 = vld [vmem:[#allocation2 + $0xdc] sm:$0xff]
        %v4940 = vld [vmem:[#allocation2 + $0xe4] sm:$0xff]
        %v4941 = vld [vmem:[#allocation2 + $0xec] sm:$0xff]
        %v4942 = vld [vmem:[#allocation2 + $0xf4] sm:$0xff]
        %v4943 = vld [vmem:[#allocation2 + $0xfa] sm:$0xff]
        %v4944 = vld [vmem:[#allocation2 + $0x102] sm:$0xff]
        %v4945 = vld [vmem:[#allocation2 + $0xfb] sm:$0xff]
        %v4946 = vld [vmem:[#allocation2 + $0x103] sm:$0xff]
        %v4947 = vld [vmem:[#allocation2 + $0xfc] sm:$0xff]
        %v4948 = vld [vmem:[#allocation2 + $0x104] sm:$0xff]
        %v4949 = vld [vmem:[#allocation2 + $0x15] sm:$0xff]
        %v4950 = vld [vmem:[#allocation2 + $0x1d] sm:$0xff]
        %v4951 = vld [vmem:[#allocation2 + $0x25] sm:$0xff]
        %v4952 = vld [vmem:[#allocation2 + $0x2d] sm:$0xff]
        %v4953 = vld [vmem:[#allocation2 + $0x35] sm:$0xff]
        %v4954 = vld [vmem:[#allocation2 + $0x3d] sm:$0xff]
        %v4955 = vld [vmem:[#allocation2 + $0x45] sm:$0xff]
        %v4956 = vld [vmem:[#allocation2 + $0x4d] sm:$0xff]
        %v4957 = vld [vmem:[#allocation2 + $0x55] sm:$0xff]
        %v4958 = vld [vmem:[#allocation2 + $0x5d] sm:$0xff]
        %v4959 = vld [vmem:[#allocation2 + $0x65] sm:$0xff]
        %v4960 = vld [vmem:[#allocation2 + $0x6d] sm:$0xff]
        %v4961 = vld [vmem:[#allocation2 + $0x75] sm:$0xff]
        %v4962 = vld [vmem:[#allocation2 + $0x7d] sm:$0xff]
        %v4963 = vld [vmem:[#allocation2 + $0x85] sm:$0xff]
        %v4964 = vld [vmem:[#allocation2 + $0x8d] sm:$0xff]
        %v4965 = vld [vmem:[#allocation2 + $0x95] sm:$0xff]
        %v4966 = vld [vmem:[#allocation2 + $0x9d] sm:$0xff]
        %v4967 = vld [vmem:[#allocation2 + $0xa5] sm:$0xff]
        %v4968 = vld [vmem:[#allocation2 + $0xad] sm:$0xff]
        %v4969 = vld [vmem:[#allocation2 + $0xb5] sm:$0xff]
        %v4970 = vld [vmem:[#allocation2 + $0xbd] sm:$0xff]
        %v4971 = vld [vmem:[#allocation2 + $0xc5] sm:$0xff]
        %v4972 = vld [vmem:[#allocation2 + $0xcd] sm:$0xff]
        %v4973 = vld [vmem:[#allocation2 + $0xd5] sm:$0xff]
        %v4974 = vld [vmem:[#allocation2 + $0xdd] sm:$0xff]
        %v4975 = vld [vmem:[#allocation2 + $0xe5] sm:$0xff]
        %v4976 = vld [vmem:[#allocation2 + $0xed] sm:$0xff]
        %v4977 = vld [vmem:[#allocation2 + $0xf5] sm:$0xff]
        %v4978 = vld [vmem:[#allocation2 + $0xfd] sm:$0xff]
        %v4979 = vld [vmem:[#allocation2 + $0x105] sm:$0xff]
        %v4980 = vld [vmem:[#allocation2 + $0x16] sm:$0xff]
        %v4981 = vld [vmem:[#allocation2 + $0x1e] sm:$0xff]
        %v4982 = vld [vmem:[#allocation2 + $0x26] sm:$0xff]
        %v4983 = vld [vmem:[#allocation2 + $0x2e] sm:$0xff]
        %v4984 = vld [vmem:[#allocation2 + $0x36] sm:$0xff]
        %v4985 = vld [vmem:[#allocation2 + $0x3e] sm:$0xff]
        %v4986 = vld [vmem:[#allocation2 + $0x46] sm:$0xff]
        %v4987 = vld [vmem:[#allocation2 + $0x4e] sm:$0xff]
        %v4988 = vld [vmem:[#allocation2 + $0x56] sm:$0xff]
        %v4989 = vld [vmem:[#allocation2 + $0x5e] sm:$0xff]
        %v4990 = vld [vmem:[#allocation2 + $0x66] sm:$0xff]
        %v4991 = vld [vmem:[#allocation2 + $0x6e] sm:$0xff]
        %v4992 = vld [vmem:[#allocation2 + $0x76] sm:$0xff]
        %v4993 = vld [vmem:[#allocation2 + $0x7e] sm:$0xff]
        %v4994 = vld [vmem:[#allocation2 + $0x86] sm:$0xff]
        %v4995 = vld [vmem:[#allocation2 + $0x8e] sm:$0xff]
        %v4996 = vld [vmem:[#allocation2 + $0x96] sm:$0xff]
        %v4997 = vld [vmem:[#allocation2 + $0x9e] sm:$0xff]
        %v4998 = vld [vmem:[#allocation2 + $0xa6] sm:$0xff]
        %v4999 = vld [vmem:[#allocation2 + $0xae] sm:$0xff]
        %v5000 = vld [vmem:[#allocation2 + $0xb6] sm:$0xff]
        %v5001 = vld [vmem:[#allocation2 + $0xbe] sm:$0xff]
        %v5002 = vld [vmem:[#allocation2 + $0xc6] sm:$0xff]
        %v5003 = vld [vmem:[#allocation2 + $0xce] sm:$0xff]
        %v5004 = vld [vmem:[#allocation2 + $0xd6] sm:$0xff]
        %v5005 = vld [vmem:[#allocation2 + $0xde] sm:$0xff]
        %v5006 = vld [vmem:[#allocation2 + $0xe6] sm:$0xff]
        %v5007 = vld [vmem:[#allocation2 + $0xee] sm:$0xff]
        %v5008 = vld [vmem:[#allocation2 + $0xf6] sm:$0xff]
        %v5009 = vld [vmem:[#allocation2 + $0xfe] sm:$0xff]
        %v5010 = vld [vmem:[#allocation2 + $0x106] sm:$0xff]
        %v5011 = vld [vmem:[#allocation2 + $0x10c] sm:$0xff]
        %v5012 = vld [vmem:[#allocation2 + $0x114] sm:$0xff]
        %v5013 = vld [vmem:[#allocation2 + $0x10d] sm:$0xff]
        %v5014 = vld [vmem:[#allocation2 + $0x115] sm:$0xff]
        %v5015 = vld [vmem:[#allocation2 + $0x10e] sm:$0xff]
        %v5016 = vld [vmem:[#allocation2 + $0x116] sm:$0xff]
        %v5017 = vld [vmem:[#allocation2 + $0x27] sm:$0xff]
        %v5018 = vld [vmem:[#allocation2 + $0x2f] sm:$0xff]
        %v5019 = vld [vmem:[#allocation2 + $0x37] sm:$0xff]
        %v5020 = vld [vmem:[#allocation2 + $0x3f] sm:$0xff]
        %v5021 = vld [vmem:[#allocation2 + $0x47] sm:$0xff]
        %v5022 = vld [vmem:[#allocation2 + $0x4f] sm:$0xff]
        %v5023 = vld [vmem:[#allocation2 + $0x57] sm:$0xff]
        %v5024 = vld [vmem:[#allocation2 + $0x5f] sm:$0xff]
        %v5025 = vld [vmem:[#allocation2 + $0x67] sm:$0xff]
        %v5026 = vld [vmem:[#allocation2 + $0x6f] sm:$0xff]
        %v5027 = vld [vmem:[#allocation2 + $0x77] sm:$0xff]
        %v5028 = vld [vmem:[#allocation2 + $0x7f] sm:$0xff]
        %v5029 = vld [vmem:[#allocation2 + $0x87] sm:$0xff]
        %v5030 = vld [vmem:[#allocation2 + $0x8f] sm:$0xff]
        %v5031 = vld [vmem:[#allocation2 + $0x97] sm:$0xff]
        %v5032 = vld [vmem:[#allocation2 + $0x9f] sm:$0xff]
        %v5033 = vld [vmem:[#allocation2 + $0xa7] sm:$0xff]
        %v5034 = vld [vmem:[#allocation2 + $0xaf] sm:$0xff]
        %v5035 = vld [vmem:[#allocation2 + $0xb7] sm:$0xff]
        %v5036 = vld [vmem:[#allocation2 + $0xbf] sm:$0xff]
        %v5037 = vld [vmem:[#allocation2 + $0xc7] sm:$0xff]
        %v5038 = vld [vmem:[#allocation2 + $0xcf] sm:$0xff]
        %v5039 = vld [vmem:[#allocation2 + $0xd7] sm:$0xff]
        %v5040 = vld [vmem:[#allocation2 + $0xdf] sm:$0xff]
        %v5041 = vld [vmem:[#allocation2 + $0xe7] sm:$0xff]
        %v5042 = vld [vmem:[#allocation2 + $0xef] sm:$0xff]
        %v5043 = vld [vmem:[#allocation2 + $0xf7] sm:$0xff]
        %v5044 = vld [vmem:[#allocation2 + $0xff] sm:$0xff]
        %v5045 = vld [vmem:[#allocation2 + $0x107] sm:$0xff]
        %v5046 = vld [vmem:[#allocation2 + $0x10f] sm:$0xff]
        %v5047 = vld [vmem:[#allocation2 + $0x117] sm:$0xff]
        %v5048 = vld [vmem:[#allocation2 + $0xf8] sm:$0xff]
        %v5049 = vld [vmem:[#allocation2 + $0x100] sm:$0xff]
        %v5050 = vld [vmem:[#allocation2 + $0x108] sm:$0xff]
        %v5051 = vld [vmem:[#allocation2 + $0x110] sm:$0xff]
        %v5052 = vld [vmem:[#allocation2 + $0x118] sm:$0xff]
        %v5053 = vld [vmem:[#allocation2 + $0x11e] sm:$0xff]
        %v5054 = vld [vmem:[#allocation2 + $0x126] sm:$0xff]
        %v5055 = vld [vmem:[#allocation2 + $0x11f] sm:$0xff]
        %v5056 = vld [vmem:[#allocation2 + $0x127] sm:$0xff]
        %v5057 = vld [vmem:[#allocation2 + $0x120] sm:$0xff]
        %v5058 = vld [vmem:[#allocation2 + $0x128] sm:$0xff]
        %v5059 = vld [vmem:[#allocation2 + $0xf9] sm:$0xff]
        %v5060 = vld [vmem:[#allocation2 + $0x101] sm:$0xff]
        %v5061 = vld [vmem:[#allocation2 + $0x109] sm:$0xff]
        %v5062 = vld [vmem:[#allocation2 + $0x111] sm:$0xff]
        %v5063 = vld [vmem:[#allocation2 + $0x119] sm:$0xff]
        %v5064 = vld [vmem:[#allocation2 + $0x121] sm:$0xff]
        %v5065 = vld [vmem:[#allocation2 + $0x129] sm:$0xff]
        %v5066 = vld [vmem:[#allocation2 + $0x10a] sm:$0xff]
        %v5067 = vld [vmem:[#allocation2 + $0x112] sm:$0xff]
        %v5068 = vld [vmem:[#allocation2 + $0x11a] sm:$0xff]
        %v5069 = vld [vmem:[#allocation2 + $0x122] sm:$0xff]
        %v5070 = vld [vmem:[#allocation2 + $0x12a] sm:$0xff]
        %v5071 = vld [vmem:[#allocation2 + $0x130] sm:$0xff]
        %v5072 = vld [vmem:[#allocation2 + $0x138] sm:$0xff]
        %v5073 = vld [vmem:[#allocation2 + $0x131] sm:$0xff]
        %v5074 = vld [vmem:[#allocation2 + $0x139] sm:$0xff]
        %v5075 = vld [vmem:[#allocation2 + $0x132] sm:$0xff]
        %v5076 = vld [vmem:[#allocation2 + $0x13a] sm:$0xff]
        %v5077 = vld [vmem:[#allocation2 + $0x10b] sm:$0xff]
        %v5078 = vld [vmem:[#allocation2 + $0x113] sm:$0xff]
        %v5079 = vld [vmem:[#allocation2 + $0x11b] sm:$0xff]
        %v5080 = vld [vmem:[#allocation2 + $0x123] sm:$0xff]
        %v5081 = vld [vmem:[#allocation2 + $0x12b] sm:$0xff]
        %v5082 = vld [vmem:[#allocation2 + $0x133] sm:$0xff]
        %v5083 = vld [vmem:[#allocation2 + $0x13b] sm:$0xff]
        %v5084 = vld [vmem:[#allocation2 + $0x11c] sm:$0xff]
        %v5085 = vld [vmem:[#allocation2 + $0x124] sm:$0xff]
        %v5086 = vld [vmem:[#allocation2 + $0x12c] sm:$0xff]
        %v5087 = vld [vmem:[#allocation2 + $0x134] sm:$0xff]
        %v5088 = vld [vmem:[#allocation2 + $0x13c] sm:$0xff]
        %5089 = vmatpush.msra.mxu0 %v335
        %5090 = vmatpush.msra.mxu0 %v334
        %5091 = vmatpush.msra.mxu0 %v333
        %5092 = vmatpush.msra.mxu0 %v332
        %5093 = vmatpush.msra.mxu0 %v331
        %5094 = vmatpush.msra.mxu0 %v330
        %5095 = vmatpush.msra.mxu0 %v329
        %5096 = vmatpush.msra.mxu0 %v328
        %5097 = vmatpush.msra.mxu0 %v327
        %5098 = vmatpush.msra.mxu0 %v326
        %5099 = vmatpush.msra.mxu0 %v325
        %5100 = vmatpush.msra.mxu0 %v324
        %5101 = vmatpush.msra.mxu0 %v323
        %5102 = vmatpush.msra.mxu0 %v322
        %5103 = vmatpush.msra.mxu0 %v321
        %5104 = vmatpush.msra.mxu0 %v320
        %5105 = vmatmul.f32.gmra.mxu0 %v4788
        %v5106 = vpop.f32.mrf.mxu0
        %v5107 = vadd.f32 0.0, %v5106
        %5108 = vmatmul.f32.gmra.mxu0 %v4789
        %v5109 = vpop.f32.mrf.mxu0
        %v5110 = vadd.f32 0.0, %v5109
        %5111 = vmatmul.f32.gmra.mxu0 %v4790
        %v5112 = vpop.f32.mrf.mxu0
        %v5113 = vadd.f32 0.0, %v5112
        %5114 = vmatmul.f32.gmra.mxu0 %v4791
        %v5115 = vpop.f32.mrf.mxu0
        %v5116 = vadd.f32 0.0, %v5115
        %5117 = vmatmul.f32.gmra.mxu0 %v4792
        %v5118 = vpop.f32.mrf.mxu0
        %v5119 = vadd.f32 0.0, %v5118
        %5120 = vmatmul.f32.gmra.mxu0 %v4793
        %v5121 = vpop.f32.mrf.mxu0
        %v5122 = vadd.f32 0.0, %v5121
        %5123 = vmatmul.f32.gmra.mxu0 %v4794
        %v5124 = vpop.f32.mrf.mxu0
        %v5125 = vadd.f32 0.0, %v5124
        %5126 = vmatmul.f32.gmra.mxu0 %v4795
        %v5127 = vpop.f32.mrf.mxu0
        %v5128 = vadd.f32 0.0, %v5127
        %5129 = vmatmul.f32.gmra.mxu0 %v4796
        %v5130 = vpop.f32.mrf.mxu0
        %v5131 = vadd.f32 0.0, %v5130
        %5132 = vmatmul.f32.gmra.mxu0 %v4797
        %v5133 = vpop.f32.mrf.mxu0
        %v5134 = vadd.f32 0.0, %v5133
        %5135 = vmatmul.f32.gmra.mxu0 %v4798
        %v5136 = vpop.f32.mrf.mxu0
        %v5137 = vadd.f32 0.0, %v5136
        %5138 = vmatmul.f32.gmra.mxu0 %v4799
        %v5139 = vpop.f32.mrf.mxu0
        %v5140 = vadd.f32 0.0, %v5139
        %5141 = vmatmul.f32.gmra.mxu0 %v4800
        %v5142 = vpop.f32.mrf.mxu0
        %v5143 = vadd.f32 0.0, %v5142
        %5144 = vmatmul.f32.gmra.mxu0 %v4801
        %v5145 = vpop.f32.mrf.mxu0
        %v5146 = vadd.f32 0.0, %v5145
        %5147 = vmatmul.f32.gmra.mxu0 %v4802
        %v5148 = vpop.f32.mrf.mxu0
        %v5149 = vadd.f32 0.0, %v5148
        %5150 = vmatmul.f32.gmra.mxu0 %v4803
        %v5151 = vpop.f32.mrf.mxu0
        %v5152 = vadd.f32 0.0, %v5151
        %5153 = vmatmul.f32.gmra.mxu0 %v4804
        %v5154 = vpop.f32.mrf.mxu0
        %v5155 = vadd.f32 0.0, %v5154
        %5156 = vmatmul.f32.gmra.mxu0 %v4805
        %v5157 = vpop.f32.mrf.mxu0
        %v5158 = vadd.f32 0.0, %v5157
        %5159 = vmatmul.f32.gmra.mxu0 %v4806
        %v5160 = vpop.f32.mrf.mxu0
        %v5161 = vadd.f32 0.0, %v5160
        %5162 = vmatmul.f32.gmra.mxu0 %v4807
        %v5163 = vpop.f32.mrf.mxu0
        %v5164 = vadd.f32 0.0, %v5163
        %5165 = vmatmul.f32.gmra.mxu0 %v4808
        %v5166 = vpop.f32.mrf.mxu0
        %v5167 = vadd.f32 0.0, %v5166
        %5168 = vmatmul.f32.gmra.mxu0 %v4809
        %v5169 = vpop.f32.mrf.mxu0
        %v5170 = vadd.f32 0.0, %v5169
        %5171 = vmatmul.f32.gmra.mxu0 %v4810
        %v5172 = vpop.f32.mrf.mxu0
        %v5173 = vadd.f32 0.0, %v5172
        %5174 = vmatmul.f32.gmra.mxu0 %v4811
        %v5175 = vpop.f32.mrf.mxu0
        %v5176 = vadd.f32 0.0, %v5175
        %5177 = vmatmul.f32.gmra.mxu0 %v4812
        %v5178 = vpop.f32.mrf.mxu0
        %v5179 = vadd.f32 0.0, %v5178
        %5180 = vmatmul.f32.gmra.mxu0 %v4813
        %v5181 = vpop.f32.mrf.mxu0
        %v5182 = vadd.f32 0.0, %v5181
        %5183 = vmatmul.f32.gmra.mxu0 %v4814
        %v5184 = vpop.f32.mrf.mxu0
        %v5185 = vadd.f32 0.0, %v5184
        %5186 = vmatmul.f32.gmra.mxu0 %v4815
        %v5187 = vpop.f32.mrf.mxu0
        %v5188 = vadd.f32 0.0, %v5187
        %5189 = vmatmul.f32.gmra.mxu0 %v4816
        %v5190 = vpop.f32.mrf.mxu0
        %v5191 = vadd.f32 0.0, %v5190
        %5192 = vmatmul.f32.gmra.mxu0 %v4817
        %v5193 = vpop.f32.mrf.mxu0
        %v5194 = vadd.f32 0.0, %v5193
        %5195 = vmatmul.f32.gmra.mxu0 %v4818
        %v5196 = vpop.f32.mrf.mxu0
        %v5197 = vadd.f32 0.0, %v5196
        %5198 = vdwg.mxu0
        %5199 = vmatpush.msra.mxu0 %v351
        %5200 = vmatpush.msra.mxu0 %v350
        %5201 = vmatpush.msra.mxu0 %v349
        %5202 = vmatpush.msra.mxu0 %v348
        %5203 = vmatpush.msra.mxu0 %v347
        %5204 = vmatpush.msra.mxu0 %v346
        %5205 = vmatpush.msra.mxu0 %v345
        %5206 = vmatpush.msra.mxu0 %v344
        %5207 = vmatpush.msra.mxu0 %v343
        %5208 = vmatpush.msra.mxu0 %v342
        %5209 = vmatpush.msra.mxu0 %v341
        %5210 = vmatpush.msra.mxu0 %v340
        %5211 = vmatpush.msra.mxu0 %v339
        %5212 = vmatpush.msra.mxu0 %v338
        %5213 = vmatpush.msra.mxu0 %v337
        %5214 = vmatpush.msra.mxu0 %v336
        %5215 = vmatmul.f32.gmra.mxu0 %v4819
        %v5216 = vpop.f32.mrf.mxu0
        %v5217 = vadd.f32 %v5107, %v5216
        %5218 = vmatmul.f32.gmra.mxu0 %v4820
        %v5219 = vpop.f32.mrf.mxu0
        %v5220 = vadd.f32 %v5110, %v5219
        %5221 = vmatmul.f32.gmra.mxu0 %v4821
        %v5222 = vpop.f32.mrf.mxu0
        %v5223 = vadd.f32 %v5113, %v5222
        %5224 = vmatmul.f32.gmra.mxu0 %v4822
        %v5225 = vpop.f32.mrf.mxu0
        %v5226 = vadd.f32 %v5116, %v5225
        %5227 = vmatmul.f32.gmra.mxu0 %v4823
        %v5228 = vpop.f32.mrf.mxu0
        %v5229 = vadd.f32 %v5119, %v5228
        %5230 = vmatmul.f32.gmra.mxu0 %v4824
        %v5231 = vpop.f32.mrf.mxu0
        %v5232 = vadd.f32 %v5122, %v5231
        %5233 = vmatmul.f32.gmra.mxu0 %v4825
        %v5234 = vpop.f32.mrf.mxu0
        %v5235 = vadd.f32 %v5125, %v5234
        %5236 = vmatmul.f32.gmra.mxu0 %v4826
        %v5237 = vpop.f32.mrf.mxu0
        %v5238 = vadd.f32 %v5128, %v5237
        %5239 = vmatmul.f32.gmra.mxu0 %v4827
        %v5240 = vpop.f32.mrf.mxu0
        %v5241 = vadd.f32 %v5131, %v5240
        %5242 = vmatmul.f32.gmra.mxu0 %v4828
        %v5243 = vpop.f32.mrf.mxu0
        %v5244 = vadd.f32 %v5134, %v5243
        %5245 = vmatmul.f32.gmra.mxu0 %v4829
        %v5246 = vpop.f32.mrf.mxu0
        %v5247 = vadd.f32 %v5137, %v5246
        %5248 = vmatmul.f32.gmra.mxu0 %v4830
        %v5249 = vpop.f32.mrf.mxu0
        %v5250 = vadd.f32 %v5140, %v5249
        %5251 = vmatmul.f32.gmra.mxu0 %v4831
        %v5252 = vpop.f32.mrf.mxu0
        %v5253 = vadd.f32 %v5143, %v5252
        %5254 = vmatmul.f32.gmra.mxu0 %v4832
        %v5255 = vpop.f32.mrf.mxu0
        %v5256 = vadd.f32 %v5146, %v5255
        %5257 = vmatmul.f32.gmra.mxu0 %v4833
        %v5258 = vpop.f32.mrf.mxu0
        %v5259 = vadd.f32 %v5149, %v5258
        %5260 = vmatmul.f32.gmra.mxu0 %v4834
        %v5261 = vpop.f32.mrf.mxu0
        %v5262 = vadd.f32 %v5152, %v5261
        %5263 = vmatmul.f32.gmra.mxu0 %v4835
        %v5264 = vpop.f32.mrf.mxu0
        %v5265 = vadd.f32 %v5155, %v5264
        %5266 = vmatmul.f32.gmra.mxu0 %v4836
        %v5267 = vpop.f32.mrf.mxu0
        %v5268 = vadd.f32 %v5158, %v5267
        %5269 = vmatmul.f32.gmra.mxu0 %v4837
        %v5270 = vpop.f32.mrf.mxu0
        %v5271 = vadd.f32 %v5161, %v5270
        %5272 = vmatmul.f32.gmra.mxu0 %v4838
        %v5273 = vpop.f32.mrf.mxu0
        %v5274 = vadd.f32 %v5164, %v5273
        %5275 = vmatmul.f32.gmra.mxu0 %v4839
        %v5276 = vpop.f32.mrf.mxu0
        %v5277 = vadd.f32 %v5167, %v5276
        %5278 = vmatmul.f32.gmra.mxu0 %v4840
        %v5279 = vpop.f32.mrf.mxu0
        %v5280 = vadd.f32 %v5170, %v5279
        %5281 = vmatmul.f32.gmra.mxu0 %v4841
        %v5282 = vpop.f32.mrf.mxu0
        %v5283 = vadd.f32 %v5173, %v5282
        %5284 = vmatmul.f32.gmra.mxu0 %v4842
        %v5285 = vpop.f32.mrf.mxu0
        %v5286 = vadd.f32 %v5176, %v5285
        %5287 = vmatmul.f32.gmra.mxu0 %v4843
        %v5288 = vpop.f32.mrf.mxu0
        %v5289 = vadd.f32 %v5179, %v5288
        %5290 = vmatmul.f32.gmra.mxu0 %v4844
        %v5291 = vpop.f32.mrf.mxu0
        %v5292 = vadd.f32 %v5182, %v5291
        %5293 = vmatmul.f32.gmra.mxu0 %v4845
        %v5294 = vpop.f32.mrf.mxu0
        %v5295 = vadd.f32 %v5185, %v5294
        %5296 = vmatmul.f32.gmra.mxu0 %v4846
        %v5297 = vpop.f32.mrf.mxu0
        %v5298 = vadd.f32 %v5188, %v5297
        %5299 = vmatmul.f32.gmra.mxu0 %v4847
        %v5300 = vpop.f32.mrf.mxu0
        %v5301 = vadd.f32 %v5191, %v5300
        %5302 = vmatmul.f32.gmra.mxu0 %v4848
        %v5303 = vpop.f32.mrf.mxu0
        %v5304 = vadd.f32 %v5194, %v5303
        %5305 = vmatmul.f32.gmra.mxu0 %v4849
        %v5306 = vpop.f32.mrf.mxu0
        %v5307 = vadd.f32 %v5197, %v5306
        %5308 = vdwg.mxu0
        %5309 = vmatpush.msra.mxu0 %v367
        %5310 = vmatpush.msra.mxu0 %v366
        %5311 = vmatpush.msra.mxu0 %v365
        %5312 = vmatpush.msra.mxu0 %v364
        %5313 = vmatpush.msra.mxu0 %v363
        %5314 = vmatpush.msra.mxu0 %v362
        %5315 = vmatpush.msra.mxu0 %v361
        %5316 = vmatpush.msra.mxu0 %v360
        %5317 = vmatpush.msra.mxu0 %v359
        %5318 = vmatpush.msra.mxu0 %v358
        %5319 = vmatpush.msra.mxu0 %v357
        %5320 = vmatpush.msra.mxu0 %v356
        %5321 = vmatpush.msra.mxu0 %v355
        %5322 = vmatpush.msra.mxu0 %v354
        %5323 = vmatpush.msra.mxu0 %v353
        %5324 = vmatpush.msra.mxu0 %v352
        %5325 = vmatmul.f32.gmra.mxu0 %v4850
        %v5326 = vpop.f32.mrf.mxu0
        %v5327 = vadd.f32 %v5217, %v5326
        %5328 = vmatmul.f32.gmra.mxu0 %v4851
        %v5329 = vpop.f32.mrf.mxu0
        %v5330 = vadd.f32 %v5220, %v5329
        %5331 = vmatmul.f32.gmra.mxu0 %v4852
        %v5332 = vpop.f32.mrf.mxu0
        %v5333 = vadd.f32 %v5223, %v5332
        %5334 = vmatmul.f32.gmra.mxu0 %v4853
        %v5335 = vpop.f32.mrf.mxu0
        %v5336 = vadd.f32 %v5226, %v5335
        %5337 = vmatmul.f32.gmra.mxu0 %v4854
        %v5338 = vpop.f32.mrf.mxu0
        %v5339 = vadd.f32 %v5229, %v5338
        %5340 = vmatmul.f32.gmra.mxu0 %v4855
        %v5341 = vpop.f32.mrf.mxu0
        %v5342 = vadd.f32 %v5232, %v5341
        %5343 = vmatmul.f32.gmra.mxu0 %v4856
        %v5344 = vpop.f32.mrf.mxu0
        %v5345 = vadd.f32 %v5235, %v5344
        %5346 = vmatmul.f32.gmra.mxu0 %v4857
        %v5347 = vpop.f32.mrf.mxu0
        %v5348 = vadd.f32 %v5238, %v5347
        %5349 = vmatmul.f32.gmra.mxu0 %v4858
        %v5350 = vpop.f32.mrf.mxu0
        %v5351 = vadd.f32 %v5241, %v5350
        %5352 = vmatmul.f32.gmra.mxu0 %v4859
        %v5353 = vpop.f32.mrf.mxu0
        %v5354 = vadd.f32 %v5244, %v5353
        %5355 = vmatmul.f32.gmra.mxu0 %v4860
        %v5356 = vpop.f32.mrf.mxu0
        %v5357 = vadd.f32 %v5247, %v5356
        %5358 = vmatmul.f32.gmra.mxu0 %v4861
        %v5359 = vpop.f32.mrf.mxu0
        %v5360 = vadd.f32 %v5250, %v5359
        %5361 = vmatmul.f32.gmra.mxu0 %v4862
        %v5362 = vpop.f32.mrf.mxu0
        %v5363 = vadd.f32 %v5253, %v5362
        %5364 = vmatmul.f32.gmra.mxu0 %v4863
        %v5365 = vpop.f32.mrf.mxu0
        %v5366 = vadd.f32 %v5256, %v5365
        %5367 = vmatmul.f32.gmra.mxu0 %v4864
        %v5368 = vpop.f32.mrf.mxu0
        %v5369 = vadd.f32 %v5259, %v5368
        %5370 = vmatmul.f32.gmra.mxu0 %v4865
        %v5371 = vpop.f32.mrf.mxu0
        %v5372 = vadd.f32 %v5262, %v5371
        %5373 = vmatmul.f32.gmra.mxu0 %v4866
        %v5374 = vpop.f32.mrf.mxu0
        %v5375 = vadd.f32 %v5265, %v5374
        %5376 = vmatmul.f32.gmra.mxu0 %v4867
        %v5377 = vpop.f32.mrf.mxu0
        %v5378 = vadd.f32 %v5268, %v5377
        %5379 = vmatmul.f32.gmra.mxu0 %v4868
        %v5380 = vpop.f32.mrf.mxu0
        %v5381 = vadd.f32 %v5271, %v5380
        %5382 = vmatmul.f32.gmra.mxu0 %v4869
        %v5383 = vpop.f32.mrf.mxu0
        %v5384 = vadd.f32 %v5274, %v5383
        %5385 = vmatmul.f32.gmra.mxu0 %v4870
        %v5386 = vpop.f32.mrf.mxu0
        %v5387 = vadd.f32 %v5277, %v5386
        %5388 = vmatmul.f32.gmra.mxu0 %v4871
        %v5389 = vpop.f32.mrf.mxu0
        %v5390 = vadd.f32 %v5280, %v5389
        %5391 = vmatmul.f32.gmra.mxu0 %v4872
        %v5392 = vpop.f32.mrf.mxu0
        %v5393 = vadd.f32 %v5283, %v5392
        %5394 = vmatmul.f32.gmra.mxu0 %v4873
        %v5395 = vpop.f32.mrf.mxu0
        %v5396 = vadd.f32 %v5286, %v5395
        %5397 = vmatmul.f32.gmra.mxu0 %v4874
        %v5398 = vpop.f32.mrf.mxu0
        %v5399 = vadd.f32 %v5289, %v5398
        %5400 = vmatmul.f32.gmra.mxu0 %v4875
        %v5401 = vpop.f32.mrf.mxu0
        %v5402 = vadd.f32 %v5292, %v5401
        %5403 = vmatmul.f32.gmra.mxu0 %v4876
        %v5404 = vpop.f32.mrf.mxu0
        %v5405 = vadd.f32 %v5295, %v5404
        %5406 = vmatmul.f32.gmra.mxu0 %v4877
        %v5407 = vpop.f32.mrf.mxu0
        %v5408 = vadd.f32 %v5298, %v5407
        %5409 = vmatmul.f32.gmra.mxu0 %v4878
        %v5410 = vpop.f32.mrf.mxu0
        %v5411 = vadd.f32 %v5301, %v5410
        %5412 = vmatmul.f32.gmra.mxu0 %v4879
        %v5413 = vpop.f32.mrf.mxu0
        %v5414 = vadd.f32 %v5304, %v5413
        %5415 = vmatmul.f32.gmra.mxu0 %v4880
        %v5416 = vpop.f32.mrf.mxu0
        %v5417 = vadd.f32 %v5307, %v5416
        %5418 = vdwg.mxu0
        %5419 = vmatpush.msra.mxu0 %v383
        %5420 = vmatpush.msra.mxu0 %v382
        %5421 = vmatpush.msra.mxu0 %v381
        %5422 = vmatpush.msra.mxu0 %v380
        %5423 = vmatpush.msra.mxu0 %v379
        %5424 = vmatpush.msra.mxu0 %v378
        %5425 = vmatpush.msra.mxu0 %v377
        %5426 = vmatpush.msra.mxu0 %v376
        %5427 = vmatpush.msra.mxu0 %v375
        %5428 = vmatpush.msra.mxu0 %v374
        %5429 = vmatpush.msra.mxu0 %v373
        %5430 = vmatpush.msra.mxu0 %v372
        %5431 = vmatpush.msra.mxu0 %v371
        %5432 = vmatpush.msra.mxu0 %v370
        %5433 = vmatpush.msra.mxu0 %v369
        %5434 = vmatpush.msra.mxu0 %v368
        %5435 = vmatmul.f32.gmra.mxu0 %v4881
        %v5436 = vpop.f32.mrf.mxu0
        %v5437 = vadd.f32 %v5327, %v5436
        %5438 = vmatmul.f32.gmra.mxu0 %v4882
        %v5439 = vpop.f32.mrf.mxu0
        %v5440 = vadd.f32 %v5330, %v5439
        %5441 = vmatmul.f32.gmra.mxu0 %v4883
        %v5442 = vpop.f32.mrf.mxu0
        %v5443 = vadd.f32 %v5333, %v5442
        %5444 = vmatmul.f32.gmra.mxu0 %v4884
        %v5445 = vpop.f32.mrf.mxu0
        %v5446 = vadd.f32 %v5336, %v5445
        %5447 = vmatmul.f32.gmra.mxu0 %v4885
        %v5448 = vpop.f32.mrf.mxu0
        %v5449 = vadd.f32 %v5339, %v5448
        %5450 = vmatmul.f32.gmra.mxu0 %v4886
        %v5451 = vpop.f32.mrf.mxu0
        %v5452 = vadd.f32 %v5342, %v5451
        %5453 = vmatmul.f32.gmra.mxu0 %v4887
        %v5454 = vpop.f32.mrf.mxu0
        %v5455 = vadd.f32 %v5345, %v5454
        %5456 = vmatmul.f32.gmra.mxu0 %v4888
        %v5457 = vpop.f32.mrf.mxu0
        %v5458 = vadd.f32 %v5348, %v5457
        %5459 = vmatmul.f32.gmra.mxu0 %v4889
        %v5460 = vpop.f32.mrf.mxu0
        %v5461 = vadd.f32 %v5351, %v5460
        %5462 = vmatmul.f32.gmra.mxu0 %v4890
        %v5463 = vpop.f32.mrf.mxu0
        %v5464 = vadd.f32 %v5354, %v5463
        %5465 = vmatmul.f32.gmra.mxu0 %v4891
        %v5466 = vpop.f32.mrf.mxu0
        %v5467 = vadd.f32 %v5357, %v5466
        %5468 = vmatmul.f32.gmra.mxu0 %v4892
        %v5469 = vpop.f32.mrf.mxu0
        %v5470 = vadd.f32 %v5360, %v5469
        %5471 = vmatmul.f32.gmra.mxu0 %v4893
        %v5472 = vpop.f32.mrf.mxu0
        %v5473 = vadd.f32 %v5363, %v5472
        %5474 = vmatmul.f32.gmra.mxu0 %v4894
        %v5475 = vpop.f32.mrf.mxu0
        %v5476 = vadd.f32 %v5366, %v5475
        %5477 = vmatmul.f32.gmra.mxu0 %v4895
        %v5478 = vpop.f32.mrf.mxu0
        %v5479 = vadd.f32 %v5369, %v5478
        %5480 = vmatmul.f32.gmra.mxu0 %v4896
        %v5481 = vpop.f32.mrf.mxu0
        %v5482 = vadd.f32 %v5372, %v5481
        %5483 = vmatmul.f32.gmra.mxu0 %v4897
        %v5484 = vpop.f32.mrf.mxu0
        %v5485 = vadd.f32 %v5375, %v5484
        %5486 = vmatmul.f32.gmra.mxu0 %v4898
        %v5487 = vpop.f32.mrf.mxu0
        %v5488 = vadd.f32 %v5378, %v5487
        %5489 = vmatmul.f32.gmra.mxu0 %v4899
        %v5490 = vpop.f32.mrf.mxu0
        %v5491 = vadd.f32 %v5381, %v5490
        %5492 = vmatmul.f32.gmra.mxu0 %v4900
        %v5493 = vpop.f32.mrf.mxu0
        %v5494 = vadd.f32 %v5384, %v5493
        %5495 = vmatmul.f32.gmra.mxu0 %v4901
        %v5496 = vpop.f32.mrf.mxu0
        %v5497 = vadd.f32 %v5387, %v5496
        %5498 = vmatmul.f32.gmra.mxu0 %v4902
        %v5499 = vpop.f32.mrf.mxu0
        %v5500 = vadd.f32 %v5390, %v5499
        %5501 = vmatmul.f32.gmra.mxu0 %v4903
        %v5502 = vpop.f32.mrf.mxu0
        %v5503 = vadd.f32 %v5393, %v5502
        %5504 = vmatmul.f32.gmra.mxu0 %v4904
        %v5505 = vpop.f32.mrf.mxu0
        %v5506 = vadd.f32 %v5396, %v5505
        %5507 = vmatmul.f32.gmra.mxu0 %v4905
        %v5508 = vpop.f32.mrf.mxu0
        %v5509 = vadd.f32 %v5399, %v5508
        %5510 = vmatmul.f32.gmra.mxu0 %v4906
        %v5511 = vpop.f32.mrf.mxu0
        %v5512 = vadd.f32 %v5402, %v5511
        %5513 = vmatmul.f32.gmra.mxu0 %v4907
        %v5514 = vpop.f32.mrf.mxu0
        %v5515 = vadd.f32 %v5405, %v5514
        %5516 = vmatmul.f32.gmra.mxu0 %v4908
        %v5517 = vpop.f32.mrf.mxu0
        %v5518 = vadd.f32 %v5408, %v5517
        %5519 = vmatmul.f32.gmra.mxu0 %v4909
        %v5520 = vpop.f32.mrf.mxu0
        %v5521 = vadd.f32 %v5411, %v5520
        %5522 = vmatmul.f32.gmra.mxu0 %v4910
        %v5523 = vpop.f32.mrf.mxu0
        %v5524 = vadd.f32 %v5414, %v5523
        %5525 = vmatmul.f32.gmra.mxu0 %v4911
        %v5526 = vpop.f32.mrf.mxu0
        %v5527 = vadd.f32 %v5417, %v5526
        %5528 = vdwg.mxu0
        %5529 = vmatpush.msra.mxu0 %v399
        %5530 = vmatpush.msra.mxu0 %v398
        %5531 = vmatpush.msra.mxu0 %v397
        %5532 = vmatpush.msra.mxu0 %v396
        %5533 = vmatpush.msra.mxu0 %v395
        %5534 = vmatpush.msra.mxu0 %v394
        %5535 = vmatpush.msra.mxu0 %v393
        %5536 = vmatpush.msra.mxu0 %v392
        %5537 = vmatpush.msra.mxu0 %v391
        %5538 = vmatpush.msra.mxu0 %v390
        %5539 = vmatpush.msra.mxu0 %v389
        %5540 = vmatpush.msra.mxu0 %v388
        %5541 = vmatpush.msra.mxu0 %v387
        %5542 = vmatpush.msra.mxu0 %v386
        %5543 = vmatpush.msra.mxu0 %v385
        %5544 = vmatpush.msra.mxu0 %v384
        %5545 = vmatmul.f32.gmra.mxu0 %v4912
        %v5546 = vpop.f32.mrf.mxu0
        %v5547 = vadd.f32 %v5437, %v5546
        %5548 = vmatmul.f32.gmra.mxu0 %v4913
        %v5549 = vpop.f32.mrf.mxu0
        %v5550 = vadd.f32 %v5440, %v5549
        %5551 = vmatmul.f32.gmra.mxu0 %v4914
        %v5552 = vpop.f32.mrf.mxu0
        %v5553 = vadd.f32 %v5443, %v5552
        %5554 = vmatmul.f32.gmra.mxu0 %v4915
        %v5555 = vpop.f32.mrf.mxu0
        %v5556 = vadd.f32 %v5446, %v5555
        %5557 = vmatmul.f32.gmra.mxu0 %v4916
        %v5558 = vpop.f32.mrf.mxu0
        %v5559 = vadd.f32 %v5449, %v5558
        %5560 = vmatmul.f32.gmra.mxu0 %v4917
        %v5561 = vpop.f32.mrf.mxu0
        %v5562 = vadd.f32 %v5452, %v5561
        %5563 = vmatmul.f32.gmra.mxu0 %v4918
        %v5564 = vpop.f32.mrf.mxu0
        %v5565 = vadd.f32 %v5455, %v5564
        %5566 = vmatmul.f32.gmra.mxu0 %v4919
        %v5567 = vpop.f32.mrf.mxu0
        %v5568 = vadd.f32 %v5458, %v5567
        %5569 = vmatmul.f32.gmra.mxu0 %v4920
        %v5570 = vpop.f32.mrf.mxu0
        %v5571 = vadd.f32 %v5461, %v5570
        %5572 = vmatmul.f32.gmra.mxu0 %v4921
        %v5573 = vpop.f32.mrf.mxu0
        %v5574 = vadd.f32 %v5464, %v5573
        %5575 = vmatmul.f32.gmra.mxu0 %v4922
        %v5576 = vpop.f32.mrf.mxu0
        %v5577 = vadd.f32 %v5467, %v5576
        %5578 = vmatmul.f32.gmra.mxu0 %v4923
        %v5579 = vpop.f32.mrf.mxu0
        %v5580 = vadd.f32 %v5470, %v5579
        %5581 = vmatmul.f32.gmra.mxu0 %v4924
        %v5582 = vpop.f32.mrf.mxu0
        %v5583 = vadd.f32 %v5473, %v5582
        %5584 = vmatmul.f32.gmra.mxu0 %v4925
        %v5585 = vpop.f32.mrf.mxu0
        %v5586 = vadd.f32 %v5476, %v5585
        %5587 = vmatmul.f32.gmra.mxu0 %v4926
        %v5588 = vpop.f32.mrf.mxu0
        %v5589 = vadd.f32 %v5479, %v5588
        %5590 = vmatmul.f32.gmra.mxu0 %v4927
        %v5591 = vpop.f32.mrf.mxu0
        %v5592 = vadd.f32 %v5482, %v5591
        %5593 = vmatmul.f32.gmra.mxu0 %v4928
        %v5594 = vpop.f32.mrf.mxu0
        %v5595 = vadd.f32 %v5485, %v5594
        %5596 = vmatmul.f32.gmra.mxu0 %v4929
        %v5597 = vpop.f32.mrf.mxu0
        %v5598 = vadd.f32 %v5488, %v5597
        %5599 = vmatmul.f32.gmra.mxu0 %v4930
        %v5600 = vpop.f32.mrf.mxu0
        %v5601 = vadd.f32 %v5491, %v5600
        %5602 = vmatmul.f32.gmra.mxu0 %v4931
        %v5603 = vpop.f32.mrf.mxu0
        %v5604 = vadd.f32 %v5494, %v5603
        %5605 = vmatmul.f32.gmra.mxu0 %v4932
        %v5606 = vpop.f32.mrf.mxu0
        %v5607 = vadd.f32 %v5497, %v5606
        %5608 = vmatmul.f32.gmra.mxu0 %v4933
        %v5609 = vpop.f32.mrf.mxu0
        %v5610 = vadd.f32 %v5500, %v5609
        %5611 = vmatmul.f32.gmra.mxu0 %v4934
        %v5612 = vpop.f32.mrf.mxu0
        %v5613 = vadd.f32 %v5503, %v5612
        %5614 = vmatmul.f32.gmra.mxu0 %v4935
        %v5615 = vpop.f32.mrf.mxu0
        %v5616 = vadd.f32 %v5506, %v5615
        %5617 = vmatmul.f32.gmra.mxu0 %v4936
        %v5618 = vpop.f32.mrf.mxu0
        %v5619 = vadd.f32 %v5509, %v5618
        %5620 = vmatmul.f32.gmra.mxu0 %v4937
        %v5621 = vpop.f32.mrf.mxu0
        %v5622 = vadd.f32 %v5512, %v5621
        %5623 = vmatmul.f32.gmra.mxu0 %v4938
        %v5624 = vpop.f32.mrf.mxu0
        %v5625 = vadd.f32 %v5515, %v5624
        %5626 = vmatmul.f32.gmra.mxu0 %v4939
        %v5627 = vpop.f32.mrf.mxu0
        %v5628 = vadd.f32 %v5518, %v5627
        %5629 = vmatmul.f32.gmra.mxu0 %v4940
        %v5630 = vpop.f32.mrf.mxu0
        %v5631 = vadd.f32 %v5521, %v5630
        %5632 = vmatmul.f32.gmra.mxu0 %v4941
        %v5633 = vpop.f32.mrf.mxu0
        %v5634 = vadd.f32 %v5524, %v5633
        %5635 = vmatmul.f32.gmra.mxu0 %v4942
        %v5636 = vpop.f32.mrf.mxu0
        %v5637 = vadd.f32 %v5527, %v5636
        %5638 = vdwg.mxu0
        %5639 = vmatpush.msra.mxu0 %v415
        %5640 = vmatpush.msra.mxu0 %v414
        %5641 = vmatpush.msra.mxu0 %v413
        %5642 = vmatpush.msra.mxu0 %v412
        %5643 = vmatpush.msra.mxu0 %v411
        %5644 = vmatpush.msra.mxu0 %v410
        %5645 = vmatpush.msra.mxu0 %v409
        %5646 = vmatpush.msra.mxu0 %v408
        %5647 = vmatpush.msra.mxu0 %v407
        %5648 = vmatpush.msra.mxu0 %v406
        %5649 = vmatpush.msra.mxu0 %v405
        %5650 = vmatpush.msra.mxu0 %v404
        %5651 = vmatpush.msra.mxu0 %v403
        %5652 = vmatpush.msra.mxu0 %v402
        %5653 = vmatpush.msra.mxu0 %v401
        %5654 = vmatpush.msra.mxu0 %v400
        %5655 = vmatmul.f32.gmra.mxu0 %v4852
        %v5656 = vpop.f32.mrf.mxu0
        %v5657 = vadd.f32 %v5547, %v5656
        %5658 = vmatmul.f32.gmra.mxu0 %v4853
        %v5659 = vpop.f32.mrf.mxu0
        %v5660 = vadd.f32 %v5550, %v5659
        %5661 = vmatmul.f32.gmra.mxu0 %v4854
        %v5662 = vpop.f32.mrf.mxu0
        %v5663 = vadd.f32 %v5553, %v5662
        %5664 = vmatmul.f32.gmra.mxu0 %v4855
        %v5665 = vpop.f32.mrf.mxu0
        %v5666 = vadd.f32 %v5556, %v5665
        %5667 = vmatmul.f32.gmra.mxu0 %v4856
        %v5668 = vpop.f32.mrf.mxu0
        %v5669 = vadd.f32 %v5559, %v5668
        %5670 = vmatmul.f32.gmra.mxu0 %v4857
        %v5671 = vpop.f32.mrf.mxu0
        %v5672 = vadd.f32 %v5562, %v5671
        %5673 = vmatmul.f32.gmra.mxu0 %v4858
        %v5674 = vpop.f32.mrf.mxu0
        %v5675 = vadd.f32 %v5565, %v5674
        %5676 = vmatmul.f32.gmra.mxu0 %v4859
        %v5677 = vpop.f32.mrf.mxu0
        %v5678 = vadd.f32 %v5568, %v5677
        %5679 = vmatmul.f32.gmra.mxu0 %v4860
        %v5680 = vpop.f32.mrf.mxu0
        %v5681 = vadd.f32 %v5571, %v5680
        %5682 = vmatmul.f32.gmra.mxu0 %v4861
        %v5683 = vpop.f32.mrf.mxu0
        %v5684 = vadd.f32 %v5574, %v5683
        %5685 = vmatmul.f32.gmra.mxu0 %v4862
        %v5686 = vpop.f32.mrf.mxu0
        %v5687 = vadd.f32 %v5577, %v5686
        %5688 = vmatmul.f32.gmra.mxu0 %v4863
        %v5689 = vpop.f32.mrf.mxu0
        %v5690 = vadd.f32 %v5580, %v5689
        %5691 = vmatmul.f32.gmra.mxu0 %v4864
        %v5692 = vpop.f32.mrf.mxu0
        %v5693 = vadd.f32 %v5583, %v5692
        %5694 = vmatmul.f32.gmra.mxu0 %v4865
        %v5695 = vpop.f32.mrf.mxu0
        %v5696 = vadd.f32 %v5586, %v5695
        %5697 = vmatmul.f32.gmra.mxu0 %v4866
        %v5698 = vpop.f32.mrf.mxu0
        %v5699 = vadd.f32 %v5589, %v5698
        %5700 = vmatmul.f32.gmra.mxu0 %v4867
        %v5701 = vpop.f32.mrf.mxu0
        %v5702 = vadd.f32 %v5592, %v5701
        %5703 = vmatmul.f32.gmra.mxu0 %v4868
        %v5704 = vpop.f32.mrf.mxu0
        %v5705 = vadd.f32 %v5595, %v5704
        %5706 = vmatmul.f32.gmra.mxu0 %v4869
        %v5707 = vpop.f32.mrf.mxu0
        %v5708 = vadd.f32 %v5598, %v5707
        %5709 = vmatmul.f32.gmra.mxu0 %v4870
        %v5710 = vpop.f32.mrf.mxu0
        %v5711 = vadd.f32 %v5601, %v5710
        %5712 = vmatmul.f32.gmra.mxu0 %v4871
        %v5713 = vpop.f32.mrf.mxu0
        %v5714 = vadd.f32 %v5604, %v5713
        %5715 = vmatmul.f32.gmra.mxu0 %v4872
        %v5716 = vpop.f32.mrf.mxu0
        %v5717 = vadd.f32 %v5607, %v5716
        %5718 = vmatmul.f32.gmra.mxu0 %v4873
        %v5719 = vpop.f32.mrf.mxu0
        %v5720 = vadd.f32 %v5610, %v5719
        %5721 = vmatmul.f32.gmra.mxu0 %v4874
        %v5722 = vpop.f32.mrf.mxu0
        %v5723 = vadd.f32 %v5613, %v5722
        %5724 = vmatmul.f32.gmra.mxu0 %v4875
        %v5725 = vpop.f32.mrf.mxu0
        %v5726 = vadd.f32 %v5616, %v5725
        %5727 = vmatmul.f32.gmra.mxu0 %v4876
        %v5728 = vpop.f32.mrf.mxu0
        %v5729 = vadd.f32 %v5619, %v5728
        %5730 = vmatmul.f32.gmra.mxu0 %v4877
        %v5731 = vpop.f32.mrf.mxu0
        %v5732 = vadd.f32 %v5622, %v5731
        %5733 = vmatmul.f32.gmra.mxu0 %v4878
        %v5734 = vpop.f32.mrf.mxu0
        %v5735 = vadd.f32 %v5625, %v5734
        %5736 = vmatmul.f32.gmra.mxu0 %v4879
        %v5737 = vpop.f32.mrf.mxu0
        %v5738 = vadd.f32 %v5628, %v5737
        %5739 = vmatmul.f32.gmra.mxu0 %v4880
        %v5740 = vpop.f32.mrf.mxu0
        %v5741 = vadd.f32 %v5631, %v5740
        %5742 = vmatmul.f32.gmra.mxu0 %v4943
        %v5743 = vpop.f32.mrf.mxu0
        %v5744 = vadd.f32 %v5634, %v5743
        %5745 = vmatmul.f32.gmra.mxu0 %v4944
        %v5746 = vpop.f32.mrf.mxu0
        %v5747 = vadd.f32 %v5637, %v5746
        %5748 = vdwg.mxu0
        %5749 = vmatpush.msra.mxu0 %v431
        %5750 = vmatpush.msra.mxu0 %v430
        %5751 = vmatpush.msra.mxu0 %v429
        %5752 = vmatpush.msra.mxu0 %v428
        %5753 = vmatpush.msra.mxu0 %v427
        %5754 = vmatpush.msra.mxu0 %v426
        %5755 = vmatpush.msra.mxu0 %v425
        %5756 = vmatpush.msra.mxu0 %v424
        %5757 = vmatpush.msra.mxu0 %v423
        %5758 = vmatpush.msra.mxu0 %v422
        %5759 = vmatpush.msra.mxu0 %v421
        %5760 = vmatpush.msra.mxu0 %v420
        %5761 = vmatpush.msra.mxu0 %v419
        %5762 = vmatpush.msra.mxu0 %v418
        %5763 = vmatpush.msra.mxu0 %v417
        %5764 = vmatpush.msra.mxu0 %v416
        %5765 = vmatmul.f32.gmra.mxu0 %v4883
        %v5766 = vpop.f32.mrf.mxu0
        %v5767 = vadd.f32 %v5657, %v5766
        %5768 = vmatmul.f32.gmra.mxu0 %v4884
        %v5769 = vpop.f32.mrf.mxu0
        %v5770 = vadd.f32 %v5660, %v5769
        %5771 = vmatmul.f32.gmra.mxu0 %v4885
        %v5772 = vpop.f32.mrf.mxu0
        %v5773 = vadd.f32 %v5663, %v5772
        %5774 = vmatmul.f32.gmra.mxu0 %v4886
        %v5775 = vpop.f32.mrf.mxu0
        %v5776 = vadd.f32 %v5666, %v5775
        %5777 = vmatmul.f32.gmra.mxu0 %v4887
        %v5778 = vpop.f32.mrf.mxu0
        %v5779 = vadd.f32 %v5669, %v5778
        %5780 = vmatmul.f32.gmra.mxu0 %v4888
        %v5781 = vpop.f32.mrf.mxu0
        %v5782 = vadd.f32 %v5672, %v5781
        %5783 = vmatmul.f32.gmra.mxu0 %v4889
        %v5784 = vpop.f32.mrf.mxu0
        %v5785 = vadd.f32 %v5675, %v5784
        %5786 = vmatmul.f32.gmra.mxu0 %v4890
        %v5787 = vpop.f32.mrf.mxu0
        %v5788 = vadd.f32 %v5678, %v5787
        %5789 = vmatmul.f32.gmra.mxu0 %v4891
        %v5790 = vpop.f32.mrf.mxu0
        %v5791 = vadd.f32 %v5681, %v5790
        %5792 = vmatmul.f32.gmra.mxu0 %v4892
        %v5793 = vpop.f32.mrf.mxu0
        %v5794 = vadd.f32 %v5684, %v5793
        %5795 = vmatmul.f32.gmra.mxu0 %v4893
        %v5796 = vpop.f32.mrf.mxu0
        %v5797 = vadd.f32 %v5687, %v5796
        %5798 = vmatmul.f32.gmra.mxu0 %v4894
        %v5799 = vpop.f32.mrf.mxu0
        %v5800 = vadd.f32 %v5690, %v5799
        %5801 = vmatmul.f32.gmra.mxu0 %v4895
        %v5802 = vpop.f32.mrf.mxu0
        %v5803 = vadd.f32 %v5693, %v5802
        %5804 = vmatmul.f32.gmra.mxu0 %v4896
        %v5805 = vpop.f32.mrf.mxu0
        %v5806 = vadd.f32 %v5696, %v5805
        %5807 = vmatmul.f32.gmra.mxu0 %v4897
        %v5808 = vpop.f32.mrf.mxu0
        %v5809 = vadd.f32 %v5699, %v5808
        %5810 = vmatmul.f32.gmra.mxu0 %v4898
        %v5811 = vpop.f32.mrf.mxu0
        %v5812 = vadd.f32 %v5702, %v5811
        %5813 = vmatmul.f32.gmra.mxu0 %v4899
        %v5814 = vpop.f32.mrf.mxu0
        %v5815 = vadd.f32 %v5705, %v5814
        %5816 = vmatmul.f32.gmra.mxu0 %v4900
        %v5817 = vpop.f32.mrf.mxu0
        %v5818 = vadd.f32 %v5708, %v5817
        %5819 = vmatmul.f32.gmra.mxu0 %v4901
        %v5820 = vpop.f32.mrf.mxu0
        %v5821 = vadd.f32 %v5711, %v5820
        %5822 = vmatmul.f32.gmra.mxu0 %v4902
        %v5823 = vpop.f32.mrf.mxu0
        %v5824 = vadd.f32 %v5714, %v5823
        %5825 = vmatmul.f32.gmra.mxu0 %v4903
        %v5826 = vpop.f32.mrf.mxu0
        %v5827 = vadd.f32 %v5717, %v5826
        %5828 = vmatmul.f32.gmra.mxu0 %v4904
        %v5829 = vpop.f32.mrf.mxu0
        %v5830 = vadd.f32 %v5720, %v5829
        %5831 = vmatmul.f32.gmra.mxu0 %v4905
        %v5832 = vpop.f32.mrf.mxu0
        %v5833 = vadd.f32 %v5723, %v5832
        %5834 = vmatmul.f32.gmra.mxu0 %v4906
        %v5835 = vpop.f32.mrf.mxu0
        %v5836 = vadd.f32 %v5726, %v5835
        %5837 = vmatmul.f32.gmra.mxu0 %v4907
        %v5838 = vpop.f32.mrf.mxu0
        %v5839 = vadd.f32 %v5729, %v5838
        %5840 = vmatmul.f32.gmra.mxu0 %v4908
        %v5841 = vpop.f32.mrf.mxu0
        %v5842 = vadd.f32 %v5732, %v5841
        %5843 = vmatmul.f32.gmra.mxu0 %v4909
        %v5844 = vpop.f32.mrf.mxu0
        %v5845 = vadd.f32 %v5735, %v5844
        %5846 = vmatmul.f32.gmra.mxu0 %v4910
        %v5847 = vpop.f32.mrf.mxu0
        %v5848 = vadd.f32 %v5738, %v5847
        %5849 = vmatmul.f32.gmra.mxu0 %v4911
        %v5850 = vpop.f32.mrf.mxu0
        %v5851 = vadd.f32 %v5741, %v5850
        %5852 = vmatmul.f32.gmra.mxu0 %v4945
        %v5853 = vpop.f32.mrf.mxu0
        %v5854 = vadd.f32 %v5744, %v5853
        %5855 = vmatmul.f32.gmra.mxu0 %v4946
        %v5856 = vpop.f32.mrf.mxu0
        %v5857 = vadd.f32 %v5747, %v5856
        %5858 = vdwg.mxu0
        %5859 = vmatpush.msra.mxu0 %v447
        %5860 = vmatpush.msra.mxu0 %v446
        %5861 = vmatpush.msra.mxu0 %v445
        %5862 = vmatpush.msra.mxu0 %v444
        %5863 = vmatpush.msra.mxu0 %v443
        %5864 = vmatpush.msra.mxu0 %v442
        %5865 = vmatpush.msra.mxu0 %v441
        %5866 = vmatpush.msra.mxu0 %v440
        %5867 = vmatpush.msra.mxu0 %v439
        %5868 = vmatpush.msra.mxu0 %v438
        %5869 = vmatpush.msra.mxu0 %v437
        %5870 = vmatpush.msra.mxu0 %v436
        %5871 = vmatpush.msra.mxu0 %v435
        %5872 = vmatpush.msra.mxu0 %v434
        %5873 = vmatpush.msra.mxu0 %v433
        %5874 = vmatpush.msra.mxu0 %v432
        %5875 = vmatmul.f32.gmra.mxu0 %v4914
        %v5876 = vpop.f32.mrf.mxu0
        %v5877 = vadd.f32 %v5767, %v5876
        %5878 = vmatmul.f32.gmra.mxu0 %v4915
        %v5879 = vpop.f32.mrf.mxu0
        %v5880 = vadd.f32 %v5770, %v5879
        %5881 = vmatmul.f32.gmra.mxu0 %v4916
        %v5882 = vpop.f32.mrf.mxu0
        %v5883 = vadd.f32 %v5773, %v5882
        %5884 = vmatmul.f32.gmra.mxu0 %v4917
        %v5885 = vpop.f32.mrf.mxu0
        %v5886 = vadd.f32 %v5776, %v5885
        %5887 = vmatmul.f32.gmra.mxu0 %v4918
        %v5888 = vpop.f32.mrf.mxu0
        %v5889 = vadd.f32 %v5779, %v5888
        %5890 = vmatmul.f32.gmra.mxu0 %v4919
        %v5891 = vpop.f32.mrf.mxu0
        %v5892 = vadd.f32 %v5782, %v5891
        %5893 = vmatmul.f32.gmra.mxu0 %v4920
        %v5894 = vpop.f32.mrf.mxu0
        %v5895 = vadd.f32 %v5785, %v5894
        %5896 = vmatmul.f32.gmra.mxu0 %v4921
        %v5897 = vpop.f32.mrf.mxu0
        %v5898 = vadd.f32 %v5788, %v5897
        %5899 = vmatmul.f32.gmra.mxu0 %v4922
        %v5900 = vpop.f32.mrf.mxu0
        %v5901 = vadd.f32 %v5791, %v5900
        %5902 = vmatmul.f32.gmra.mxu0 %v4923
        %v5903 = vpop.f32.mrf.mxu0
        %v5904 = vadd.f32 %v5794, %v5903
        %5905 = vmatmul.f32.gmra.mxu0 %v4924
        %v5906 = vpop.f32.mrf.mxu0
        %v5907 = vadd.f32 %v5797, %v5906
        %5908 = vmatmul.f32.gmra.mxu0 %v4925
        %v5909 = vpop.f32.mrf.mxu0
        %v5910 = vadd.f32 %v5800, %v5909
        %5911 = vmatmul.f32.gmra.mxu0 %v4926
        %v5912 = vpop.f32.mrf.mxu0
        %v5913 = vadd.f32 %v5803, %v5912
        %5914 = vmatmul.f32.gmra.mxu0 %v4927
        %v5915 = vpop.f32.mrf.mxu0
        %v5916 = vadd.f32 %v5806, %v5915
        %5917 = vmatmul.f32.gmra.mxu0 %v4928
        %v5918 = vpop.f32.mrf.mxu0
        %v5919 = vadd.f32 %v5809, %v5918
        %5920 = vmatmul.f32.gmra.mxu0 %v4929
        %v5921 = vpop.f32.mrf.mxu0
        %v5922 = vadd.f32 %v5812, %v5921
        %5923 = vmatmul.f32.gmra.mxu0 %v4930
        %v5924 = vpop.f32.mrf.mxu0
        %v5925 = vadd.f32 %v5815, %v5924
        %5926 = vmatmul.f32.gmra.mxu0 %v4931
        %v5927 = vpop.f32.mrf.mxu0
        %v5928 = vadd.f32 %v5818, %v5927
        %5929 = vmatmul.f32.gmra.mxu0 %v4932
        %v5930 = vpop.f32.mrf.mxu0
        %v5931 = vadd.f32 %v5821, %v5930
        %5932 = vmatmul.f32.gmra.mxu0 %v4933
        %v5933 = vpop.f32.mrf.mxu0
        %v5934 = vadd.f32 %v5824, %v5933
        %5935 = vmatmul.f32.gmra.mxu0 %v4934
        %v5936 = vpop.f32.mrf.mxu0
        %v5937 = vadd.f32 %v5827, %v5936
        %5938 = vmatmul.f32.gmra.mxu0 %v4935
        %v5939 = vpop.f32.mrf.mxu0
        %v5940 = vadd.f32 %v5830, %v5939
        %5941 = vmatmul.f32.gmra.mxu0 %v4936
        %v5942 = vpop.f32.mrf.mxu0
        %v5943 = vadd.f32 %v5833, %v5942
        %5944 = vmatmul.f32.gmra.mxu0 %v4937
        %v5945 = vpop.f32.mrf.mxu0
        %v5946 = vadd.f32 %v5836, %v5945
        %5947 = vmatmul.f32.gmra.mxu0 %v4938
        %v5948 = vpop.f32.mrf.mxu0
        %v5949 = vadd.f32 %v5839, %v5948
        %5950 = vmatmul.f32.gmra.mxu0 %v4939
        %v5951 = vpop.f32.mrf.mxu0
        %v5952 = vadd.f32 %v5842, %v5951
        %5953 = vmatmul.f32.gmra.mxu0 %v4940
        %v5954 = vpop.f32.mrf.mxu0
        %v5955 = vadd.f32 %v5845, %v5954
        %5956 = vmatmul.f32.gmra.mxu0 %v4941
        %v5957 = vpop.f32.mrf.mxu0
        %v5958 = vadd.f32 %v5848, %v5957
        %5959 = vmatmul.f32.gmra.mxu0 %v4942
        %v5960 = vpop.f32.mrf.mxu0
        %v5961 = vadd.f32 %v5851, %v5960
        %5962 = vmatmul.f32.gmra.mxu0 %v4947
        %v5963 = vpop.f32.mrf.mxu0
        %v5964 = vadd.f32 %v5854, %v5963
        %5965 = vmatmul.f32.gmra.mxu0 %v4948
        %v5966 = vpop.f32.mrf.mxu0
        %v5967 = vadd.f32 %v5857, %v5966
        %5968 = vdwg.mxu0
        %5969 = vmatpush.msra.mxu0 %v463
        %5970 = vmatpush.msra.mxu0 %v462
        %5971 = vmatpush.msra.mxu0 %v461
        %5972 = vmatpush.msra.mxu0 %v460
        %5973 = vmatpush.msra.mxu0 %v459
        %5974 = vmatpush.msra.mxu0 %v458
        %5975 = vmatpush.msra.mxu0 %v457
        %5976 = vmatpush.msra.mxu0 %v456
        %5977 = vmatpush.msra.mxu0 %v455
        %5978 = vmatpush.msra.mxu0 %v454
        %5979 = vmatpush.msra.mxu0 %v453
        %5980 = vmatpush.msra.mxu0 %v452
        %5981 = vmatpush.msra.mxu0 %v451
        %5982 = vmatpush.msra.mxu0 %v450
        %5983 = vmatpush.msra.mxu0 %v449
        %5984 = vmatpush.msra.mxu0 %v448
        %5985 = vmatmul.f32.gmra.mxu0 %v4949
        %v5986 = vpop.f32.mrf.mxu0
        %v5987 = vadd.f32 %v5877, %v5986
        %5988 = vmatmul.f32.gmra.mxu0 %v4950
        %v5989 = vpop.f32.mrf.mxu0
        %v5990 = vadd.f32 %v5880, %v5989
        %5991 = vmatmul.f32.gmra.mxu0 %v4951
        %v5992 = vpop.f32.mrf.mxu0
        %v5993 = vadd.f32 %v5883, %v5992
        %5994 = vmatmul.f32.gmra.mxu0 %v4952
        %v5995 = vpop.f32.mrf.mxu0
        %v5996 = vadd.f32 %v5886, %v5995
        %5997 = vmatmul.f32.gmra.mxu0 %v4953
        %v5998 = vpop.f32.mrf.mxu0
        %v5999 = vadd.f32 %v5889, %v5998
        %6000 = vmatmul.f32.gmra.mxu0 %v4954
        %v6001 = vpop.f32.mrf.mxu0
        %v6002 = vadd.f32 %v5892, %v6001
        %6003 = vmatmul.f32.gmra.mxu0 %v4955
        %v6004 = vpop.f32.mrf.mxu0
        %v6005 = vadd.f32 %v5895, %v6004
        %6006 = vmatmul.f32.gmra.mxu0 %v4956
        %v6007 = vpop.f32.mrf.mxu0
        %v6008 = vadd.f32 %v5898, %v6007
        %6009 = vmatmul.f32.gmra.mxu0 %v4957
        %v6010 = vpop.f32.mrf.mxu0
        %v6011 = vadd.f32 %v5901, %v6010
        %6012 = vmatmul.f32.gmra.mxu0 %v4958
        %v6013 = vpop.f32.mrf.mxu0
        %v6014 = vadd.f32 %v5904, %v6013
        %6015 = vmatmul.f32.gmra.mxu0 %v4959
        %v6016 = vpop.f32.mrf.mxu0
        %v6017 = vadd.f32 %v5907, %v6016
        %6018 = vmatmul.f32.gmra.mxu0 %v4960
        %v6019 = vpop.f32.mrf.mxu0
        %v6020 = vadd.f32 %v5910, %v6019
        %6021 = vmatmul.f32.gmra.mxu0 %v4961
        %v6022 = vpop.f32.mrf.mxu0
        %v6023 = vadd.f32 %v5913, %v6022
        %6024 = vmatmul.f32.gmra.mxu0 %v4962
        %v6025 = vpop.f32.mrf.mxu0
        %v6026 = vadd.f32 %v5916, %v6025
        %6027 = vmatmul.f32.gmra.mxu0 %v4963
        %v6028 = vpop.f32.mrf.mxu0
        %v6029 = vadd.f32 %v5919, %v6028
        %6030 = vmatmul.f32.gmra.mxu0 %v4964
        %v6031 = vpop.f32.mrf.mxu0
        %v6032 = vadd.f32 %v5922, %v6031
        %6033 = vmatmul.f32.gmra.mxu0 %v4965
        %v6034 = vpop.f32.mrf.mxu0
        %v6035 = vadd.f32 %v5925, %v6034
        %6036 = vmatmul.f32.gmra.mxu0 %v4966
        %v6037 = vpop.f32.mrf.mxu0
        %v6038 = vadd.f32 %v5928, %v6037
        %6039 = vmatmul.f32.gmra.mxu0 %v4967
        %v6040 = vpop.f32.mrf.mxu0
        %v6041 = vadd.f32 %v5931, %v6040
        %6042 = vmatmul.f32.gmra.mxu0 %v4968
        %v6043 = vpop.f32.mrf.mxu0
        %v6044 = vadd.f32 %v5934, %v6043
        %6045 = vmatmul.f32.gmra.mxu0 %v4969
        %v6046 = vpop.f32.mrf.mxu0
        %v6047 = vadd.f32 %v5937, %v6046
        %6048 = vmatmul.f32.gmra.mxu0 %v4970
        %v6049 = vpop.f32.mrf.mxu0
        %v6050 = vadd.f32 %v5940, %v6049
        %6051 = vmatmul.f32.gmra.mxu0 %v4971
        %v6052 = vpop.f32.mrf.mxu0
        %v6053 = vadd.f32 %v5943, %v6052
        %6054 = vmatmul.f32.gmra.mxu0 %v4972
        %v6055 = vpop.f32.mrf.mxu0
        %v6056 = vadd.f32 %v5946, %v6055
        %6057 = vmatmul.f32.gmra.mxu0 %v4973
        %v6058 = vpop.f32.mrf.mxu0
        %v6059 = vadd.f32 %v5949, %v6058
        %6060 = vmatmul.f32.gmra.mxu0 %v4974
        %v6061 = vpop.f32.mrf.mxu0
        %v6062 = vadd.f32 %v5952, %v6061
        %6063 = vmatmul.f32.gmra.mxu0 %v4975
        %v6064 = vpop.f32.mrf.mxu0
        %v6065 = vadd.f32 %v5955, %v6064
        %6066 = vmatmul.f32.gmra.mxu0 %v4976
        %v6067 = vpop.f32.mrf.mxu0
        %v6068 = vadd.f32 %v5958, %v6067
        %6069 = vmatmul.f32.gmra.mxu0 %v4977
        %v6070 = vpop.f32.mrf.mxu0
        %v6071 = vadd.f32 %v5961, %v6070
        %6072 = vmatmul.f32.gmra.mxu0 %v4978
        %v6073 = vpop.f32.mrf.mxu0
        %v6074 = vadd.f32 %v5964, %v6073
        %6075 = vmatmul.f32.gmra.mxu0 %v4979
        %v6076 = vpop.f32.mrf.mxu0
        %v6077 = vadd.f32 %v5967, %v6076
        %6078 = vdwg.mxu0
        %6079 = vmatpush.msra.mxu0 %v479
        %6080 = vmatpush.msra.mxu0 %v478
        %6081 = vmatpush.msra.mxu0 %v477
        %6082 = vmatpush.msra.mxu0 %v476
        %6083 = vmatpush.msra.mxu0 %v475
        %6084 = vmatpush.msra.mxu0 %v474
        %6085 = vmatpush.msra.mxu0 %v473
        %6086 = vmatpush.msra.mxu0 %v472
        %6087 = vmatpush.msra.mxu0 %v471
        %6088 = vmatpush.msra.mxu0 %v470
        %6089 = vmatpush.msra.mxu0 %v469
        %6090 = vmatpush.msra.mxu0 %v468
        %6091 = vmatpush.msra.mxu0 %v467
        %6092 = vmatpush.msra.mxu0 %v466
        %6093 = vmatpush.msra.mxu0 %v465
        %6094 = vmatpush.msra.mxu0 %v464
        %6095 = vmatmul.f32.gmra.mxu0 %v4980
        %v6096 = vpop.f32.mrf.mxu0
        %v6097 = vadd.f32 %v5987, %v6096
        %6098 = vmatmul.f32.gmra.mxu0 %v4981
        %v6099 = vpop.f32.mrf.mxu0
        %v6100 = vadd.f32 %v5990, %v6099
        %6101 = vmatmul.f32.gmra.mxu0 %v4982
        %v6102 = vpop.f32.mrf.mxu0
        %v6103 = vadd.f32 %v5993, %v6102
        %6104 = vmatmul.f32.gmra.mxu0 %v4983
        %v6105 = vpop.f32.mrf.mxu0
        %v6106 = vadd.f32 %v5996, %v6105
        %6107 = vmatmul.f32.gmra.mxu0 %v4984
        %v6108 = vpop.f32.mrf.mxu0
        %v6109 = vadd.f32 %v5999, %v6108
        %6110 = vmatmul.f32.gmra.mxu0 %v4985
        %v6111 = vpop.f32.mrf.mxu0
        %v6112 = vadd.f32 %v6002, %v6111
        %6113 = vmatmul.f32.gmra.mxu0 %v4986
        %v6114 = vpop.f32.mrf.mxu0
        %v6115 = vadd.f32 %v6005, %v6114
        %6116 = vmatmul.f32.gmra.mxu0 %v4987
        %v6117 = vpop.f32.mrf.mxu0
        %v6118 = vadd.f32 %v6008, %v6117
        %6119 = vmatmul.f32.gmra.mxu0 %v4988
        %v6120 = vpop.f32.mrf.mxu0
        %v6121 = vadd.f32 %v6011, %v6120
        %6122 = vmatmul.f32.gmra.mxu0 %v4989
        %v6123 = vpop.f32.mrf.mxu0
        %v6124 = vadd.f32 %v6014, %v6123
        %6125 = vmatmul.f32.gmra.mxu0 %v4990
        %v6126 = vpop.f32.mrf.mxu0
        %v6127 = vadd.f32 %v6017, %v6126
        %6128 = vmatmul.f32.gmra.mxu0 %v4991
        %v6129 = vpop.f32.mrf.mxu0
        %v6130 = vadd.f32 %v6020, %v6129
        %6131 = vmatmul.f32.gmra.mxu0 %v4992
        %v6132 = vpop.f32.mrf.mxu0
        %v6133 = vadd.f32 %v6023, %v6132
        %6134 = vmatmul.f32.gmra.mxu0 %v4993
        %v6135 = vpop.f32.mrf.mxu0
        %v6136 = vadd.f32 %v6026, %v6135
        %6137 = vmatmul.f32.gmra.mxu0 %v4994
        %v6138 = vpop.f32.mrf.mxu0
        %v6139 = vadd.f32 %v6029, %v6138
        %6140 = vmatmul.f32.gmra.mxu0 %v4995
        %v6141 = vpop.f32.mrf.mxu0
        %v6142 = vadd.f32 %v6032, %v6141
        %6143 = vmatmul.f32.gmra.mxu0 %v4996
        %v6144 = vpop.f32.mrf.mxu0
        %v6145 = vadd.f32 %v6035, %v6144
        %6146 = vmatmul.f32.gmra.mxu0 %v4997
        %v6147 = vpop.f32.mrf.mxu0
        %v6148 = vadd.f32 %v6038, %v6147
        %6149 = vmatmul.f32.gmra.mxu0 %v4998
        %v6150 = vpop.f32.mrf.mxu0
        %v6151 = vadd.f32 %v6041, %v6150
        %6152 = vmatmul.f32.gmra.mxu0 %v4999
        %v6153 = vpop.f32.mrf.mxu0
        %v6154 = vadd.f32 %v6044, %v6153
        %6155 = vmatmul.f32.gmra.mxu0 %v5000
        %v6156 = vpop.f32.mrf.mxu0
        %v6157 = vadd.f32 %v6047, %v6156
        %6158 = vmatmul.f32.gmra.mxu0 %v5001
        %v6159 = vpop.f32.mrf.mxu0
        %v6160 = vadd.f32 %v6050, %v6159
        %6161 = vmatmul.f32.gmra.mxu0 %v5002
        %v6162 = vpop.f32.mrf.mxu0
        %v6163 = vadd.f32 %v6053, %v6162
        %6164 = vmatmul.f32.gmra.mxu0 %v5003
        %v6165 = vpop.f32.mrf.mxu0
        %v6166 = vadd.f32 %v6056, %v6165
        %6167 = vmatmul.f32.gmra.mxu0 %v5004
        %v6168 = vpop.f32.mrf.mxu0
        %v6169 = vadd.f32 %v6059, %v6168
        %6170 = vmatmul.f32.gmra.mxu0 %v5005
        %v6171 = vpop.f32.mrf.mxu0
        %v6172 = vadd.f32 %v6062, %v6171
        %6173 = vmatmul.f32.gmra.mxu0 %v5006
        %v6174 = vpop.f32.mrf.mxu0
        %v6175 = vadd.f32 %v6065, %v6174
        %6176 = vmatmul.f32.gmra.mxu0 %v5007
        %v6177 = vpop.f32.mrf.mxu0
        %v6178 = vadd.f32 %v6068, %v6177
        %6179 = vmatmul.f32.gmra.mxu0 %v5008
        %v6180 = vpop.f32.mrf.mxu0
        %v6181 = vadd.f32 %v6071, %v6180
        %6182 = vmatmul.f32.gmra.mxu0 %v5009
        %v6183 = vpop.f32.mrf.mxu0
        %v6184 = vadd.f32 %v6074, %v6183
        %6185 = vmatmul.f32.gmra.mxu0 %v5010
        %v6186 = vpop.f32.mrf.mxu0
        %v6187 = vadd.f32 %v6077, %v6186
        %6188 = vdwg.mxu0
        %6189 = vmatpush.msra.mxu0 %v495
        %6190 = vmatpush.msra.mxu0 %v494
        %6191 = vmatpush.msra.mxu0 %v493
        %6192 = vmatpush.msra.mxu0 %v492
        %6193 = vmatpush.msra.mxu0 %v491
        %6194 = vmatpush.msra.mxu0 %v490
        %6195 = vmatpush.msra.mxu0 %v489
        %6196 = vmatpush.msra.mxu0 %v488
        %6197 = vmatpush.msra.mxu0 %v487
        %6198 = vmatpush.msra.mxu0 %v486
        %6199 = vmatpush.msra.mxu0 %v485
        %6200 = vmatpush.msra.mxu0 %v484
        %6201 = vmatpush.msra.mxu0 %v483
        %6202 = vmatpush.msra.mxu0 %v482
        %6203 = vmatpush.msra.mxu0 %v481
        %6204 = vmatpush.msra.mxu0 %v480
        %6205 = vmatmul.f32.gmra.mxu0 %v4916
        %v6206 = vpop.f32.mrf.mxu0
        %v6207 = vadd.f32 %v6097, %v6206
        %6208 = vmatmul.f32.gmra.mxu0 %v4917
        %v6209 = vpop.f32.mrf.mxu0
        %v6210 = vadd.f32 %v6100, %v6209
        %6211 = vmatmul.f32.gmra.mxu0 %v4918
        %v6212 = vpop.f32.mrf.mxu0
        %v6213 = vadd.f32 %v6103, %v6212
        %6214 = vmatmul.f32.gmra.mxu0 %v4919
        %v6215 = vpop.f32.mrf.mxu0
        %v6216 = vadd.f32 %v6106, %v6215
        %6217 = vmatmul.f32.gmra.mxu0 %v4920
        %v6218 = vpop.f32.mrf.mxu0
        %v6219 = vadd.f32 %v6109, %v6218
        %6220 = vmatmul.f32.gmra.mxu0 %v4921
        %v6221 = vpop.f32.mrf.mxu0
        %v6222 = vadd.f32 %v6112, %v6221
        %6223 = vmatmul.f32.gmra.mxu0 %v4922
        %v6224 = vpop.f32.mrf.mxu0
        %v6225 = vadd.f32 %v6115, %v6224
        %6226 = vmatmul.f32.gmra.mxu0 %v4923
        %v6227 = vpop.f32.mrf.mxu0
        %v6228 = vadd.f32 %v6118, %v6227
        %6229 = vmatmul.f32.gmra.mxu0 %v4924
        %v6230 = vpop.f32.mrf.mxu0
        %v6231 = vadd.f32 %v6121, %v6230
        %6232 = vmatmul.f32.gmra.mxu0 %v4925
        %v6233 = vpop.f32.mrf.mxu0
        %v6234 = vadd.f32 %v6124, %v6233
        %6235 = vmatmul.f32.gmra.mxu0 %v4926
        %v6236 = vpop.f32.mrf.mxu0
        %v6237 = vadd.f32 %v6127, %v6236
        %6238 = vmatmul.f32.gmra.mxu0 %v4927
        %v6239 = vpop.f32.mrf.mxu0
        %v6240 = vadd.f32 %v6130, %v6239
        %6241 = vmatmul.f32.gmra.mxu0 %v4928
        %v6242 = vpop.f32.mrf.mxu0
        %v6243 = vadd.f32 %v6133, %v6242
        %6244 = vmatmul.f32.gmra.mxu0 %v4929
        %v6245 = vpop.f32.mrf.mxu0
        %v6246 = vadd.f32 %v6136, %v6245
        %6247 = vmatmul.f32.gmra.mxu0 %v4930
        %v6248 = vpop.f32.mrf.mxu0
        %v6249 = vadd.f32 %v6139, %v6248
        %6250 = vmatmul.f32.gmra.mxu0 %v4931
        %v6251 = vpop.f32.mrf.mxu0
        %v6252 = vadd.f32 %v6142, %v6251
        %6253 = vmatmul.f32.gmra.mxu0 %v4932
        %v6254 = vpop.f32.mrf.mxu0
        %v6255 = vadd.f32 %v6145, %v6254
        %6256 = vmatmul.f32.gmra.mxu0 %v4933
        %v6257 = vpop.f32.mrf.mxu0
        %v6258 = vadd.f32 %v6148, %v6257
        %6259 = vmatmul.f32.gmra.mxu0 %v4934
        %v6260 = vpop.f32.mrf.mxu0
        %v6261 = vadd.f32 %v6151, %v6260
        %6262 = vmatmul.f32.gmra.mxu0 %v4935
        %v6263 = vpop.f32.mrf.mxu0
        %v6264 = vadd.f32 %v6154, %v6263
        %6265 = vmatmul.f32.gmra.mxu0 %v4936
        %v6266 = vpop.f32.mrf.mxu0
        %v6267 = vadd.f32 %v6157, %v6266
        %6268 = vmatmul.f32.gmra.mxu0 %v4937
        %v6269 = vpop.f32.mrf.mxu0
        %v6270 = vadd.f32 %v6160, %v6269
        %6271 = vmatmul.f32.gmra.mxu0 %v4938
        %v6272 = vpop.f32.mrf.mxu0
        %v6273 = vadd.f32 %v6163, %v6272
        %6274 = vmatmul.f32.gmra.mxu0 %v4939
        %v6275 = vpop.f32.mrf.mxu0
        %v6276 = vadd.f32 %v6166, %v6275
        %6277 = vmatmul.f32.gmra.mxu0 %v4940
        %v6278 = vpop.f32.mrf.mxu0
        %v6279 = vadd.f32 %v6169, %v6278
        %6280 = vmatmul.f32.gmra.mxu0 %v4941
        %v6281 = vpop.f32.mrf.mxu0
        %v6282 = vadd.f32 %v6172, %v6281
        %6283 = vmatmul.f32.gmra.mxu0 %v4942
        %v6284 = vpop.f32.mrf.mxu0
        %v6285 = vadd.f32 %v6175, %v6284
        %6286 = vmatmul.f32.gmra.mxu0 %v4947
        %v6287 = vpop.f32.mrf.mxu0
        %v6288 = vadd.f32 %v6178, %v6287
        %6289 = vmatmul.f32.gmra.mxu0 %v4948
        %v6290 = vpop.f32.mrf.mxu0
        %v6291 = vadd.f32 %v6181, %v6290
        %6292 = vmatmul.f32.gmra.mxu0 %v5011
        %v6293 = vpop.f32.mrf.mxu0
        %v6294 = vadd.f32 %v6184, %v6293
        %6295 = vmatmul.f32.gmra.mxu0 %v5012
        %v6296 = vpop.f32.mrf.mxu0
        %v6297 = vadd.f32 %v6187, %v6296
        %6298 = vdwg.mxu0
        %6299 = vmatpush.msra.mxu0 %v511
        %6300 = vmatpush.msra.mxu0 %v510
        %6301 = vmatpush.msra.mxu0 %v509
        %6302 = vmatpush.msra.mxu0 %v508
        %6303 = vmatpush.msra.mxu0 %v507
        %6304 = vmatpush.msra.mxu0 %v506
        %6305 = vmatpush.msra.mxu0 %v505
        %6306 = vmatpush.msra.mxu0 %v504
        %6307 = vmatpush.msra.mxu0 %v503
        %6308 = vmatpush.msra.mxu0 %v502
        %6309 = vmatpush.msra.mxu0 %v501
        %6310 = vmatpush.msra.mxu0 %v500
        %6311 = vmatpush.msra.mxu0 %v499
        %6312 = vmatpush.msra.mxu0 %v498
        %6313 = vmatpush.msra.mxu0 %v497
        %6314 = vmatpush.msra.mxu0 %v496
        %6315 = vmatmul.f32.gmra.mxu0 %v4951
        %v6316 = vpop.f32.mrf.mxu0
        %v6317 = vadd.f32 %v6207, %v6316
        %6318 = vmatmul.f32.gmra.mxu0 %v4952
        %v6319 = vpop.f32.mrf.mxu0
        %v6320 = vadd.f32 %v6210, %v6319
        %6321 = vmatmul.f32.gmra.mxu0 %v4953
        %v6322 = vpop.f32.mrf.mxu0
        %v6323 = vadd.f32 %v6213, %v6322
        %6324 = vmatmul.f32.gmra.mxu0 %v4954
        %v6325 = vpop.f32.mrf.mxu0
        %v6326 = vadd.f32 %v6216, %v6325
        %6327 = vmatmul.f32.gmra.mxu0 %v4955
        %v6328 = vpop.f32.mrf.mxu0
        %v6329 = vadd.f32 %v6219, %v6328
        %6330 = vmatmul.f32.gmra.mxu0 %v4956
        %v6331 = vpop.f32.mrf.mxu0
        %v6332 = vadd.f32 %v6222, %v6331
        %6333 = vmatmul.f32.gmra.mxu0 %v4957
        %v6334 = vpop.f32.mrf.mxu0
        %v6335 = vadd.f32 %v6225, %v6334
        %6336 = vmatmul.f32.gmra.mxu0 %v4958
        %v6337 = vpop.f32.mrf.mxu0
        %v6338 = vadd.f32 %v6228, %v6337
        %6339 = vmatmul.f32.gmra.mxu0 %v4959
        %v6340 = vpop.f32.mrf.mxu0
        %v6341 = vadd.f32 %v6231, %v6340
        %6342 = vmatmul.f32.gmra.mxu0 %v4960
        %v6343 = vpop.f32.mrf.mxu0
        %v6344 = vadd.f32 %v6234, %v6343
        %6345 = vmatmul.f32.gmra.mxu0 %v4961
        %v6346 = vpop.f32.mrf.mxu0
        %v6347 = vadd.f32 %v6237, %v6346
        %6348 = vmatmul.f32.gmra.mxu0 %v4962
        %v6349 = vpop.f32.mrf.mxu0
        %v6350 = vadd.f32 %v6240, %v6349
        %6351 = vmatmul.f32.gmra.mxu0 %v4963
        %v6352 = vpop.f32.mrf.mxu0
        %v6353 = vadd.f32 %v6243, %v6352
        %6354 = vmatmul.f32.gmra.mxu0 %v4964
        %v6355 = vpop.f32.mrf.mxu0
        %v6356 = vadd.f32 %v6246, %v6355
        %6357 = vmatmul.f32.gmra.mxu0 %v4965
        %v6358 = vpop.f32.mrf.mxu0
        %v6359 = vadd.f32 %v6249, %v6358
        %6360 = vmatmul.f32.gmra.mxu0 %v4966
        %v6361 = vpop.f32.mrf.mxu0
        %v6362 = vadd.f32 %v6252, %v6361
        %6363 = vmatmul.f32.gmra.mxu0 %v4967
        %v6364 = vpop.f32.mrf.mxu0
        %v6365 = vadd.f32 %v6255, %v6364
        %6366 = vmatmul.f32.gmra.mxu0 %v4968
        %v6367 = vpop.f32.mrf.mxu0
        %v6368 = vadd.f32 %v6258, %v6367
        %6369 = vmatmul.f32.gmra.mxu0 %v4969
        %v6370 = vpop.f32.mrf.mxu0
        %v6371 = vadd.f32 %v6261, %v6370
        %6372 = vmatmul.f32.gmra.mxu0 %v4970
        %v6373 = vpop.f32.mrf.mxu0
        %v6374 = vadd.f32 %v6264, %v6373
        %6375 = vmatmul.f32.gmra.mxu0 %v4971
        %v6376 = vpop.f32.mrf.mxu0
        %v6377 = vadd.f32 %v6267, %v6376
        %6378 = vmatmul.f32.gmra.mxu0 %v4972
        %v6379 = vpop.f32.mrf.mxu0
        %v6380 = vadd.f32 %v6270, %v6379
        %6381 = vmatmul.f32.gmra.mxu0 %v4973
        %v6382 = vpop.f32.mrf.mxu0
        %v6383 = vadd.f32 %v6273, %v6382
        %6384 = vmatmul.f32.gmra.mxu0 %v4974
        %v6385 = vpop.f32.mrf.mxu0
        %v6386 = vadd.f32 %v6276, %v6385
        %6387 = vmatmul.f32.gmra.mxu0 %v4975
        %v6388 = vpop.f32.mrf.mxu0
        %v6389 = vadd.f32 %v6279, %v6388
        %6390 = vmatmul.f32.gmra.mxu0 %v4976
        %v6391 = vpop.f32.mrf.mxu0
        %v6392 = vadd.f32 %v6282, %v6391
        %6393 = vmatmul.f32.gmra.mxu0 %v4977
        %v6394 = vpop.f32.mrf.mxu0
        %v6395 = vadd.f32 %v6285, %v6394
        %6396 = vmatmul.f32.gmra.mxu0 %v4978
        %v6397 = vpop.f32.mrf.mxu0
        %v6398 = vadd.f32 %v6288, %v6397
        %6399 = vmatmul.f32.gmra.mxu0 %v4979
        %v6400 = vpop.f32.mrf.mxu0
        %v6401 = vadd.f32 %v6291, %v6400
        %6402 = vmatmul.f32.gmra.mxu0 %v5013
        %v6403 = vpop.f32.mrf.mxu0
        %v6404 = vadd.f32 %v6294, %v6403
        %6405 = vmatmul.f32.gmra.mxu0 %v5014
        %v6406 = vpop.f32.mrf.mxu0
        %v6407 = vadd.f32 %v6297, %v6406
        %6408 = vdwg.mxu0
        %6409 = vmatpush.msra.mxu0 %v527
        %6410 = vmatpush.msra.mxu0 %v526
        %6411 = vmatpush.msra.mxu0 %v525
        %6412 = vmatpush.msra.mxu0 %v524
        %6413 = vmatpush.msra.mxu0 %v523
        %6414 = vmatpush.msra.mxu0 %v522
        %6415 = vmatpush.msra.mxu0 %v521
        %6416 = vmatpush.msra.mxu0 %v520
        %6417 = vmatpush.msra.mxu0 %v519
        %6418 = vmatpush.msra.mxu0 %v518
        %6419 = vmatpush.msra.mxu0 %v517
        %6420 = vmatpush.msra.mxu0 %v516
        %6421 = vmatpush.msra.mxu0 %v515
        %6422 = vmatpush.msra.mxu0 %v514
        %6423 = vmatpush.msra.mxu0 %v513
        %6424 = vmatpush.msra.mxu0 %v512
        %6425 = vmatmul.f32.gmra.mxu0 %v4982
        %v6426 = vpop.f32.mrf.mxu0
        %v6427 = vadd.f32 %v6317, %v6426
        %6428 = vmatmul.f32.gmra.mxu0 %v4983
        %v6429 = vpop.f32.mrf.mxu0
        %v6430 = vadd.f32 %v6320, %v6429
        %6431 = vmatmul.f32.gmra.mxu0 %v4984
        %v6432 = vpop.f32.mrf.mxu0
        %v6433 = vadd.f32 %v6323, %v6432
        %6434 = vmatmul.f32.gmra.mxu0 %v4985
        %v6435 = vpop.f32.mrf.mxu0
        %v6436 = vadd.f32 %v6326, %v6435
        %6437 = vmatmul.f32.gmra.mxu0 %v4986
        %v6438 = vpop.f32.mrf.mxu0
        %v6439 = vadd.f32 %v6329, %v6438
        %6440 = vmatmul.f32.gmra.mxu0 %v4987
        %v6441 = vpop.f32.mrf.mxu0
        %v6442 = vadd.f32 %v6332, %v6441
        %6443 = vmatmul.f32.gmra.mxu0 %v4988
        %v6444 = vpop.f32.mrf.mxu0
        %v6445 = vadd.f32 %v6335, %v6444
        %6446 = vmatmul.f32.gmra.mxu0 %v4989
        %v6447 = vpop.f32.mrf.mxu0
        %v6448 = vadd.f32 %v6338, %v6447
        %6449 = vmatmul.f32.gmra.mxu0 %v4990
        %v6450 = vpop.f32.mrf.mxu0
        %v6451 = vadd.f32 %v6341, %v6450
        %6452 = vmatmul.f32.gmra.mxu0 %v4991
        %v6453 = vpop.f32.mrf.mxu0
        %v6454 = vadd.f32 %v6344, %v6453
        %6455 = vmatmul.f32.gmra.mxu0 %v4992
        %v6456 = vpop.f32.mrf.mxu0
        %v6457 = vadd.f32 %v6347, %v6456
        %6458 = vmatmul.f32.gmra.mxu0 %v4993
        %v6459 = vpop.f32.mrf.mxu0
        %v6460 = vadd.f32 %v6350, %v6459
        %6461 = vmatmul.f32.gmra.mxu0 %v4994
        %v6462 = vpop.f32.mrf.mxu0
        %v6463 = vadd.f32 %v6353, %v6462
        %6464 = vmatmul.f32.gmra.mxu0 %v4995
        %v6465 = vpop.f32.mrf.mxu0
        %v6466 = vadd.f32 %v6356, %v6465
        %6467 = vmatmul.f32.gmra.mxu0 %v4996
        %v6468 = vpop.f32.mrf.mxu0
        %v6469 = vadd.f32 %v6359, %v6468
        %6470 = vmatmul.f32.gmra.mxu0 %v4997
        %v6471 = vpop.f32.mrf.mxu0
        %v6472 = vadd.f32 %v6362, %v6471
        %6473 = vmatmul.f32.gmra.mxu0 %v4998
        %v6474 = vpop.f32.mrf.mxu0
        %v6475 = vadd.f32 %v6365, %v6474
        %6476 = vmatmul.f32.gmra.mxu0 %v4999
        %v6477 = vpop.f32.mrf.mxu0
        %v6478 = vadd.f32 %v6368, %v6477
        %6479 = vmatmul.f32.gmra.mxu0 %v5000
        %v6480 = vpop.f32.mrf.mxu0
        %v6481 = vadd.f32 %v6371, %v6480
        %6482 = vmatmul.f32.gmra.mxu0 %v5001
        %v6483 = vpop.f32.mrf.mxu0
        %v6484 = vadd.f32 %v6374, %v6483
        %6485 = vmatmul.f32.gmra.mxu0 %v5002
        %v6486 = vpop.f32.mrf.mxu0
        %v6487 = vadd.f32 %v6377, %v6486
        %6488 = vmatmul.f32.gmra.mxu0 %v5003
        %v6489 = vpop.f32.mrf.mxu0
        %v6490 = vadd.f32 %v6380, %v6489
        %6491 = vmatmul.f32.gmra.mxu0 %v5004
        %v6492 = vpop.f32.mrf.mxu0
        %v6493 = vadd.f32 %v6383, %v6492
        %6494 = vmatmul.f32.gmra.mxu0 %v5005
        %v6495 = vpop.f32.mrf.mxu0
        %v6496 = vadd.f32 %v6386, %v6495
        %6497 = vmatmul.f32.gmra.mxu0 %v5006
        %v6498 = vpop.f32.mrf.mxu0
        %v6499 = vadd.f32 %v6389, %v6498
        %6500 = vmatmul.f32.gmra.mxu0 %v5007
        %v6501 = vpop.f32.mrf.mxu0
        %v6502 = vadd.f32 %v6392, %v6501
        %6503 = vmatmul.f32.gmra.mxu0 %v5008
        %v6504 = vpop.f32.mrf.mxu0
        %v6505 = vadd.f32 %v6395, %v6504
        %6506 = vmatmul.f32.gmra.mxu0 %v5009
        %v6507 = vpop.f32.mrf.mxu0
        %v6508 = vadd.f32 %v6398, %v6507
        %6509 = vmatmul.f32.gmra.mxu0 %v5010
        %v6510 = vpop.f32.mrf.mxu0
        %v6511 = vadd.f32 %v6401, %v6510
        %6512 = vmatmul.f32.gmra.mxu0 %v5015
        %v6513 = vpop.f32.mrf.mxu0
        %v6514 = vadd.f32 %v6404, %v6513
        %6515 = vmatmul.f32.gmra.mxu0 %v5016
        %v6516 = vpop.f32.mrf.mxu0
        %v6517 = vadd.f32 %v6407, %v6516
        %6518 = vdwg.mxu0
        %6519 = vmatpush.msra.mxu0 %v543
        %6520 = vmatpush.msra.mxu0 %v542
        %6521 = vmatpush.msra.mxu0 %v541
        %6522 = vmatpush.msra.mxu0 %v540
        %6523 = vmatpush.msra.mxu0 %v539
        %6524 = vmatpush.msra.mxu0 %v538
        %6525 = vmatpush.msra.mxu0 %v537
        %6526 = vmatpush.msra.mxu0 %v536
        %6527 = vmatpush.msra.mxu0 %v535
        %6528 = vmatpush.msra.mxu0 %v534
        %6529 = vmatpush.msra.mxu0 %v533
        %6530 = vmatpush.msra.mxu0 %v532
        %6531 = vmatpush.msra.mxu0 %v531
        %6532 = vmatpush.msra.mxu0 %v530
        %6533 = vmatpush.msra.mxu0 %v529
        %6534 = vmatpush.msra.mxu0 %v528
        %6535 = vmatmul.f32.gmra.mxu0 %v5017
        %v6536 = vpop.f32.mrf.mxu0
        %v6537 = vadd.f32 %v6427, %v6536
        %6538 = vmatmul.f32.gmra.mxu0 %v5018
        %v6539 = vpop.f32.mrf.mxu0
        %v6540 = vadd.f32 %v6430, %v6539
        %6541 = vmatmul.f32.gmra.mxu0 %v5019
        %v6542 = vpop.f32.mrf.mxu0
        %v6543 = vadd.f32 %v6433, %v6542
        %6544 = vmatmul.f32.gmra.mxu0 %v5020
        %v6545 = vpop.f32.mrf.mxu0
        %v6546 = vadd.f32 %v6436, %v6545
        %6547 = vmatmul.f32.gmra.mxu0 %v5021
        %v6548 = vpop.f32.mrf.mxu0
        %v6549 = vadd.f32 %v6439, %v6548
        %6550 = vmatmul.f32.gmra.mxu0 %v5022
        %v6551 = vpop.f32.mrf.mxu0
        %v6552 = vadd.f32 %v6442, %v6551
        %6553 = vmatmul.f32.gmra.mxu0 %v5023
        %v6554 = vpop.f32.mrf.mxu0
        %v6555 = vadd.f32 %v6445, %v6554
        %6556 = vmatmul.f32.gmra.mxu0 %v5024
        %v6557 = vpop.f32.mrf.mxu0
        %v6558 = vadd.f32 %v6448, %v6557
        %6559 = vmatmul.f32.gmra.mxu0 %v5025
        %v6560 = vpop.f32.mrf.mxu0
        %v6561 = vadd.f32 %v6451, %v6560
        %6562 = vmatmul.f32.gmra.mxu0 %v5026
        %v6563 = vpop.f32.mrf.mxu0
        %v6564 = vadd.f32 %v6454, %v6563
        %6565 = vmatmul.f32.gmra.mxu0 %v5027
        %v6566 = vpop.f32.mrf.mxu0
        %v6567 = vadd.f32 %v6457, %v6566
        %6568 = vmatmul.f32.gmra.mxu0 %v5028
        %v6569 = vpop.f32.mrf.mxu0
        %v6570 = vadd.f32 %v6460, %v6569
        %6571 = vmatmul.f32.gmra.mxu0 %v5029
        %v6572 = vpop.f32.mrf.mxu0
        %v6573 = vadd.f32 %v6463, %v6572
        %6574 = vmatmul.f32.gmra.mxu0 %v5030
        %v6575 = vpop.f32.mrf.mxu0
        %v6576 = vadd.f32 %v6466, %v6575
        %6577 = vmatmul.f32.gmra.mxu0 %v5031
        %v6578 = vpop.f32.mrf.mxu0
        %v6579 = vadd.f32 %v6469, %v6578
        %6580 = vmatmul.f32.gmra.mxu0 %v5032
        %v6581 = vpop.f32.mrf.mxu0
        %v6582 = vadd.f32 %v6472, %v6581
        %6583 = vmatmul.f32.gmra.mxu0 %v5033
        %v6584 = vpop.f32.mrf.mxu0
        %v6585 = vadd.f32 %v6475, %v6584
        %6586 = vmatmul.f32.gmra.mxu0 %v5034
        %v6587 = vpop.f32.mrf.mxu0
        %v6588 = vadd.f32 %v6478, %v6587
        %6589 = vmatmul.f32.gmra.mxu0 %v5035
        %v6590 = vpop.f32.mrf.mxu0
        %v6591 = vadd.f32 %v6481, %v6590
        %6592 = vmatmul.f32.gmra.mxu0 %v5036
        %v6593 = vpop.f32.mrf.mxu0
        %v6594 = vadd.f32 %v6484, %v6593
        %6595 = vmatmul.f32.gmra.mxu0 %v5037
        %v6596 = vpop.f32.mrf.mxu0
        %v6597 = vadd.f32 %v6487, %v6596
        %6598 = vmatmul.f32.gmra.mxu0 %v5038
        %v6599 = vpop.f32.mrf.mxu0
        %v6600 = vadd.f32 %v6490, %v6599
        %6601 = vmatmul.f32.gmra.mxu0 %v5039
        %v6602 = vpop.f32.mrf.mxu0
        %v6603 = vadd.f32 %v6493, %v6602
        %6604 = vmatmul.f32.gmra.mxu0 %v5040
        %v6605 = vpop.f32.mrf.mxu0
        %v6606 = vadd.f32 %v6496, %v6605
        %6607 = vmatmul.f32.gmra.mxu0 %v5041
        %v6608 = vpop.f32.mrf.mxu0
        %v6609 = vadd.f32 %v6499, %v6608
        %6610 = vmatmul.f32.gmra.mxu0 %v5042
        %v6611 = vpop.f32.mrf.mxu0
        %v6612 = vadd.f32 %v6502, %v6611
        %6613 = vmatmul.f32.gmra.mxu0 %v5043
        %v6614 = vpop.f32.mrf.mxu0
        %v6615 = vadd.f32 %v6505, %v6614
        %6616 = vmatmul.f32.gmra.mxu0 %v5044
        %v6617 = vpop.f32.mrf.mxu0
        %v6618 = vadd.f32 %v6508, %v6617
        %6619 = vmatmul.f32.gmra.mxu0 %v5045
        %v6620 = vpop.f32.mrf.mxu0
        %v6621 = vadd.f32 %v6511, %v6620
        %6622 = vmatmul.f32.gmra.mxu0 %v5046
        %v6623 = vpop.f32.mrf.mxu0
        %v6624 = vadd.f32 %v6514, %v6623
        %6625 = vmatmul.f32.gmra.mxu0 %v5047
        %v6626 = vpop.f32.mrf.mxu0
        %v6627 = vadd.f32 %v6517, %v6626
        %6628 = vdwg.mxu0
        %6629 = vmatpush.msra.mxu0 %v559
        %6630 = vmatpush.msra.mxu0 %v558
        %6631 = vmatpush.msra.mxu0 %v557
        %6632 = vmatpush.msra.mxu0 %v556
        %6633 = vmatpush.msra.mxu0 %v555
        %6634 = vmatpush.msra.mxu0 %v554
        %6635 = vmatpush.msra.mxu0 %v553
        %6636 = vmatpush.msra.mxu0 %v552
        %6637 = vmatpush.msra.mxu0 %v551
        %6638 = vmatpush.msra.mxu0 %v550
        %6639 = vmatpush.msra.mxu0 %v549
        %6640 = vmatpush.msra.mxu0 %v548
        %6641 = vmatpush.msra.mxu0 %v547
        %6642 = vmatpush.msra.mxu0 %v546
        %6643 = vmatpush.msra.mxu0 %v545
        %6644 = vmatpush.msra.mxu0 %v544
        %6645 = vmatmul.f32.gmra.mxu0 %v4793
        %v6646 = vpop.f32.mrf.mxu0
        %v6647 = vadd.f32 %v6537, %v6646
        %6648 = vmatmul.f32.gmra.mxu0 %v4794
        %v6649 = vpop.f32.mrf.mxu0
        %v6650 = vadd.f32 %v6540, %v6649
        %6651 = vmatmul.f32.gmra.mxu0 %v4795
        %v6652 = vpop.f32.mrf.mxu0
        %v6653 = vadd.f32 %v6543, %v6652
        %6654 = vmatmul.f32.gmra.mxu0 %v4796
        %v6655 = vpop.f32.mrf.mxu0
        %v6656 = vadd.f32 %v6546, %v6655
        %6657 = vmatmul.f32.gmra.mxu0 %v4797
        %v6658 = vpop.f32.mrf.mxu0
        %v6659 = vadd.f32 %v6549, %v6658
        %6660 = vmatmul.f32.gmra.mxu0 %v4798
        %v6661 = vpop.f32.mrf.mxu0
        %v6662 = vadd.f32 %v6552, %v6661
        %6663 = vmatmul.f32.gmra.mxu0 %v4799
        %v6664 = vpop.f32.mrf.mxu0
        %v6665 = vadd.f32 %v6555, %v6664
        %6666 = vmatmul.f32.gmra.mxu0 %v4800
        %v6667 = vpop.f32.mrf.mxu0
        %v6668 = vadd.f32 %v6558, %v6667
        %6669 = vmatmul.f32.gmra.mxu0 %v4801
        %v6670 = vpop.f32.mrf.mxu0
        %v6671 = vadd.f32 %v6561, %v6670
        %6672 = vmatmul.f32.gmra.mxu0 %v4802
        %v6673 = vpop.f32.mrf.mxu0
        %v6674 = vadd.f32 %v6564, %v6673
        %6675 = vmatmul.f32.gmra.mxu0 %v4803
        %v6676 = vpop.f32.mrf.mxu0
        %v6677 = vadd.f32 %v6567, %v6676
        %6678 = vmatmul.f32.gmra.mxu0 %v4804
        %v6679 = vpop.f32.mrf.mxu0
        %v6680 = vadd.f32 %v6570, %v6679
        %6681 = vmatmul.f32.gmra.mxu0 %v4805
        %v6682 = vpop.f32.mrf.mxu0
        %v6683 = vadd.f32 %v6573, %v6682
        %6684 = vmatmul.f32.gmra.mxu0 %v4806
        %v6685 = vpop.f32.mrf.mxu0
        %v6686 = vadd.f32 %v6576, %v6685
        %6687 = vmatmul.f32.gmra.mxu0 %v4807
        %v6688 = vpop.f32.mrf.mxu0
        %v6689 = vadd.f32 %v6579, %v6688
        %6690 = vmatmul.f32.gmra.mxu0 %v4808
        %v6691 = vpop.f32.mrf.mxu0
        %v6692 = vadd.f32 %v6582, %v6691
        %6693 = vmatmul.f32.gmra.mxu0 %v4809
        %v6694 = vpop.f32.mrf.mxu0
        %v6695 = vadd.f32 %v6585, %v6694
        %6696 = vmatmul.f32.gmra.mxu0 %v4810
        %v6697 = vpop.f32.mrf.mxu0
        %v6698 = vadd.f32 %v6588, %v6697
        %6699 = vmatmul.f32.gmra.mxu0 %v4811
        %v6700 = vpop.f32.mrf.mxu0
        %v6701 = vadd.f32 %v6591, %v6700
        %6702 = vmatmul.f32.gmra.mxu0 %v4812
        %v6703 = vpop.f32.mrf.mxu0
        %v6704 = vadd.f32 %v6594, %v6703
        %6705 = vmatmul.f32.gmra.mxu0 %v4813
        %v6706 = vpop.f32.mrf.mxu0
        %v6707 = vadd.f32 %v6597, %v6706
        %6708 = vmatmul.f32.gmra.mxu0 %v4814
        %v6709 = vpop.f32.mrf.mxu0
        %v6710 = vadd.f32 %v6600, %v6709
        %6711 = vmatmul.f32.gmra.mxu0 %v4815
        %v6712 = vpop.f32.mrf.mxu0
        %v6713 = vadd.f32 %v6603, %v6712
        %6714 = vmatmul.f32.gmra.mxu0 %v4816
        %v6715 = vpop.f32.mrf.mxu0
        %v6716 = vadd.f32 %v6606, %v6715
        %6717 = vmatmul.f32.gmra.mxu0 %v4817
        %v6718 = vpop.f32.mrf.mxu0
        %v6719 = vadd.f32 %v6609, %v6718
        %6720 = vmatmul.f32.gmra.mxu0 %v4818
        %v6721 = vpop.f32.mrf.mxu0
        %v6722 = vadd.f32 %v6612, %v6721
        %6723 = vmatmul.f32.gmra.mxu0 %v5048
        %v6724 = vpop.f32.mrf.mxu0
        %v6725 = vadd.f32 %v6615, %v6724
        %6726 = vmatmul.f32.gmra.mxu0 %v5049
        %v6727 = vpop.f32.mrf.mxu0
        %v6728 = vadd.f32 %v6618, %v6727
        %6729 = vmatmul.f32.gmra.mxu0 %v5050
        %v6730 = vpop.f32.mrf.mxu0
        %v6731 = vadd.f32 %v6621, %v6730
        %6732 = vmatmul.f32.gmra.mxu0 %v5051
        %v6733 = vpop.f32.mrf.mxu0
        %v6734 = vadd.f32 %v6624, %v6733
        %6735 = vmatmul.f32.gmra.mxu0 %v5052
        %v6736 = vpop.f32.mrf.mxu0
        %v6737 = vadd.f32 %v6627, %v6736
        %6738 = vdwg.mxu0
        %6739 = vmatpush.msra.mxu0 %v575
        %6740 = vmatpush.msra.mxu0 %v574
        %6741 = vmatpush.msra.mxu0 %v573
        %6742 = vmatpush.msra.mxu0 %v572
        %6743 = vmatpush.msra.mxu0 %v571
        %6744 = vmatpush.msra.mxu0 %v570
        %6745 = vmatpush.msra.mxu0 %v569
        %6746 = vmatpush.msra.mxu0 %v568
        %6747 = vmatpush.msra.mxu0 %v567
        %6748 = vmatpush.msra.mxu0 %v566
        %6749 = vmatpush.msra.mxu0 %v565
        %6750 = vmatpush.msra.mxu0 %v564
        %6751 = vmatpush.msra.mxu0 %v563
        %6752 = vmatpush.msra.mxu0 %v562
        %6753 = vmatpush.msra.mxu0 %v561
        %6754 = vmatpush.msra.mxu0 %v560
        %6755 = vmatmul.f32.gmra.mxu0 %v4984
        %v6756 = vpop.f32.mrf.mxu0
        %v6757 = vadd.f32 %v6647, %v6756
        %6758 = vmatmul.f32.gmra.mxu0 %v4985
        %v6759 = vpop.f32.mrf.mxu0
        %v6760 = vadd.f32 %v6650, %v6759
        %6761 = vmatmul.f32.gmra.mxu0 %v4986
        %v6762 = vpop.f32.mrf.mxu0
        %v6763 = vadd.f32 %v6653, %v6762
        %6764 = vmatmul.f32.gmra.mxu0 %v4987
        %v6765 = vpop.f32.mrf.mxu0
        %v6766 = vadd.f32 %v6656, %v6765
        %6767 = vmatmul.f32.gmra.mxu0 %v4988
        %v6768 = vpop.f32.mrf.mxu0
        %v6769 = vadd.f32 %v6659, %v6768
        %6770 = vmatmul.f32.gmra.mxu0 %v4989
        %v6771 = vpop.f32.mrf.mxu0
        %v6772 = vadd.f32 %v6662, %v6771
        %6773 = vmatmul.f32.gmra.mxu0 %v4990
        %v6774 = vpop.f32.mrf.mxu0
        %v6775 = vadd.f32 %v6665, %v6774
        %6776 = vmatmul.f32.gmra.mxu0 %v4991
        %v6777 = vpop.f32.mrf.mxu0
        %v6778 = vadd.f32 %v6668, %v6777
        %6779 = vmatmul.f32.gmra.mxu0 %v4992
        %v6780 = vpop.f32.mrf.mxu0
        %v6781 = vadd.f32 %v6671, %v6780
        %6782 = vmatmul.f32.gmra.mxu0 %v4993
        %v6783 = vpop.f32.mrf.mxu0
        %v6784 = vadd.f32 %v6674, %v6783
        %6785 = vmatmul.f32.gmra.mxu0 %v4994
        %v6786 = vpop.f32.mrf.mxu0
        %v6787 = vadd.f32 %v6677, %v6786
        %6788 = vmatmul.f32.gmra.mxu0 %v4995
        %v6789 = vpop.f32.mrf.mxu0
        %v6790 = vadd.f32 %v6680, %v6789
        %6791 = vmatmul.f32.gmra.mxu0 %v4996
        %v6792 = vpop.f32.mrf.mxu0
        %v6793 = vadd.f32 %v6683, %v6792
        %6794 = vmatmul.f32.gmra.mxu0 %v4997
        %v6795 = vpop.f32.mrf.mxu0
        %v6796 = vadd.f32 %v6686, %v6795
        %6797 = vmatmul.f32.gmra.mxu0 %v4998
        %v6798 = vpop.f32.mrf.mxu0
        %v6799 = vadd.f32 %v6689, %v6798
        %6800 = vmatmul.f32.gmra.mxu0 %v4999
        %v6801 = vpop.f32.mrf.mxu0
        %v6802 = vadd.f32 %v6692, %v6801
        %6803 = vmatmul.f32.gmra.mxu0 %v5000
        %v6804 = vpop.f32.mrf.mxu0
        %v6805 = vadd.f32 %v6695, %v6804
        %6806 = vmatmul.f32.gmra.mxu0 %v5001
        %v6807 = vpop.f32.mrf.mxu0
        %v6808 = vadd.f32 %v6698, %v6807
        %6809 = vmatmul.f32.gmra.mxu0 %v5002
        %v6810 = vpop.f32.mrf.mxu0
        %v6811 = vadd.f32 %v6701, %v6810
        %6812 = vmatmul.f32.gmra.mxu0 %v5003
        %v6813 = vpop.f32.mrf.mxu0
        %v6814 = vadd.f32 %v6704, %v6813
        %6815 = vmatmul.f32.gmra.mxu0 %v5004
        %v6816 = vpop.f32.mrf.mxu0
        %v6817 = vadd.f32 %v6707, %v6816
        %6818 = vmatmul.f32.gmra.mxu0 %v5005
        %v6819 = vpop.f32.mrf.mxu0
        %v6820 = vadd.f32 %v6710, %v6819
        %6821 = vmatmul.f32.gmra.mxu0 %v5006
        %v6822 = vpop.f32.mrf.mxu0
        %v6823 = vadd.f32 %v6713, %v6822
        %6824 = vmatmul.f32.gmra.mxu0 %v5007
        %v6825 = vpop.f32.mrf.mxu0
        %v6826 = vadd.f32 %v6716, %v6825
        %6827 = vmatmul.f32.gmra.mxu0 %v5008
        %v6828 = vpop.f32.mrf.mxu0
        %v6829 = vadd.f32 %v6719, %v6828
        %6830 = vmatmul.f32.gmra.mxu0 %v5009
        %v6831 = vpop.f32.mrf.mxu0
        %v6832 = vadd.f32 %v6722, %v6831
        %6833 = vmatmul.f32.gmra.mxu0 %v5010
        %v6834 = vpop.f32.mrf.mxu0
        %v6835 = vadd.f32 %v6725, %v6834
        %6836 = vmatmul.f32.gmra.mxu0 %v5015
        %v6837 = vpop.f32.mrf.mxu0
        %v6838 = vadd.f32 %v6728, %v6837
        %6839 = vmatmul.f32.gmra.mxu0 %v5016
        %v6840 = vpop.f32.mrf.mxu0
        %v6841 = vadd.f32 %v6731, %v6840
        %6842 = vmatmul.f32.gmra.mxu0 %v5053
        %v6843 = vpop.f32.mrf.mxu0
        %v6844 = vadd.f32 %v6734, %v6843
        %6845 = vmatmul.f32.gmra.mxu0 %v5054
        %v6846 = vpop.f32.mrf.mxu0
        %v6847 = vadd.f32 %v6737, %v6846
        %6848 = vdwg.mxu0
        %6849 = vmatpush.msra.mxu0 %v591
        %6850 = vmatpush.msra.mxu0 %v590
        %6851 = vmatpush.msra.mxu0 %v589
        %6852 = vmatpush.msra.mxu0 %v588
        %6853 = vmatpush.msra.mxu0 %v587
        %6854 = vmatpush.msra.mxu0 %v586
        %6855 = vmatpush.msra.mxu0 %v585
        %6856 = vmatpush.msra.mxu0 %v584
        %6857 = vmatpush.msra.mxu0 %v583
        %6858 = vmatpush.msra.mxu0 %v582
        %6859 = vmatpush.msra.mxu0 %v581
        %6860 = vmatpush.msra.mxu0 %v580
        %6861 = vmatpush.msra.mxu0 %v579
        %6862 = vmatpush.msra.mxu0 %v578
        %6863 = vmatpush.msra.mxu0 %v577
        %6864 = vmatpush.msra.mxu0 %v576
        %6865 = vmatmul.f32.gmra.mxu0 %v5019
        %v6866 = vpop.f32.mrf.mxu0
        %v6867 = vadd.f32 %v6757, %v6866
        %6868 = vmatmul.f32.gmra.mxu0 %v5020
        %v6869 = vpop.f32.mrf.mxu0
        %v6870 = vadd.f32 %v6760, %v6869
        %6871 = vmatmul.f32.gmra.mxu0 %v5021
        %v6872 = vpop.f32.mrf.mxu0
        %v6873 = vadd.f32 %v6763, %v6872
        %6874 = vmatmul.f32.gmra.mxu0 %v5022
        %v6875 = vpop.f32.mrf.mxu0
        %v6876 = vadd.f32 %v6766, %v6875
        %6877 = vmatmul.f32.gmra.mxu0 %v5023
        %v6878 = vpop.f32.mrf.mxu0
        %v6879 = vadd.f32 %v6769, %v6878
        %6880 = vmatmul.f32.gmra.mxu0 %v5024
        %v6881 = vpop.f32.mrf.mxu0
        %v6882 = vadd.f32 %v6772, %v6881
        %6883 = vmatmul.f32.gmra.mxu0 %v5025
        %v6884 = vpop.f32.mrf.mxu0
        %v6885 = vadd.f32 %v6775, %v6884
        %6886 = vmatmul.f32.gmra.mxu0 %v5026
        %v6887 = vpop.f32.mrf.mxu0
        %v6888 = vadd.f32 %v6778, %v6887
        %6889 = vmatmul.f32.gmra.mxu0 %v5027
        %v6890 = vpop.f32.mrf.mxu0
        %v6891 = vadd.f32 %v6781, %v6890
        %6892 = vmatmul.f32.gmra.mxu0 %v5028
        %v6893 = vpop.f32.mrf.mxu0
        %v6894 = vadd.f32 %v6784, %v6893
        %6895 = vmatmul.f32.gmra.mxu0 %v5029
        %v6896 = vpop.f32.mrf.mxu0
        %v6897 = vadd.f32 %v6787, %v6896
        %6898 = vmatmul.f32.gmra.mxu0 %v5030
        %v6899 = vpop.f32.mrf.mxu0
        %v6900 = vadd.f32 %v6790, %v6899
        %6901 = vmatmul.f32.gmra.mxu0 %v5031
        %v6902 = vpop.f32.mrf.mxu0
        %v6903 = vadd.f32 %v6793, %v6902
        %6904 = vmatmul.f32.gmra.mxu0 %v5032
        %v6905 = vpop.f32.mrf.mxu0
        %v6906 = vadd.f32 %v6796, %v6905
        %6907 = vmatmul.f32.gmra.mxu0 %v5033
        %v6908 = vpop.f32.mrf.mxu0
        %v6909 = vadd.f32 %v6799, %v6908
        %6910 = vmatmul.f32.gmra.mxu0 %v5034
        %v6911 = vpop.f32.mrf.mxu0
        %v6912 = vadd.f32 %v6802, %v6911
        %6913 = vmatmul.f32.gmra.mxu0 %v5035
        %v6914 = vpop.f32.mrf.mxu0
        %v6915 = vadd.f32 %v6805, %v6914
        %6916 = vmatmul.f32.gmra.mxu0 %v5036
        %v6917 = vpop.f32.mrf.mxu0
        %v6918 = vadd.f32 %v6808, %v6917
        %6919 = vmatmul.f32.gmra.mxu0 %v5037
        %v6920 = vpop.f32.mrf.mxu0
        %v6921 = vadd.f32 %v6811, %v6920
        %6922 = vmatmul.f32.gmra.mxu0 %v5038
        %v6923 = vpop.f32.mrf.mxu0
        %v6924 = vadd.f32 %v6814, %v6923
        %6925 = vmatmul.f32.gmra.mxu0 %v5039
        %v6926 = vpop.f32.mrf.mxu0
        %v6927 = vadd.f32 %v6817, %v6926
        %6928 = vmatmul.f32.gmra.mxu0 %v5040
        %v6929 = vpop.f32.mrf.mxu0
        %v6930 = vadd.f32 %v6820, %v6929
        %6931 = vmatmul.f32.gmra.mxu0 %v5041
        %v6932 = vpop.f32.mrf.mxu0
        %v6933 = vadd.f32 %v6823, %v6932
        %6934 = vmatmul.f32.gmra.mxu0 %v5042
        %v6935 = vpop.f32.mrf.mxu0
        %v6936 = vadd.f32 %v6826, %v6935
        %6937 = vmatmul.f32.gmra.mxu0 %v5043
        %v6938 = vpop.f32.mrf.mxu0
        %v6939 = vadd.f32 %v6829, %v6938
        %6940 = vmatmul.f32.gmra.mxu0 %v5044
        %v6941 = vpop.f32.mrf.mxu0
        %v6942 = vadd.f32 %v6832, %v6941
        %6943 = vmatmul.f32.gmra.mxu0 %v5045
        %v6944 = vpop.f32.mrf.mxu0
        %v6945 = vadd.f32 %v6835, %v6944
        %6946 = vmatmul.f32.gmra.mxu0 %v5046
        %v6947 = vpop.f32.mrf.mxu0
        %v6948 = vadd.f32 %v6838, %v6947
        %6949 = vmatmul.f32.gmra.mxu0 %v5047
        %v6950 = vpop.f32.mrf.mxu0
        %v6951 = vadd.f32 %v6841, %v6950
        %6952 = vmatmul.f32.gmra.mxu0 %v5055
        %v6953 = vpop.f32.mrf.mxu0
        %v6954 = vadd.f32 %v6844, %v6953
        %6955 = vmatmul.f32.gmra.mxu0 %v5056
        %v6956 = vpop.f32.mrf.mxu0
        %v6957 = vadd.f32 %v6847, %v6956
        %6958 = vdwg.mxu0
        %6959 = vmatpush.msra.mxu0 %v607
        %6960 = vmatpush.msra.mxu0 %v606
        %6961 = vmatpush.msra.mxu0 %v605
        %6962 = vmatpush.msra.mxu0 %v604
        %6963 = vmatpush.msra.mxu0 %v603
        %6964 = vmatpush.msra.mxu0 %v602
        %6965 = vmatpush.msra.mxu0 %v601
        %6966 = vmatpush.msra.mxu0 %v600
        %6967 = vmatpush.msra.mxu0 %v599
        %6968 = vmatpush.msra.mxu0 %v598
        %6969 = vmatpush.msra.mxu0 %v597
        %6970 = vmatpush.msra.mxu0 %v596
        %6971 = vmatpush.msra.mxu0 %v595
        %6972 = vmatpush.msra.mxu0 %v594
        %6973 = vmatpush.msra.mxu0 %v593
        %6974 = vmatpush.msra.mxu0 %v592
        %6975 = vmatmul.f32.gmra.mxu0 %v4795
        %v6976 = vpop.f32.mrf.mxu0
        %v6977 = vadd.f32 %v6867, %v6976
        %6978 = vmatmul.f32.gmra.mxu0 %v4796
        %v6979 = vpop.f32.mrf.mxu0
        %v6980 = vadd.f32 %v6870, %v6979
        %6981 = vmatmul.f32.gmra.mxu0 %v4797
        %v6982 = vpop.f32.mrf.mxu0
        %v6983 = vadd.f32 %v6873, %v6982
        %6984 = vmatmul.f32.gmra.mxu0 %v4798
        %v6985 = vpop.f32.mrf.mxu0
        %v6986 = vadd.f32 %v6876, %v6985
        %6987 = vmatmul.f32.gmra.mxu0 %v4799
        %v6988 = vpop.f32.mrf.mxu0
        %v6989 = vadd.f32 %v6879, %v6988
        %6990 = vmatmul.f32.gmra.mxu0 %v4800
        %v6991 = vpop.f32.mrf.mxu0
        %v6992 = vadd.f32 %v6882, %v6991
        %6993 = vmatmul.f32.gmra.mxu0 %v4801
        %v6994 = vpop.f32.mrf.mxu0
        %v6995 = vadd.f32 %v6885, %v6994
        %6996 = vmatmul.f32.gmra.mxu0 %v4802
        %v6997 = vpop.f32.mrf.mxu0
        %v6998 = vadd.f32 %v6888, %v6997
        %6999 = vmatmul.f32.gmra.mxu0 %v4803
        %v7000 = vpop.f32.mrf.mxu0
        %v7001 = vadd.f32 %v6891, %v7000
        %7002 = vmatmul.f32.gmra.mxu0 %v4804
        %v7003 = vpop.f32.mrf.mxu0
        %v7004 = vadd.f32 %v6894, %v7003
        %7005 = vmatmul.f32.gmra.mxu0 %v4805
        %v7006 = vpop.f32.mrf.mxu0
        %v7007 = vadd.f32 %v6897, %v7006
        %7008 = vmatmul.f32.gmra.mxu0 %v4806
        %v7009 = vpop.f32.mrf.mxu0
        %v7010 = vadd.f32 %v6900, %v7009
        %7011 = vmatmul.f32.gmra.mxu0 %v4807
        %v7012 = vpop.f32.mrf.mxu0
        %v7013 = vadd.f32 %v6903, %v7012
        %7014 = vmatmul.f32.gmra.mxu0 %v4808
        %v7015 = vpop.f32.mrf.mxu0
        %v7016 = vadd.f32 %v6906, %v7015
        %7017 = vmatmul.f32.gmra.mxu0 %v4809
        %v7018 = vpop.f32.mrf.mxu0
        %v7019 = vadd.f32 %v6909, %v7018
        %7020 = vmatmul.f32.gmra.mxu0 %v4810
        %v7021 = vpop.f32.mrf.mxu0
        %v7022 = vadd.f32 %v6912, %v7021
        %7023 = vmatmul.f32.gmra.mxu0 %v4811
        %v7024 = vpop.f32.mrf.mxu0
        %v7025 = vadd.f32 %v6915, %v7024
        %7026 = vmatmul.f32.gmra.mxu0 %v4812
        %v7027 = vpop.f32.mrf.mxu0
        %v7028 = vadd.f32 %v6918, %v7027
        %7029 = vmatmul.f32.gmra.mxu0 %v4813
        %v7030 = vpop.f32.mrf.mxu0
        %v7031 = vadd.f32 %v6921, %v7030
        %7032 = vmatmul.f32.gmra.mxu0 %v4814
        %v7033 = vpop.f32.mrf.mxu0
        %v7034 = vadd.f32 %v6924, %v7033
        %7035 = vmatmul.f32.gmra.mxu0 %v4815
        %v7036 = vpop.f32.mrf.mxu0
        %v7037 = vadd.f32 %v6927, %v7036
        %7038 = vmatmul.f32.gmra.mxu0 %v4816
        %v7039 = vpop.f32.mrf.mxu0
        %v7040 = vadd.f32 %v6930, %v7039
        %7041 = vmatmul.f32.gmra.mxu0 %v4817
        %v7042 = vpop.f32.mrf.mxu0
        %v7043 = vadd.f32 %v6933, %v7042
        %7044 = vmatmul.f32.gmra.mxu0 %v4818
        %v7045 = vpop.f32.mrf.mxu0
        %v7046 = vadd.f32 %v6936, %v7045
        %7047 = vmatmul.f32.gmra.mxu0 %v5048
        %v7048 = vpop.f32.mrf.mxu0
        %v7049 = vadd.f32 %v6939, %v7048
        %7050 = vmatmul.f32.gmra.mxu0 %v5049
        %v7051 = vpop.f32.mrf.mxu0
        %v7052 = vadd.f32 %v6942, %v7051
        %7053 = vmatmul.f32.gmra.mxu0 %v5050
        %v7054 = vpop.f32.mrf.mxu0
        %v7055 = vadd.f32 %v6945, %v7054
        %7056 = vmatmul.f32.gmra.mxu0 %v5051
        %v7057 = vpop.f32.mrf.mxu0
        %v7058 = vadd.f32 %v6948, %v7057
        %7059 = vmatmul.f32.gmra.mxu0 %v5052
        %v7060 = vpop.f32.mrf.mxu0
        %v7061 = vadd.f32 %v6951, %v7060
        %7062 = vmatmul.f32.gmra.mxu0 %v5057
        %v7063 = vpop.f32.mrf.mxu0
        %v7064 = vadd.f32 %v6954, %v7063
        %7065 = vmatmul.f32.gmra.mxu0 %v5058
        %v7066 = vpop.f32.mrf.mxu0
        %v7067 = vadd.f32 %v6957, %v7066
        %7068 = vdwg.mxu0
        %7069 = vmatpush.msra.mxu0 %v623
        %7070 = vmatpush.msra.mxu0 %v622
        %7071 = vmatpush.msra.mxu0 %v621
        %7072 = vmatpush.msra.mxu0 %v620
        %7073 = vmatpush.msra.mxu0 %v619
        %7074 = vmatpush.msra.mxu0 %v618
        %7075 = vmatpush.msra.mxu0 %v617
        %7076 = vmatpush.msra.mxu0 %v616
        %7077 = vmatpush.msra.mxu0 %v615
        %7078 = vmatpush.msra.mxu0 %v614
        %7079 = vmatpush.msra.mxu0 %v613
        %7080 = vmatpush.msra.mxu0 %v612
        %7081 = vmatpush.msra.mxu0 %v611
        %7082 = vmatpush.msra.mxu0 %v610
        %7083 = vmatpush.msra.mxu0 %v609
        %7084 = vmatpush.msra.mxu0 %v608
        %7085 = vmatmul.f32.gmra.mxu0 %v4826
        %v7086 = vpop.f32.mrf.mxu0
        %v7087 = vadd.f32 %v6977, %v7086
        %7088 = vmatmul.f32.gmra.mxu0 %v4827
        %v7089 = vpop.f32.mrf.mxu0
        %v7090 = vadd.f32 %v6980, %v7089
        %7091 = vmatmul.f32.gmra.mxu0 %v4828
        %v7092 = vpop.f32.mrf.mxu0
        %v7093 = vadd.f32 %v6983, %v7092
        %7094 = vmatmul.f32.gmra.mxu0 %v4829
        %v7095 = vpop.f32.mrf.mxu0
        %v7096 = vadd.f32 %v6986, %v7095
        %7097 = vmatmul.f32.gmra.mxu0 %v4830
        %v7098 = vpop.f32.mrf.mxu0
        %v7099 = vadd.f32 %v6989, %v7098
        %7100 = vmatmul.f32.gmra.mxu0 %v4831
        %v7101 = vpop.f32.mrf.mxu0
        %v7102 = vadd.f32 %v6992, %v7101
        %7103 = vmatmul.f32.gmra.mxu0 %v4832
        %v7104 = vpop.f32.mrf.mxu0
        %v7105 = vadd.f32 %v6995, %v7104
        %7106 = vmatmul.f32.gmra.mxu0 %v4833
        %v7107 = vpop.f32.mrf.mxu0
        %v7108 = vadd.f32 %v6998, %v7107
        %7109 = vmatmul.f32.gmra.mxu0 %v4834
        %v7110 = vpop.f32.mrf.mxu0
        %v7111 = vadd.f32 %v7001, %v7110
        %7112 = vmatmul.f32.gmra.mxu0 %v4835
        %v7113 = vpop.f32.mrf.mxu0
        %v7114 = vadd.f32 %v7004, %v7113
        %7115 = vmatmul.f32.gmra.mxu0 %v4836
        %v7116 = vpop.f32.mrf.mxu0
        %v7117 = vadd.f32 %v7007, %v7116
        %7118 = vmatmul.f32.gmra.mxu0 %v4837
        %v7119 = vpop.f32.mrf.mxu0
        %v7120 = vadd.f32 %v7010, %v7119
        %7121 = vmatmul.f32.gmra.mxu0 %v4838
        %v7122 = vpop.f32.mrf.mxu0
        %v7123 = vadd.f32 %v7013, %v7122
        %7124 = vmatmul.f32.gmra.mxu0 %v4839
        %v7125 = vpop.f32.mrf.mxu0
        %v7126 = vadd.f32 %v7016, %v7125
        %7127 = vmatmul.f32.gmra.mxu0 %v4840
        %v7128 = vpop.f32.mrf.mxu0
        %v7129 = vadd.f32 %v7019, %v7128
        %7130 = vmatmul.f32.gmra.mxu0 %v4841
        %v7131 = vpop.f32.mrf.mxu0
        %v7132 = vadd.f32 %v7022, %v7131
        %7133 = vmatmul.f32.gmra.mxu0 %v4842
        %v7134 = vpop.f32.mrf.mxu0
        %v7135 = vadd.f32 %v7025, %v7134
        %7136 = vmatmul.f32.gmra.mxu0 %v4843
        %v7137 = vpop.f32.mrf.mxu0
        %v7138 = vadd.f32 %v7028, %v7137
        %7139 = vmatmul.f32.gmra.mxu0 %v4844
        %v7140 = vpop.f32.mrf.mxu0
        %v7141 = vadd.f32 %v7031, %v7140
        %7142 = vmatmul.f32.gmra.mxu0 %v4845
        %v7143 = vpop.f32.mrf.mxu0
        %v7144 = vadd.f32 %v7034, %v7143
        %7145 = vmatmul.f32.gmra.mxu0 %v4846
        %v7146 = vpop.f32.mrf.mxu0
        %v7147 = vadd.f32 %v7037, %v7146
        %7148 = vmatmul.f32.gmra.mxu0 %v4847
        %v7149 = vpop.f32.mrf.mxu0
        %v7150 = vadd.f32 %v7040, %v7149
        %7151 = vmatmul.f32.gmra.mxu0 %v4848
        %v7152 = vpop.f32.mrf.mxu0
        %v7153 = vadd.f32 %v7043, %v7152
        %7154 = vmatmul.f32.gmra.mxu0 %v4849
        %v7155 = vpop.f32.mrf.mxu0
        %v7156 = vadd.f32 %v7046, %v7155
        %7157 = vmatmul.f32.gmra.mxu0 %v5059
        %v7158 = vpop.f32.mrf.mxu0
        %v7159 = vadd.f32 %v7049, %v7158
        %7160 = vmatmul.f32.gmra.mxu0 %v5060
        %v7161 = vpop.f32.mrf.mxu0
        %v7162 = vadd.f32 %v7052, %v7161
        %7163 = vmatmul.f32.gmra.mxu0 %v5061
        %v7164 = vpop.f32.mrf.mxu0
        %v7165 = vadd.f32 %v7055, %v7164
        %7166 = vmatmul.f32.gmra.mxu0 %v5062
        %v7167 = vpop.f32.mrf.mxu0
        %v7168 = vadd.f32 %v7058, %v7167
        %7169 = vmatmul.f32.gmra.mxu0 %v5063
        %v7170 = vpop.f32.mrf.mxu0
        %v7171 = vadd.f32 %v7061, %v7170
        %7172 = vmatmul.f32.gmra.mxu0 %v5064
        %v7173 = vpop.f32.mrf.mxu0
        %v7174 = vadd.f32 %v7064, %v7173
        %7175 = vmatmul.f32.gmra.mxu0 %v5065
        %v7176 = vpop.f32.mrf.mxu0
        %v7177 = vadd.f32 %v7067, %v7176
        %7178 = vdwg.mxu0
        %7179 = vmatpush.msra.mxu0 %v639
        %7180 = vmatpush.msra.mxu0 %v638
        %7181 = vmatpush.msra.mxu0 %v637
        %7182 = vmatpush.msra.mxu0 %v636
        %7183 = vmatpush.msra.mxu0 %v635
        %7184 = vmatpush.msra.mxu0 %v634
        %7185 = vmatpush.msra.mxu0 %v633
        %7186 = vmatpush.msra.mxu0 %v632
        %7187 = vmatpush.msra.mxu0 %v631
        %7188 = vmatpush.msra.mxu0 %v630
        %7189 = vmatpush.msra.mxu0 %v629
        %7190 = vmatpush.msra.mxu0 %v628
        %7191 = vmatpush.msra.mxu0 %v627
        %7192 = vmatpush.msra.mxu0 %v626
        %7193 = vmatpush.msra.mxu0 %v625
        %7194 = vmatpush.msra.mxu0 %v624
        %7195 = vmatmul.f32.gmra.mxu0 %v4857
        %v7196 = vpop.f32.mrf.mxu0
        %v7197 = vadd.f32 %v7087, %v7196
        %7198 = vmatmul.f32.gmra.mxu0 %v4858
        %v7199 = vpop.f32.mrf.mxu0
        %v7200 = vadd.f32 %v7090, %v7199
        %7201 = vmatmul.f32.gmra.mxu0 %v4859
        %v7202 = vpop.f32.mrf.mxu0
        %v7203 = vadd.f32 %v7093, %v7202
        %7204 = vmatmul.f32.gmra.mxu0 %v4860
        %v7205 = vpop.f32.mrf.mxu0
        %v7206 = vadd.f32 %v7096, %v7205
        %7207 = vmatmul.f32.gmra.mxu0 %v4861
        %v7208 = vpop.f32.mrf.mxu0
        %v7209 = vadd.f32 %v7099, %v7208
        %7210 = vmatmul.f32.gmra.mxu0 %v4862
        %v7211 = vpop.f32.mrf.mxu0
        %v7212 = vadd.f32 %v7102, %v7211
        %7213 = vmatmul.f32.gmra.mxu0 %v4863
        %v7214 = vpop.f32.mrf.mxu0
        %v7215 = vadd.f32 %v7105, %v7214
        %7216 = vmatmul.f32.gmra.mxu0 %v4864
        %v7217 = vpop.f32.mrf.mxu0
        %v7218 = vadd.f32 %v7108, %v7217
        %7219 = vmatmul.f32.gmra.mxu0 %v4865
        %v7220 = vpop.f32.mrf.mxu0
        %v7221 = vadd.f32 %v7111, %v7220
        %7222 = vmatmul.f32.gmra.mxu0 %v4866
        %v7223 = vpop.f32.mrf.mxu0
        %v7224 = vadd.f32 %v7114, %v7223
        %7225 = vmatmul.f32.gmra.mxu0 %v4867
        %v7226 = vpop.f32.mrf.mxu0
        %v7227 = vadd.f32 %v7117, %v7226
        %7228 = vmatmul.f32.gmra.mxu0 %v4868
        %v7229 = vpop.f32.mrf.mxu0
        %v7230 = vadd.f32 %v7120, %v7229
        %7231 = vmatmul.f32.gmra.mxu0 %v4869
        %v7232 = vpop.f32.mrf.mxu0
        %v7233 = vadd.f32 %v7123, %v7232
        %7234 = vmatmul.f32.gmra.mxu0 %v4870
        %v7235 = vpop.f32.mrf.mxu0
        %v7236 = vadd.f32 %v7126, %v7235
        %7237 = vmatmul.f32.gmra.mxu0 %v4871
        %v7238 = vpop.f32.mrf.mxu0
        %v7239 = vadd.f32 %v7129, %v7238
        %7240 = vmatmul.f32.gmra.mxu0 %v4872
        %v7241 = vpop.f32.mrf.mxu0
        %v7242 = vadd.f32 %v7132, %v7241
        %7243 = vmatmul.f32.gmra.mxu0 %v4873
        %v7244 = vpop.f32.mrf.mxu0
        %v7245 = vadd.f32 %v7135, %v7244
        %7246 = vmatmul.f32.gmra.mxu0 %v4874
        %v7247 = vpop.f32.mrf.mxu0
        %v7248 = vadd.f32 %v7138, %v7247
        %7249 = vmatmul.f32.gmra.mxu0 %v4875
        %v7250 = vpop.f32.mrf.mxu0
        %v7251 = vadd.f32 %v7141, %v7250
        %7252 = vmatmul.f32.gmra.mxu0 %v4876
        %v7253 = vpop.f32.mrf.mxu0
        %v7254 = vadd.f32 %v7144, %v7253
        %7255 = vmatmul.f32.gmra.mxu0 %v4877
        %v7256 = vpop.f32.mrf.mxu0
        %v7257 = vadd.f32 %v7147, %v7256
        %7258 = vmatmul.f32.gmra.mxu0 %v4878
        %v7259 = vpop.f32.mrf.mxu0
        %v7260 = vadd.f32 %v7150, %v7259
        %7261 = vmatmul.f32.gmra.mxu0 %v4879
        %v7262 = vpop.f32.mrf.mxu0
        %v7263 = vadd.f32 %v7153, %v7262
        %7264 = vmatmul.f32.gmra.mxu0 %v4880
        %v7265 = vpop.f32.mrf.mxu0
        %v7266 = vadd.f32 %v7156, %v7265
        %7267 = vmatmul.f32.gmra.mxu0 %v4943
        %v7268 = vpop.f32.mrf.mxu0
        %v7269 = vadd.f32 %v7159, %v7268
        %7270 = vmatmul.f32.gmra.mxu0 %v4944
        %v7271 = vpop.f32.mrf.mxu0
        %v7272 = vadd.f32 %v7162, %v7271
        %7273 = vmatmul.f32.gmra.mxu0 %v5066
        %v7274 = vpop.f32.mrf.mxu0
        %v7275 = vadd.f32 %v7165, %v7274
        %7276 = vmatmul.f32.gmra.mxu0 %v5067
        %v7277 = vpop.f32.mrf.mxu0
        %v7278 = vadd.f32 %v7168, %v7277
        %7279 = vmatmul.f32.gmra.mxu0 %v5068
        %v7280 = vpop.f32.mrf.mxu0
        %v7281 = vadd.f32 %v7171, %v7280
        %7282 = vmatmul.f32.gmra.mxu0 %v5069
        %v7283 = vpop.f32.mrf.mxu0
        %v7284 = vadd.f32 %v7174, %v7283
        %7285 = vmatmul.f32.gmra.mxu0 %v5070
        %v7286 = vpop.f32.mrf.mxu0
        %v7287 = vadd.f32 %v7177, %v7286
        %7288 = vdwg.mxu0
        %7289 = vmatpush.msra.mxu0 %v655
        %7290 = vmatpush.msra.mxu0 %v654
        %7291 = vmatpush.msra.mxu0 %v653
        %7292 = vmatpush.msra.mxu0 %v652
        %7293 = vmatpush.msra.mxu0 %v651
        %7294 = vmatpush.msra.mxu0 %v650
        %7295 = vmatpush.msra.mxu0 %v649
        %7296 = vmatpush.msra.mxu0 %v648
        %7297 = vmatpush.msra.mxu0 %v647
        %7298 = vmatpush.msra.mxu0 %v646
        %7299 = vmatpush.msra.mxu0 %v645
        %7300 = vmatpush.msra.mxu0 %v644
        %7301 = vmatpush.msra.mxu0 %v643
        %7302 = vmatpush.msra.mxu0 %v642
        %7303 = vmatpush.msra.mxu0 %v641
        %7304 = vmatpush.msra.mxu0 %v640
        %7305 = vmatmul.f32.gmra.mxu0 %v4797
        %v7306 = vpop.f32.mrf.mxu0
        %v7307 = vadd.f32 %v7197, %v7306
        %7308 = vmatmul.f32.gmra.mxu0 %v4798
        %v7309 = vpop.f32.mrf.mxu0
        %v7310 = vadd.f32 %v7200, %v7309
        %7311 = vmatmul.f32.gmra.mxu0 %v4799
        %v7312 = vpop.f32.mrf.mxu0
        %v7313 = vadd.f32 %v7203, %v7312
        %7314 = vmatmul.f32.gmra.mxu0 %v4800
        %v7315 = vpop.f32.mrf.mxu0
        %v7316 = vadd.f32 %v7206, %v7315
        %7317 = vmatmul.f32.gmra.mxu0 %v4801
        %v7318 = vpop.f32.mrf.mxu0
        %v7319 = vadd.f32 %v7209, %v7318
        %7320 = vmatmul.f32.gmra.mxu0 %v4802
        %v7321 = vpop.f32.mrf.mxu0
        %v7322 = vadd.f32 %v7212, %v7321
        %7323 = vmatmul.f32.gmra.mxu0 %v4803
        %v7324 = vpop.f32.mrf.mxu0
        %v7325 = vadd.f32 %v7215, %v7324
        %7326 = vmatmul.f32.gmra.mxu0 %v4804
        %v7327 = vpop.f32.mrf.mxu0
        %v7328 = vadd.f32 %v7218, %v7327
        %7329 = vmatmul.f32.gmra.mxu0 %v4805
        %v7330 = vpop.f32.mrf.mxu0
        %v7331 = vadd.f32 %v7221, %v7330
        %7332 = vmatmul.f32.gmra.mxu0 %v4806
        %v7333 = vpop.f32.mrf.mxu0
        %v7334 = vadd.f32 %v7224, %v7333
        %7335 = vmatmul.f32.gmra.mxu0 %v4807
        %v7336 = vpop.f32.mrf.mxu0
        %v7337 = vadd.f32 %v7227, %v7336
        %7338 = vmatmul.f32.gmra.mxu0 %v4808
        %v7339 = vpop.f32.mrf.mxu0
        %v7340 = vadd.f32 %v7230, %v7339
        %7341 = vmatmul.f32.gmra.mxu0 %v4809
        %v7342 = vpop.f32.mrf.mxu0
        %v7343 = vadd.f32 %v7233, %v7342
        %7344 = vmatmul.f32.gmra.mxu0 %v4810
        %v7345 = vpop.f32.mrf.mxu0
        %v7346 = vadd.f32 %v7236, %v7345
        %7347 = vmatmul.f32.gmra.mxu0 %v4811
        %v7348 = vpop.f32.mrf.mxu0
        %v7349 = vadd.f32 %v7239, %v7348
        %7350 = vmatmul.f32.gmra.mxu0 %v4812
        %v7351 = vpop.f32.mrf.mxu0
        %v7352 = vadd.f32 %v7242, %v7351
        %7353 = vmatmul.f32.gmra.mxu0 %v4813
        %v7354 = vpop.f32.mrf.mxu0
        %v7355 = vadd.f32 %v7245, %v7354
        %7356 = vmatmul.f32.gmra.mxu0 %v4814
        %v7357 = vpop.f32.mrf.mxu0
        %v7358 = vadd.f32 %v7248, %v7357
        %7359 = vmatmul.f32.gmra.mxu0 %v4815
        %v7360 = vpop.f32.mrf.mxu0
        %v7361 = vadd.f32 %v7251, %v7360
        %7362 = vmatmul.f32.gmra.mxu0 %v4816
        %v7363 = vpop.f32.mrf.mxu0
        %v7364 = vadd.f32 %v7254, %v7363
        %7365 = vmatmul.f32.gmra.mxu0 %v4817
        %v7366 = vpop.f32.mrf.mxu0
        %v7367 = vadd.f32 %v7257, %v7366
        %7368 = vmatmul.f32.gmra.mxu0 %v4818
        %v7369 = vpop.f32.mrf.mxu0
        %v7370 = vadd.f32 %v7260, %v7369
        %7371 = vmatmul.f32.gmra.mxu0 %v5048
        %v7372 = vpop.f32.mrf.mxu0
        %v7373 = vadd.f32 %v7263, %v7372
        %7374 = vmatmul.f32.gmra.mxu0 %v5049
        %v7375 = vpop.f32.mrf.mxu0
        %v7376 = vadd.f32 %v7266, %v7375
        %7377 = vmatmul.f32.gmra.mxu0 %v5050
        %v7378 = vpop.f32.mrf.mxu0
        %v7379 = vadd.f32 %v7269, %v7378
        %7380 = vmatmul.f32.gmra.mxu0 %v5051
        %v7381 = vpop.f32.mrf.mxu0
        %v7382 = vadd.f32 %v7272, %v7381
        %7383 = vmatmul.f32.gmra.mxu0 %v5052
        %v7384 = vpop.f32.mrf.mxu0
        %v7385 = vadd.f32 %v7275, %v7384
        %7386 = vmatmul.f32.gmra.mxu0 %v5057
        %v7387 = vpop.f32.mrf.mxu0
        %v7388 = vadd.f32 %v7278, %v7387
        %7389 = vmatmul.f32.gmra.mxu0 %v5058
        %v7390 = vpop.f32.mrf.mxu0
        %v7391 = vadd.f32 %v7281, %v7390
        %7392 = vmatmul.f32.gmra.mxu0 %v5071
        %v7393 = vpop.f32.mrf.mxu0
        %v7394 = vadd.f32 %v7284, %v7393
        %7395 = vmatmul.f32.gmra.mxu0 %v5072
        %v7396 = vpop.f32.mrf.mxu0
        %v7397 = vadd.f32 %v7287, %v7396
        %7398 = vdwg.mxu0
        %7399 = vmatpush.msra.mxu0 %v671
        %7400 = vmatpush.msra.mxu0 %v670
        %7401 = vmatpush.msra.mxu0 %v669
        %7402 = vmatpush.msra.mxu0 %v668
        %7403 = vmatpush.msra.mxu0 %v667
        %7404 = vmatpush.msra.mxu0 %v666
        %7405 = vmatpush.msra.mxu0 %v665
        %7406 = vmatpush.msra.mxu0 %v664
        %7407 = vmatpush.msra.mxu0 %v663
        %7408 = vmatpush.msra.mxu0 %v662
        %7409 = vmatpush.msra.mxu0 %v661
        %7410 = vmatpush.msra.mxu0 %v660
        %7411 = vmatpush.msra.mxu0 %v659
        %7412 = vmatpush.msra.mxu0 %v658
        %7413 = vmatpush.msra.mxu0 %v657
        %7414 = vmatpush.msra.mxu0 %v656
        %7415 = vmatmul.f32.gmra.mxu0 %v4828
        %v7416 = vpop.f32.mrf.mxu0
        %v7417 = vadd.f32 %v7307, %v7416
        %7418 = vmatmul.f32.gmra.mxu0 %v4829
        %v7419 = vpop.f32.mrf.mxu0
        %v7420 = vadd.f32 %v7310, %v7419
        %7421 = vmatmul.f32.gmra.mxu0 %v4830
        %v7422 = vpop.f32.mrf.mxu0
        %v7423 = vadd.f32 %v7313, %v7422
        %7424 = vmatmul.f32.gmra.mxu0 %v4831
        %v7425 = vpop.f32.mrf.mxu0
        %v7426 = vadd.f32 %v7316, %v7425
        %7427 = vmatmul.f32.gmra.mxu0 %v4832
        %v7428 = vpop.f32.mrf.mxu0
        %v7429 = vadd.f32 %v7319, %v7428
        %7430 = vmatmul.f32.gmra.mxu0 %v4833
        %v7431 = vpop.f32.mrf.mxu0
        %v7432 = vadd.f32 %v7322, %v7431
        %7433 = vmatmul.f32.gmra.mxu0 %v4834
        %v7434 = vpop.f32.mrf.mxu0
        %v7435 = vadd.f32 %v7325, %v7434
        %7436 = vmatmul.f32.gmra.mxu0 %v4835
        %v7437 = vpop.f32.mrf.mxu0
        %v7438 = vadd.f32 %v7328, %v7437
        %7439 = vmatmul.f32.gmra.mxu0 %v4836
        %v7440 = vpop.f32.mrf.mxu0
        %v7441 = vadd.f32 %v7331, %v7440
        %7442 = vmatmul.f32.gmra.mxu0 %v4837
        %v7443 = vpop.f32.mrf.mxu0
        %v7444 = vadd.f32 %v7334, %v7443
        %7445 = vmatmul.f32.gmra.mxu0 %v4838
        %v7446 = vpop.f32.mrf.mxu0
        %v7447 = vadd.f32 %v7337, %v7446
        %7448 = vmatmul.f32.gmra.mxu0 %v4839
        %v7449 = vpop.f32.mrf.mxu0
        %v7450 = vadd.f32 %v7340, %v7449
        %7451 = vmatmul.f32.gmra.mxu0 %v4840
        %v7452 = vpop.f32.mrf.mxu0
        %v7453 = vadd.f32 %v7343, %v7452
        %7454 = vmatmul.f32.gmra.mxu0 %v4841
        %v7455 = vpop.f32.mrf.mxu0
        %v7456 = vadd.f32 %v7346, %v7455
        %7457 = vmatmul.f32.gmra.mxu0 %v4842
        %v7458 = vpop.f32.mrf.mxu0
        %v7459 = vadd.f32 %v7349, %v7458
        %7460 = vmatmul.f32.gmra.mxu0 %v4843
        %v7461 = vpop.f32.mrf.mxu0
        %v7462 = vadd.f32 %v7352, %v7461
        %7463 = vmatmul.f32.gmra.mxu0 %v4844
        %v7464 = vpop.f32.mrf.mxu0
        %v7465 = vadd.f32 %v7355, %v7464
        %7466 = vmatmul.f32.gmra.mxu0 %v4845
        %v7467 = vpop.f32.mrf.mxu0
        %v7468 = vadd.f32 %v7358, %v7467
        %7469 = vmatmul.f32.gmra.mxu0 %v4846
        %v7470 = vpop.f32.mrf.mxu0
        %v7471 = vadd.f32 %v7361, %v7470
        %7472 = vmatmul.f32.gmra.mxu0 %v4847
        %v7473 = vpop.f32.mrf.mxu0
        %v7474 = vadd.f32 %v7364, %v7473
        %7475 = vmatmul.f32.gmra.mxu0 %v4848
        %v7476 = vpop.f32.mrf.mxu0
        %v7477 = vadd.f32 %v7367, %v7476
        %7478 = vmatmul.f32.gmra.mxu0 %v4849
        %v7479 = vpop.f32.mrf.mxu0
        %v7480 = vadd.f32 %v7370, %v7479
        %7481 = vmatmul.f32.gmra.mxu0 %v5059
        %v7482 = vpop.f32.mrf.mxu0
        %v7483 = vadd.f32 %v7373, %v7482
        %7484 = vmatmul.f32.gmra.mxu0 %v5060
        %v7485 = vpop.f32.mrf.mxu0
        %v7486 = vadd.f32 %v7376, %v7485
        %7487 = vmatmul.f32.gmra.mxu0 %v5061
        %v7488 = vpop.f32.mrf.mxu0
        %v7489 = vadd.f32 %v7379, %v7488
        %7490 = vmatmul.f32.gmra.mxu0 %v5062
        %v7491 = vpop.f32.mrf.mxu0
        %v7492 = vadd.f32 %v7382, %v7491
        %7493 = vmatmul.f32.gmra.mxu0 %v5063
        %v7494 = vpop.f32.mrf.mxu0
        %v7495 = vadd.f32 %v7385, %v7494
        %7496 = vmatmul.f32.gmra.mxu0 %v5064
        %v7497 = vpop.f32.mrf.mxu0
        %v7498 = vadd.f32 %v7388, %v7497
        %7499 = vmatmul.f32.gmra.mxu0 %v5065
        %v7500 = vpop.f32.mrf.mxu0
        %v7501 = vadd.f32 %v7391, %v7500
        %7502 = vmatmul.f32.gmra.mxu0 %v5073
        %v7503 = vpop.f32.mrf.mxu0
        %v7504 = vadd.f32 %v7394, %v7503
        %7505 = vmatmul.f32.gmra.mxu0 %v5074
        %v7506 = vpop.f32.mrf.mxu0
        %v7507 = vadd.f32 %v7397, %v7506
        %7508 = vdwg.mxu0
        %7509 = vmatpush.msra.mxu0 %v687
        %7510 = vmatpush.msra.mxu0 %v686
        %7511 = vmatpush.msra.mxu0 %v685
        %7512 = vmatpush.msra.mxu0 %v684
        %7513 = vmatpush.msra.mxu0 %v683
        %7514 = vmatpush.msra.mxu0 %v682
        %7515 = vmatpush.msra.mxu0 %v681
        %7516 = vmatpush.msra.mxu0 %v680
        %7517 = vmatpush.msra.mxu0 %v679
        %7518 = vmatpush.msra.mxu0 %v678
        %7519 = vmatpush.msra.mxu0 %v677
        %7520 = vmatpush.msra.mxu0 %v676
        %7521 = vmatpush.msra.mxu0 %v675
        %7522 = vmatpush.msra.mxu0 %v674
        %7523 = vmatpush.msra.mxu0 %v673
        %7524 = vmatpush.msra.mxu0 %v672
        %7525 = vmatmul.f32.gmra.mxu0 %v4859
        %v7526 = vpop.f32.mrf.mxu0
        %v7527 = vadd.f32 %v7417, %v7526
        %7528 = vmatmul.f32.gmra.mxu0 %v4860
        %v7529 = vpop.f32.mrf.mxu0
        %v7530 = vadd.f32 %v7420, %v7529
        %7531 = vmatmul.f32.gmra.mxu0 %v4861
        %v7532 = vpop.f32.mrf.mxu0
        %v7533 = vadd.f32 %v7423, %v7532
        %7534 = vmatmul.f32.gmra.mxu0 %v4862
        %v7535 = vpop.f32.mrf.mxu0
        %v7536 = vadd.f32 %v7426, %v7535
        %7537 = vmatmul.f32.gmra.mxu0 %v4863
        %v7538 = vpop.f32.mrf.mxu0
        %v7539 = vadd.f32 %v7429, %v7538
        %7540 = vmatmul.f32.gmra.mxu0 %v4864
        %v7541 = vpop.f32.mrf.mxu0
        %v7542 = vadd.f32 %v7432, %v7541
        %7543 = vmatmul.f32.gmra.mxu0 %v4865
        %v7544 = vpop.f32.mrf.mxu0
        %v7545 = vadd.f32 %v7435, %v7544
        %7546 = vmatmul.f32.gmra.mxu0 %v4866
        %v7547 = vpop.f32.mrf.mxu0
        %v7548 = vadd.f32 %v7438, %v7547
        %7549 = vmatmul.f32.gmra.mxu0 %v4867
        %v7550 = vpop.f32.mrf.mxu0
        %v7551 = vadd.f32 %v7441, %v7550
        %7552 = vmatmul.f32.gmra.mxu0 %v4868
        %v7553 = vpop.f32.mrf.mxu0
        %v7554 = vadd.f32 %v7444, %v7553
        %7555 = vmatmul.f32.gmra.mxu0 %v4869
        %v7556 = vpop.f32.mrf.mxu0
        %v7557 = vadd.f32 %v7447, %v7556
        %7558 = vmatmul.f32.gmra.mxu0 %v4870
        %v7559 = vpop.f32.mrf.mxu0
        %v7560 = vadd.f32 %v7450, %v7559
        %7561 = vmatmul.f32.gmra.mxu0 %v4871
        %v7562 = vpop.f32.mrf.mxu0
        %v7563 = vadd.f32 %v7453, %v7562
        %7564 = vmatmul.f32.gmra.mxu0 %v4872
        %v7565 = vpop.f32.mrf.mxu0
        %v7566 = vadd.f32 %v7456, %v7565
        %7567 = vmatmul.f32.gmra.mxu0 %v4873
        %v7568 = vpop.f32.mrf.mxu0
        %v7569 = vadd.f32 %v7459, %v7568
        %7570 = vmatmul.f32.gmra.mxu0 %v4874
        %v7571 = vpop.f32.mrf.mxu0
        %v7572 = vadd.f32 %v7462, %v7571
        %7573 = vmatmul.f32.gmra.mxu0 %v4875
        %v7574 = vpop.f32.mrf.mxu0
        %v7575 = vadd.f32 %v7465, %v7574
        %7576 = vmatmul.f32.gmra.mxu0 %v4876
        %v7577 = vpop.f32.mrf.mxu0
        %v7578 = vadd.f32 %v7468, %v7577
        %7579 = vmatmul.f32.gmra.mxu0 %v4877
        %v7580 = vpop.f32.mrf.mxu0
        %v7581 = vadd.f32 %v7471, %v7580
        %7582 = vmatmul.f32.gmra.mxu0 %v4878
        %v7583 = vpop.f32.mrf.mxu0
        %v7584 = vadd.f32 %v7474, %v7583
        %7585 = vmatmul.f32.gmra.mxu0 %v4879
        %v7586 = vpop.f32.mrf.mxu0
        %v7587 = vadd.f32 %v7477, %v7586
        %7588 = vmatmul.f32.gmra.mxu0 %v4880
        %v7589 = vpop.f32.mrf.mxu0
        %v7590 = vadd.f32 %v7480, %v7589
        %7591 = vmatmul.f32.gmra.mxu0 %v4943
        %v7592 = vpop.f32.mrf.mxu0
        %v7593 = vadd.f32 %v7483, %v7592
        %7594 = vmatmul.f32.gmra.mxu0 %v4944
        %v7595 = vpop.f32.mrf.mxu0
        %v7596 = vadd.f32 %v7486, %v7595
        %7597 = vmatmul.f32.gmra.mxu0 %v5066
        %v7598 = vpop.f32.mrf.mxu0
        %v7599 = vadd.f32 %v7489, %v7598
        %7600 = vmatmul.f32.gmra.mxu0 %v5067
        %v7601 = vpop.f32.mrf.mxu0
        %v7602 = vadd.f32 %v7492, %v7601
        %7603 = vmatmul.f32.gmra.mxu0 %v5068
        %v7604 = vpop.f32.mrf.mxu0
        %v7605 = vadd.f32 %v7495, %v7604
        %7606 = vmatmul.f32.gmra.mxu0 %v5069
        %v7607 = vpop.f32.mrf.mxu0
        %v7608 = vadd.f32 %v7498, %v7607
        %7609 = vmatmul.f32.gmra.mxu0 %v5070
        %v7610 = vpop.f32.mrf.mxu0
        %v7611 = vadd.f32 %v7501, %v7610
        %7612 = vmatmul.f32.gmra.mxu0 %v5075
        %v7613 = vpop.f32.mrf.mxu0
        %v7614 = vadd.f32 %v7504, %v7613
        %7615 = vmatmul.f32.gmra.mxu0 %v5076
        %v7616 = vpop.f32.mrf.mxu0
        %v7617 = vadd.f32 %v7507, %v7616
        %7618 = vdwg.mxu0
        %7619 = vmatpush.msra.mxu0 %v703
        %7620 = vmatpush.msra.mxu0 %v702
        %7621 = vmatpush.msra.mxu0 %v701
        %7622 = vmatpush.msra.mxu0 %v700
        %7623 = vmatpush.msra.mxu0 %v699
        %7624 = vmatpush.msra.mxu0 %v698
        %7625 = vmatpush.msra.mxu0 %v697
        %7626 = vmatpush.msra.mxu0 %v696
        %7627 = vmatpush.msra.mxu0 %v695
        %7628 = vmatpush.msra.mxu0 %v694
        %7629 = vmatpush.msra.mxu0 %v693
        %7630 = vmatpush.msra.mxu0 %v692
        %7631 = vmatpush.msra.mxu0 %v691
        %7632 = vmatpush.msra.mxu0 %v690
        %7633 = vmatpush.msra.mxu0 %v689
        %7634 = vmatpush.msra.mxu0 %v688
        %7635 = vmatmul.f32.gmra.mxu0 %v4890
        %v7636 = vpop.f32.mrf.mxu0
        %v7637 = vadd.f32 %v7527, %v7636
        %7638 = vmatmul.f32.gmra.mxu0 %v4891
        %v7639 = vpop.f32.mrf.mxu0
        %v7640 = vadd.f32 %v7530, %v7639
        %7641 = vmatmul.f32.gmra.mxu0 %v4892
        %v7642 = vpop.f32.mrf.mxu0
        %v7643 = vadd.f32 %v7533, %v7642
        %7644 = vmatmul.f32.gmra.mxu0 %v4893
        %v7645 = vpop.f32.mrf.mxu0
        %v7646 = vadd.f32 %v7536, %v7645
        %7647 = vmatmul.f32.gmra.mxu0 %v4894
        %v7648 = vpop.f32.mrf.mxu0
        %v7649 = vadd.f32 %v7539, %v7648
        %7650 = vmatmul.f32.gmra.mxu0 %v4895
        %v7651 = vpop.f32.mrf.mxu0
        %v7652 = vadd.f32 %v7542, %v7651
        %7653 = vmatmul.f32.gmra.mxu0 %v4896
        %v7654 = vpop.f32.mrf.mxu0
        %v7655 = vadd.f32 %v7545, %v7654
        %7656 = vmatmul.f32.gmra.mxu0 %v4897
        %v7657 = vpop.f32.mrf.mxu0
        %v7658 = vadd.f32 %v7548, %v7657
        %7659 = vmatmul.f32.gmra.mxu0 %v4898
        %v7660 = vpop.f32.mrf.mxu0
        %v7661 = vadd.f32 %v7551, %v7660
        %7662 = vmatmul.f32.gmra.mxu0 %v4899
        %v7663 = vpop.f32.mrf.mxu0
        %v7664 = vadd.f32 %v7554, %v7663
        %7665 = vmatmul.f32.gmra.mxu0 %v4900
        %v7666 = vpop.f32.mrf.mxu0
        %v7667 = vadd.f32 %v7557, %v7666
        %7668 = vmatmul.f32.gmra.mxu0 %v4901
        %v7669 = vpop.f32.mrf.mxu0
        %v7670 = vadd.f32 %v7560, %v7669
        %7671 = vmatmul.f32.gmra.mxu0 %v4902
        %v7672 = vpop.f32.mrf.mxu0
        %v7673 = vadd.f32 %v7563, %v7672
        %7674 = vmatmul.f32.gmra.mxu0 %v4903
        %v7675 = vpop.f32.mrf.mxu0
        %v7676 = vadd.f32 %v7566, %v7675
        %7677 = vmatmul.f32.gmra.mxu0 %v4904
        %v7678 = vpop.f32.mrf.mxu0
        %v7679 = vadd.f32 %v7569, %v7678
        %7680 = vmatmul.f32.gmra.mxu0 %v4905
        %v7681 = vpop.f32.mrf.mxu0
        %v7682 = vadd.f32 %v7572, %v7681
        %7683 = vmatmul.f32.gmra.mxu0 %v4906
        %v7684 = vpop.f32.mrf.mxu0
        %v7685 = vadd.f32 %v7575, %v7684
        %7686 = vmatmul.f32.gmra.mxu0 %v4907
        %v7687 = vpop.f32.mrf.mxu0
        %v7688 = vadd.f32 %v7578, %v7687
        %7689 = vmatmul.f32.gmra.mxu0 %v4908
        %v7690 = vpop.f32.mrf.mxu0
        %v7691 = vadd.f32 %v7581, %v7690
        %7692 = vmatmul.f32.gmra.mxu0 %v4909
        %v7693 = vpop.f32.mrf.mxu0
        %v7694 = vadd.f32 %v7584, %v7693
        %7695 = vmatmul.f32.gmra.mxu0 %v4910
        %v7696 = vpop.f32.mrf.mxu0
        %v7697 = vadd.f32 %v7587, %v7696
        %7698 = vmatmul.f32.gmra.mxu0 %v4911
        %v7699 = vpop.f32.mrf.mxu0
        %v7700 = vadd.f32 %v7590, %v7699
        %7701 = vmatmul.f32.gmra.mxu0 %v4945
        %v7702 = vpop.f32.mrf.mxu0
        %v7703 = vadd.f32 %v7593, %v7702
        %7704 = vmatmul.f32.gmra.mxu0 %v4946
        %v7705 = vpop.f32.mrf.mxu0
        %v7706 = vadd.f32 %v7596, %v7705
        %7707 = vmatmul.f32.gmra.mxu0 %v5077
        %v7708 = vpop.f32.mrf.mxu0
        %v7709 = vadd.f32 %v7599, %v7708
        %7710 = vmatmul.f32.gmra.mxu0 %v5078
        %v7711 = vpop.f32.mrf.mxu0
        %v7712 = vadd.f32 %v7602, %v7711
        %7713 = vmatmul.f32.gmra.mxu0 %v5079
        %v7714 = vpop.f32.mrf.mxu0
        %v7715 = vadd.f32 %v7605, %v7714
        %7716 = vmatmul.f32.gmra.mxu0 %v5080
        %v7717 = vpop.f32.mrf.mxu0
        %v7718 = vadd.f32 %v7608, %v7717
        %7719 = vmatmul.f32.gmra.mxu0 %v5081
        %v7720 = vpop.f32.mrf.mxu0
        %v7721 = vadd.f32 %v7611, %v7720
        %7722 = vmatmul.f32.gmra.mxu0 %v5082
        %v7723 = vpop.f32.mrf.mxu0
        %v7724 = vadd.f32 %v7614, %v7723
        %7725 = vmatmul.f32.gmra.mxu0 %v5083
        %v7726 = vpop.f32.mrf.mxu0
        %v7727 = vadd.f32 %v7617, %v7726
        %7728 = vdwg.mxu0
        %7729 = vmatpush.msra.mxu0 %v719
        %7730 = vmatpush.msra.mxu0 %v718
        %7731 = vmatpush.msra.mxu0 %v717
        %7732 = vmatpush.msra.mxu0 %v716
        %7733 = vmatpush.msra.mxu0 %v715
        %7734 = vmatpush.msra.mxu0 %v714
        %7735 = vmatpush.msra.mxu0 %v713
        %7736 = vmatpush.msra.mxu0 %v712
        %7737 = vmatpush.msra.mxu0 %v711
        %7738 = vmatpush.msra.mxu0 %v710
        %7739 = vmatpush.msra.mxu0 %v709
        %7740 = vmatpush.msra.mxu0 %v708
        %7741 = vmatpush.msra.mxu0 %v707
        %7742 = vmatpush.msra.mxu0 %v706
        %7743 = vmatpush.msra.mxu0 %v705
        %7744 = vmatpush.msra.mxu0 %v704
        %7745 = vmatmul.f32.gmra.mxu0 %v4921
        %v7746 = vpop.f32.mrf.mxu0
        %v7747 = vadd.f32 %v7637, %v7746
        %7748 = vmatmul.f32.gmra.mxu0 %v4922
        %v7749 = vpop.f32.mrf.mxu0
        %v7750 = vadd.f32 %v7640, %v7749
        %7751 = vmatmul.f32.gmra.mxu0 %v4923
        %v7752 = vpop.f32.mrf.mxu0
        %v7753 = vadd.f32 %v7643, %v7752
        %7754 = vmatmul.f32.gmra.mxu0 %v4924
        %v7755 = vpop.f32.mrf.mxu0
        %v7756 = vadd.f32 %v7646, %v7755
        %7757 = vmatmul.f32.gmra.mxu0 %v4925
        %v7758 = vpop.f32.mrf.mxu0
        %v7759 = vadd.f32 %v7649, %v7758
        %7760 = vmatmul.f32.gmra.mxu0 %v4926
        %v7761 = vpop.f32.mrf.mxu0
        %v7762 = vadd.f32 %v7652, %v7761
        %7763 = vmatmul.f32.gmra.mxu0 %v4927
        %v7764 = vpop.f32.mrf.mxu0
        %v7765 = vadd.f32 %v7655, %v7764
        %7766 = vmatmul.f32.gmra.mxu0 %v4928
        %v7767 = vpop.f32.mrf.mxu0
        %v7768 = vadd.f32 %v7658, %v7767
        %7769 = vmatmul.f32.gmra.mxu0 %v4929
        %v7770 = vpop.f32.mrf.mxu0
        %v7771 = vadd.f32 %v7661, %v7770
        %7772 = vmatmul.f32.gmra.mxu0 %v4930
        %v7773 = vpop.f32.mrf.mxu0
        %v7774 = vadd.f32 %v7664, %v7773
        %7775 = vmatmul.f32.gmra.mxu0 %v4931
        %v7776 = vpop.f32.mrf.mxu0
        %v7777 = vadd.f32 %v7667, %v7776
        %7778 = vmatmul.f32.gmra.mxu0 %v4932
        %v7779 = vpop.f32.mrf.mxu0
        %v7780 = vadd.f32 %v7670, %v7779
        %7781 = vmatmul.f32.gmra.mxu0 %v4933
        %v7782 = vpop.f32.mrf.mxu0
        %v7783 = vadd.f32 %v7673, %v7782
        %7784 = vmatmul.f32.gmra.mxu0 %v4934
        %v7785 = vpop.f32.mrf.mxu0
        %v7786 = vadd.f32 %v7676, %v7785
        %7787 = vmatmul.f32.gmra.mxu0 %v4935
        %v7788 = vpop.f32.mrf.mxu0
        %v7789 = vadd.f32 %v7679, %v7788
        %7790 = vmatmul.f32.gmra.mxu0 %v4936
        %v7791 = vpop.f32.mrf.mxu0
        %v7792 = vadd.f32 %v7682, %v7791
        %7793 = vmatmul.f32.gmra.mxu0 %v4937
        %v7794 = vpop.f32.mrf.mxu0
        %v7795 = vadd.f32 %v7685, %v7794
        %7796 = vmatmul.f32.gmra.mxu0 %v4938
        %v7797 = vpop.f32.mrf.mxu0
        %v7798 = vadd.f32 %v7688, %v7797
        %7799 = vmatmul.f32.gmra.mxu0 %v4939
        %v7800 = vpop.f32.mrf.mxu0
        %v7801 = vadd.f32 %v7691, %v7800
        %7802 = vmatmul.f32.gmra.mxu0 %v4940
        %v7803 = vpop.f32.mrf.mxu0
        %v7804 = vadd.f32 %v7694, %v7803
        %7805 = vmatmul.f32.gmra.mxu0 %v4941
        %v7806 = vpop.f32.mrf.mxu0
        %v7807 = vadd.f32 %v7697, %v7806
        %7808 = vmatmul.f32.gmra.mxu0 %v4942
        %v7809 = vpop.f32.mrf.mxu0
        %v7810 = vadd.f32 %v7700, %v7809
        %7811 = vmatmul.f32.gmra.mxu0 %v4947
        %v7812 = vpop.f32.mrf.mxu0
        %v7813 = vadd.f32 %v7703, %v7812
        %7814 = vmatmul.f32.gmra.mxu0 %v4948
        %v7815 = vpop.f32.mrf.mxu0
        %v7816 = vadd.f32 %v7706, %v7815
        %7817 = vmatmul.f32.gmra.mxu0 %v5011
        %v7818 = vpop.f32.mrf.mxu0
        %v7819 = vadd.f32 %v7709, %v7818
        %7820 = vmatmul.f32.gmra.mxu0 %v5012
        %v7821 = vpop.f32.mrf.mxu0
        %v7822 = vadd.f32 %v7712, %v7821
        %7823 = vmatmul.f32.gmra.mxu0 %v5084
        %v7824 = vpop.f32.mrf.mxu0
        %v7825 = vadd.f32 %v7715, %v7824
        %7826 = vmatmul.f32.gmra.mxu0 %v5085
        %v7827 = vpop.f32.mrf.mxu0
        %v7828 = vadd.f32 %v7718, %v7827
        %7829 = vmatmul.f32.gmra.mxu0 %v5086
        %v7830 = vpop.f32.mrf.mxu0
        %v7831 = vadd.f32 %v7721, %v7830
        %7832 = vmatmul.f32.gmra.mxu0 %v5087
        %v7833 = vpop.f32.mrf.mxu0
        %v7834 = vadd.f32 %v7724, %v7833
        %7835 = vmatmul.f32.gmra.mxu0 %v5088
        %v7836 = vpop.f32.mrf.mxu0
        %v7837 = vadd.f32 %v7727, %v7836
        %7838 = vdwg.mxu0
        %v7839 = vsub.f32 %v4982, %v7747
        %v7840 = vsub.f32 %v4983, %v7750
        %v7841 = vsub.f32 %v4984, %v7753
        %v7842 = vsub.f32 %v4985, %v7756
        %v7843 = vsub.f32 %v4986, %v7759
        %v7844 = vsub.f32 %v4987, %v7762
        %v7845 = vsub.f32 %v4988, %v7765
        %v7846 = vsub.f32 %v4989, %v7768
        %v7847 = vsub.f32 %v4990, %v7771
        %v7848 = vsub.f32 %v4991, %v7774
        %v7849 = vsub.f32 %v4992, %v7777
        %v7850 = vsub.f32 %v4993, %v7780
        %v7851 = vsub.f32 %v4994, %v7783
        %v7852 = vsub.f32 %v4995, %v7786
        %v7853 = vsub.f32 %v4996, %v7789
        %v7854 = vsub.f32 %v4997, %v7792
        %v7855 = vsub.f32 %v4998, %v7795
        %v7856 = vsub.f32 %v4999, %v7798
        %v7857 = vsub.f32 %v5000, %v7801
        %v7858 = vsub.f32 %v5001, %v7804
        %v7859 = vsub.f32 %v5002, %v7807
        %v7860 = vsub.f32 %v5003, %v7810
        %v7861 = vsub.f32 %v5004, %v7813
        %v7862 = vsub.f32 %v5005, %v7816
        %v7863 = vsub.f32 %v5006, %v7819
        %v7864 = vsub.f32 %v5007, %v7822
        %v7865 = vsub.f32 %v5008, %v7825
        %v7866 = vsub.f32 %v5009, %v7828
        %v7867 = vsub.f32 %v5010, %v7831
        %v7868 = vsub.f32 %v5015, %v7834
        %v7869 = vsub.f32 %v5016, %v7837
        %v7870 = vadd.f32 %v7839, %v1046
        %v7871 = vadd.f32 %v7840, %v1049
        %v7872 = vadd.f32 %v7841, %v1052
        %v7873 = vadd.f32 %v7842, %v1055
        %v7874 = vadd.f32 %v7843, %v1058
        %v7875 = vadd.f32 %v7844, %v1061
        %v7876 = vadd.f32 %v7845, %v1064
        %v7877 = vadd.f32 %v7846, %v1067
        %v7878 = vadd.f32 %v7847, %v1070
        %v7879 = vadd.f32 %v7848, %v1073
        %v7880 = vadd.f32 %v7849, %v1076
        %v7881 = vadd.f32 %v7850, %v1079
        %v7882 = vadd.f32 %v7851, %v1082
        %v7883 = vadd.f32 %v7852, %v1085
        %v7884 = vadd.f32 %v7853, %v1088
        %v7885 = vadd.f32 %v7854, %v1091
        %v7886 = vadd.f32 %v7855, %v1094
        %v7887 = vadd.f32 %v7856, %v1097
        %v7888 = vadd.f32 %v7857, %v1100
        %v7889 = vadd.f32 %v7858, %v1103
        %v7890 = vadd.f32 %v7859, %v1106
        %v7891 = vadd.f32 %v7860, %v1109
        %v7892 = vadd.f32 %v7861, %v1112
        %v7893 = vadd.f32 %v7862, %v1115
        %v7894 = vadd.f32 %v7863, %v1118
        %v7895 = vadd.f32 %v7864, %v1121
        %v7896 = vadd.f32 %v7865, %v1124
        %v7897 = vadd.f32 %v7866, %v1127
        %v7898 = vadd.f32 %v7867, %v1130
        %v7899 = vadd.f32 %v7868, %v1133
        %v7900 = vadd.f32 %v7869, %v1136
        %v7901 = vsub.f32 %v7870, %v897
        %v7902 = vsub.f32 %v7871, %v897
        %v7903 = vsub.f32 %v7872, %v897
        %v7904 = vsub.f32 %v7873, %v897
        %v7905 = vsub.f32 %v7874, %v897
        %v7906 = vsub.f32 %v7875, %v897
        %v7907 = vsub.f32 %v7876, %v897
        %v7908 = vsub.f32 %v7877, %v897
        %v7909 = vsub.f32 %v7878, %v897
        %v7910 = vsub.f32 %v7879, %v897
        %v7911 = vsub.f32 %v7880, %v897
        %v7912 = vsub.f32 %v7881, %v897
        %v7913 = vsub.f32 %v7882, %v897
        %v7914 = vsub.f32 %v7883, %v897
        %v7915 = vsub.f32 %v7884, %v897
        %v7916 = vsub.f32 %v7885, %v897
        %v7917 = vsub.f32 %v7886, %v897
        %v7918 = vsub.f32 %v7887, %v897
        %v7919 = vsub.f32 %v7888, %v897
        %v7920 = vsub.f32 %v7889, %v897
        %v7921 = vsub.f32 %v7890, %v897
        %v7922 = vsub.f32 %v7891, %v897
        %v7923 = vsub.f32 %v7892, %v897
        %v7924 = vsub.f32 %v7893, %v897
        %v7925 = vsub.f32 %v7894, %v897
        %v7926 = vsub.f32 %v7895, %v897
        %v7927 = vsub.f32 %v7896, %v897
        %v7928 = vsub.f32 %v7897, %v897
        %v7929 = vsub.f32 %v7898, %v897
        %v7930 = vsub.f32 %v7899, %v897
        %v7931 = vsub.f32 %v7900, %v897
        %v7932 = vmax.f32 %v7901, 0.0
        %v7933 = vmax.f32 %v7902, 0.0
        %v7934 = vmax.f32 %v7903, 0.0
        %v7935 = vmax.f32 %v7904, 0.0
        %v7936 = vmax.f32 %v7905, 0.0
        %v7937 = vmax.f32 %v7906, 0.0
        %v7938 = vmax.f32 %v7907, 0.0
        %v7939 = vmax.f32 %v7908, 0.0
        %v7940 = vmax.f32 %v7909, 0.0
        %v7941 = vmax.f32 %v7910, 0.0
        %v7942 = vmax.f32 %v7911, 0.0
        %v7943 = vmax.f32 %v7912, 0.0
        %v7944 = vmax.f32 %v7913, 0.0
        %v7945 = vmax.f32 %v7914, 0.0
        %v7946 = vmax.f32 %v7915, 0.0
        %v7947 = vmax.f32 %v7916, 0.0
        %v7948 = vmax.f32 %v7917, 0.0
        %v7949 = vmax.f32 %v7918, 0.0
        %v7950 = vmax.f32 %v7919, 0.0
        %v7951 = vmax.f32 %v7920, 0.0
        %v7952 = vmax.f32 %v7921, 0.0
        %v7953 = vmax.f32 %v7922, 0.0
        %v7954 = vmax.f32 %v7923, 0.0
        %v7955 = vmax.f32 %v7924, 0.0
        %v7956 = vmax.f32 %v7925, 0.0
        %v7957 = vmax.f32 %v7926, 0.0
        %v7958 = vmax.f32 %v7927, 0.0
        %v7959 = vmax.f32 %v7928, 0.0
        %v7960 = vmax.f32 %v7929, 0.0
        %v7961 = vmax.f32 %v7930, 0.0
        %v7962 = vmax.f32 %v7931, 0.0
        %v7963 = vsub.f32 0.0, %v7870
        %v7964 = vsub.f32 0.0, %v7871
        %v7965 = vsub.f32 0.0, %v7872
        %v7966 = vsub.f32 0.0, %v7873
        %v7967 = vsub.f32 0.0, %v7874
        %v7968 = vsub.f32 0.0, %v7875
        %v7969 = vsub.f32 0.0, %v7876
        %v7970 = vsub.f32 0.0, %v7877
        %v7971 = vsub.f32 0.0, %v7878
        %v7972 = vsub.f32 0.0, %v7879
        %v7973 = vsub.f32 0.0, %v7880
        %v7974 = vsub.f32 0.0, %v7881
        %v7975 = vsub.f32 0.0, %v7882
        %v7976 = vsub.f32 0.0, %v7883
        %v7977 = vsub.f32 0.0, %v7884
        %v7978 = vsub.f32 0.0, %v7885
        %v7979 = vsub.f32 0.0, %v7886
        %v7980 = vsub.f32 0.0, %v7887
        %v7981 = vsub.f32 0.0, %v7888
        %v7982 = vsub.f32 0.0, %v7889
        %v7983 = vsub.f32 0.0, %v7890
        %v7984 = vsub.f32 0.0, %v7891
        %v7985 = vsub.f32 0.0, %v7892
        %v7986 = vsub.f32 0.0, %v7893
        %v7987 = vsub.f32 0.0, %v7894
        %v7988 = vsub.f32 0.0, %v7895
        %v7989 = vsub.f32 0.0, %v7896
        %v7990 = vsub.f32 0.0, %v7897
        %v7991 = vsub.f32 0.0, %v7898
        %v7992 = vsub.f32 0.0, %v7899
        %v7993 = vsub.f32 0.0, %v7900
        %v7994 = vsub.f32 %v7963, %v897
        %v7995 = vsub.f32 %v7964, %v897
        %v7996 = vsub.f32 %v7965, %v897
        %v7997 = vsub.f32 %v7966, %v897
        %v7998 = vsub.f32 %v7967, %v897
        %v7999 = vsub.f32 %v7968, %v897
        %v8000 = vsub.f32 %v7969, %v897
        %v8001 = vsub.f32 %v7970, %v897
        %v8002 = vsub.f32 %v7971, %v897
        %v8003 = vsub.f32 %v7972, %v897
        %v8004 = vsub.f32 %v7973, %v897
        %v8005 = vsub.f32 %v7974, %v897
        %v8006 = vsub.f32 %v7975, %v897
        %v8007 = vsub.f32 %v7976, %v897
        %v8008 = vsub.f32 %v7977, %v897
        %v8009 = vsub.f32 %v7978, %v897
        %v8010 = vsub.f32 %v7979, %v897
        %v8011 = vsub.f32 %v7980, %v897
        %v8012 = vsub.f32 %v7981, %v897
        %v8013 = vsub.f32 %v7982, %v897
        %v8014 = vsub.f32 %v7983, %v897
        %v8015 = vsub.f32 %v7984, %v897
        %v8016 = vsub.f32 %v7985, %v897
        %v8017 = vsub.f32 %v7986, %v897
        %v8018 = vsub.f32 %v7987, %v897
        %v8019 = vsub.f32 %v7988, %v897
        %v8020 = vsub.f32 %v7989, %v897
        %v8021 = vsub.f32 %v7990, %v897
        %v8022 = vsub.f32 %v7991, %v897
        %v8023 = vsub.f32 %v7992, %v897
        %v8024 = vsub.f32 %v7993, %v897
        %v8025 = vmax.f32 %v7994, 0.0
        %v8026 = vmax.f32 %v7995, 0.0
        %v8027 = vmax.f32 %v7996, 0.0
        %v8028 = vmax.f32 %v7997, 0.0
        %v8029 = vmax.f32 %v7998, 0.0
        %v8030 = vmax.f32 %v7999, 0.0
        %v8031 = vmax.f32 %v8000, 0.0
        %v8032 = vmax.f32 %v8001, 0.0
        %v8033 = vmax.f32 %v8002, 0.0
        %v8034 = vmax.f32 %v8003, 0.0
        %v8035 = vmax.f32 %v8004, 0.0
        %v8036 = vmax.f32 %v8005, 0.0
        %v8037 = vmax.f32 %v8006, 0.0
        %v8038 = vmax.f32 %v8007, 0.0
        %v8039 = vmax.f32 %v8008, 0.0
        %v8040 = vmax.f32 %v8009, 0.0
        %v8041 = vmax.f32 %v8010, 0.0
        %v8042 = vmax.f32 %v8011, 0.0
        %v8043 = vmax.f32 %v8012, 0.0
        %v8044 = vmax.f32 %v8013, 0.0
        %v8045 = vmax.f32 %v8014, 0.0
        %v8046 = vmax.f32 %v8015, 0.0
        %v8047 = vmax.f32 %v8016, 0.0
        %v8048 = vmax.f32 %v8017, 0.0
        %v8049 = vmax.f32 %v8018, 0.0
        %v8050 = vmax.f32 %v8019, 0.0
        %v8051 = vmax.f32 %v8020, 0.0
        %v8052 = vmax.f32 %v8021, 0.0
        %v8053 = vmax.f32 %v8022, 0.0
        %v8054 = vmax.f32 %v8023, 0.0
        %v8055 = vmax.f32 %v8024, 0.0
        %v8056 = vsub.f32 %v7932, %v8025
        %v8057 = vsub.f32 %v7933, %v8026
        %v8058 = vsub.f32 %v7934, %v8027
        %v8059 = vsub.f32 %v7935, %v8028
        %v8060 = vsub.f32 %v7936, %v8029
        %v8061 = vsub.f32 %v7937, %v8030
        %v8062 = vsub.f32 %v7938, %v8031
        %v8063 = vsub.f32 %v7939, %v8032
        %v8064 = vsub.f32 %v7940, %v8033
        %v8065 = vsub.f32 %v7941, %v8034
        %v8066 = vsub.f32 %v7942, %v8035
        %v8067 = vsub.f32 %v7943, %v8036
        %v8068 = vsub.f32 %v7944, %v8037
        %v8069 = vsub.f32 %v7945, %v8038
        %v8070 = vsub.f32 %v7946, %v8039
        %v8071 = vsub.f32 %v7947, %v8040
        %v8072 = vsub.f32 %v7948, %v8041
        %v8073 = vsub.f32 %v7949, %v8042
        %v8074 = vsub.f32 %v7950, %v8043
        %v8075 = vsub.f32 %v7951, %v8044
        %v8076 = vsub.f32 %v7952, %v8045
        %v8077 = vsub.f32 %v7953, %v8046
        %v8078 = vsub.f32 %v7954, %v8047
        %v8079 = vsub.f32 %v7955, %v8048
        %v8080 = vsub.f32 %v7956, %v8049
        %v8081 = vsub.f32 %v7957, %v8050
        %v8082 = vsub.f32 %v7958, %v8051
        %v8083 = vsub.f32 %v7959, %v8052
        %v8084 = vsub.f32 %v7960, %v8053
        %v8085 = vsub.f32 %v7961, %v8054
        %v8086 = vsub.f32 %v7962, %v8055
        %v8087 = vmul.f32 %v8056, %v864
        %v8088 = vmul.f32 %v8057, %v865
        %v8089 = vmul.f32 %v8058, %v866
        %v8090 = vmul.f32 %v8059, %v867
        %v8091 = vmul.f32 %v8060, %v868
        %v8092 = vmul.f32 %v8061, %v869
        %v8093 = vmul.f32 %v8062, %v870
        %v8094 = vmul.f32 %v8063, %v871
        %v8095 = vmul.f32 %v8064, %v872
        %v8096 = vmul.f32 %v8065, %v873
        %v8097 = vmul.f32 %v8066, %v874
        %v8098 = vmul.f32 %v8067, %v875
        %v8099 = vmul.f32 %v8068, %v876
        %v8100 = vmul.f32 %v8069, %v877
        %v8101 = vmul.f32 %v8070, %v878
        %v8102 = vmul.f32 %v8071, %v879
        %v8103 = vmul.f32 %v8072, %v880
        %v8104 = vmul.f32 %v8073, %v881
        %v8105 = vmul.f32 %v8074, %v882
        %v8106 = vmul.f32 %v8075, %v883
        %v8107 = vmul.f32 %v8076, %v884
        %v8108 = vmul.f32 %v8077, %v885
        %v8109 = vmul.f32 %v8078, %v886
        %v8110 = vmul.f32 %v8079, %v887
        %v8111 = vmul.f32 %v8080, %v888
        %v8112 = vmul.f32 %v8081, %v889
        %v8113 = vmul.f32 %v8082, %v890
        %v8114 = vmul.f32 %v8083, %v891
        %v8115 = vmul.f32 %v8084, %v892
        %v8116 = vmul.f32 %v8085, %v893
        %v8117 = vmul.f32 %v8086, %v894
        %8118 = vst [vmem:[#allocation2 + $0x26] sm:$0xff] %v8087
        %8119 = vst [vmem:[#allocation2 + $0x2e] sm:$0xff] %v8088
        %8120 = vst [vmem:[#allocation2 + $0x36] sm:$0xff] %v8089
        %8121 = vst [vmem:[#allocation2 + $0x3e] sm:$0xff] %v8090
        %8122 = vst [vmem:[#allocation2 + $0x46] sm:$0xff] %v8091
        %8123 = vst [vmem:[#allocation2 + $0x4e] sm:$0xff] %v8092
        %8124 = vst [vmem:[#allocation2 + $0x56] sm:$0xff] %v8093
        %8125 = vst [vmem:[#allocation2 + $0x5e] sm:$0xff] %v8094
        %8126 = vst [vmem:[#allocation2 + $0x66] sm:$0xff] %v8095
        %8127 = vst [vmem:[#allocation2 + $0x6e] sm:$0xff] %v8096
        %8128 = vst [vmem:[#allocation2 + $0x76] sm:$0xff] %v8097
        %8129 = vst [vmem:[#allocation2 + $0x7e] sm:$0xff] %v8098
        %8130 = vst [vmem:[#allocation2 + $0x86] sm:$0xff] %v8099
        %8131 = vst [vmem:[#allocation2 + $0x8e] sm:$0xff] %v8100
        %8132 = vst [vmem:[#allocation2 + $0x96] sm:$0xff] %v8101
        %8133 = vst [vmem:[#allocation2 + $0x9e] sm:$0xff] %v8102
        %8134 = vst [vmem:[#allocation2 + $0xa6] sm:$0xff] %v8103
        %8135 = vst [vmem:[#allocation2 + $0xae] sm:$0xff] %v8104
        %8136 = vst [vmem:[#allocation2 + $0xb6] sm:$0xff] %v8105
        %8137 = vst [vmem:[#allocation2 + $0xbe] sm:$0xff] %v8106
        %8138 = vst [vmem:[#allocation2 + $0xc6] sm:$0xff] %v8107
        %8139 = vst [vmem:[#allocation2 + $0xce] sm:$0xff] %v8108
        %8140 = vst [vmem:[#allocation2 + $0xd6] sm:$0xff] %v8109
        %8141 = vst [vmem:[#allocation2 + $0xde] sm:$0xff] %v8110
        %8142 = vst [vmem:[#allocation2 + $0xe6] sm:$0xff] %v8111
        %8143 = vst [vmem:[#allocation2 + $0xee] sm:$0xff] %v8112
        %8144 = vst [vmem:[#allocation2 + $0xf6] sm:$0xff] %v8113
        %8145 = vst [vmem:[#allocation2 + $0xfe] sm:$0xff] %v8114
        %8146 = vst [vmem:[#allocation2 + $0x106] sm:$0xff] %v8115
        %8147 = vst [vmem:[#allocation2 + $0x10e] sm:$0xff] %v8116
        %8148 = vst [vmem:[#allocation2 + $0x116] sm:$0xff] %v8117
        %v8149 = vld [vmem:[#allocation2 + $0x26] sm:$0xff]
        %v8150 = vld [vmem:[#allocation2 + $0x2e] sm:$0xff]
        %v8151 = vld [vmem:[#allocation2 + $0x36] sm:$0xff]
        %v8152 = vld [vmem:[#allocation2 + $0x3e] sm:$0xff]
        %v8153 = vld [vmem:[#allocation2 + $0x46] sm:$0xff]
        %v8154 = vld [vmem:[#allocation2 + $0x4e] sm:$0xff]
        %v8155 = vld [vmem:[#allocation2 + $0x56] sm:$0xff]
        %v8156 = vld [vmem:[#allocation2 + $0x5e] sm:$0xff]
        %v8157 = vld [vmem:[#allocation2 + $0x66] sm:$0xff]
        %v8158 = vld [vmem:[#allocation2 + $0x6e] sm:$0xff]
        %v8159 = vld [vmem:[#allocation2 + $0x76] sm:$0xff]
        %v8160 = vld [vmem:[#allocation2 + $0x7e] sm:$0xff]
        %v8161 = vld [vmem:[#allocation2 + $0x86] sm:$0xff]
        %v8162 = vld [vmem:[#allocation2 + $0x8e] sm:$0xff]
        %v8163 = vld [vmem:[#allocation2 + $0x96] sm:$0xff]
        %v8164 = vld [vmem:[#allocation2 + $0x9e] sm:$0xff]
        %v8165 = vld [vmem:[#allocation2 + $0xa6] sm:$0xff]
        %v8166 = vld [vmem:[#allocation2 + $0xae] sm:$0xff]
        %v8167 = vld [vmem:[#allocation2 + $0xb6] sm:$0xff]
        %v8168 = vld [vmem:[#allocation2 + $0xbe] sm:$0xff]
        %v8169 = vld [vmem:[#allocation2 + $0xc6] sm:$0xff]
        %v8170 = vld [vmem:[#allocation2 + $0xce] sm:$0xff]
        %v8171 = vld [vmem:[#allocation2 + $0xd6] sm:$0xff]
        %v8172 = vld [vmem:[#allocation2 + $0xde] sm:$0xff]
        %v8173 = vld [vmem:[#allocation2 + $0xe6] sm:$0xff]
        %v8174 = vld [vmem:[#allocation2 + $0xee] sm:$0xff]
        %v8175 = vld [vmem:[#allocation2 + $0xf6] sm:$0xff]
        %v8176 = vld [vmem:[#allocation2 + $0xfe] sm:$0xff]
        %v8177 = vld [vmem:[#allocation2 + $0x106] sm:$0xff]
        %v8178 = vld [vmem:[#allocation2 + $0x10e] sm:$0xff]
        %v8179 = vld [vmem:[#allocation2 + $0x116] sm:$0xff]
        %v8180 = vld [vmem:[#allocation2 + $0x11e] sm:$0xff]
        %v8181 = vld [vmem:[#allocation2 + $0x126] sm:$0xff]
        %v8182 = vld [vmem:[#allocation2 + $0x12e] sm:$0xff]
        %v8183 = vld [vmem:[#allocation2 + $0x136] sm:$0xff]
        %v8184 = vld [vmem:[#allocation2 + $0x13e] sm:$0xff]
        %v8185 = vld [vmem:[#allocation2 + $0x25] sm:$0xff]
        %v8186 = vld [vmem:[#allocation2 + $0x2d] sm:$0xff]
        %v8187 = vld [vmem:[#allocation2 + $0x35] sm:$0xff]
        %v8188 = vld [vmem:[#allocation2 + $0x3d] sm:$0xff]
        %v8189 = vld [vmem:[#allocation2 + $0x45] sm:$0xff]
        %v8190 = vld [vmem:[#allocation2 + $0x4d] sm:$0xff]
        %v8191 = vld [vmem:[#allocation2 + $0x55] sm:$0xff]
        %v8192 = vld [vmem:[#allocation2 + $0x5d] sm:$0xff]
        %v8193 = vld [vmem:[#allocation2 + $0x65] sm:$0xff]
        %v8194 = vld [vmem:[#allocation2 + $0x6d] sm:$0xff]
        %v8195 = vld [vmem:[#allocation2 + $0x75] sm:$0xff]
        %v8196 = vld [vmem:[#allocation2 + $0x7d] sm:$0xff]
        %v8197 = vld [vmem:[#allocation2 + $0x85] sm:$0xff]
        %v8198 = vld [vmem:[#allocation2 + $0x8d] sm:$0xff]
        %v8199 = vld [vmem:[#allocation2 + $0x95] sm:$0xff]
        %v8200 = vld [vmem:[#allocation2 + $0x9d] sm:$0xff]
        %v8201 = vld [vmem:[#allocation2 + $0xa5] sm:$0xff]
        %v8202 = vld [vmem:[#allocation2 + $0xad] sm:$0xff]
        %v8203 = vld [vmem:[#allocation2 + $0xb5] sm:$0xff]
        %v8204 = vld [vmem:[#allocation2 + $0xbd] sm:$0xff]
        %v8205 = vld [vmem:[#allocation2 + $0xc5] sm:$0xff]
        %v8206 = vld [vmem:[#allocation2 + $0xcd] sm:$0xff]
        %v8207 = vld [vmem:[#allocation2 + $0xd5] sm:$0xff]
        %v8208 = vld [vmem:[#allocation2 + $0xdd] sm:$0xff]
        %v8209 = vld [vmem:[#allocation2 + $0xe5] sm:$0xff]
        %v8210 = vld [vmem:[#allocation2 + $0xed] sm:$0xff]
        %v8211 = vld [vmem:[#allocation2 + $0xf5] sm:$0xff]
        %v8212 = vld [vmem:[#allocation2 + $0xfd] sm:$0xff]
        %v8213 = vld [vmem:[#allocation2 + $0x105] sm:$0xff]
        %v8214 = vld [vmem:[#allocation2 + $0x10d] sm:$0xff]
        %v8215 = vld [vmem:[#allocation2 + $0x115] sm:$0xff]
        %v8216 = vld [vmem:[#allocation2 + $0x11d] sm:$0xff]
        %v8217 = vld [vmem:[#allocation2 + $0x125] sm:$0xff]
        %v8218 = vld [vmem:[#allocation2 + $0x12d] sm:$0xff]
        %v8219 = vld [vmem:[#allocation2 + $0x135] sm:$0xff]
        %v8220 = vld [vmem:[#allocation2 + $0x13d] sm:$0xff]
        %v8221 = vld [vmem:[#allocation2 + $0x24] sm:$0xff]
        %v8222 = vld [vmem:[#allocation2 + $0x2c] sm:$0xff]
        %v8223 = vld [vmem:[#allocation2 + $0x34] sm:$0xff]
        %v8224 = vld [vmem:[#allocation2 + $0x3c] sm:$0xff]
        %v8225 = vld [vmem:[#allocation2 + $0x44] sm:$0xff]
        %v8226 = vld [vmem:[#allocation2 + $0x4c] sm:$0xff]
        %v8227 = vld [vmem:[#allocation2 + $0x54] sm:$0xff]
        %v8228 = vld [vmem:[#allocation2 + $0x5c] sm:$0xff]
        %v8229 = vld [vmem:[#allocation2 + $0x64] sm:$0xff]
        %v8230 = vld [vmem:[#allocation2 + $0x6c] sm:$0xff]
        %v8231 = vld [vmem:[#allocation2 + $0x74] sm:$0xff]
        %v8232 = vld [vmem:[#allocation2 + $0x7c] sm:$0xff]
        %v8233 = vld [vmem:[#allocation2 + $0x84] sm:$0xff]
        %v8234 = vld [vmem:[#allocation2 + $0x8c] sm:$0xff]
        %v8235 = vld [vmem:[#allocation2 + $0x94] sm:$0xff]
        %v8236 = vld [vmem:[#allocation2 + $0x9c] sm:$0xff]
        %v8237 = vld [vmem:[#allocation2 + $0xa4] sm:$0xff]
        %v8238 = vld [vmem:[#allocation2 + $0xac] sm:$0xff]
        %v8239 = vld [vmem:[#allocation2 + $0xb4] sm:$0xff]
        %v8240 = vld [vmem:[#allocation2 + $0xbc] sm:$0xff]
        %v8241 = vld [vmem:[#allocation2 + $0xc4] sm:$0xff]
        %v8242 = vld [vmem:[#allocation2 + $0xcc] sm:$0xff]
        %v8243 = vld [vmem:[#allocation2 + $0xd4] sm:$0xff]
        %v8244 = vld [vmem:[#allocation2 + $0xdc] sm:$0xff]
        %v8245 = vld [vmem:[#allocation2 + $0xe4] sm:$0xff]
        %v8246 = vld [vmem:[#allocation2 + $0xec] sm:$0xff]
        %v8247 = vld [vmem:[#allocation2 + $0xf4] sm:$0xff]
        %v8248 = vld [vmem:[#allocation2 + $0xfc] sm:$0xff]
        %v8249 = vld [vmem:[#allocation2 + $0x104] sm:$0xff]
        %v8250 = vld [vmem:[#allocation2 + $0x10c] sm:$0xff]
        %v8251 = vld [vmem:[#allocation2 + $0x114] sm:$0xff]
        %v8252 = vld [vmem:[#allocation2 + $0x11c] sm:$0xff]
        %v8253 = vld [vmem:[#allocation2 + $0x124] sm:$0xff]
        %v8254 = vld [vmem:[#allocation2 + $0x12c] sm:$0xff]
        %v8255 = vld [vmem:[#allocation2 + $0x134] sm:$0xff]
        %v8256 = vld [vmem:[#allocation2 + $0x13c] sm:$0xff]
        %v8257 = vld [vmem:[#allocation2 + $0x14] sm:$0xff]
        %v8258 = vld [vmem:[#allocation2 + $0x1c] sm:$0xff]
        %v8259 = vld [vmem:[#allocation2 + $0x13] sm:$0xff]
        %v8260 = vld [vmem:[#allocation2 + $0x1b] sm:$0xff]
        %v8261 = vld [vmem:[#allocation2 + $0x23] sm:$0xff]
        %v8262 = vld [vmem:[#allocation2 + $0x2b] sm:$0xff]
        %v8263 = vld [vmem:[#allocation2 + $0x33] sm:$0xff]
        %v8264 = vld [vmem:[#allocation2 + $0x3b] sm:$0xff]
        %v8265 = vld [vmem:[#allocation2 + $0x43] sm:$0xff]
        %v8266 = vld [vmem:[#allocation2 + $0x4b] sm:$0xff]
        %v8267 = vld [vmem:[#allocation2 + $0x53] sm:$0xff]
        %v8268 = vld [vmem:[#allocation2 + $0x5b] sm:$0xff]
        %v8269 = vld [vmem:[#allocation2 + $0x63] sm:$0xff]
        %v8270 = vld [vmem:[#allocation2 + $0x6b] sm:$0xff]
        %v8271 = vld [vmem:[#allocation2 + $0x73] sm:$0xff]
        %v8272 = vld [vmem:[#allocation2 + $0x7b] sm:$0xff]
        %v8273 = vld [vmem:[#allocation2 + $0x83] sm:$0xff]
        %v8274 = vld [vmem:[#allocation2 + $0x8b] sm:$0xff]
        %v8275 = vld [vmem:[#allocation2 + $0x93] sm:$0xff]
        %v8276 = vld [vmem:[#allocation2 + $0x9b] sm:$0xff]
        %v8277 = vld [vmem:[#allocation2 + $0xa3] sm:$0xff]
        %v8278 = vld [vmem:[#allocation2 + $0xab] sm:$0xff]
        %v8279 = vld [vmem:[#allocation2 + $0xb3] sm:$0xff]
        %v8280 = vld [vmem:[#allocation2 + $0xbb] sm:$0xff]
        %v8281 = vld [vmem:[#allocation2 + $0xc3] sm:$0xff]
        %v8282 = vld [vmem:[#allocation2 + $0xcb] sm:$0xff]
        %v8283 = vld [vmem:[#allocation2 + $0xd3] sm:$0xff]
        %v8284 = vld [vmem:[#allocation2 + $0xdb] sm:$0xff]
        %v8285 = vld [vmem:[#allocation2 + $0xe3] sm:$0xff]
        %v8286 = vld [vmem:[#allocation2 + $0xeb] sm:$0xff]
        %v8287 = vld [vmem:[#allocation2 + $0xf3] sm:$0xff]
        %v8288 = vld [vmem:[#allocation2 + $0xfb] sm:$0xff]
        %v8289 = vld [vmem:[#allocation2 + $0x103] sm:$0xff]
        %v8290 = vld [vmem:[#allocation2 + $0x10b] sm:$0xff]
        %v8291 = vld [vmem:[#allocation2 + $0x113] sm:$0xff]
        %v8292 = vld [vmem:[#allocation2 + $0x11b] sm:$0xff]
        %v8293 = vld [vmem:[#allocation2 + $0x123] sm:$0xff]
        %v8294 = vld [vmem:[#allocation2 + $0x12b] sm:$0xff]
        %v8295 = vld [vmem:[#allocation2 + $0x12] sm:$0xff]
        %v8296 = vld [vmem:[#allocation2 + $0x1a] sm:$0xff]
        %v8297 = vld [vmem:[#allocation2 + $0x22] sm:$0xff]
        %v8298 = vld [vmem:[#allocation2 + $0x2a] sm:$0xff]
        %v8299 = vld [vmem:[#allocation2 + $0x32] sm:$0xff]
        %v8300 = vld [vmem:[#allocation2 + $0x3a] sm:$0xff]
        %v8301 = vld [vmem:[#allocation2 + $0x42] sm:$0xff]
        %v8302 = vld [vmem:[#allocation2 + $0x4a] sm:$0xff]
        %v8303 = vld [vmem:[#allocation2 + $0x52] sm:$0xff]
        %v8304 = vld [vmem:[#allocation2 + $0x5a] sm:$0xff]
        %v8305 = vld [vmem:[#allocation2 + $0x62] sm:$0xff]
        %v8306 = vld [vmem:[#allocation2 + $0x6a] sm:$0xff]
        %v8307 = vld [vmem:[#allocation2 + $0x72] sm:$0xff]
        %v8308 = vld [vmem:[#allocation2 + $0x7a] sm:$0xff]
        %v8309 = vld [vmem:[#allocation2 + $0x82] sm:$0xff]
        %v8310 = vld [vmem:[#allocation2 + $0x8a] sm:$0xff]
        %v8311 = vld [vmem:[#allocation2 + $0x92] sm:$0xff]
        %v8312 = vld [vmem:[#allocation2 + $0x9a] sm:$0xff]
        %v8313 = vld [vmem:[#allocation2 + $0xa2] sm:$0xff]
        %v8314 = vld [vmem:[#allocation2 + $0xaa] sm:$0xff]
        %v8315 = vld [vmem:[#allocation2 + $0xb2] sm:$0xff]
        %v8316 = vld [vmem:[#allocation2 + $0xba] sm:$0xff]
        %v8317 = vld [vmem:[#allocation2 + $0xc2] sm:$0xff]
        %v8318 = vld [vmem:[#allocation2 + $0xca] sm:$0xff]
        %v8319 = vld [vmem:[#allocation2 + $0xd2] sm:$0xff]
        %v8320 = vld [vmem:[#allocation2 + $0xda] sm:$0xff]
        %v8321 = vld [vmem:[#allocation2 + $0xe2] sm:$0xff]
        %v8322 = vld [vmem:[#allocation2 + $0xea] sm:$0xff]
        %v8323 = vld [vmem:[#allocation2 + $0xf2] sm:$0xff]
        %v8324 = vld [vmem:[#allocation2 + $0xfa] sm:$0xff]
        %v8325 = vld [vmem:[#allocation2 + $0x102] sm:$0xff]
        %v8326 = vld [vmem:[#allocation2 + $0x10a] sm:$0xff]
        %v8327 = vld [vmem:[#allocation2 + $0x112] sm:$0xff]
        %v8328 = vld [vmem:[#allocation2 + $0x11a] sm:$0xff]
        %v8329 = vld [vmem:[#allocation2 + $0x122] sm:$0xff]
        %v8330 = vld [vmem:[#allocation2 + $0x12a] sm:$0xff]
        %v8331 = vld [vmem:[#allocation2 + $0x2] sm:$0xff]
        %v8332 = vld [vmem:[#allocation2 + $0xa] sm:$0xff]
        %v8333 = vld [vmem:[#allocation2 + $0x1] sm:$0xff]
        %v8334 = vld [vmem:[#allocation2 + $0x9] sm:$0xff]
        %v8335 = vld [vmem:[#allocation2 + $0x11] sm:$0xff]
        %v8336 = vld [vmem:[#allocation2 + $0x19] sm:$0xff]
        %v8337 = vld [vmem:[#allocation2 + $0x21] sm:$0xff]
        %v8338 = vld [vmem:[#allocation2 + $0x29] sm:$0xff]
        %v8339 = vld [vmem:[#allocation2 + $0x31] sm:$0xff]
        %v8340 = vld [vmem:[#allocation2 + $0x39] sm:$0xff]
        %v8341 = vld [vmem:[#allocation2 + $0x41] sm:$0xff]
        %v8342 = vld [vmem:[#allocation2 + $0x49] sm:$0xff]
        %v8343 = vld [vmem:[#allocation2 + $0x51] sm:$0xff]
        %v8344 = vld [vmem:[#allocation2 + $0x59] sm:$0xff]
        %v8345 = vld [vmem:[#allocation2 + $0x61] sm:$0xff]
        %v8346 = vld [vmem:[#allocation2 + $0x69] sm:$0xff]
        %v8347 = vld [vmem:[#allocation2 + $0x71] sm:$0xff]
        %v8348 = vld [vmem:[#allocation2 + $0x79] sm:$0xff]
        %v8349 = vld [vmem:[#allocation2 + $0x81] sm:$0xff]
        %v8350 = vld [vmem:[#allocation2 + $0x89] sm:$0xff]
        %v8351 = vld [vmem:[#allocation2 + $0x91] sm:$0xff]
        %v8352 = vld [vmem:[#allocation2 + $0x99] sm:$0xff]
        %v8353 = vld [vmem:[#allocation2 + $0xa1] sm:$0xff]
        %v8354 = vld [vmem:[#allocation2 + $0xa9] sm:$0xff]
        %v8355 = vld [vmem:[#allocation2 + $0xb1] sm:$0xff]
        %v8356 = vld [vmem:[#allocation2 + $0xb9] sm:$0xff]
        %v8357 = vld [vmem:[#allocation2 + $0xc1] sm:$0xff]
        %v8358 = vld [vmem:[#allocation2 + $0xc9] sm:$0xff]
        %v8359 = vld [vmem:[#allocation2 + $0xd1] sm:$0xff]
        %v8360 = vld [vmem:[#allocation2 + $0xd9] sm:$0xff]
        %v8361 = vld [vmem:[#allocation2 + $0xe1] sm:$0xff]
        %v8362 = vld [vmem:[#allocation2 + $0xe9] sm:$0xff]
        %v8363 = vld [vmem:[#allocation2 + $0xf1] sm:$0xff]
        %v8364 = vld [vmem:[#allocation2 + $0xf9] sm:$0xff]
        %v8365 = vld [vmem:[#allocation2 + $0x101] sm:$0xff]
        %v8366 = vld [vmem:[#allocation2 + $0x109] sm:$0xff]
        %v8367 = vld [vmem:[#allocation2 + $0x111] sm:$0xff]
        %v8368 = vld [vmem:[#allocation2 + $0x119] sm:$0xff]
        %v8369 = vld [vmem:[#allocation2] sm:$0xff]
        %v8370 = vld [vmem:[#allocation2 + $0x8] sm:$0xff]
        %v8371 = vld [vmem:[#allocation2 + $0x10] sm:$0xff]
        %v8372 = vld [vmem:[#allocation2 + $0x18] sm:$0xff]
        %v8373 = vld [vmem:[#allocation2 + $0x20] sm:$0xff]
        %v8374 = vld [vmem:[#allocation2 + $0x28] sm:$0xff]
        %v8375 = vld [vmem:[#allocation2 + $0x30] sm:$0xff]
        %v8376 = vld [vmem:[#allocation2 + $0x38] sm:$0xff]
        %v8377 = vld [vmem:[#allocation2 + $0x40] sm:$0xff]
        %v8378 = vld [vmem:[#allocation2 + $0x48] sm:$0xff]
        %v8379 = vld [vmem:[#allocation2 + $0x50] sm:$0xff]
        %v8380 = vld [vmem:[#allocation2 + $0x58] sm:$0xff]
        %v8381 = vld [vmem:[#allocation2 + $0x60] sm:$0xff]
        %v8382 = vld [vmem:[#allocation2 + $0x68] sm:$0xff]
        %v8383 = vld [vmem:[#allocation2 + $0x70] sm:$0xff]
        %v8384 = vld [vmem:[#allocation2 + $0x78] sm:$0xff]
        %v8385 = vld [vmem:[#allocation2 + $0x80] sm:$0xff]
        %v8386 = vld [vmem:[#allocation2 + $0x88] sm:$0xff]
        %v8387 = vld [vmem:[#allocation2 + $0x90] sm:$0xff]
        %v8388 = vld [vmem:[#allocation2 + $0x98] sm:$0xff]
        %v8389 = vld [vmem:[#allocation2 + $0xa0] sm:$0xff]
        %v8390 = vld [vmem:[#allocation2 + $0xa8] sm:$0xff]
        %v8391 = vld [vmem:[#allocation2 + $0xb0] sm:$0xff]
        %v8392 = vld [vmem:[#allocation2 + $0xb8] sm:$0xff]
        %v8393 = vld [vmem:[#allocation2 + $0xc0] sm:$0xff]
        %v8394 = vld [vmem:[#allocation2 + $0xc8] sm:$0xff]
        %v8395 = vld [vmem:[#allocation2 + $0xd0] sm:$0xff]
        %v8396 = vld [vmem:[#allocation2 + $0xd8] sm:$0xff]
        %v8397 = vld [vmem:[#allocation2 + $0xe0] sm:$0xff]
        %v8398 = vld [vmem:[#allocation2 + $0xe8] sm:$0xff]
        %v8399 = vld [vmem:[#allocation2 + $0xf0] sm:$0xff]
        %v8400 = vld [vmem:[#allocation2 + $0xf8] sm:$0xff]
        %v8401 = vld [vmem:[#allocation2 + $0x100] sm:$0xff]
        %v8402 = vld [vmem:[#allocation2 + $0x108] sm:$0xff]
        %v8403 = vld [vmem:[#allocation2 + $0x110] sm:$0xff]
        %v8404 = vld [vmem:[#allocation2 + $0x118] sm:$0xff]
        %8405 = vmatpush.msra.mxu0 %v735
        %8406 = vmatpush.msra.mxu0 %v734
        %8407 = vmatpush.msra.mxu0 %v733
        %8408 = vmatpush.msra.mxu0 %v732
        %8409 = vmatpush.msra.mxu0 %v731
        %8410 = vmatpush.msra.mxu0 %v730
        %8411 = vmatpush.msra.mxu0 %v729
        %8412 = vmatpush.msra.mxu0 %v728
        %8413 = vmatpush.msra.mxu0 %v727
        %8414 = vmatpush.msra.mxu0 %v726
        %8415 = vmatpush.msra.mxu0 %v725
        %8416 = vmatpush.msra.mxu0 %v724
        %8417 = vmatpush.msra.mxu0 %v723
        %8418 = vmatpush.msra.mxu0 %v722
        %8419 = vmatpush.msra.mxu0 %v721
        %8420 = vmatpush.msra.mxu0 %v720
        %8421 = vmatmul.f32.gmra.mxu0 %v8149
        %v8422 = vpop.f32.mrf.mxu0
        %v8423 = vadd.f32 0.0, %v8422
        %8424 = vmatmul.f32.gmra.mxu0 %v8150
        %v8425 = vpop.f32.mrf.mxu0
        %v8426 = vadd.f32 0.0, %v8425
        %8427 = vmatmul.f32.gmra.mxu0 %v8151
        %v8428 = vpop.f32.mrf.mxu0
        %v8429 = vadd.f32 0.0, %v8428
        %8430 = vmatmul.f32.gmra.mxu0 %v8152
        %v8431 = vpop.f32.mrf.mxu0
        %v8432 = vadd.f32 0.0, %v8431
        %8433 = vmatmul.f32.gmra.mxu0 %v8153
        %v8434 = vpop.f32.mrf.mxu0
        %v8435 = vadd.f32 0.0, %v8434
        %8436 = vmatmul.f32.gmra.mxu0 %v8154
        %v8437 = vpop.f32.mrf.mxu0
        %v8438 = vadd.f32 0.0, %v8437
        %8439 = vmatmul.f32.gmra.mxu0 %v8155
        %v8440 = vpop.f32.mrf.mxu0
        %v8441 = vadd.f32 0.0, %v8440
        %8442 = vmatmul.f32.gmra.mxu0 %v8156
        %v8443 = vpop.f32.mrf.mxu0
        %v8444 = vadd.f32 0.0, %v8443
        %8445 = vmatmul.f32.gmra.mxu0 %v8157
        %v8446 = vpop.f32.mrf.mxu0
        %v8447 = vadd.f32 0.0, %v8446
        %8448 = vmatmul.f32.gmra.mxu0 %v8158
        %v8449 = vpop.f32.mrf.mxu0
        %v8450 = vadd.f32 0.0, %v8449
        %8451 = vmatmul.f32.gmra.mxu0 %v8159
        %v8452 = vpop.f32.mrf.mxu0
        %v8453 = vadd.f32 0.0, %v8452
        %8454 = vmatmul.f32.gmra.mxu0 %v8160
        %v8455 = vpop.f32.mrf.mxu0
        %v8456 = vadd.f32 0.0, %v8455
        %8457 = vmatmul.f32.gmra.mxu0 %v8161
        %v8458 = vpop.f32.mrf.mxu0
        %v8459 = vadd.f32 0.0, %v8458
        %8460 = vmatmul.f32.gmra.mxu0 %v8162
        %v8461 = vpop.f32.mrf.mxu0
        %v8462 = vadd.f32 0.0, %v8461
        %8463 = vmatmul.f32.gmra.mxu0 %v8163
        %v8464 = vpop.f32.mrf.mxu0
        %v8465 = vadd.f32 0.0, %v8464
        %8466 = vmatmul.f32.gmra.mxu0 %v8164
        %v8467 = vpop.f32.mrf.mxu0
        %v8468 = vadd.f32 0.0, %v8467
        %8469 = vmatmul.f32.gmra.mxu0 %v8165
        %v8470 = vpop.f32.mrf.mxu0
        %v8471 = vadd.f32 0.0, %v8470
        %8472 = vmatmul.f32.gmra.mxu0 %v8166
        %v8473 = vpop.f32.mrf.mxu0
        %v8474 = vadd.f32 0.0, %v8473
        %8475 = vmatmul.f32.gmra.mxu0 %v8167
        %v8476 = vpop.f32.mrf.mxu0
        %v8477 = vadd.f32 0.0, %v8476
        %8478 = vmatmul.f32.gmra.mxu0 %v8168
        %v8479 = vpop.f32.mrf.mxu0
        %v8480 = vadd.f32 0.0, %v8479
        %8481 = vmatmul.f32.gmra.mxu0 %v8169
        %v8482 = vpop.f32.mrf.mxu0
        %v8483 = vadd.f32 0.0, %v8482
        %8484 = vmatmul.f32.gmra.mxu0 %v8170
        %v8485 = vpop.f32.mrf.mxu0
        %v8486 = vadd.f32 0.0, %v8485
        %8487 = vmatmul.f32.gmra.mxu0 %v8171
        %v8488 = vpop.f32.mrf.mxu0
        %v8489 = vadd.f32 0.0, %v8488
        %8490 = vmatmul.f32.gmra.mxu0 %v8172
        %v8491 = vpop.f32.mrf.mxu0
        %v8492 = vadd.f32 0.0, %v8491
        %8493 = vmatmul.f32.gmra.mxu0 %v8173
        %v8494 = vpop.f32.mrf.mxu0
        %v8495 = vadd.f32 0.0, %v8494
        %8496 = vmatmul.f32.gmra.mxu0 %v8174
        %v8497 = vpop.f32.mrf.mxu0
        %v8498 = vadd.f32 0.0, %v8497
        %8499 = vmatmul.f32.gmra.mxu0 %v8175
        %v8500 = vpop.f32.mrf.mxu0
        %v8501 = vadd.f32 0.0, %v8500
        %8502 = vmatmul.f32.gmra.mxu0 %v8176
        %v8503 = vpop.f32.mrf.mxu0
        %v8504 = vadd.f32 0.0, %v8503
        %8505 = vmatmul.f32.gmra.mxu0 %v8177
        %v8506 = vpop.f32.mrf.mxu0
        %v8507 = vadd.f32 0.0, %v8506
        %8508 = vmatmul.f32.gmra.mxu0 %v8178
        %v8509 = vpop.f32.mrf.mxu0
        %v8510 = vadd.f32 0.0, %v8509
        %8511 = vmatmul.f32.gmra.mxu0 %v8179
        %v8512 = vpop.f32.mrf.mxu0
        %v8513 = vadd.f32 0.0, %v8512
        %8514 = vmatmul.f32.gmra.mxu0 %v8180
        %v8515 = vpop.f32.mrf.mxu0
        %v8516 = vadd.f32 0.0, %v8515
        %8517 = vmatmul.f32.gmra.mxu0 %v8181
        %v8518 = vpop.f32.mrf.mxu0
        %v8519 = vadd.f32 0.0, %v8518
        %8520 = vmatmul.f32.gmra.mxu0 %v8182
        %v8521 = vpop.f32.mrf.mxu0
        %v8522 = vadd.f32 0.0, %v8521
        %8523 = vmatmul.f32.gmra.mxu0 %v8183
        %v8524 = vpop.f32.mrf.mxu0
        %v8525 = vadd.f32 0.0, %v8524
        %8526 = vmatmul.f32.gmra.mxu0 %v8184
        %v8527 = vpop.f32.mrf.mxu0
        %v8528 = vadd.f32 0.0, %v8527
        %8529 = vdwg.mxu0
        %8530 = vmatpush.msra.mxu0 %v751
        %8531 = vmatpush.msra.mxu0 %v750
        %8532 = vmatpush.msra.mxu0 %v749
        %8533 = vmatpush.msra.mxu0 %v748
        %8534 = vmatpush.msra.mxu0 %v747
        %8535 = vmatpush.msra.mxu0 %v746
        %8536 = vmatpush.msra.mxu0 %v745
        %8537 = vmatpush.msra.mxu0 %v744
        %8538 = vmatpush.msra.mxu0 %v743
        %8539 = vmatpush.msra.mxu0 %v742
        %8540 = vmatpush.msra.mxu0 %v741
        %8541 = vmatpush.msra.mxu0 %v740
        %8542 = vmatpush.msra.mxu0 %v739
        %8543 = vmatpush.msra.mxu0 %v738
        %8544 = vmatpush.msra.mxu0 %v737
        %8545 = vmatpush.msra.mxu0 %v736
        %8546 = vmatmul.f32.gmra.mxu0 %v8185
        %v8547 = vpop.f32.mrf.mxu0
        %v8548 = vadd.f32 %v8423, %v8547
        %8549 = vmatmul.f32.gmra.mxu0 %v8186
        %v8550 = vpop.f32.mrf.mxu0
        %v8551 = vadd.f32 %v8426, %v8550
        %8552 = vmatmul.f32.gmra.mxu0 %v8187
        %v8553 = vpop.f32.mrf.mxu0
        %v8554 = vadd.f32 %v8429, %v8553
        %8555 = vmatmul.f32.gmra.mxu0 %v8188
        %v8556 = vpop.f32.mrf.mxu0
        %v8557 = vadd.f32 %v8432, %v8556
        %8558 = vmatmul.f32.gmra.mxu0 %v8189
        %v8559 = vpop.f32.mrf.mxu0
        %v8560 = vadd.f32 %v8435, %v8559
        %8561 = vmatmul.f32.gmra.mxu0 %v8190
        %v8562 = vpop.f32.mrf.mxu0
        %v8563 = vadd.f32 %v8438, %v8562
        %8564 = vmatmul.f32.gmra.mxu0 %v8191
        %v8565 = vpop.f32.mrf.mxu0
        %v8566 = vadd.f32 %v8441, %v8565
        %8567 = vmatmul.f32.gmra.mxu0 %v8192
        %v8568 = vpop.f32.mrf.mxu0
        %v8569 = vadd.f32 %v8444, %v8568
        %8570 = vmatmul.f32.gmra.mxu0 %v8193
        %v8571 = vpop.f32.mrf.mxu0
        %v8572 = vadd.f32 %v8447, %v8571
        %8573 = vmatmul.f32.gmra.mxu0 %v8194
        %v8574 = vpop.f32.mrf.mxu0
        %v8575 = vadd.f32 %v8450, %v8574
        %8576 = vmatmul.f32.gmra.mxu0 %v8195
        %v8577 = vpop.f32.mrf.mxu0
        %v8578 = vadd.f32 %v8453, %v8577
        %8579 = vmatmul.f32.gmra.mxu0 %v8196
        %v8580 = vpop.f32.mrf.mxu0
        %v8581 = vadd.f32 %v8456, %v8580
        %8582 = vmatmul.f32.gmra.mxu0 %v8197
        %v8583 = vpop.f32.mrf.mxu0
        %v8584 = vadd.f32 %v8459, %v8583
        %8585 = vmatmul.f32.gmra.mxu0 %v8198
        %v8586 = vpop.f32.mrf.mxu0
        %v8587 = vadd.f32 %v8462, %v8586
        %8588 = vmatmul.f32.gmra.mxu0 %v8199
        %v8589 = vpop.f32.mrf.mxu0
        %v8590 = vadd.f32 %v8465, %v8589
        %8591 = vmatmul.f32.gmra.mxu0 %v8200
        %v8592 = vpop.f32.mrf.mxu0
        %v8593 = vadd.f32 %v8468, %v8592
        %8594 = vmatmul.f32.gmra.mxu0 %v8201
        %v8595 = vpop.f32.mrf.mxu0
        %v8596 = vadd.f32 %v8471, %v8595
        %8597 = vmatmul.f32.gmra.mxu0 %v8202
        %v8598 = vpop.f32.mrf.mxu0
        %v8599 = vadd.f32 %v8474, %v8598
        %8600 = vmatmul.f32.gmra.mxu0 %v8203
        %v8601 = vpop.f32.mrf.mxu0
        %v8602 = vadd.f32 %v8477, %v8601
        %8603 = vmatmul.f32.gmra.mxu0 %v8204
        %v8604 = vpop.f32.mrf.mxu0
        %v8605 = vadd.f32 %v8480, %v8604
        %8606 = vmatmul.f32.gmra.mxu0 %v8205
        %v8607 = vpop.f32.mrf.mxu0
        %v8608 = vadd.f32 %v8483, %v8607
        %8609 = vmatmul.f32.gmra.mxu0 %v8206
        %v8610 = vpop.f32.mrf.mxu0
        %v8611 = vadd.f32 %v8486, %v8610
        %8612 = vmatmul.f32.gmra.mxu0 %v8207
        %v8613 = vpop.f32.mrf.mxu0
        %v8614 = vadd.f32 %v8489, %v8613
        %8615 = vmatmul.f32.gmra.mxu0 %v8208
        %v8616 = vpop.f32.mrf.mxu0
        %v8617 = vadd.f32 %v8492, %v8616
        %8618 = vmatmul.f32.gmra.mxu0 %v8209
        %v8619 = vpop.f32.mrf.mxu0
        %v8620 = vadd.f32 %v8495, %v8619
        %8621 = vmatmul.f32.gmra.mxu0 %v8210
        %v8622 = vpop.f32.mrf.mxu0
        %v8623 = vadd.f32 %v8498, %v8622
        %8624 = vmatmul.f32.gmra.mxu0 %v8211
        %v8625 = vpop.f32.mrf.mxu0
        %v8626 = vadd.f32 %v8501, %v8625
        %8627 = vmatmul.f32.gmra.mxu0 %v8212
        %v8628 = vpop.f32.mrf.mxu0
        %v8629 = vadd.f32 %v8504, %v8628
        %8630 = vmatmul.f32.gmra.mxu0 %v8213
        %v8631 = vpop.f32.mrf.mxu0
        %v8632 = vadd.f32 %v8507, %v8631
        %8633 = vmatmul.f32.gmra.mxu0 %v8214
        %v8634 = vpop.f32.mrf.mxu0
        %v8635 = vadd.f32 %v8510, %v8634
        %8636 = vmatmul.f32.gmra.mxu0 %v8215
        %v8637 = vpop.f32.mrf.mxu0
        %v8638 = vadd.f32 %v8513, %v8637
        %8639 = vmatmul.f32.gmra.mxu0 %v8216
        %v8640 = vpop.f32.mrf.mxu0
        %v8641 = vadd.f32 %v8516, %v8640
        %8642 = vmatmul.f32.gmra.mxu0 %v8217
        %v8643 = vpop.f32.mrf.mxu0
        %v8644 = vadd.f32 %v8519, %v8643
        %8645 = vmatmul.f32.gmra.mxu0 %v8218
        %v8646 = vpop.f32.mrf.mxu0
        %v8647 = vadd.f32 %v8522, %v8646
        %8648 = vmatmul.f32.gmra.mxu0 %v8219
        %v8649 = vpop.f32.mrf.mxu0
        %v8650 = vadd.f32 %v8525, %v8649
        %8651 = vmatmul.f32.gmra.mxu0 %v8220
        %v8652 = vpop.f32.mrf.mxu0
        %v8653 = vadd.f32 %v8528, %v8652
        %8654 = vdwg.mxu0
        %8655 = vmatpush.msra.mxu0 %v767
        %8656 = vmatpush.msra.mxu0 %v766
        %8657 = vmatpush.msra.mxu0 %v765
        %8658 = vmatpush.msra.mxu0 %v764
        %8659 = vmatpush.msra.mxu0 %v763
        %8660 = vmatpush.msra.mxu0 %v762
        %8661 = vmatpush.msra.mxu0 %v761
        %8662 = vmatpush.msra.mxu0 %v760
        %8663 = vmatpush.msra.mxu0 %v759
        %8664 = vmatpush.msra.mxu0 %v758
        %8665 = vmatpush.msra.mxu0 %v757
        %8666 = vmatpush.msra.mxu0 %v756
        %8667 = vmatpush.msra.mxu0 %v755
        %8668 = vmatpush.msra.mxu0 %v754
        %8669 = vmatpush.msra.mxu0 %v753
        %8670 = vmatpush.msra.mxu0 %v752
        %8671 = vmatmul.f32.gmra.mxu0 %v8221
        %v8672 = vpop.f32.mrf.mxu0
        %v8673 = vadd.f32 %v8548, %v8672
        %8674 = vmatmul.f32.gmra.mxu0 %v8222
        %v8675 = vpop.f32.mrf.mxu0
        %v8676 = vadd.f32 %v8551, %v8675
        %8677 = vmatmul.f32.gmra.mxu0 %v8223
        %v8678 = vpop.f32.mrf.mxu0
        %v8679 = vadd.f32 %v8554, %v8678
        %8680 = vmatmul.f32.gmra.mxu0 %v8224
        %v8681 = vpop.f32.mrf.mxu0
        %v8682 = vadd.f32 %v8557, %v8681
        %8683 = vmatmul.f32.gmra.mxu0 %v8225
        %v8684 = vpop.f32.mrf.mxu0
        %v8685 = vadd.f32 %v8560, %v8684
        %8686 = vmatmul.f32.gmra.mxu0 %v8226
        %v8687 = vpop.f32.mrf.mxu0
        %v8688 = vadd.f32 %v8563, %v8687
        %8689 = vmatmul.f32.gmra.mxu0 %v8227
        %v8690 = vpop.f32.mrf.mxu0
        %v8691 = vadd.f32 %v8566, %v8690
        %8692 = vmatmul.f32.gmra.mxu0 %v8228
        %v8693 = vpop.f32.mrf.mxu0
        %v8694 = vadd.f32 %v8569, %v8693
        %8695 = vmatmul.f32.gmra.mxu0 %v8229
        %v8696 = vpop.f32.mrf.mxu0
        %v8697 = vadd.f32 %v8572, %v8696
        %8698 = vmatmul.f32.gmra.mxu0 %v8230
        %v8699 = vpop.f32.mrf.mxu0
        %v8700 = vadd.f32 %v8575, %v8699
        %8701 = vmatmul.f32.gmra.mxu0 %v8231
        %v8702 = vpop.f32.mrf.mxu0
        %v8703 = vadd.f32 %v8578, %v8702
        %8704 = vmatmul.f32.gmra.mxu0 %v8232
        %v8705 = vpop.f32.mrf.mxu0
        %v8706 = vadd.f32 %v8581, %v8705
        %8707 = vmatmul.f32.gmra.mxu0 %v8233
        %v8708 = vpop.f32.mrf.mxu0
        %v8709 = vadd.f32 %v8584, %v8708
        %8710 = vmatmul.f32.gmra.mxu0 %v8234
        %v8711 = vpop.f32.mrf.mxu0
        %v8712 = vadd.f32 %v8587, %v8711
        %8713 = vmatmul.f32.gmra.mxu0 %v8235
        %v8714 = vpop.f32.mrf.mxu0
        %v8715 = vadd.f32 %v8590, %v8714
        %8716 = vmatmul.f32.gmra.mxu0 %v8236
        %v8717 = vpop.f32.mrf.mxu0
        %v8718 = vadd.f32 %v8593, %v8717
        %8719 = vmatmul.f32.gmra.mxu0 %v8237
        %v8720 = vpop.f32.mrf.mxu0
        %v8721 = vadd.f32 %v8596, %v8720
        %8722 = vmatmul.f32.gmra.mxu0 %v8238
        %v8723 = vpop.f32.mrf.mxu0
        %v8724 = vadd.f32 %v8599, %v8723
        %8725 = vmatmul.f32.gmra.mxu0 %v8239
        %v8726 = vpop.f32.mrf.mxu0
        %v8727 = vadd.f32 %v8602, %v8726
        %8728 = vmatmul.f32.gmra.mxu0 %v8240
        %v8729 = vpop.f32.mrf.mxu0
        %v8730 = vadd.f32 %v8605, %v8729
        %8731 = vmatmul.f32.gmra.mxu0 %v8241
        %v8732 = vpop.f32.mrf.mxu0
        %v8733 = vadd.f32 %v8608, %v8732
        %8734 = vmatmul.f32.gmra.mxu0 %v8242
        %v8735 = vpop.f32.mrf.mxu0
        %v8736 = vadd.f32 %v8611, %v8735
        %8737 = vmatmul.f32.gmra.mxu0 %v8243
        %v8738 = vpop.f32.mrf.mxu0
        %v8739 = vadd.f32 %v8614, %v8738
        %8740 = vmatmul.f32.gmra.mxu0 %v8244
        %v8741 = vpop.f32.mrf.mxu0
        %v8742 = vadd.f32 %v8617, %v8741
        %8743 = vmatmul.f32.gmra.mxu0 %v8245
        %v8744 = vpop.f32.mrf.mxu0
        %v8745 = vadd.f32 %v8620, %v8744
        %8746 = vmatmul.f32.gmra.mxu0 %v8246
        %v8747 = vpop.f32.mrf.mxu0
        %v8748 = vadd.f32 %v8623, %v8747
        %8749 = vmatmul.f32.gmra.mxu0 %v8247
        %v8750 = vpop.f32.mrf.mxu0
        %v8751 = vadd.f32 %v8626, %v8750
        %8752 = vmatmul.f32.gmra.mxu0 %v8248
        %v8753 = vpop.f32.mrf.mxu0
        %v8754 = vadd.f32 %v8629, %v8753
        %8755 = vmatmul.f32.gmra.mxu0 %v8249
        %v8756 = vpop.f32.mrf.mxu0
        %v8757 = vadd.f32 %v8632, %v8756
        %8758 = vmatmul.f32.gmra.mxu0 %v8250
        %v8759 = vpop.f32.mrf.mxu0
        %v8760 = vadd.f32 %v8635, %v8759
        %8761 = vmatmul.f32.gmra.mxu0 %v8251
        %v8762 = vpop.f32.mrf.mxu0
        %v8763 = vadd.f32 %v8638, %v8762
        %8764 = vmatmul.f32.gmra.mxu0 %v8252
        %v8765 = vpop.f32.mrf.mxu0
        %v8766 = vadd.f32 %v8641, %v8765
        %8767 = vmatmul.f32.gmra.mxu0 %v8253
        %v8768 = vpop.f32.mrf.mxu0
        %v8769 = vadd.f32 %v8644, %v8768
        %8770 = vmatmul.f32.gmra.mxu0 %v8254
        %v8771 = vpop.f32.mrf.mxu0
        %v8772 = vadd.f32 %v8647, %v8771
        %8773 = vmatmul.f32.gmra.mxu0 %v8255
        %v8774 = vpop.f32.mrf.mxu0
        %v8775 = vadd.f32 %v8650, %v8774
        %8776 = vmatmul.f32.gmra.mxu0 %v8256
        %v8777 = vpop.f32.mrf.mxu0
        %v8778 = vadd.f32 %v8653, %v8777
        %8779 = vdwg.mxu0
        %8780 = vmatpush.msra.mxu0 %v783
        %8781 = vmatpush.msra.mxu0 %v782
        %8782 = vmatpush.msra.mxu0 %v781
        %8783 = vmatpush.msra.mxu0 %v780
        %8784 = vmatpush.msra.mxu0 %v779
        %8785 = vmatpush.msra.mxu0 %v778
        %8786 = vmatpush.msra.mxu0 %v777
        %8787 = vmatpush.msra.mxu0 %v776
        %8788 = vmatpush.msra.mxu0 %v775
        %8789 = vmatpush.msra.mxu0 %v774
        %8790 = vmatpush.msra.mxu0 %v773
        %8791 = vmatpush.msra.mxu0 %v772
        %8792 = vmatpush.msra.mxu0 %v771
        %8793 = vmatpush.msra.mxu0 %v770
        %8794 = vmatpush.msra.mxu0 %v769
        %8795 = vmatpush.msra.mxu0 %v768
        %8796 = vmatmul.f32.gmra.mxu0 %v8257
        %v8797 = vpop.f32.mrf.mxu0
        %v8798 = vadd.f32 %v8673, %v8797
        %8799 = vmatmul.f32.gmra.mxu0 %v8258
        %v8800 = vpop.f32.mrf.mxu0
        %v8801 = vadd.f32 %v8676, %v8800
        %8802 = vmatmul.f32.gmra.mxu0 %v8221
        %v8803 = vpop.f32.mrf.mxu0
        %v8804 = vadd.f32 %v8679, %v8803
        %8805 = vmatmul.f32.gmra.mxu0 %v8222
        %v8806 = vpop.f32.mrf.mxu0
        %v8807 = vadd.f32 %v8682, %v8806
        %8808 = vmatmul.f32.gmra.mxu0 %v8223
        %v8809 = vpop.f32.mrf.mxu0
        %v8810 = vadd.f32 %v8685, %v8809
        %8811 = vmatmul.f32.gmra.mxu0 %v8224
        %v8812 = vpop.f32.mrf.mxu0
        %v8813 = vadd.f32 %v8688, %v8812
        %8814 = vmatmul.f32.gmra.mxu0 %v8225
        %v8815 = vpop.f32.mrf.mxu0
        %v8816 = vadd.f32 %v8691, %v8815
        %8817 = vmatmul.f32.gmra.mxu0 %v8226
        %v8818 = vpop.f32.mrf.mxu0
        %v8819 = vadd.f32 %v8694, %v8818
        %8820 = vmatmul.f32.gmra.mxu0 %v8227
        %v8821 = vpop.f32.mrf.mxu0
        %v8822 = vadd.f32 %v8697, %v8821
        %8823 = vmatmul.f32.gmra.mxu0 %v8228
        %v8824 = vpop.f32.mrf.mxu0
        %v8825 = vadd.f32 %v8700, %v8824
        %8826 = vmatmul.f32.gmra.mxu0 %v8229
        %v8827 = vpop.f32.mrf.mxu0
        %v8828 = vadd.f32 %v8703, %v8827
        %8829 = vmatmul.f32.gmra.mxu0 %v8230
        %v8830 = vpop.f32.mrf.mxu0
        %v8831 = vadd.f32 %v8706, %v8830
        %8832 = vmatmul.f32.gmra.mxu0 %v8231
        %v8833 = vpop.f32.mrf.mxu0
        %v8834 = vadd.f32 %v8709, %v8833
        %8835 = vmatmul.f32.gmra.mxu0 %v8232
        %v8836 = vpop.f32.mrf.mxu0
        %v8837 = vadd.f32 %v8712, %v8836
        %8838 = vmatmul.f32.gmra.mxu0 %v8233
        %v8839 = vpop.f32.mrf.mxu0
        %v8840 = vadd.f32 %v8715, %v8839
        %8841 = vmatmul.f32.gmra.mxu0 %v8234
        %v8842 = vpop.f32.mrf.mxu0
        %v8843 = vadd.f32 %v8718, %v8842
        %8844 = vmatmul.f32.gmra.mxu0 %v8235
        %v8845 = vpop.f32.mrf.mxu0
        %v8846 = vadd.f32 %v8721, %v8845
        %8847 = vmatmul.f32.gmra.mxu0 %v8236
        %v8848 = vpop.f32.mrf.mxu0
        %v8849 = vadd.f32 %v8724, %v8848
        %8850 = vmatmul.f32.gmra.mxu0 %v8237
        %v8851 = vpop.f32.mrf.mxu0
        %v8852 = vadd.f32 %v8727, %v8851
        %8853 = vmatmul.f32.gmra.mxu0 %v8238
        %v8854 = vpop.f32.mrf.mxu0
        %v8855 = vadd.f32 %v8730, %v8854
        %8856 = vmatmul.f32.gmra.mxu0 %v8239
        %v8857 = vpop.f32.mrf.mxu0
        %v8858 = vadd.f32 %v8733, %v8857
        %8859 = vmatmul.f32.gmra.mxu0 %v8240
        %v8860 = vpop.f32.mrf.mxu0
        %v8861 = vadd.f32 %v8736, %v8860
        %8862 = vmatmul.f32.gmra.mxu0 %v8241
        %v8863 = vpop.f32.mrf.mxu0
        %v8864 = vadd.f32 %v8739, %v8863
        %8865 = vmatmul.f32.gmra.mxu0 %v8242
        %v8866 = vpop.f32.mrf.mxu0
        %v8867 = vadd.f32 %v8742, %v8866
        %8868 = vmatmul.f32.gmra.mxu0 %v8243
        %v8869 = vpop.f32.mrf.mxu0
        %v8870 = vadd.f32 %v8745, %v8869
        %8871 = vmatmul.f32.gmra.mxu0 %v8244
        %v8872 = vpop.f32.mrf.mxu0
        %v8873 = vadd.f32 %v8748, %v8872
        %8874 = vmatmul.f32.gmra.mxu0 %v8245
        %v8875 = vpop.f32.mrf.mxu0
        %v8876 = vadd.f32 %v8751, %v8875
        %8877 = vmatmul.f32.gmra.mxu0 %v8246
        %v8878 = vpop.f32.mrf.mxu0
        %v8879 = vadd.f32 %v8754, %v8878
        %8880 = vmatmul.f32.gmra.mxu0 %v8247
        %v8881 = vpop.f32.mrf.mxu0
        %v8882 = vadd.f32 %v8757, %v8881
        %8883 = vmatmul.f32.gmra.mxu0 %v8248
        %v8884 = vpop.f32.mrf.mxu0
        %v8885 = vadd.f32 %v8760, %v8884
        %8886 = vmatmul.f32.gmra.mxu0 %v8249
        %v8887 = vpop.f32.mrf.mxu0
        %v8888 = vadd.f32 %v8763, %v8887
        %8889 = vmatmul.f32.gmra.mxu0 %v8250
        %v8890 = vpop.f32.mrf.mxu0
        %v8891 = vadd.f32 %v8766, %v8890
        %8892 = vmatmul.f32.gmra.mxu0 %v8251
        %v8893 = vpop.f32.mrf.mxu0
        %v8894 = vadd.f32 %v8769, %v8893
        %8895 = vmatmul.f32.gmra.mxu0 %v8252
        %v8896 = vpop.f32.mrf.mxu0
        %v8897 = vadd.f32 %v8772, %v8896
        %8898 = vmatmul.f32.gmra.mxu0 %v8253
        %v8899 = vpop.f32.mrf.mxu0
        %v8900 = vadd.f32 %v8775, %v8899
        %8901 = vmatmul.f32.gmra.mxu0 %v8254
        %v8902 = vpop.f32.mrf.mxu0
        %v8903 = vadd.f32 %v8778, %v8902
        %8904 = vdwg.mxu0
        %8905 = vmatpush.msra.mxu0 %v799
        %8906 = vmatpush.msra.mxu0 %v798
        %8907 = vmatpush.msra.mxu0 %v797
        %8908 = vmatpush.msra.mxu0 %v796
        %8909 = vmatpush.msra.mxu0 %v795
        %8910 = vmatpush.msra.mxu0 %v794
        %8911 = vmatpush.msra.mxu0 %v793
        %8912 = vmatpush.msra.mxu0 %v792
        %8913 = vmatpush.msra.mxu0 %v791
        %8914 = vmatpush.msra.mxu0 %v790
        %8915 = vmatpush.msra.mxu0 %v789
        %8916 = vmatpush.msra.mxu0 %v788
        %8917 = vmatpush.msra.mxu0 %v787
        %8918 = vmatpush.msra.mxu0 %v786
        %8919 = vmatpush.msra.mxu0 %v785
        %8920 = vmatpush.msra.mxu0 %v784
        %8921 = vmatmul.f32.gmra.mxu0 %v8259
        %v8922 = vpop.f32.mrf.mxu0
        %v8923 = vadd.f32 %v8798, %v8922
        %8924 = vmatmul.f32.gmra.mxu0 %v8260
        %v8925 = vpop.f32.mrf.mxu0
        %v8926 = vadd.f32 %v8801, %v8925
        %8927 = vmatmul.f32.gmra.mxu0 %v8261
        %v8928 = vpop.f32.mrf.mxu0
        %v8929 = vadd.f32 %v8804, %v8928
        %8930 = vmatmul.f32.gmra.mxu0 %v8262
        %v8931 = vpop.f32.mrf.mxu0
        %v8932 = vadd.f32 %v8807, %v8931
        %8933 = vmatmul.f32.gmra.mxu0 %v8263
        %v8934 = vpop.f32.mrf.mxu0
        %v8935 = vadd.f32 %v8810, %v8934
        %8936 = vmatmul.f32.gmra.mxu0 %v8264
        %v8937 = vpop.f32.mrf.mxu0
        %v8938 = vadd.f32 %v8813, %v8937
        %8939 = vmatmul.f32.gmra.mxu0 %v8265
        %v8940 = vpop.f32.mrf.mxu0
        %v8941 = vadd.f32 %v8816, %v8940
        %8942 = vmatmul.f32.gmra.mxu0 %v8266
        %v8943 = vpop.f32.mrf.mxu0
        %v8944 = vadd.f32 %v8819, %v8943
        %8945 = vmatmul.f32.gmra.mxu0 %v8267
        %v8946 = vpop.f32.mrf.mxu0
        %v8947 = vadd.f32 %v8822, %v8946
        %8948 = vmatmul.f32.gmra.mxu0 %v8268
        %v8949 = vpop.f32.mrf.mxu0
        %v8950 = vadd.f32 %v8825, %v8949
        %8951 = vmatmul.f32.gmra.mxu0 %v8269
        %v8952 = vpop.f32.mrf.mxu0
        %v8953 = vadd.f32 %v8828, %v8952
        %8954 = vmatmul.f32.gmra.mxu0 %v8270
        %v8955 = vpop.f32.mrf.mxu0
        %v8956 = vadd.f32 %v8831, %v8955
        %8957 = vmatmul.f32.gmra.mxu0 %v8271
        %v8958 = vpop.f32.mrf.mxu0
        %v8959 = vadd.f32 %v8834, %v8958
        %8960 = vmatmul.f32.gmra.mxu0 %v8272
        %v8961 = vpop.f32.mrf.mxu0
        %v8962 = vadd.f32 %v8837, %v8961
        %8963 = vmatmul.f32.gmra.mxu0 %v8273
        %v8964 = vpop.f32.mrf.mxu0
        %v8965 = vadd.f32 %v8840, %v8964
        %8966 = vmatmul.f32.gmra.mxu0 %v8274
        %v8967 = vpop.f32.mrf.mxu0
        %v8968 = vadd.f32 %v8843, %v8967
        %8969 = vmatmul.f32.gmra.mxu0 %v8275
        %v8970 = vpop.f32.mrf.mxu0
        %v8971 = vadd.f32 %v8846, %v8970
        %8972 = vmatmul.f32.gmra.mxu0 %v8276
        %v8973 = vpop.f32.mrf.mxu0
        %v8974 = vadd.f32 %v8849, %v8973
        %8975 = vmatmul.f32.gmra.mxu0 %v8277
        %v8976 = vpop.f32.mrf.mxu0
        %v8977 = vadd.f32 %v8852, %v8976
        %8978 = vmatmul.f32.gmra.mxu0 %v8278
        %v8979 = vpop.f32.mrf.mxu0
        %v8980 = vadd.f32 %v8855, %v8979
        %8981 = vmatmul.f32.gmra.mxu0 %v8279
        %v8982 = vpop.f32.mrf.mxu0
        %v8983 = vadd.f32 %v8858, %v8982
        %8984 = vmatmul.f32.gmra.mxu0 %v8280
        %v8985 = vpop.f32.mrf.mxu0
        %v8986 = vadd.f32 %v8861, %v8985
        %8987 = vmatmul.f32.gmra.mxu0 %v8281
        %v8988 = vpop.f32.mrf.mxu0
        %v8989 = vadd.f32 %v8864, %v8988
        %8990 = vmatmul.f32.gmra.mxu0 %v8282
        %v8991 = vpop.f32.mrf.mxu0
        %v8992 = vadd.f32 %v8867, %v8991
        %8993 = vmatmul.f32.gmra.mxu0 %v8283
        %v8994 = vpop.f32.mrf.mxu0
        %v8995 = vadd.f32 %v8870, %v8994
        %8996 = vmatmul.f32.gmra.mxu0 %v8284
        %v8997 = vpop.f32.mrf.mxu0
        %v8998 = vadd.f32 %v8873, %v8997
        %8999 = vmatmul.f32.gmra.mxu0 %v8285
        %v9000 = vpop.f32.mrf.mxu0
        %v9001 = vadd.f32 %v8876, %v9000
        %9002 = vmatmul.f32.gmra.mxu0 %v8286
        %v9003 = vpop.f32.mrf.mxu0
        %v9004 = vadd.f32 %v8879, %v9003
        %9005 = vmatmul.f32.gmra.mxu0 %v8287
        %v9006 = vpop.f32.mrf.mxu0
        %v9007 = vadd.f32 %v8882, %v9006
        %9008 = vmatmul.f32.gmra.mxu0 %v8288
        %v9009 = vpop.f32.mrf.mxu0
        %v9010 = vadd.f32 %v8885, %v9009
        %9011 = vmatmul.f32.gmra.mxu0 %v8289
        %v9012 = vpop.f32.mrf.mxu0
        %v9013 = vadd.f32 %v8888, %v9012
        %9014 = vmatmul.f32.gmra.mxu0 %v8290
        %v9015 = vpop.f32.mrf.mxu0
        %v9016 = vadd.f32 %v8891, %v9015
        %9017 = vmatmul.f32.gmra.mxu0 %v8291
        %v9018 = vpop.f32.mrf.mxu0
        %v9019 = vadd.f32 %v8894, %v9018
        %9020 = vmatmul.f32.gmra.mxu0 %v8292
        %v9021 = vpop.f32.mrf.mxu0
        %v9022 = vadd.f32 %v8897, %v9021
        %9023 = vmatmul.f32.gmra.mxu0 %v8293
        %v9024 = vpop.f32.mrf.mxu0
        %v9025 = vadd.f32 %v8900, %v9024
        %9026 = vmatmul.f32.gmra.mxu0 %v8294
        %v9027 = vpop.f32.mrf.mxu0
        %v9028 = vadd.f32 %v8903, %v9027
        %9029 = vdwg.mxu0
        %9030 = vmatpush.msra.mxu0 %v815
        %9031 = vmatpush.msra.mxu0 %v814
        %9032 = vmatpush.msra.mxu0 %v813
        %9033 = vmatpush.msra.mxu0 %v812
        %9034 = vmatpush.msra.mxu0 %v811
        %9035 = vmatpush.msra.mxu0 %v810
        %9036 = vmatpush.msra.mxu0 %v809
        %9037 = vmatpush.msra.mxu0 %v808
        %9038 = vmatpush.msra.mxu0 %v807
        %9039 = vmatpush.msra.mxu0 %v806
        %9040 = vmatpush.msra.mxu0 %v805
        %9041 = vmatpush.msra.mxu0 %v804
        %9042 = vmatpush.msra.mxu0 %v803
        %9043 = vmatpush.msra.mxu0 %v802
        %9044 = vmatpush.msra.mxu0 %v801
        %9045 = vmatpush.msra.mxu0 %v800
        %9046 = vmatmul.f32.gmra.mxu0 %v8295
        %v9047 = vpop.f32.mrf.mxu0
        %v9048 = vadd.f32 %v8923, %v9047
        %9049 = vmatmul.f32.gmra.mxu0 %v8296
        %v9050 = vpop.f32.mrf.mxu0
        %v9051 = vadd.f32 %v8926, %v9050
        %9052 = vmatmul.f32.gmra.mxu0 %v8297
        %v9053 = vpop.f32.mrf.mxu0
        %v9054 = vadd.f32 %v8929, %v9053
        %9055 = vmatmul.f32.gmra.mxu0 %v8298
        %v9056 = vpop.f32.mrf.mxu0
        %v9057 = vadd.f32 %v8932, %v9056
        %9058 = vmatmul.f32.gmra.mxu0 %v8299
        %v9059 = vpop.f32.mrf.mxu0
        %v9060 = vadd.f32 %v8935, %v9059
        %9061 = vmatmul.f32.gmra.mxu0 %v8300
        %v9062 = vpop.f32.mrf.mxu0
        %v9063 = vadd.f32 %v8938, %v9062
        %9064 = vmatmul.f32.gmra.mxu0 %v8301
        %v9065 = vpop.f32.mrf.mxu0
        %v9066 = vadd.f32 %v8941, %v9065
        %9067 = vmatmul.f32.gmra.mxu0 %v8302
        %v9068 = vpop.f32.mrf.mxu0
        %v9069 = vadd.f32 %v8944, %v9068
        %9070 = vmatmul.f32.gmra.mxu0 %v8303
        %v9071 = vpop.f32.mrf.mxu0
        %v9072 = vadd.f32 %v8947, %v9071
        %9073 = vmatmul.f32.gmra.mxu0 %v8304
        %v9074 = vpop.f32.mrf.mxu0
        %v9075 = vadd.f32 %v8950, %v9074
        %9076 = vmatmul.f32.gmra.mxu0 %v8305
        %v9077 = vpop.f32.mrf.mxu0
        %v9078 = vadd.f32 %v8953, %v9077
        %9079 = vmatmul.f32.gmra.mxu0 %v8306
        %v9080 = vpop.f32.mrf.mxu0
        %v9081 = vadd.f32 %v8956, %v9080
        %9082 = vmatmul.f32.gmra.mxu0 %v8307
        %v9083 = vpop.f32.mrf.mxu0
        %v9084 = vadd.f32 %v8959, %v9083
        %9085 = vmatmul.f32.gmra.mxu0 %v8308
        %v9086 = vpop.f32.mrf.mxu0
        %v9087 = vadd.f32 %v8962, %v9086
        %9088 = vmatmul.f32.gmra.mxu0 %v8309
        %v9089 = vpop.f32.mrf.mxu0
        %v9090 = vadd.f32 %v8965, %v9089
        %9091 = vmatmul.f32.gmra.mxu0 %v8310
        %v9092 = vpop.f32.mrf.mxu0
        %v9093 = vadd.f32 %v8968, %v9092
        %9094 = vmatmul.f32.gmra.mxu0 %v8311
        %v9095 = vpop.f32.mrf.mxu0
        %v9096 = vadd.f32 %v8971, %v9095
        %9097 = vmatmul.f32.gmra.mxu0 %v8312
        %v9098 = vpop.f32.mrf.mxu0
        %v9099 = vadd.f32 %v8974, %v9098
        %9100 = vmatmul.f32.gmra.mxu0 %v8313
        %v9101 = vpop.f32.mrf.mxu0
        %v9102 = vadd.f32 %v8977, %v9101
        %9103 = vmatmul.f32.gmra.mxu0 %v8314
        %v9104 = vpop.f32.mrf.mxu0
        %v9105 = vadd.f32 %v8980, %v9104
        %9106 = vmatmul.f32.gmra.mxu0 %v8315
        %v9107 = vpop.f32.mrf.mxu0
        %v9108 = vadd.f32 %v8983, %v9107
        %9109 = vmatmul.f32.gmra.mxu0 %v8316
        %v9110 = vpop.f32.mrf.mxu0
        %v9111 = vadd.f32 %v8986, %v9110
        %9112 = vmatmul.f32.gmra.mxu0 %v8317
        %v9113 = vpop.f32.mrf.mxu0
        %v9114 = vadd.f32 %v8989, %v9113
        %9115 = vmatmul.f32.gmra.mxu0 %v8318
        %v9116 = vpop.f32.mrf.mxu0
        %v9117 = vadd.f32 %v8992, %v9116
        %9118 = vmatmul.f32.gmra.mxu0 %v8319
        %v9119 = vpop.f32.mrf.mxu0
        %v9120 = vadd.f32 %v8995, %v9119
        %9121 = vmatmul.f32.gmra.mxu0 %v8320
        %v9122 = vpop.f32.mrf.mxu0
        %v9123 = vadd.f32 %v8998, %v9122
        %9124 = vmatmul.f32.gmra.mxu0 %v8321
        %v9125 = vpop.f32.mrf.mxu0
        %v9126 = vadd.f32 %v9001, %v9125
        %9127 = vmatmul.f32.gmra.mxu0 %v8322
        %v9128 = vpop.f32.mrf.mxu0
        %v9129 = vadd.f32 %v9004, %v9128
        %9130 = vmatmul.f32.gmra.mxu0 %v8323
        %v9131 = vpop.f32.mrf.mxu0
        %v9132 = vadd.f32 %v9007, %v9131
        %9133 = vmatmul.f32.gmra.mxu0 %v8324
        %v9134 = vpop.f32.mrf.mxu0
        %v9135 = vadd.f32 %v9010, %v9134
        %9136 = vmatmul.f32.gmra.mxu0 %v8325
        %v9137 = vpop.f32.mrf.mxu0
        %v9138 = vadd.f32 %v9013, %v9137
        %9139 = vmatmul.f32.gmra.mxu0 %v8326
        %v9140 = vpop.f32.mrf.mxu0
        %v9141 = vadd.f32 %v9016, %v9140
        %9142 = vmatmul.f32.gmra.mxu0 %v8327
        %v9143 = vpop.f32.mrf.mxu0
        %v9144 = vadd.f32 %v9019, %v9143
        %9145 = vmatmul.f32.gmra.mxu0 %v8328
        %v9146 = vpop.f32.mrf.mxu0
        %v9147 = vadd.f32 %v9022, %v9146
        %9148 = vmatmul.f32.gmra.mxu0 %v8329
        %v9149 = vpop.f32.mrf.mxu0
        %v9150 = vadd.f32 %v9025, %v9149
        %9151 = vmatmul.f32.gmra.mxu0 %v8330
        %v9152 = vpop.f32.mrf.mxu0
        %v9153 = vadd.f32 %v9028, %v9152
        %9154 = vdwg.mxu0
        %9155 = vmatpush.msra.mxu0 %v831
        %9156 = vmatpush.msra.mxu0 %v830
        %9157 = vmatpush.msra.mxu0 %v829
        %9158 = vmatpush.msra.mxu0 %v828
        %9159 = vmatpush.msra.mxu0 %v827
        %9160 = vmatpush.msra.mxu0 %v826
        %9161 = vmatpush.msra.mxu0 %v825
        %9162 = vmatpush.msra.mxu0 %v824
        %9163 = vmatpush.msra.mxu0 %v823
        %9164 = vmatpush.msra.mxu0 %v822
        %9165 = vmatpush.msra.mxu0 %v821
        %9166 = vmatpush.msra.mxu0 %v820
        %9167 = vmatpush.msra.mxu0 %v819
        %9168 = vmatpush.msra.mxu0 %v818
        %9169 = vmatpush.msra.mxu0 %v817
        %9170 = vmatpush.msra.mxu0 %v816
        %9171 = vmatmul.f32.gmra.mxu0 %v8331
        %v9172 = vpop.f32.mrf.mxu0
        %v9173 = vadd.f32 %v9048, %v9172
        %9174 = vmatmul.f32.gmra.mxu0 %v8332
        %v9175 = vpop.f32.mrf.mxu0
        %v9176 = vadd.f32 %v9051, %v9175
        %9177 = vmatmul.f32.gmra.mxu0 %v8295
        %v9178 = vpop.f32.mrf.mxu0
        %v9179 = vadd.f32 %v9054, %v9178
        %9180 = vmatmul.f32.gmra.mxu0 %v8296
        %v9181 = vpop.f32.mrf.mxu0
        %v9182 = vadd.f32 %v9057, %v9181
        %9183 = vmatmul.f32.gmra.mxu0 %v8297
        %v9184 = vpop.f32.mrf.mxu0
        %v9185 = vadd.f32 %v9060, %v9184
        %9186 = vmatmul.f32.gmra.mxu0 %v8298
        %v9187 = vpop.f32.mrf.mxu0
        %v9188 = vadd.f32 %v9063, %v9187
        %9189 = vmatmul.f32.gmra.mxu0 %v8299
        %v9190 = vpop.f32.mrf.mxu0
        %v9191 = vadd.f32 %v9066, %v9190
        %9192 = vmatmul.f32.gmra.mxu0 %v8300
        %v9193 = vpop.f32.mrf.mxu0
        %v9194 = vadd.f32 %v9069, %v9193
        %9195 = vmatmul.f32.gmra.mxu0 %v8301
        %v9196 = vpop.f32.mrf.mxu0
        %v9197 = vadd.f32 %v9072, %v9196
        %9198 = vmatmul.f32.gmra.mxu0 %v8302
        %v9199 = vpop.f32.mrf.mxu0
        %v9200 = vadd.f32 %v9075, %v9199
        %9201 = vmatmul.f32.gmra.mxu0 %v8303
        %v9202 = vpop.f32.mrf.mxu0
        %v9203 = vadd.f32 %v9078, %v9202
        %9204 = vmatmul.f32.gmra.mxu0 %v8304
        %v9205 = vpop.f32.mrf.mxu0
        %v9206 = vadd.f32 %v9081, %v9205
        %9207 = vmatmul.f32.gmra.mxu0 %v8305
        %v9208 = vpop.f32.mrf.mxu0
        %v9209 = vadd.f32 %v9084, %v9208
        %9210 = vmatmul.f32.gmra.mxu0 %v8306
        %v9211 = vpop.f32.mrf.mxu0
        %v9212 = vadd.f32 %v9087, %v9211
        %9213 = vmatmul.f32.gmra.mxu0 %v8307
        %v9214 = vpop.f32.mrf.mxu0
        %v9215 = vadd.f32 %v9090, %v9214
        %9216 = vmatmul.f32.gmra.mxu0 %v8308
        %v9217 = vpop.f32.mrf.mxu0
        %v9218 = vadd.f32 %v9093, %v9217
        %9219 = vmatmul.f32.gmra.mxu0 %v8309
        %v9220 = vpop.f32.mrf.mxu0
        %v9221 = vadd.f32 %v9096, %v9220
        %9222 = vmatmul.f32.gmra.mxu0 %v8310
        %v9223 = vpop.f32.mrf.mxu0
        %v9224 = vadd.f32 %v9099, %v9223
        %9225 = vmatmul.f32.gmra.mxu0 %v8311
        %v9226 = vpop.f32.mrf.mxu0
        %v9227 = vadd.f32 %v9102, %v9226
        %9228 = vmatmul.f32.gmra.mxu0 %v8312
        %v9229 = vpop.f32.mrf.mxu0
        %v9230 = vadd.f32 %v9105, %v9229
        %9231 = vmatmul.f32.gmra.mxu0 %v8313
        %v9232 = vpop.f32.mrf.mxu0
        %v9233 = vadd.f32 %v9108, %v9232
        %9234 = vmatmul.f32.gmra.mxu0 %v8314
        %v9235 = vpop.f32.mrf.mxu0
        %v9236 = vadd.f32 %v9111, %v9235
        %9237 = vmatmul.f32.gmra.mxu0 %v8315
        %v9238 = vpop.f32.mrf.mxu0
        %v9239 = vadd.f32 %v9114, %v9238
        %9240 = vmatmul.f32.gmra.mxu0 %v8316
        %v9241 = vpop.f32.mrf.mxu0
        %v9242 = vadd.f32 %v9117, %v9241
        %9243 = vmatmul.f32.gmra.mxu0 %v8317
        %v9244 = vpop.f32.mrf.mxu0
        %v9245 = vadd.f32 %v9120, %v9244
        %9246 = vmatmul.f32.gmra.mxu0 %v8318
        %v9247 = vpop.f32.mrf.mxu0
        %v9248 = vadd.f32 %v9123, %v9247
        %9249 = vmatmul.f32.gmra.mxu0 %v8319
        %v9250 = vpop.f32.mrf.mxu0
        %v9251 = vadd.f32 %v9126, %v9250
        %9252 = vmatmul.f32.gmra.mxu0 %v8320
        %v9253 = vpop.f32.mrf.mxu0
        %v9254 = vadd.f32 %v9129, %v9253
        %9255 = vmatmul.f32.gmra.mxu0 %v8321
        %v9256 = vpop.f32.mrf.mxu0
        %v9257 = vadd.f32 %v9132, %v9256
        %9258 = vmatmul.f32.gmra.mxu0 %v8322
        %v9259 = vpop.f32.mrf.mxu0
        %v9260 = vadd.f32 %v9135, %v9259
        %9261 = vmatmul.f32.gmra.mxu0 %v8323
        %v9262 = vpop.f32.mrf.mxu0
        %v9263 = vadd.f32 %v9138, %v9262
        %9264 = vmatmul.f32.gmra.mxu0 %v8324
        %v9265 = vpop.f32.mrf.mxu0
        %v9266 = vadd.f32 %v9141, %v9265
        %9267 = vmatmul.f32.gmra.mxu0 %v8325
        %v9268 = vpop.f32.mrf.mxu0
        %v9269 = vadd.f32 %v9144, %v9268
        %9270 = vmatmul.f32.gmra.mxu0 %v8326
        %v9271 = vpop.f32.mrf.mxu0
        %v9272 = vadd.f32 %v9147, %v9271
        %9273 = vmatmul.f32.gmra.mxu0 %v8327
        %v9274 = vpop.f32.mrf.mxu0
        %v9275 = vadd.f32 %v9150, %v9274
        %9276 = vmatmul.f32.gmra.mxu0 %v8328
        %v9277 = vpop.f32.mrf.mxu0
        %v9278 = vadd.f32 %v9153, %v9277
        %9279 = vdwg.mxu0
        %9280 = vmatpush.msra.mxu0 %v847
        %9281 = vmatpush.msra.mxu0 %v846
        %9282 = vmatpush.msra.mxu0 %v845
        %9283 = vmatpush.msra.mxu0 %v844
        %9284 = vmatpush.msra.mxu0 %v843
        %9285 = vmatpush.msra.mxu0 %v842
        %9286 = vmatpush.msra.mxu0 %v841
        %9287 = vmatpush.msra.mxu0 %v840
        %9288 = vmatpush.msra.mxu0 %v839
        %9289 = vmatpush.msra.mxu0 %v838
        %9290 = vmatpush.msra.mxu0 %v837
        %9291 = vmatpush.msra.mxu0 %v836
        %9292 = vmatpush.msra.mxu0 %v835
        %9293 = vmatpush.msra.mxu0 %v834
        %9294 = vmatpush.msra.mxu0 %v833
        %9295 = vmatpush.msra.mxu0 %v832
        %9296 = vmatmul.f32.gmra.mxu0 %v8333
        %v9297 = vpop.f32.mrf.mxu0
        %v9298 = vadd.f32 %v9173, %v9297
        %9299 = vmatmul.f32.gmra.mxu0 %v8334
        %v9300 = vpop.f32.mrf.mxu0
        %v9301 = vadd.f32 %v9176, %v9300
        %9302 = vmatmul.f32.gmra.mxu0 %v8335
        %v9303 = vpop.f32.mrf.mxu0
        %v9304 = vadd.f32 %v9179, %v9303
        %9305 = vmatmul.f32.gmra.mxu0 %v8336
        %v9306 = vpop.f32.mrf.mxu0
        %v9307 = vadd.f32 %v9182, %v9306
        %9308 = vmatmul.f32.gmra.mxu0 %v8337
        %v9309 = vpop.f32.mrf.mxu0
        %v9310 = vadd.f32 %v9185, %v9309
        %9311 = vmatmul.f32.gmra.mxu0 %v8338
        %v9312 = vpop.f32.mrf.mxu0
        %v9313 = vadd.f32 %v9188, %v9312
        %9314 = vmatmul.f32.gmra.mxu0 %v8339
        %v9315 = vpop.f32.mrf.mxu0
        %v9316 = vadd.f32 %v9191, %v9315
        %9317 = vmatmul.f32.gmra.mxu0 %v8340
        %v9318 = vpop.f32.mrf.mxu0
        %v9319 = vadd.f32 %v9194, %v9318
        %9320 = vmatmul.f32.gmra.mxu0 %v8341
        %v9321 = vpop.f32.mrf.mxu0
        %v9322 = vadd.f32 %v9197, %v9321
        %9323 = vmatmul.f32.gmra.mxu0 %v8342
        %v9324 = vpop.f32.mrf.mxu0
        %v9325 = vadd.f32 %v9200, %v9324
        %9326 = vmatmul.f32.gmra.mxu0 %v8343
        %v9327 = vpop.f32.mrf.mxu0
        %v9328 = vadd.f32 %v9203, %v9327
        %9329 = vmatmul.f32.gmra.mxu0 %v8344
        %v9330 = vpop.f32.mrf.mxu0
        %v9331 = vadd.f32 %v9206, %v9330
        %9332 = vmatmul.f32.gmra.mxu0 %v8345
        %v9333 = vpop.f32.mrf.mxu0
        %v9334 = vadd.f32 %v9209, %v9333
        %9335 = vmatmul.f32.gmra.mxu0 %v8346
        %v9336 = vpop.f32.mrf.mxu0
        %v9337 = vadd.f32 %v9212, %v9336
        %9338 = vmatmul.f32.gmra.mxu0 %v8347
        %v9339 = vpop.f32.mrf.mxu0
        %v9340 = vadd.f32 %v9215, %v9339
        %9341 = vmatmul.f32.gmra.mxu0 %v8348
        %v9342 = vpop.f32.mrf.mxu0
        %v9343 = vadd.f32 %v9218, %v9342
        %9344 = vmatmul.f32.gmra.mxu0 %v8349
        %v9345 = vpop.f32.mrf.mxu0
        %v9346 = vadd.f32 %v9221, %v9345
        %9347 = vmatmul.f32.gmra.mxu0 %v8350
        %v9348 = vpop.f32.mrf.mxu0
        %v9349 = vadd.f32 %v9224, %v9348
        %9350 = vmatmul.f32.gmra.mxu0 %v8351
        %v9351 = vpop.f32.mrf.mxu0
        %v9352 = vadd.f32 %v9227, %v9351
        %9353 = vmatmul.f32.gmra.mxu0 %v8352
        %v9354 = vpop.f32.mrf.mxu0
        %v9355 = vadd.f32 %v9230, %v9354
        %9356 = vmatmul.f32.gmra.mxu0 %v8353
        %v9357 = vpop.f32.mrf.mxu0
        %v9358 = vadd.f32 %v9233, %v9357
        %9359 = vmatmul.f32.gmra.mxu0 %v8354
        %v9360 = vpop.f32.mrf.mxu0
        %v9361 = vadd.f32 %v9236, %v9360
        %9362 = vmatmul.f32.gmra.mxu0 %v8355
        %v9363 = vpop.f32.mrf.mxu0
        %v9364 = vadd.f32 %v9239, %v9363
        %9365 = vmatmul.f32.gmra.mxu0 %v8356
        %v9366 = vpop.f32.mrf.mxu0
        %v9367 = vadd.f32 %v9242, %v9366
        %9368 = vmatmul.f32.gmra.mxu0 %v8357
        %v9369 = vpop.f32.mrf.mxu0
        %v9370 = vadd.f32 %v9245, %v9369
        %9371 = vmatmul.f32.gmra.mxu0 %v8358
        %v9372 = vpop.f32.mrf.mxu0
        %v9373 = vadd.f32 %v9248, %v9372
        %9374 = vmatmul.f32.gmra.mxu0 %v8359
        %v9375 = vpop.f32.mrf.mxu0
        %v9376 = vadd.f32 %v9251, %v9375
        %9377 = vmatmul.f32.gmra.mxu0 %v8360
        %v9378 = vpop.f32.mrf.mxu0
        %v9379 = vadd.f32 %v9254, %v9378
        %9380 = vmatmul.f32.gmra.mxu0 %v8361
        %v9381 = vpop.f32.mrf.mxu0
        %v9382 = vadd.f32 %v9257, %v9381
        %9383 = vmatmul.f32.gmra.mxu0 %v8362
        %v9384 = vpop.f32.mrf.mxu0
        %v9385 = vadd.f32 %v9260, %v9384
        %9386 = vmatmul.f32.gmra.mxu0 %v8363
        %v9387 = vpop.f32.mrf.mxu0
        %v9388 = vadd.f32 %v9263, %v9387
        %9389 = vmatmul.f32.gmra.mxu0 %v8364
        %v9390 = vpop.f32.mrf.mxu0
        %v9391 = vadd.f32 %v9266, %v9390
        %9392 = vmatmul.f32.gmra.mxu0 %v8365
        %v9393 = vpop.f32.mrf.mxu0
        %v9394 = vadd.f32 %v9269, %v9393
        %9395 = vmatmul.f32.gmra.mxu0 %v8366
        %v9396 = vpop.f32.mrf.mxu0
        %v9397 = vadd.f32 %v9272, %v9396
        %9398 = vmatmul.f32.gmra.mxu0 %v8367
        %v9399 = vpop.f32.mrf.mxu0
        %v9400 = vadd.f32 %v9275, %v9399
        %9401 = vmatmul.f32.gmra.mxu0 %v8368
        %v9402 = vpop.f32.mrf.mxu0
        %v9403 = vadd.f32 %v9278, %v9402
        %9404 = vdwg.mxu0
        %9405 = vmatpush.msra.mxu0 %v863
        %9406 = vmatpush.msra.mxu0 %v862
        %9407 = vmatpush.msra.mxu0 %v861
        %9408 = vmatpush.msra.mxu0 %v860
        %9409 = vmatpush.msra.mxu0 %v859
        %9410 = vmatpush.msra.mxu0 %v858
        %9411 = vmatpush.msra.mxu0 %v857
        %9412 = vmatpush.msra.mxu0 %v856
        %9413 = vmatpush.msra.mxu0 %v855
        %9414 = vmatpush.msra.mxu0 %v854
        %9415 = vmatpush.msra.mxu0 %v853
        %9416 = vmatpush.msra.mxu0 %v852
        %9417 = vmatpush.msra.mxu0 %v851
        %9418 = vmatpush.msra.mxu0 %v850
        %9419 = vmatpush.msra.mxu0 %v849
        %9420 = vmatpush.msra.mxu0 %v848
        %9421 = vmatmul.f32.gmra.mxu0 %v8369
        %v9422 = vpop.f32.mrf.mxu0
        %v9423 = vadd.f32 %v9298, %v9422
        %9424 = vmatmul.f32.gmra.mxu0 %v8370
        %v9425 = vpop.f32.mrf.mxu0
        %v9426 = vadd.f32 %v9301, %v9425
        %9427 = vmatmul.f32.gmra.mxu0 %v8371
        %v9428 = vpop.f32.mrf.mxu0
        %v9429 = vadd.f32 %v9304, %v9428
        %9430 = vmatmul.f32.gmra.mxu0 %v8372
        %v9431 = vpop.f32.mrf.mxu0
        %v9432 = vadd.f32 %v9307, %v9431
        %9433 = vmatmul.f32.gmra.mxu0 %v8373
        %v9434 = vpop.f32.mrf.mxu0
        %v9435 = vadd.f32 %v9310, %v9434
        %9436 = vmatmul.f32.gmra.mxu0 %v8374
        %v9437 = vpop.f32.mrf.mxu0
        %v9438 = vadd.f32 %v9313, %v9437
        %9439 = vmatmul.f32.gmra.mxu0 %v8375
        %v9440 = vpop.f32.mrf.mxu0
        %v9441 = vadd.f32 %v9316, %v9440
        %9442 = vmatmul.f32.gmra.mxu0 %v8376
        %v9443 = vpop.f32.mrf.mxu0
        %v9444 = vadd.f32 %v9319, %v9443
        %9445 = vmatmul.f32.gmra.mxu0 %v8377
        %v9446 = vpop.f32.mrf.mxu0
        %v9447 = vadd.f32 %v9322, %v9446
        %9448 = vmatmul.f32.gmra.mxu0 %v8378
        %v9449 = vpop.f32.mrf.mxu0
        %v9450 = vadd.f32 %v9325, %v9449
        %9451 = vmatmul.f32.gmra.mxu0 %v8379
        %v9452 = vpop.f32.mrf.mxu0
        %v9453 = vadd.f32 %v9328, %v9452
        %9454 = vmatmul.f32.gmra.mxu0 %v8380
        %v9455 = vpop.f32.mrf.mxu0
        %v9456 = vadd.f32 %v9331, %v9455
        %9457 = vmatmul.f32.gmra.mxu0 %v8381
        %v9458 = vpop.f32.mrf.mxu0
        %v9459 = vadd.f32 %v9334, %v9458
        %9460 = vmatmul.f32.gmra.mxu0 %v8382
        %v9461 = vpop.f32.mrf.mxu0
        %v9462 = vadd.f32 %v9337, %v9461
        %9463 = vmatmul.f32.gmra.mxu0 %v8383
        %v9464 = vpop.f32.mrf.mxu0
        %v9465 = vadd.f32 %v9340, %v9464
        %9466 = vmatmul.f32.gmra.mxu0 %v8384
        %v9467 = vpop.f32.mrf.mxu0
        %v9468 = vadd.f32 %v9343, %v9467
        %9469 = vmatmul.f32.gmra.mxu0 %v8385
        %v9470 = vpop.f32.mrf.mxu0
        %v9471 = vadd.f32 %v9346, %v9470
        %9472 = vmatmul.f32.gmra.mxu0 %v8386
        %v9473 = vpop.f32.mrf.mxu0
        %v9474 = vadd.f32 %v9349, %v9473
        %9475 = vmatmul.f32.gmra.mxu0 %v8387
        %v9476 = vpop.f32.mrf.mxu0
        %v9477 = vadd.f32 %v9352, %v9476
        %9478 = vmatmul.f32.gmra.mxu0 %v8388
        %v9479 = vpop.f32.mrf.mxu0
        %v9480 = vadd.f32 %v9355, %v9479
        %9481 = vmatmul.f32.gmra.mxu0 %v8389
        %v9482 = vpop.f32.mrf.mxu0
        %v9483 = vadd.f32 %v9358, %v9482
        %9484 = vmatmul.f32.gmra.mxu0 %v8390
        %v9485 = vpop.f32.mrf.mxu0
        %v9486 = vadd.f32 %v9361, %v9485
        %9487 = vmatmul.f32.gmra.mxu0 %v8391
        %v9488 = vpop.f32.mrf.mxu0
        %v9489 = vadd.f32 %v9364, %v9488
        %9490 = vmatmul.f32.gmra.mxu0 %v8392
        %v9491 = vpop.f32.mrf.mxu0
        %v9492 = vadd.f32 %v9367, %v9491
        %9493 = vmatmul.f32.gmra.mxu0 %v8393
        %v9494 = vpop.f32.mrf.mxu0
        %v9495 = vadd.f32 %v9370, %v9494
        %9496 = vmatmul.f32.gmra.mxu0 %v8394
        %v9497 = vpop.f32.mrf.mxu0
        %v9498 = vadd.f32 %v9373, %v9497
        %9499 = vmatmul.f32.gmra.mxu0 %v8395
        %v9500 = vpop.f32.mrf.mxu0
        %v9501 = vadd.f32 %v9376, %v9500
        %9502 = vmatmul.f32.gmra.mxu0 %v8396
        %v9503 = vpop.f32.mrf.mxu0
        %v9504 = vadd.f32 %v9379, %v9503
        %9505 = vmatmul.f32.gmra.mxu0 %v8397
        %v9506 = vpop.f32.mrf.mxu0
        %v9507 = vadd.f32 %v9382, %v9506
        %9508 = vmatmul.f32.gmra.mxu0 %v8398
        %v9509 = vpop.f32.mrf.mxu0
        %v9510 = vadd.f32 %v9385, %v9509
        %9511 = vmatmul.f32.gmra.mxu0 %v8399
        %v9512 = vpop.f32.mrf.mxu0
        %v9513 = vadd.f32 %v9388, %v9512
        %9514 = vmatmul.f32.gmra.mxu0 %v8400
        %v9515 = vpop.f32.mrf.mxu0
        %v9516 = vadd.f32 %v9391, %v9515
        %9517 = vmatmul.f32.gmra.mxu0 %v8401
        %v9518 = vpop.f32.mrf.mxu0
        %v9519 = vadd.f32 %v9394, %v9518
        %9520 = vmatmul.f32.gmra.mxu0 %v8402
        %v9521 = vpop.f32.mrf.mxu0
        %v9522 = vadd.f32 %v9397, %v9521
        %9523 = vmatmul.f32.gmra.mxu0 %v8403
        %v9524 = vpop.f32.mrf.mxu0
        %v9525 = vadd.f32 %v9400, %v9524
        %9526 = vmatmul.f32.gmra.mxu0 %v8404
        %v9527 = vpop.f32.mrf.mxu0
        %v9528 = vadd.f32 %v9403, %v9527
        %9529 = vdwg.mxu0
        %9530 = vxpose.xlu0.b32.start [1/16] %v9423, 128
        %9531 = vxpose.xlu0.b32.cont [2/16] %v9426, 128
        %9532 = vxpose.xlu0.b32.cont [3/16] %v9429, 128
        %9533 = vxpose.xlu0.b32.cont [4/16] %v9432, 128
        %9534 = vxpose.xlu0.b32.cont [5/16] %v9435, 128
        %9535 = vxpose.xlu0.b32.cont [6/16] %v9438, 128
        %9536 = vxpose.xlu0.b32.cont [7/16] %v9441, 128
        %9537 = vxpose.xlu0.b32.cont [8/16] %v9444, 128
        %9538 = vxpose.xlu0.b32.cont [9/16] %v9447, 128
        %9539 = vxpose.xlu0.b32.cont [10/16] %v9450, 128
        %9540 = vxpose.xlu0.b32.cont [11/16] %v9453, 128
        %9541 = vxpose.xlu0.b32.cont [12/16] %v9456, 128
        %9542 = vxpose.xlu0.b32.cont [13/16] %v9459, 128
        %9543 = vxpose.xlu0.b32.cont [14/16] %v9462, 128
        %9544 = vxpose.xlu0.b32.cont [15/16] %v9465, 128
        %9545 = vxpose.xlu0.b32.end [16/16] %v9468, 128
        %v9546 = vpop.trf.xlu0
        %v9547 = vpop.trf.xlu0
        %v9548 = vpop.trf.xlu0
        %v9549 = vpop.trf.xlu0
        %v9550 = vpop.trf.xlu0
        %v9551 = vpop.trf.xlu0
        %v9552 = vpop.trf.xlu0
        %v9553 = vpop.trf.xlu0
        %v9554 = vpop.trf.xlu0
        %v9555 = vpop.trf.xlu0
        %v9556 = vpop.trf.xlu0
        %v9557 = vpop.trf.xlu0
        %v9558 = vpop.trf.xlu0
        %v9559 = vpop.trf.xlu0
        %v9560 = vpop.trf.xlu0
        %v9561 = vpop.trf.xlu0
        %9562 = vxpose.xlu0.b32.start [1/16] %v9471, 128
        %9563 = vxpose.xlu0.b32.cont [2/16] %v9474, 128
        %9564 = vxpose.xlu0.b32.cont [3/16] %v9477, 128
        %9565 = vxpose.xlu0.b32.cont [4/16] %v9480, 128
        %9566 = vxpose.xlu0.b32.cont [5/16] %v9483, 128
        %9567 = vxpose.xlu0.b32.cont [6/16] %v9486, 128
        %9568 = vxpose.xlu0.b32.cont [7/16] %v9489, 128
        %9569 = vxpose.xlu0.b32.cont [8/16] %v9492, 128
        %9570 = vxpose.xlu0.b32.cont [9/16] %v9495, 128
        %9571 = vxpose.xlu0.b32.cont [10/16] %v9498, 128
        %9572 = vxpose.xlu0.b32.cont [11/16] %v9501, 128
        %9573 = vxpose.xlu0.b32.cont [12/16] %v9504, 128
        %9574 = vxpose.xlu0.b32.cont [13/16] %v9507, 128
        %9575 = vxpose.xlu0.b32.cont [14/16] %v9510, 128
        %9576 = vxpose.xlu0.b32.cont [15/16] %v9513, 128
        %9577 = vxpose.xlu0.b32.end [16/16] %v9516, 128
        %v9578 = vpop.trf.xlu0
        %v9579 = vpop.trf.xlu0
        %v9580 = vpop.trf.xlu0
        %v9581 = vpop.trf.xlu0
        %v9582 = vpop.trf.xlu0
        %v9583 = vpop.trf.xlu0
        %v9584 = vpop.trf.xlu0
        %v9585 = vpop.trf.xlu0
        %v9586 = vpop.trf.xlu0
        %v9587 = vpop.trf.xlu0
        %v9588 = vpop.trf.xlu0
        %v9589 = vpop.trf.xlu0
        %v9590 = vpop.trf.xlu0
        %v9591 = vpop.trf.xlu0
        %v9592 = vpop.trf.xlu0
        %v9593 = vpop.trf.xlu0
        %9594 = vxpose.xlu0.b32.start [1/16] %v9519, 128
        %9595 = vxpose.xlu0.b32.cont [2/16] %v9522, 128
        %9596 = vxpose.xlu0.b32.cont [3/16] %v9525, 128
        %9597 = vxpose.xlu0.b32.cont [4/16] %v9528, 128
        %9598 = vxpose.xlu0.b32.cont [5/16] 0.0, 128
        %9599 = vxpose.xlu0.b32.cont [6/16] 0.0, 128
        %9600 = vxpose.xlu0.b32.cont [7/16] 0.0, 128
        %9601 = vxpose.xlu0.b32.cont [8/16] 0.0, 128
        %9602 = vxpose.xlu0.b32.cont [9/16] 0.0, 128
        %9603 = vxpose.xlu0.b32.cont [10/16] 0.0, 128
        %9604 = vxpose.xlu0.b32.cont [11/16] 0.0, 128
        %9605 = vxpose.xlu0.b32.cont [12/16] 0.0, 128
        %9606 = vxpose.xlu0.b32.cont [13/16] 0.0, 128
        %9607 = vxpose.xlu0.b32.cont [14/16] 0.0, 128
        %9608 = vxpose.xlu0.b32.cont [15/16] 0.0, 128
        %9609 = vxpose.xlu0.b32.end [16/16] 0.0, 128
        %v9610 = vpop.trf.xlu0
        %v9611 = vpop.trf.xlu0
        %v9612 = vpop.trf.xlu0
        %v9613 = vpop.trf.xlu0
        %v9614 = vpop.trf.xlu0
        %v9615 = vpop.trf.xlu0
        %v9616 = vpop.trf.xlu0
        %v9617 = vpop.trf.xlu0
        %v9618 = vpop.trf.xlu0
        %v9619 = vpop.trf.xlu0
        %v9620 = vpop.trf.xlu0
        %v9621 = vpop.trf.xlu0
        %v9622 = vpop.trf.xlu0
        %v9623 = vpop.trf.xlu0
        %v9624 = vpop.trf.xlu0
        %v9625 = vpop.trf.xlu0
        %v9628 = vrot.slane %v9578, 4
        %v9629 = vsel %vm1024, %v9546, %v9628
        %9631 = vst [vmem:[%s309] sm:$0xff] %v9629
        %vm9632 = vcmask 257024
        %9633 = vst.msk [vmem:[%s309 + $0x8] sm:$0xf] %vm9632, %v9610
        %s9634 = sand.u32 %s162, 1
        %s9635 = scalar_lea.sflag [#allocation5], %s9634
        %s9636 = sand.u32 %s162, 1
        %s9637 = smul.addr %s9636, 12
        %s9638 = scalar_lea.vmem [#allocation11], %s9637
        // Predicated region
        $region61: #{tpu_custom_call.1} parent=43 // pred_check
          %p9639 = pneg %p172
        $region62: #{tpu_custom_call.1} parent=43 // pred_check_branch
          %9641 = sbr.rel (%p9639) target = $region64
        $region63: #{tpu_custom_call.1} parent=43 // pred_region
          %9643 = vsyncadd %s9635, 0
          %s9644 = smul.addr %s23, 3
          %s9645 = smul.addr %s9644, 4
          %s9646 = scalar_lea.hbm %s6, %s9645
          %s9648 = sshll.u32 %s9638, 4
          %s9649 = int_to_ptr.vmem [resolvable:$true] %s9648
          %s9650 = sshll.u32 %s9646, 4
          %s9651 = int_to_ptr.hbm [resolvable:$true] %s9650
          %9653 = dma.vmem_to_hbm [thread:$0]  %s9649, 192, %s9651, %s9635
        $region64: #{tpu_custom_call.1} parent=43 // pred_fallthru
          _
      $region44: #{tpu_custom_call.1} parent=5 // pred_fallthru
        _
      %p9654 = scmp.le.s32.totalorder 2, %s18
      // Predicated region
      $region65: #{tpu_custom_call.1} parent=5 // pred_check
        %p9655 = pneg %p9654
      $region66: #{tpu_custom_call.1} parent=5 // pred_check_branch
        %9657 = sbr.rel (%p9655) target = $region68
      $region67: #{tpu_custom_call.1} parent=5 // pred_region
        %s9658 = ssub.s32 %s18, 2
        // Predicated region
        $region69: #{tpu_custom_call.1} parent=67 // pred_check
          %p9659 = pneg %p178
        $region70: #{tpu_custom_call.1} parent=67 // pred_check_branch
          %9661 = sbr.rel (%p9659) target = $region72
        $region71: #{tpu_custom_call.1} parent=67 // pred_region
          %s9662 = sand.u32 %s163, 1
          %s9663 = scalar_lea.sflag [#allocation5], %s9662
          %s9664 = sand.u32 %s163, 1
          %s9665 = smul.addr %s9664, 12
          %s9666 = scalar_lea.vmem [#allocation11], %s9665
          %9668 = dma.done %s9663, 192
        $region72: #{tpu_custom_call.1} parent=67 // pred_fallthru
          _
      $region68: #{tpu_custom_call.1} parent=5 // pred_fallthru
        _
    $region6: #{tpu_custom_call.1} parent=1 // loop_footer
      %s22 = sadd.s32 1, %s18
    $region7: #{tpu_custom_call.1} parent=1 // loop_footer_branch
      %17 = sbr.rel target = $region3
    $region8: #{tpu_custom_call.1} parent=1 // loop_exit
      _
    %9669 = vsyncpa [#allocation4], 1
    %s9670 = scalar_lea.sflag [#allocation4], 1
    %9671 = vsyncpa %s9670, 1
    %9672 = vsyncpa [#allocation7], 1
    %9673 = vsyncpa [#allocation10], 1
    %9674 = vsyncpa [#allocation5], 1
    %s9675 = scalar_lea.sflag [#allocation5], 1
    %9676 = vsyncpa %s9675, 1

</llo_original>
